<compile_context>
chip_gen: v6e
topology: v6e:2x2x1
jax: 0.10.0
libtpu: 0.0.40
codegen_flags: <defaults>
</compile_context>

<pallas_src>
import jax
import jax.numpy as jnp
from jax.experimental import pallas as pl
from jax.experimental.pallas import tpu as pltpu

LANE = 128
SUBLANE = 8


def _round_up(x, m):
    return ((x + m - 1) // m) * m


# ----------------------------- Pallas kernel -------------------------------

def rep_model_kernel(xp_ref, wconv_ref, bconv_ref, w1_ref, b1_ref,
                     w2_ref, b2_ref, out_ref):
    # xp_ref   : (TB, H+2, W+2, CP)  f32   zero-padded NHWC input tile
    # wconv_ref: (9*CP, dim_in)      bf16  im2col conv weight (dy,dx major, c minor)
    # bconv_ref: (1, dim_in)         f32
    # w1_ref   : (dim_in, dim_in)    bf16  head linear 1
    # b1_ref   : (1, dim_in)         f32
    # w2_ref   : (dim_in, OUTP)      bf16  head linear 2, lane-padded to 128
    # b2_ref   : (1, OUTP)           f32
    # out_ref  : (TB, OUTP)          f32   full-tile lane-dense output block
    TB, Hp2, Wp2, CP = xp_ref.shape
    H, W = Hp2 - 2, Wp2 - 2
    HW = H * W
    dim_in = wconv_ref.shape[1]

    x = xp_ref[...]                                            # load once (f32)

    # ---- in-kernel im2col, built ONCE: 9 shifted windows -> channel concat ----
    taps = [x[:, dy:dy + H, dx:dx + W, :]                      # (TB, H, W, CP)
            for dy in range(3) for dx in range(3)]
    patches = jnp.concatenate(taps, axis=-1)                   # (TB, H, W, 9*CP)
    patches2d = patches.reshape(TB * HW, 9 * CP)               # leading-dim fold only

    # ---- encoder conv: single K=9*CP MXU dot, bf16 x bf16, f32 accumulate ----
    acc = jnp.dot(patches2d.astype(jnp.bfloat16), wconv_ref[...],
                  preferred_element_type=jnp.float32)          # (TB*HW, dim_in)
    conv = jnp.maximum(acc + bconv_ref[...], 0.0)

    # ---- encoder: global average pool (sum over HW, then 1/HW scale) ----
    pooled = jnp.sum(conv.reshape(TB, HW, dim_in), axis=1) * (1.0 / HW)

    # ---- head (mlp): Linear -> ReLU -> Linear, bf16 activations into the MXU ----
    h = jnp.dot(pooled.astype(jnp.bfloat16), w1_ref[...],
                preferred_element_type=jnp.float32) + b1_ref[...]
    h = jnp.maximum(h, 0.0)
    out = jnp.dot(h.astype(jnp.bfloat16), w2_ref[...],
                  preferred_element_type=jnp.float32) + b2_ref[...]

    out_ref[...] = out.astype(out_ref.dtype)                   # (TB, OUTP)


# ------------------------------ JAX wrapper ---------------------------------

def rep_model_forward(x_nchw, params):
    """x_nchw: (B, C, H, W) float32 -> (B, output_dim) float32."""
    wconv, bconv, w1, b1, w2, b2 = params
    B, C, H, W = x_nchw.shape
    dim_in = w1.shape[0]
    out_dim = w2.shape[1]
    assert wconv.shape == (9 * C, dim_in)

    CP = _round_up(C, SUBLANE)
    OUTP = _round_up(out_dim, LANE)

    # Grid: single step on single-TensorCore chips / small batches; 2-way
    # "parallel" split (v7x megacore) only when each step has real MXU work.
    G = 2 if B >= 8 else 1
    TB = _round_up(pl.cdiv(B, G), SUBLANE)     # >= 8 rows/step -> unmasked output store
    BP = G * TB

    # glue only (no 9x expansion): NCHW -> NHWC, halo + channel + batch pad
    x_nhwc = jnp.transpose(x_nchw, (0, 2, 3, 1))
    xp = jnp.pad(x_nhwc, ((0, BP - B), (1, 1), (1, 1), (0, CP - C))).astype(jnp.float32)

    # parameter prep: bf16 MXU weights, channel-padded conv weight, lane-padded head
    wconv_p = jnp.pad(wconv.reshape(9, C, dim_in),
                      ((0, 0), (0, CP - C), (0, 0))).reshape(9 * CP, dim_in)
    wconv_p = wconv_p.astype(jnp.bfloat16)
    bconv2 = bconv.reshape(1, dim_in).astype(jnp.float32)
    w1b = w1.astype(jnp.bfloat16)
    b12 = b1.reshape(1, dim_in).astype(jnp.float32)
    w2p = jnp.pad(w2, ((0, 0), (0, OUTP - out_dim))).astype(jnp.bfloat16)
    b2p = jnp.pad(b2.reshape(1, out_dim),
                  ((0, 0), (0, OUTP - out_dim))).astype(jnp.float32)

    grid_spec = pltpu.PrefetchScalarGridSpec(
        num_scalar_prefetch=0,
        grid=(G,),
        in_specs=[
            pl.BlockSpec((TB, H + 2, W + 2, CP), lambda g: (g, 0, 0, 0)),  # input tile
            pl.BlockSpec((9 * CP, dim_in), lambda g: (0, 0)),              # conv weight
            pl.BlockSpec((1, dim_in), lambda g: (0, 0)),                   # conv bias
            pl.BlockSpec((dim_in, dim_in), lambda g: (0, 0)),              # head W1
            pl.BlockSpec((1, dim_in), lambda g: (0, 0)),                   # head b1
            pl.BlockSpec((dim_in, OUTP), lambda g: (0, 0)),                # head W2 (padded)
            pl.BlockSpec((1, OUTP), lambda g: (0, 0)),                     # head b2 (padded)
        ],
        out_specs=pl.BlockSpec((TB, OUTP), lambda g: (g, 0)),
    )

    out_padded = pl.pallas_call(
        rep_model_kernel,
        out_shape=jax.ShapeDtypeStruct((BP, OUTP), jnp.float32),
        grid_spec=grid_spec,
        compiler_params=pltpu.CompilerParams(
            dimension_semantics=("parallel",)),
    )(xp, wconv_p, bconv2, w1b, b12, w2p, b2p)

    return out_padded[:B, :out_dim]


def init_params(key, c_in=4, dim_in=32, out_dim=16):
    """Deterministic synthetic parameters (shapes follow the module __init__)."""
    ks = jax.random.split(key, 6)
    K = 9 * c_in
    wconv = jax.random.normal(ks[0], (K, dim_in), jnp.float32) * 0.1
    bconv = jax.random.normal(ks[1], (dim_in,), jnp.float32) * 0.1
    w1 = jax.random.normal(ks[2], (dim_in, dim_in), jnp.float32) * 0.1
    b1 = jax.random.normal(ks[3], (dim_in,), jnp.float32) * 0.1
    w2 = jax.random.normal(ks[4], (dim_in, out_dim), jnp.float32) * 0.1
    b2 = jax.random.normal(ks[5], (out_dim,), jnp.float32) * 0.1
    return (wconv, bconv, w1, b1, w2, b2)


# ----------------------------- pure-JAX reference ---------------------------

def _bf16_rt(a):
    """Round-trip through bf16 (mirrors the kernel's bf16 MXU operands)."""
    return a.astype(jnp.bfloat16).astype(jnp.float32)


def im2col_3x3_same(x_nhwc):
    """3x3 padded patches, (dy, dx, c) ordering: (B,H,W,C) -> (B, H*W, 9*C)."""
    B, H, W, C = x_nhwc.shape
    xpad = jnp.pad(x_nhwc, ((0, 0), (1, 1), (1, 1), (0, 0)))
    cols = []
    for dy in range(3):
        for dx in range(3):
            cols.append(xpad[:, dy:dy + H, dx:dx + W, :])
    patches = jnp.stack(cols, axis=3)                              # (B,H,W,9,C)
    return patches.reshape(B, H * W, 9 * C)


def rep_model_ref(x_nchw, params):
    wconv, bconv, w1, b1, w2, b2 = params
    # mirror the kernel's bf16 MXU operands (weights and activation feeds)
    wconv = _bf16_rt(wconv)
    w1 = _bf16_rt(w1)
    w2 = _bf16_rt(w2)
    x_nhwc = _bf16_rt(jnp.transpose(x_nchw, (0, 2, 3, 1)))
    patches = im2col_3x3_same(x_nhwc)
    conv = jnp.maximum(jnp.einsum('bpk,kd->bpd', patches, wconv) + bconv, 0.0)
    pooled = jnp.mean(conv, axis=1)
    h = jnp.maximum(_bf16_rt(pooled) @ w1 + b1, 0.0)
    return _bf16_rt(h) @ w2 + b2


if __name__ == "__main__":
    key = jax.random.PRNGKey(0)
    k_x, k_p = jax.random.split(key)

    B, C, H, W = 2, 4, 16, 16
    dim_in, output_dim = 32, 16

    x = jax.random.normal(k_x, (B, C, H, W), jnp.float32)
    params = init_params(k_p, c_in=C, dim_in=dim_in, out_dim=output_dim)

    out = rep_model_forward(x, params)
    out = jax.block_until_ready(out)

    ref = rep_model_ref(x, params)
    assert out.shape == (B, output_dim)
    assert jnp.allclose(out, ref, atol=1e-3, rtol=1e-3), "mismatch vs reference"

    print("KERNEL_OK")
</pallas_src>

<mosaic_0001>
module attributes {stable_mosaic.version = 11 : i64} {
  func.func @rep_model_kernel(%arg0: i32, %arg1: memref<8x18x18x8xf32, #tpu.memory_space<vmem>>, %arg2: memref<72x32xbf16, #tpu.memory_space<vmem>>, %arg3: memref<1x32xf32, #tpu.memory_space<vmem>>, %arg4: memref<32x32xbf16, #tpu.memory_space<vmem>>, %arg5: memref<1x32xf32, #tpu.memory_space<vmem>>, %arg6: memref<32x128xbf16, #tpu.memory_space<vmem>>, %arg7: memref<1x128xf32, #tpu.memory_space<vmem>>, %arg8: memref<8x128xf32, #tpu.memory_space<vmem>>) attributes {dimension_semantics = [#tpu.dimension_semantics<parallel>], iteration_bounds = array<i64: 1>, scalar_prefetch = 0 : i64, scratch_operands = 0 : i64, tpu.core_type = #tpu.core_type<tc>, window_params = [{transform_indices = @transform_0, window_bounds = array<i64: 8, 18, 18, 8>}, {pipeline_mode = #tpu.pipeline_mode<synchronous>, transform_indices = @transform_1, window_bounds = array<i64: 72, 32>}, {pipeline_mode = #tpu.pipeline_mode<synchronous>, transform_indices = @transform_2, window_bounds = array<i64: 1, 32>}, {pipeline_mode = #tpu.pipeline_mode<synchronous>, transform_indices = @transform_3, window_bounds = array<i64: 32, 32>}, {pipeline_mode = #tpu.pipeline_mode<synchronous>, transform_indices = @transform_4, window_bounds = array<i64: 1, 32>}, {pipeline_mode = #tpu.pipeline_mode<synchronous>, transform_indices = @transform_5, window_bounds = array<i64: 32, 128>}, {pipeline_mode = #tpu.pipeline_mode<synchronous>, transform_indices = @transform_6, window_bounds = array<i64: 1, 128>}, {transform_indices = @transform_7, window_bounds = array<i64: 8, 128>}]} {
    %c0 = arith.constant 0 : index
    %c0_0 = arith.constant 0 : index
    %c0_1 = arith.constant 0 : index
    %c0_2 = arith.constant 0 : index
    %0 = vector.load %arg1[%c0, %c0_0, %c0_1, %c0_2] : memref<8x18x18x8xf32, #tpu.memory_space<vmem>>, vector<8x18x18x8xf32>
    %1 = vector.extract_strided_slice %0 {offsets = [0, 0, 0, 0], sizes = [8, 16, 16, 8], strides = [1, 1, 1, 1]} : vector<8x18x18x8xf32> to vector<8x16x16x8xf32>
    %2 = vector.extract_strided_slice %0 {offsets = [0, 0, 1, 0], sizes = [8, 16, 16, 8], strides = [1, 1, 1, 1]} : vector<8x18x18x8xf32> to vector<8x16x16x8xf32>
    %3 = vector.extract_strided_slice %0 {offsets = [0, 0, 2, 0], sizes = [8, 16, 16, 8], strides = [1, 1, 1, 1]} : vector<8x18x18x8xf32> to vector<8x16x16x8xf32>
    %4 = vector.extract_strided_slice %0 {offsets = [0, 1, 0, 0], sizes = [8, 16, 16, 8], strides = [1, 1, 1, 1]} : vector<8x18x18x8xf32> to vector<8x16x16x8xf32>
    %5 = vector.extract_strided_slice %0 {offsets = [0, 1, 1, 0], sizes = [8, 16, 16, 8], strides = [1, 1, 1, 1]} : vector<8x18x18x8xf32> to vector<8x16x16x8xf32>
    %6 = vector.extract_strided_slice %0 {offsets = [0, 1, 2, 0], sizes = [8, 16, 16, 8], strides = [1, 1, 1, 1]} : vector<8x18x18x8xf32> to vector<8x16x16x8xf32>
    %7 = vector.extract_strided_slice %0 {offsets = [0, 2, 0, 0], sizes = [8, 16, 16, 8], strides = [1, 1, 1, 1]} : vector<8x18x18x8xf32> to vector<8x16x16x8xf32>
    %8 = vector.extract_strided_slice %0 {offsets = [0, 2, 1, 0], sizes = [8, 16, 16, 8], strides = [1, 1, 1, 1]} : vector<8x18x18x8xf32> to vector<8x16x16x8xf32>
    %9 = vector.extract_strided_slice %0 {offsets = [0, 2, 2, 0], sizes = [8, 16, 16, 8], strides = [1, 1, 1, 1]} : vector<8x18x18x8xf32> to vector<8x16x16x8xf32>
    %10 = tpu.concatenate %1, %2, %3, %4, %5, %6, %7, %8, %9 in 3 : vector<8x16x16x8xf32>, vector<8x16x16x8xf32>, vector<8x16x16x8xf32>, vector<8x16x16x8xf32>, vector<8x16x16x8xf32>, vector<8x16x16x8xf32>, vector<8x16x16x8xf32>, vector<8x16x16x8xf32>, vector<8x16x16x8xf32> -> vector<8x16x16x72xf32>
    %11 = vector.shape_cast %10 : vector<8x16x16x72xf32> to vector<2048x72xf32>
    %12 = arith.truncf %11 : vector<2048x72xf32> to vector<2048x72xbf16>
    %c0_3 = arith.constant 0 : index
    %c0_4 = arith.constant 0 : index
    %13 = vector.load %arg2[%c0_3, %c0_4] : memref<72x32xbf16, #tpu.memory_space<vmem>>, vector<72x32xbf16>
    %cst = arith.constant dense<0.000000e+00> : vector<2048x32xf32>
    %14 = tpu.matmul %12, %13, %cst {dimension_numbers = #tpu.dot_dimension_numbers<[1], [0], [0], [1], [0, 0, 1, 1], [], []>} : vector<2048x72xbf16>, vector<72x32xbf16>, vector<2048x32xf32> -> vector<2048x32xf32>
    %c0_5 = arith.constant 0 : index
    %c0_6 = arith.constant 0 : index
    %15 = vector.load %arg3[%c0_5, %c0_6] : memref<1x32xf32, #tpu.memory_space<vmem>>, vector<1x32xf32>
    %16 = vector.broadcast %15 : vector<1x32xf32> to vector<2048x32xf32>
    %17 = arith.addf %14, %16 : vector<2048x32xf32>
    %cst_7 = arith.constant 0.000000e+00 : f32
    %18 = vector.broadcast %cst_7 : f32 to vector<2048x32xf32>
    %19 = arith.maximumf %17, %18 : vector<2048x32xf32>
    %20 = vector.shape_cast %19 : vector<2048x32xf32> to vector<8x256x32xf32>
    %cst_8 = arith.constant dense<0.000000e+00> : vector<8x32xf32>
    %21 = vector.multi_reduction <add>, %20, %cst_8 [1] : vector<8x256x32xf32> to vector<8x32xf32>
    %cst_9 = arith.constant 3.906250e-03 : f32
    %22 = vector.broadcast %cst_9 : f32 to vector<8x32xf32>
    %23 = arith.mulf %21, %22 : vector<8x32xf32>
    %24 = arith.truncf %23 : vector<8x32xf32> to vector<8x32xbf16>
    %c0_10 = arith.constant 0 : index
    %c0_11 = arith.constant 0 : index
    %25 = vector.load %arg4[%c0_10, %c0_11] : memref<32x32xbf16, #tpu.memory_space<vmem>>, vector<32x32xbf16>
    %cst_12 = arith.constant dense<0.000000e+00> : vector<8x32xf32>
    %26 = tpu.matmul %24, %25, %cst_12 {dimension_numbers = #tpu.dot_dimension_numbers<[1], [0], [0], [1], [0, 0, 1, 1], [], []>} : vector<8x32xbf16>, vector<32x32xbf16>, vector<8x32xf32> -> vector<8x32xf32>
    %c0_13 = arith.constant 0 : index
    %c0_14 = arith.constant 0 : index
    %27 = vector.load %arg5[%c0_13, %c0_14] : memref<1x32xf32, #tpu.memory_space<vmem>>, vector<1x32xf32>
    %28 = vector.broadcast %27 : vector<1x32xf32> to vector<8x32xf32>
    %29 = arith.addf %26, %28 : vector<8x32xf32>
    %cst_15 = arith.constant 0.000000e+00 : f32
    %30 = vector.broadcast %cst_15 : f32 to vector<8x32xf32>
    %31 = arith.maximumf %29, %30 : vector<8x32xf32>
    %32 = arith.truncf %31 : vector<8x32xf32> to vector<8x32xbf16>
    %c0_16 = arith.constant 0 : index
    %c0_17 = arith.constant 0 : index
    %33 = vector.load %arg6[%c0_16, %c0_17] : memref<32x128xbf16, #tpu.memory_space<vmem>>, vector<32x128xbf16>
    %cst_18 = arith.constant dense<0.000000e+00> : vector<8x128xf32>
    %34 = tpu.matmul %32, %33, %cst_18 {dimension_numbers = #tpu.dot_dimension_numbers<[1], [0], [0], [1], [0, 0, 1, 1], [], []>} : vector<8x32xbf16>, vector<32x128xbf16>, vector<8x128xf32> -> vector<8x128xf32>
    %c0_19 = arith.constant 0 : index
    %c0_20 = arith.constant 0 : index
    %35 = vector.load %arg7[%c0_19, %c0_20] : memref<1x128xf32, #tpu.memory_space<vmem>>, vector<1x128xf32>
    %36 = vector.broadcast %35 : vector<1x128xf32> to vector<8x128xf32>
    %37 = arith.addf %34, %36 : vector<8x128xf32>
    %c0_21 = arith.constant 0 : index
    %c0_22 = arith.constant 0 : index
    %38 = vector.load %arg8[%c0_21, %c0_22] : memref<8x128xf32, #tpu.memory_space<vmem>>, vector<8x128xf32>
    tpu.vector_store %arg8[%c0_21, %c0_22], %37 {strides = array<i32>} : memref<8x128xf32, #tpu.memory_space<vmem>>, vector<8x128xf32>,
    return
  }
  func.func @transform_0(%arg0: i32) -> (i32, i32, i32, i32) {
    %c0_i32 = arith.constant 0 : i32
    %c0_i32_0 = arith.constant 0 : i32
    %c0_i32_1 = arith.constant 0 : i32
    %c0_i32_2 = arith.constant 0 : i32
    return %arg0, %c0_i32, %c0_i32_0, %c0_i32_1 : i32, i32, i32, i32
  }
  func.func @transform_1(%arg0: i32) -> (i32, i32) {
    %c0_i32 = arith.constant 0 : i32
    %c0_i32_0 = arith.constant 0 : i32
    %c0_i32_1 = arith.constant 0 : i32
    return %c0_i32, %c0_i32_0 : i32, i32
  }
  func.func @transform_2(%arg0: i32) -> (i32, i32) {
    %c0_i32 = arith.constant 0 : i32
    %c0_i32_0 = arith.constant 0 : i32
    %c0_i32_1 = arith.constant 0 : i32
    return %c0_i32, %c0_i32_0 : i32, i32
  }
  func.func @transform_3(%arg0: i32) -> (i32, i32) {
    %c0_i32 = arith.constant 0 : i32
    %c0_i32_0 = arith.constant 0 : i32
    %c0_i32_1 = arith.constant 0 : i32
    return %c0_i32, %c0_i32_0 : i32, i32
  }
  func.func @transform_4(%arg0: i32) -> (i32, i32) {
    %c0_i32 = arith.constant 0 : i32
    %c0_i32_0 = arith.constant 0 : i32
    %c0_i32_1 = arith.constant 0 : i32
    return %c0_i32, %c0_i32_0 : i32, i32
  }
  func.func @transform_5(%arg0: i32) -> (i32, i32) {
    %c0_i32 = arith.constant 0 : i32
    %c0_i32_0 = arith.constant 0 : i32
    %c0_i32_1 = arith.constant 0 : i32
    return %c0_i32, %c0_i32_0 : i32, i32
  }
  func.func @transform_6(%arg0: i32) -> (i32, i32) {
    %c0_i32 = arith.constant 0 : i32
    %c0_i32_0 = arith.constant 0 : i32
    %c0_i32_1 = arith.constant 0 : i32
    return %c0_i32, %c0_i32_0 : i32, i32
  }
  func.func @transform_7(%arg0: i32) -> (i32, i32) {
    %c0_i32 = arith.constant 0 : i32
    %c0_i32_0 = arith.constant 0 : i32
    return %arg0, %c0_i32 : i32, i32
  }
}

</mosaic_0001>

<llo_original>
// kernel: tpu_custom_call.1
$region0: #{tpu_custom_call.1}
  #allocation0 [shape = 'u32[]', space=smem, size = 0x4, offset = 0x4, fixed_abs, tag = 'smem constant byte address 0x4 - core index']
  #allocation1 [shape = 'u32[144,128]{1,0:T(1,128)}', space=vmem, size = 0x12000, scoped, tag = 'internal scratch']
  %s0 = inlined_call_operand.vmem [shape: f32[8,18,18,8], index: 0, kind: input, shape index: {}]
  %s1 = inlined_call_operand.vmem [shape: bf16[72,32], index: 1, kind: input, shape index: {}]
  %s2 = inlined_call_operand.vmem [shape: f32[1,32], index: 2, kind: input, shape index: {}]
  %s3 = inlined_call_operand.vmem [shape: bf16[32,32], index: 3, kind: input, shape index: {}]
  %s4 = inlined_call_operand.vmem [shape: f32[1,32], index: 4, kind: input, shape index: {}]
  %s5 = inlined_call_operand.vmem [shape: bf16[32,128], index: 5, kind: input, shape index: {}]
  %s6 = inlined_call_operand.vmem [shape: f32[1,128], index: 6, kind: input, shape index: {}]
  %s7 = inlined_call_operand.hbm [shape: f32[8,128], index: 7, kind: output, shape index: {}]
  %s8 = sld [smem:[#allocation0]]
  $region38: #{tpu_custom_call.1} parent=0
    _
  %s10 = ssub.s32 1, %s8
  %s11 = scalar_select 0, %s10, %s8
  $region1: #{tpu_custom_call.1} parent=0
    #allocation2 [shape = 'u8[4096]{0}', space=vmem, size = 0x1000, scoped, tag = 'output window, operand 0, single buffered']
    #allocation3 [shape = 's32[1]{0}', space=sflag, size = 0x4, scoped, tag = 'scoped memory for tpu_custom_call.1']
    %12 = vsyncpa [#allocation3], 0
    // Predicated region
    $region2: #{tpu_custom_call.1} parent=1 // pred_check
      _
    $region3: #{tpu_custom_call.1} parent=1 // pred_check_branch
      %14 = sbr.rel (0) target = $region5
    $region4: #{tpu_custom_call.1} parent=1 // pred_region
      _
    $region5: #{tpu_custom_call.1} parent=1 // pred_fallthru
      _
    // Predicated region
    $region6: #{tpu_custom_call.1} parent=1 // pred_check
      _
    $region7: #{tpu_custom_call.1} parent=1 // pred_check_branch
      %16 = sbr.rel (0) target = $region9
    $region8: #{tpu_custom_call.1} parent=1 // pred_region
      _
    $region9: #{tpu_custom_call.1} parent=1 // pred_fallthru
      _
    // Predicated region
    $region10: #{tpu_custom_call.1} parent=1 // pred_check
      _
    $region11: #{tpu_custom_call.1} parent=1 // pred_check_branch
      %18 = sbr.rel (0) target = $region13
    $region12: #{tpu_custom_call.1} parent=1 // pred_region
      _
    $region13: #{tpu_custom_call.1} parent=1 // pred_fallthru
      _
    // Predicated region
    $region14: #{tpu_custom_call.1} parent=1 // pred_check
      _
    $region15: #{tpu_custom_call.1} parent=1 // pred_check_branch
      %20 = sbr.rel (0) target = $region17
    $region16: #{tpu_custom_call.1} parent=1 // pred_region
      _
    $region17: #{tpu_custom_call.1} parent=1 // pred_fallthru
      _
    // Predicated region
    $region18: #{tpu_custom_call.1} parent=1 // pred_check
      _
    $region19: #{tpu_custom_call.1} parent=1 // pred_check_branch
      %22 = sbr.rel (0) target = $region21
    $region20: #{tpu_custom_call.1} parent=1 // pred_region
      _
    $region21: #{tpu_custom_call.1} parent=1 // pred_fallthru
      _
    // Predicated region
    $region22: #{tpu_custom_call.1} parent=1 // pred_check
      _
    $region23: #{tpu_custom_call.1} parent=1 // pred_check_branch
      %24 = sbr.rel (0) target = $region25
    $region24: #{tpu_custom_call.1} parent=1 // pred_region
      _
    $region25: #{tpu_custom_call.1} parent=1 // pred_fallthru
      _
    // Predicated region
    $region26: #{tpu_custom_call.1} parent=1 // pred_check
      _
    $region27: #{tpu_custom_call.1} parent=1 // pred_check_branch
      %26 = sbr.rel (0) target = $region29
    $region28: #{tpu_custom_call.1} parent=1 // pred_region
      _
    $region29: #{tpu_custom_call.1} parent=1 // pred_fallthru
      _
    %v28 = vld [vmem:[%s0] sm:$0xff]
    %v29 = vld [vmem:[%s0 + $0x8] sm:$0xff]
    %v30 = vld [vmem:[%s0 + $0x10] sm:$0x3]
    %v31 = vld [vmem:[%s0 + $0x18] sm:$0xff]
    %v32 = vld [vmem:[%s0 + $0x20] sm:$0xff]
    %v33 = vld [vmem:[%s0 + $0x28] sm:$0x3]
    %v34 = vld [vmem:[%s0 + $0x30] sm:$0xff]
    %v35 = vld [vmem:[%s0 + $0x38] sm:$0xff]
    %v36 = vld [vmem:[%s0 + $0x40] sm:$0x3]
    %v37 = vld [vmem:[%s0 + $0x48] sm:$0xff]
    %v38 = vld [vmem:[%s0 + $0x50] sm:$0xff]
    %v39 = vld [vmem:[%s0 + $0x58] sm:$0x3]
    %v40 = vld [vmem:[%s0 + $0x60] sm:$0xff]
    %v41 = vld [vmem:[%s0 + $0x68] sm:$0xff]
    %v42 = vld [vmem:[%s0 + $0x70] sm:$0x3]
    %v43 = vld [vmem:[%s0 + $0x78] sm:$0xff]
    %v44 = vld [vmem:[%s0 + $0x80] sm:$0xff]
    %v45 = vld [vmem:[%s0 + $0x88] sm:$0x3]
    %v46 = vld [vmem:[%s0 + $0x90] sm:$0xff]
    %v47 = vld [vmem:[%s0 + $0x98] sm:$0xff]
    %v48 = vld [vmem:[%s0 + $0xa0] sm:$0x3]
    %v49 = vld [vmem:[%s0 + $0xa8] sm:$0xff]
    %v50 = vld [vmem:[%s0 + $0xb0] sm:$0xff]
    %v51 = vld [vmem:[%s0 + $0xb8] sm:$0x3]
    %v52 = vld [vmem:[%s0 + $0xc0] sm:$0xff]
    %v53 = vld [vmem:[%s0 + $0xc8] sm:$0xff]
    %v54 = vld [vmem:[%s0 + $0xd0] sm:$0x3]
    %v55 = vld [vmem:[%s0 + $0xd8] sm:$0xff]
    %v56 = vld [vmem:[%s0 + $0xe0] sm:$0xff]
    %v57 = vld [vmem:[%s0 + $0xe8] sm:$0x3]
    %v58 = vld [vmem:[%s0 + $0xf0] sm:$0xff]
    %v59 = vld [vmem:[%s0 + $0xf8] sm:$0xff]
    %v60 = vld [vmem:[%s0 + $0x100] sm:$0x3]
    %v61 = vld [vmem:[%s0 + $0x108] sm:$0xff]
    %v62 = vld [vmem:[%s0 + $0x110] sm:$0xff]
    %v63 = vld [vmem:[%s0 + $0x118] sm:$0x3]
    %v64 = vld [vmem:[%s0 + $0x120] sm:$0xff]
    %v65 = vld [vmem:[%s0 + $0x128] sm:$0xff]
    %v66 = vld [vmem:[%s0 + $0x130] sm:$0x3]
    %v67 = vld [vmem:[%s0 + $0x138] sm:$0xff]
    %v68 = vld [vmem:[%s0 + $0x140] sm:$0xff]
    %v69 = vld [vmem:[%s0 + $0x148] sm:$0x3]
    %v70 = vld [vmem:[%s0 + $0x150] sm:$0xff]
    %v71 = vld [vmem:[%s0 + $0x158] sm:$0xff]
    %v72 = vld [vmem:[%s0 + $0x160] sm:$0x3]
    %v73 = vld [vmem:[%s0 + $0x168] sm:$0xff]
    %v74 = vld [vmem:[%s0 + $0x170] sm:$0xff]
    %v75 = vld [vmem:[%s0 + $0x178] sm:$0x3]
    %v76 = vld [vmem:[%s0 + $0x180] sm:$0xff]
    %v77 = vld [vmem:[%s0 + $0x188] sm:$0xff]
    %v78 = vld [vmem:[%s0 + $0x190] sm:$0x3]
    %v79 = vld [vmem:[%s0 + $0x198] sm:$0xff]
    %v80 = vld [vmem:[%s0 + $0x1a0] sm:$0xff]
    %v81 = vld [vmem:[%s0 + $0x1a8] sm:$0x3]
    %v82 = vld [vmem:[%s0 + $0x1b0] sm:$0xff]
    %v83 = vld [vmem:[%s0 + $0x1b8] sm:$0xff]
    %v84 = vld [vmem:[%s0 + $0x1c0] sm:$0x3]
    %v85 = vld [vmem:[%s0 + $0x1c8] sm:$0xff]
    %v86 = vld [vmem:[%s0 + $0x1d0] sm:$0xff]
    %v87 = vld [vmem:[%s0 + $0x1d8] sm:$0x3]
    %v88 = vld [vmem:[%s0 + $0x1e0] sm:$0xff]
    %v89 = vld [vmem:[%s0 + $0x1e8] sm:$0xff]
    %v90 = vld [vmem:[%s0 + $0x1f0] sm:$0x3]
    %v91 = vld [vmem:[%s0 + $0x1f8] sm:$0xff]
    %v92 = vld [vmem:[%s0 + $0x200] sm:$0xff]
    %v93 = vld [vmem:[%s0 + $0x208] sm:$0x3]
    %v94 = vld [vmem:[%s0 + $0x210] sm:$0xff]
    %v95 = vld [vmem:[%s0 + $0x218] sm:$0xff]
    %v96 = vld [vmem:[%s0 + $0x220] sm:$0x3]
    %v97 = vld [vmem:[%s0 + $0x228] sm:$0xff]
    %v98 = vld [vmem:[%s0 + $0x230] sm:$0xff]
    %v99 = vld [vmem:[%s0 + $0x238] sm:$0x3]
    %v100 = vld [vmem:[%s0 + $0x240] sm:$0xff]
    %v101 = vld [vmem:[%s0 + $0x248] sm:$0xff]
    %v102 = vld [vmem:[%s0 + $0x250] sm:$0x3]
    %v103 = vld [vmem:[%s0 + $0x258] sm:$0xff]
    %v104 = vld [vmem:[%s0 + $0x260] sm:$0xff]
    %v105 = vld [vmem:[%s0 + $0x268] sm:$0x3]
    %v106 = vld [vmem:[%s0 + $0x270] sm:$0xff]
    %v107 = vld [vmem:[%s0 + $0x278] sm:$0xff]
    %v108 = vld [vmem:[%s0 + $0x280] sm:$0x3]
    %v109 = vld [vmem:[%s0 + $0x288] sm:$0xff]
    %v110 = vld [vmem:[%s0 + $0x290] sm:$0xff]
    %v111 = vld [vmem:[%s0 + $0x298] sm:$0x3]
    %v112 = vld [vmem:[%s0 + $0x2a0] sm:$0xff]
    %v113 = vld [vmem:[%s0 + $0x2a8] sm:$0xff]
    %v114 = vld [vmem:[%s0 + $0x2b0] sm:$0x3]
    %v115 = vld [vmem:[%s0 + $0x2b8] sm:$0xff]
    %v116 = vld [vmem:[%s0 + $0x2c0] sm:$0xff]
    %v117 = vld [vmem:[%s0 + $0x2c8] sm:$0x3]
    %v118 = vld [vmem:[%s0 + $0x2d0] sm:$0xff]
    %v119 = vld [vmem:[%s0 + $0x2d8] sm:$0xff]
    %v120 = vld [vmem:[%s0 + $0x2e0] sm:$0x3]
    %v121 = vld [vmem:[%s0 + $0x2e8] sm:$0xff]
    %v122 = vld [vmem:[%s0 + $0x2f0] sm:$0xff]
    %v123 = vld [vmem:[%s0 + $0x2f8] sm:$0x3]
    %v124 = vld [vmem:[%s0 + $0x300] sm:$0xff]
    %v125 = vld [vmem:[%s0 + $0x308] sm:$0xff]
    %v126 = vld [vmem:[%s0 + $0x310] sm:$0x3]
    %v127 = vld [vmem:[%s0 + $0x318] sm:$0xff]
    %v128 = vld [vmem:[%s0 + $0x320] sm:$0xff]
    %v129 = vld [vmem:[%s0 + $0x328] sm:$0x3]
    %v130 = vld [vmem:[%s0 + $0x330] sm:$0xff]
    %v131 = vld [vmem:[%s0 + $0x338] sm:$0xff]
    %v132 = vld [vmem:[%s0 + $0x340] sm:$0x3]
    %v133 = vld [vmem:[%s0 + $0x348] sm:$0xff]
    %v134 = vld [vmem:[%s0 + $0x350] sm:$0xff]
    %v135 = vld [vmem:[%s0 + $0x358] sm:$0x3]
    %v136 = vld [vmem:[%s0 + $0x360] sm:$0xff]
    %v137 = vld [vmem:[%s0 + $0x368] sm:$0xff]
    %v138 = vld [vmem:[%s0 + $0x370] sm:$0x3]
    %v139 = vld [vmem:[%s0 + $0x378] sm:$0xff]
    %v140 = vld [vmem:[%s0 + $0x380] sm:$0xff]
    %v141 = vld [vmem:[%s0 + $0x388] sm:$0x3]
    %v142 = vld [vmem:[%s0 + $0x390] sm:$0xff]
    %v143 = vld [vmem:[%s0 + $0x398] sm:$0xff]
    %v144 = vld [vmem:[%s0 + $0x3a0] sm:$0x3]
    %v145 = vld [vmem:[%s0 + $0x3a8] sm:$0xff]
    %v146 = vld [vmem:[%s0 + $0x3b0] sm:$0xff]
    %v147 = vld [vmem:[%s0 + $0x3b8] sm:$0x3]
    %v148 = vld [vmem:[%s0 + $0x3c0] sm:$0xff]
    %v149 = vld [vmem:[%s0 + $0x3c8] sm:$0xff]
    %v150 = vld [vmem:[%s0 + $0x3d0] sm:$0x3]
    %v151 = vld [vmem:[%s0 + $0x3d8] sm:$0xff]
    %v152 = vld [vmem:[%s0 + $0x3e0] sm:$0xff]
    %v153 = vld [vmem:[%s0 + $0x3e8] sm:$0x3]
    %v154 = vld [vmem:[%s0 + $0x3f0] sm:$0xff]
    %v155 = vld [vmem:[%s0 + $0x3f8] sm:$0xff]
    %v156 = vld [vmem:[%s0 + $0x400] sm:$0x3]
    %v157 = vld [vmem:[%s0 + $0x408] sm:$0xff]
    %v158 = vld [vmem:[%s0 + $0x410] sm:$0xff]
    %v159 = vld [vmem:[%s0 + $0x418] sm:$0x3]
    %v160 = vld [vmem:[%s0 + $0x420] sm:$0xff]
    %v161 = vld [vmem:[%s0 + $0x428] sm:$0xff]
    %v162 = vld [vmem:[%s0 + $0x430] sm:$0x3]
    %v163 = vld [vmem:[%s0 + $0x438] sm:$0xff]
    %v164 = vld [vmem:[%s0 + $0x440] sm:$0xff]
    %v165 = vld [vmem:[%s0 + $0x448] sm:$0x3]
    %v166 = vld [vmem:[%s0 + $0x450] sm:$0xff]
    %v167 = vld [vmem:[%s0 + $0x458] sm:$0xff]
    %v168 = vld [vmem:[%s0 + $0x460] sm:$0x3]
    %v169 = vld [vmem:[%s0 + $0x468] sm:$0xff]
    %v170 = vld [vmem:[%s0 + $0x470] sm:$0xff]
    %v171 = vld [vmem:[%s0 + $0x478] sm:$0x3]
    %v172 = vld [vmem:[%s0 + $0x480] sm:$0xff]
    %v173 = vld [vmem:[%s0 + $0x488] sm:$0xff]
    %v174 = vld [vmem:[%s0 + $0x490] sm:$0x3]
    %v175 = vld [vmem:[%s0 + $0x498] sm:$0xff]
    %v176 = vld [vmem:[%s0 + $0x4a0] sm:$0xff]
    %v177 = vld [vmem:[%s0 + $0x4a8] sm:$0x3]
    %v178 = vld [vmem:[%s0 + $0x4b0] sm:$0xff]
    %v179 = vld [vmem:[%s0 + $0x4b8] sm:$0xff]
    %v180 = vld [vmem:[%s0 + $0x4c0] sm:$0x3]
    %v181 = vld [vmem:[%s0 + $0x4c8] sm:$0xff]
    %v182 = vld [vmem:[%s0 + $0x4d0] sm:$0xff]
    %v183 = vld [vmem:[%s0 + $0x4d8] sm:$0x3]
    %v184 = vld [vmem:[%s0 + $0x4e0] sm:$0xff]
    %v185 = vld [vmem:[%s0 + $0x4e8] sm:$0xff]
    %v186 = vld [vmem:[%s0 + $0x4f0] sm:$0x3]
    %v187 = vld [vmem:[%s0 + $0x4f8] sm:$0xff]
    %v188 = vld [vmem:[%s0 + $0x500] sm:$0xff]
    %v189 = vld [vmem:[%s0 + $0x508] sm:$0x3]
    %v190 = vld [vmem:[%s0 + $0x510] sm:$0xff]
    %v191 = vld [vmem:[%s0 + $0x518] sm:$0xff]
    %v192 = vld [vmem:[%s0 + $0x520] sm:$0x3]
    %v193 = vld [vmem:[%s0 + $0x528] sm:$0xff]
    %v194 = vld [vmem:[%s0 + $0x530] sm:$0xff]
    %v195 = vld [vmem:[%s0 + $0x538] sm:$0x3]
    %v196 = vld [vmem:[%s0 + $0x540] sm:$0xff]
    %v197 = vld [vmem:[%s0 + $0x548] sm:$0xff]
    %v198 = vld [vmem:[%s0 + $0x550] sm:$0x3]
    %v199 = vld [vmem:[%s0 + $0x558] sm:$0xff]
    %v200 = vld [vmem:[%s0 + $0x560] sm:$0xff]
    %v201 = vld [vmem:[%s0 + $0x568] sm:$0x3]
    %v202 = vld [vmem:[%s0 + $0x570] sm:$0xff]
    %v203 = vld [vmem:[%s0 + $0x578] sm:$0xff]
    %v204 = vld [vmem:[%s0 + $0x580] sm:$0x3]
    %v205 = vld [vmem:[%s0 + $0x588] sm:$0xff]
    %v206 = vld [vmem:[%s0 + $0x590] sm:$0xff]
    %v207 = vld [vmem:[%s0 + $0x598] sm:$0x3]
    %v208 = vld [vmem:[%s0 + $0x5a0] sm:$0xff]
    %v209 = vld [vmem:[%s0 + $0x5a8] sm:$0xff]
    %v210 = vld [vmem:[%s0 + $0x5b0] sm:$0x3]
    %v211 = vld [vmem:[%s0 + $0x5b8] sm:$0xff]
    %v212 = vld [vmem:[%s0 + $0x5c0] sm:$0xff]
    %v213 = vld [vmem:[%s0 + $0x5c8] sm:$0x3]
    %v214 = vld [vmem:[%s0 + $0x5d0] sm:$0xff]
    %v215 = vld [vmem:[%s0 + $0x5d8] sm:$0xff]
    %v216 = vld [vmem:[%s0 + $0x5e0] sm:$0x3]
    %v217 = vld [vmem:[%s0 + $0x5e8] sm:$0xff]
    %v218 = vld [vmem:[%s0 + $0x5f0] sm:$0xff]
    %v219 = vld [vmem:[%s0 + $0x5f8] sm:$0x3]
    %v220 = vld [vmem:[%s0 + $0x600] sm:$0xff]
    %v221 = vld [vmem:[%s0 + $0x608] sm:$0xff]
    %v222 = vld [vmem:[%s0 + $0x610] sm:$0x3]
    %v223 = vld [vmem:[%s0 + $0x618] sm:$0xff]
    %v224 = vld [vmem:[%s0 + $0x620] sm:$0xff]
    %v225 = vld [vmem:[%s0 + $0x628] sm:$0x3]
    %v226 = vld [vmem:[%s0 + $0x630] sm:$0xff]
    %v227 = vld [vmem:[%s0 + $0x638] sm:$0xff]
    %v228 = vld [vmem:[%s0 + $0x640] sm:$0x3]
    %v229 = vld [vmem:[%s0 + $0x648] sm:$0xff]
    %v230 = vld [vmem:[%s0 + $0x650] sm:$0xff]
    %v231 = vld [vmem:[%s0 + $0x658] sm:$0x3]
    %v232 = vld [vmem:[%s0 + $0x660] sm:$0xff]
    %v233 = vld [vmem:[%s0 + $0x668] sm:$0xff]
    %v234 = vld [vmem:[%s0 + $0x670] sm:$0x3]
    %v235 = vld [vmem:[%s0 + $0x678] sm:$0xff]
    %v236 = vld [vmem:[%s0 + $0x680] sm:$0xff]
    %v237 = vld [vmem:[%s0 + $0x688] sm:$0x3]
    %v238 = vld [vmem:[%s0 + $0x690] sm:$0xff]
    %v239 = vld [vmem:[%s0 + $0x698] sm:$0xff]
    %v240 = vld [vmem:[%s0 + $0x6a0] sm:$0x3]
    %v241 = vld [vmem:[%s0 + $0x6a8] sm:$0xff]
    %v242 = vld [vmem:[%s0 + $0x6b0] sm:$0xff]
    %v243 = vld [vmem:[%s0 + $0x6b8] sm:$0x3]
    %v244 = vld [vmem:[%s0 + $0x6c0] sm:$0xff]
    %v245 = vld [vmem:[%s0 + $0x6c8] sm:$0xff]
    %v246 = vld [vmem:[%s0 + $0x6d0] sm:$0x3]
    %v247 = vld [vmem:[%s0 + $0x6d8] sm:$0xff]
    %v248 = vld [vmem:[%s0 + $0x6e0] sm:$0xff]
    %v249 = vld [vmem:[%s0 + $0x6e8] sm:$0x3]
    %v250 = vld [vmem:[%s0 + $0x6f0] sm:$0xff]
    %v251 = vld [vmem:[%s0 + $0x6f8] sm:$0xff]
    %v252 = vld [vmem:[%s0 + $0x700] sm:$0x3]
    %v253 = vld [vmem:[%s0 + $0x708] sm:$0xff]
    %v254 = vld [vmem:[%s0 + $0x710] sm:$0xff]
    %v255 = vld [vmem:[%s0 + $0x718] sm:$0x3]
    %v256 = vld [vmem:[%s0 + $0x720] sm:$0xff]
    %v257 = vld [vmem:[%s0 + $0x728] sm:$0xff]
    %v258 = vld [vmem:[%s0 + $0x730] sm:$0x3]
    %v259 = vld [vmem:[%s0 + $0x738] sm:$0xff]
    %v260 = vld [vmem:[%s0 + $0x740] sm:$0xff]
    %v261 = vld [vmem:[%s0 + $0x748] sm:$0x3]
    %v262 = vld [vmem:[%s0 + $0x750] sm:$0xff]
    %v263 = vld [vmem:[%s0 + $0x758] sm:$0xff]
    %v264 = vld [vmem:[%s0 + $0x760] sm:$0x3]
    %v265 = vld [vmem:[%s0 + $0x768] sm:$0xff]
    %v266 = vld [vmem:[%s0 + $0x770] sm:$0xff]
    %v267 = vld [vmem:[%s0 + $0x778] sm:$0x3]
    %v268 = vld [vmem:[%s0 + $0x780] sm:$0xff]
    %v269 = vld [vmem:[%s0 + $0x788] sm:$0xff]
    %v270 = vld [vmem:[%s0 + $0x790] sm:$0x3]
    %v271 = vld [vmem:[%s0 + $0x798] sm:$0xff]
    %v272 = vld [vmem:[%s0 + $0x7a0] sm:$0xff]
    %v273 = vld [vmem:[%s0 + $0x7a8] sm:$0x3]
    %v274 = vld [vmem:[%s0 + $0x7b0] sm:$0xff]
    %v275 = vld [vmem:[%s0 + $0x7b8] sm:$0xff]
    %v276 = vld [vmem:[%s0 + $0x7c0] sm:$0x3]
    %v277 = vld [vmem:[%s0 + $0x7c8] sm:$0xff]
    %v278 = vld [vmem:[%s0 + $0x7d0] sm:$0xff]
    %v279 = vld [vmem:[%s0 + $0x7d8] sm:$0x3]
    %v280 = vld [vmem:[%s0 + $0x7e0] sm:$0xff]
    %v281 = vld [vmem:[%s0 + $0x7e8] sm:$0xff]
    %v282 = vld [vmem:[%s0 + $0x7f0] sm:$0x3]
    %v283 = vld [vmem:[%s0 + $0x7f8] sm:$0xff]
    %v284 = vld [vmem:[%s0 + $0x800] sm:$0xff]
    %v285 = vld [vmem:[%s0 + $0x808] sm:$0x3]
    %v286 = vld [vmem:[%s0 + $0x810] sm:$0xff]
    %v287 = vld [vmem:[%s0 + $0x818] sm:$0xff]
    %v288 = vld [vmem:[%s0 + $0x820] sm:$0x3]
    %v289 = vld [vmem:[%s0 + $0x828] sm:$0xff]
    %v290 = vld [vmem:[%s0 + $0x830] sm:$0xff]
    %v291 = vld [vmem:[%s0 + $0x838] sm:$0x3]
    %v292 = vld [vmem:[%s0 + $0x840] sm:$0xff]
    %v293 = vld [vmem:[%s0 + $0x848] sm:$0xff]
    %v294 = vld [vmem:[%s0 + $0x850] sm:$0x3]
    %v295 = vld [vmem:[%s0 + $0x858] sm:$0xff]
    %v296 = vld [vmem:[%s0 + $0x860] sm:$0xff]
    %v297 = vld [vmem:[%s0 + $0x868] sm:$0x3]
    %v298 = vld [vmem:[%s0 + $0x870] sm:$0xff]
    %v299 = vld [vmem:[%s0 + $0x878] sm:$0xff]
    %v300 = vld [vmem:[%s0 + $0x880] sm:$0x3]
    %v301 = vld [vmem:[%s0 + $0x888] sm:$0xff]
    %v302 = vld [vmem:[%s0 + $0x890] sm:$0xff]
    %v303 = vld [vmem:[%s0 + $0x898] sm:$0x3]
    %v304 = vld [vmem:[%s0 + $0x8a0] sm:$0xff]
    %v305 = vld [vmem:[%s0 + $0x8a8] sm:$0xff]
    %v306 = vld [vmem:[%s0 + $0x8b0] sm:$0x3]
    %v307 = vld [vmem:[%s0 + $0x8b8] sm:$0xff]
    %v308 = vld [vmem:[%s0 + $0x8c0] sm:$0xff]
    %v309 = vld [vmem:[%s0 + $0x8c8] sm:$0x3]
    %v310 = vld [vmem:[%s0 + $0x8d0] sm:$0xff]
    %v311 = vld [vmem:[%s0 + $0x8d8] sm:$0xff]
    %v312 = vld [vmem:[%s0 + $0x8e0] sm:$0x3]
    %v313 = vld [vmem:[%s0 + $0x8e8] sm:$0xff]
    %v314 = vld [vmem:[%s0 + $0x8f0] sm:$0xff]
    %v315 = vld [vmem:[%s0 + $0x8f8] sm:$0x3]
    %v316 = vld [vmem:[%s0 + $0x900] sm:$0xff]
    %v317 = vld [vmem:[%s0 + $0x908] sm:$0xff]
    %v318 = vld [vmem:[%s0 + $0x910] sm:$0x3]
    %v319 = vld [vmem:[%s0 + $0x918] sm:$0xff]
    %v320 = vld [vmem:[%s0 + $0x920] sm:$0xff]
    %v321 = vld [vmem:[%s0 + $0x928] sm:$0x3]
    %v322 = vld [vmem:[%s0 + $0x930] sm:$0xff]
    %v323 = vld [vmem:[%s0 + $0x938] sm:$0xff]
    %v324 = vld [vmem:[%s0 + $0x940] sm:$0x3]
    %v325 = vld [vmem:[%s0 + $0x948] sm:$0xff]
    %v326 = vld [vmem:[%s0 + $0x950] sm:$0xff]
    %v327 = vld [vmem:[%s0 + $0x958] sm:$0x3]
    %v328 = vld [vmem:[%s0 + $0x960] sm:$0xff]
    %v329 = vld [vmem:[%s0 + $0x968] sm:$0xff]
    %v330 = vld [vmem:[%s0 + $0x970] sm:$0x3]
    %v331 = vld [vmem:[%s0 + $0x978] sm:$0xff]
    %v332 = vld [vmem:[%s0 + $0x980] sm:$0xff]
    %v333 = vld [vmem:[%s0 + $0x988] sm:$0x3]
    %v334 = vld [vmem:[%s0 + $0x990] sm:$0xff]
    %v335 = vld [vmem:[%s0 + $0x998] sm:$0xff]
    %v336 = vld [vmem:[%s0 + $0x9a0] sm:$0x3]
    %v337 = vld [vmem:[%s0 + $0x9a8] sm:$0xff]
    %v338 = vld [vmem:[%s0 + $0x9b0] sm:$0xff]
    %v339 = vld [vmem:[%s0 + $0x9b8] sm:$0x3]
    %v340 = vld [vmem:[%s0 + $0x9c0] sm:$0xff]
    %v341 = vld [vmem:[%s0 + $0x9c8] sm:$0xff]
    %v342 = vld [vmem:[%s0 + $0x9d0] sm:$0x3]
    %v343 = vld [vmem:[%s0 + $0x9d8] sm:$0xff]
    %v344 = vld [vmem:[%s0 + $0x9e0] sm:$0xff]
    %v345 = vld [vmem:[%s0 + $0x9e8] sm:$0x3]
    %v346 = vld [vmem:[%s0 + $0x9f0] sm:$0xff]
    %v347 = vld [vmem:[%s0 + $0x9f8] sm:$0xff]
    %v348 = vld [vmem:[%s0 + $0xa00] sm:$0x3]
    %v349 = vld [vmem:[%s0 + $0xa08] sm:$0xff]
    %v350 = vld [vmem:[%s0 + $0xa10] sm:$0xff]
    %v351 = vld [vmem:[%s0 + $0xa18] sm:$0x3]
    %v352 = vld [vmem:[%s0 + $0xa20] sm:$0xff]
    %v353 = vld [vmem:[%s0 + $0xa28] sm:$0xff]
    %v354 = vld [vmem:[%s0 + $0xa30] sm:$0x3]
    %v355 = vld [vmem:[%s0 + $0xa38] sm:$0xff]
    %v356 = vld [vmem:[%s0 + $0xa40] sm:$0xff]
    %v357 = vld [vmem:[%s0 + $0xa48] sm:$0x3]
    %v358 = vld [vmem:[%s0 + $0xa50] sm:$0xff]
    %v359 = vld [vmem:[%s0 + $0xa58] sm:$0xff]
    %v360 = vld [vmem:[%s0 + $0xa60] sm:$0x3]
    %v361 = vld [vmem:[%s0 + $0xa68] sm:$0xff]
    %v362 = vld [vmem:[%s0 + $0xa70] sm:$0xff]
    %v363 = vld [vmem:[%s0 + $0xa78] sm:$0x3]
    %v364 = vld [vmem:[%s0 + $0xa80] sm:$0xff]
    %v365 = vld [vmem:[%s0 + $0xa88] sm:$0xff]
    %v366 = vld [vmem:[%s0 + $0xa90] sm:$0x3]
    %v367 = vld [vmem:[%s0 + $0xa98] sm:$0xff]
    %v368 = vld [vmem:[%s0 + $0xaa0] sm:$0xff]
    %v369 = vld [vmem:[%s0 + $0xaa8] sm:$0x3]
    %v370 = vld [vmem:[%s0 + $0xab0] sm:$0xff]
    %v371 = vld [vmem:[%s0 + $0xab8] sm:$0xff]
    %v372 = vld [vmem:[%s0 + $0xac0] sm:$0x3]
    %v373 = vld [vmem:[%s0 + $0xac8] sm:$0xff]
    %v374 = vld [vmem:[%s0 + $0xad0] sm:$0xff]
    %v375 = vld [vmem:[%s0 + $0xad8] sm:$0x3]
    %v376 = vld [vmem:[%s0 + $0xae0] sm:$0xff]
    %v377 = vld [vmem:[%s0 + $0xae8] sm:$0xff]
    %v378 = vld [vmem:[%s0 + $0xaf0] sm:$0x3]
    %v379 = vld [vmem:[%s0 + $0xaf8] sm:$0xff]
    %v380 = vld [vmem:[%s0 + $0xb00] sm:$0xff]
    %v381 = vld [vmem:[%s0 + $0xb08] sm:$0x3]
    %v382 = vld [vmem:[%s0 + $0xb10] sm:$0xff]
    %v383 = vld [vmem:[%s0 + $0xb18] sm:$0xff]
    %v384 = vld [vmem:[%s0 + $0xb20] sm:$0x3]
    %v385 = vld [vmem:[%s0 + $0xb28] sm:$0xff]
    %v386 = vld [vmem:[%s0 + $0xb30] sm:$0xff]
    %v387 = vld [vmem:[%s0 + $0xb38] sm:$0x3]
    %v388 = vld [vmem:[%s0 + $0xb40] sm:$0xff]
    %v389 = vld [vmem:[%s0 + $0xb48] sm:$0xff]
    %v390 = vld [vmem:[%s0 + $0xb50] sm:$0x3]
    %v391 = vld [vmem:[%s0 + $0xb58] sm:$0xff]
    %v392 = vld [vmem:[%s0 + $0xb60] sm:$0xff]
    %v393 = vld [vmem:[%s0 + $0xb68] sm:$0x3]
    %v394 = vld [vmem:[%s0 + $0xb70] sm:$0xff]
    %v395 = vld [vmem:[%s0 + $0xb78] sm:$0xff]
    %v396 = vld [vmem:[%s0 + $0xb80] sm:$0x3]
    %v397 = vld [vmem:[%s0 + $0xb88] sm:$0xff]
    %v398 = vld [vmem:[%s0 + $0xb90] sm:$0xff]
    %v399 = vld [vmem:[%s0 + $0xb98] sm:$0x3]
    %v400 = vld [vmem:[%s0 + $0xba0] sm:$0xff]
    %v401 = vld [vmem:[%s0 + $0xba8] sm:$0xff]
    %v402 = vld [vmem:[%s0 + $0xbb0] sm:$0x3]
    %v403 = vld [vmem:[%s0 + $0xbb8] sm:$0xff]
    %v404 = vld [vmem:[%s0 + $0xbc0] sm:$0xff]
    %v405 = vld [vmem:[%s0 + $0xbc8] sm:$0x3]
    %v406 = vld [vmem:[%s0 + $0xbd0] sm:$0xff]
    %v407 = vld [vmem:[%s0 + $0xbd8] sm:$0xff]
    %v408 = vld [vmem:[%s0 + $0xbe0] sm:$0x3]
    %v409 = vld [vmem:[%s0 + $0xbe8] sm:$0xff]
    %v410 = vld [vmem:[%s0 + $0xbf0] sm:$0xff]
    %v411 = vld [vmem:[%s0 + $0xbf8] sm:$0x3]
    %v412 = vld [vmem:[%s0 + $0xc00] sm:$0xff]
    %v413 = vld [vmem:[%s0 + $0xc08] sm:$0xff]
    %v414 = vld [vmem:[%s0 + $0xc10] sm:$0x3]
    %v415 = vld [vmem:[%s0 + $0xc18] sm:$0xff]
    %v416 = vld [vmem:[%s0 + $0xc20] sm:$0xff]
    %v417 = vld [vmem:[%s0 + $0xc28] sm:$0x3]
    %v418 = vld [vmem:[%s0 + $0xc30] sm:$0xff]
    %v419 = vld [vmem:[%s0 + $0xc38] sm:$0xff]
    %v420 = vld [vmem:[%s0 + $0xc40] sm:$0x3]
    %v421 = vld [vmem:[%s0 + $0xc48] sm:$0xff]
    %v422 = vld [vmem:[%s0 + $0xc50] sm:$0xff]
    %v423 = vld [vmem:[%s0 + $0xc58] sm:$0x3]
    %v424 = vld [vmem:[%s0 + $0xc60] sm:$0xff]
    %v425 = vld [vmem:[%s0 + $0xc68] sm:$0xff]
    %v426 = vld [vmem:[%s0 + $0xc70] sm:$0x3]
    %v427 = vld [vmem:[%s0 + $0xc78] sm:$0xff]
    %v428 = vld [vmem:[%s0 + $0xc80] sm:$0xff]
    %v429 = vld [vmem:[%s0 + $0xc88] sm:$0x3]
    %v430 = vld [vmem:[%s0 + $0xc90] sm:$0xff]
    %v431 = vld [vmem:[%s0 + $0xc98] sm:$0xff]
    %v432 = vld [vmem:[%s0 + $0xca0] sm:$0x3]
    %v433 = vld [vmem:[%s0 + $0xca8] sm:$0xff]
    %v434 = vld [vmem:[%s0 + $0xcb0] sm:$0xff]
    %v435 = vld [vmem:[%s0 + $0xcb8] sm:$0x3]
    %v436 = vld [vmem:[%s0 + $0xcc0] sm:$0xff]
    %v437 = vld [vmem:[%s0 + $0xcc8] sm:$0xff]
    %v438 = vld [vmem:[%s0 + $0xcd0] sm:$0x3]
    %v439 = vld [vmem:[%s0 + $0xcd8] sm:$0xff]
    %v440 = vld [vmem:[%s0 + $0xce0] sm:$0xff]
    %v441 = vld [vmem:[%s0 + $0xce8] sm:$0x3]
    %v442 = vld [vmem:[%s0 + $0xcf0] sm:$0xff]
    %v443 = vld [vmem:[%s0 + $0xcf8] sm:$0xff]
    %v444 = vld [vmem:[%s0 + $0xd00] sm:$0x3]
    %v445 = vld [vmem:[%s0 + $0xd08] sm:$0xff]
    %v446 = vld [vmem:[%s0 + $0xd10] sm:$0xff]
    %v447 = vld [vmem:[%s0 + $0xd18] sm:$0x3]
    %v448 = vld [vmem:[%s0 + $0xd20] sm:$0xff]
    %v449 = vld [vmem:[%s0 + $0xd28] sm:$0xff]
    %v450 = vld [vmem:[%s0 + $0xd30] sm:$0x3]
    %v451 = vld [vmem:[%s0 + $0xd38] sm:$0xff]
    %v452 = vld [vmem:[%s0 + $0xd40] sm:$0xff]
    %v453 = vld [vmem:[%s0 + $0xd48] sm:$0x3]
    %v454 = vld [vmem:[%s0 + $0xd50] sm:$0xff]
    %v455 = vld [vmem:[%s0 + $0xd58] sm:$0xff]
    %v456 = vld [vmem:[%s0 + $0xd60] sm:$0x3]
    %v457 = vld [vmem:[%s0 + $0xd68] sm:$0xff]
    %v458 = vld [vmem:[%s0 + $0xd70] sm:$0xff]
    %v459 = vld [vmem:[%s0 + $0xd78] sm:$0x3]
    %vm844 = vcmask 1046528
    %v845 = vrot.slane %v28, 1
    %v846 = vrot.slane %v29, 1
    %v847 = vsel %vm844, %v845, %v846
    %v848 = vrot.slane %v30, 1
    %v849 = vsel %vm844, %v846, %v848
    %v850 = vrot.slane %v31, 1
    %v851 = vrot.slane %v32, 1
    %v852 = vsel %vm844, %v850, %v851
    %v853 = vrot.slane %v33, 1
    %v854 = vsel %vm844, %v851, %v853
    %v855 = vrot.slane %v34, 1
    %v856 = vrot.slane %v35, 1
    %v857 = vsel %vm844, %v855, %v856
    %v858 = vrot.slane %v36, 1
    %v859 = vsel %vm844, %v856, %v858
    %v860 = vrot.slane %v37, 1
    %v861 = vrot.slane %v38, 1
    %v862 = vsel %vm844, %v860, %v861
    %v863 = vrot.slane %v39, 1
    %v864 = vsel %vm844, %v861, %v863
    %v865 = vrot.slane %v40, 1
    %v866 = vrot.slane %v41, 1
    %v867 = vsel %vm844, %v865, %v866
    %v868 = vrot.slane %v42, 1
    %v869 = vsel %vm844, %v866, %v868
    %v870 = vrot.slane %v43, 1
    %v871 = vrot.slane %v44, 1
    %v872 = vsel %vm844, %v870, %v871
    %v873 = vrot.slane %v45, 1
    %v874 = vsel %vm844, %v871, %v873
    %v875 = vrot.slane %v46, 1
    %v876 = vrot.slane %v47, 1
    %v877 = vsel %vm844, %v875, %v876
    %v878 = vrot.slane %v48, 1
    %v879 = vsel %vm844, %v876, %v878
    %v880 = vrot.slane %v49, 1
    %v881 = vrot.slane %v50, 1
    %v882 = vsel %vm844, %v880, %v881
    %v883 = vrot.slane %v51, 1
    %v884 = vsel %vm844, %v881, %v883
    %v885 = vrot.slane %v52, 1
    %v886 = vrot.slane %v53, 1
    %v887 = vsel %vm844, %v885, %v886
    %v888 = vrot.slane %v54, 1
    %v889 = vsel %vm844, %v886, %v888
    %v890 = vrot.slane %v55, 1
    %v891 = vrot.slane %v56, 1
    %v892 = vsel %vm844, %v890, %v891
    %v893 = vrot.slane %v57, 1
    %v894 = vsel %vm844, %v891, %v893
    %v895 = vrot.slane %v58, 1
    %v896 = vrot.slane %v59, 1
    %v897 = vsel %vm844, %v895, %v896
    %v898 = vrot.slane %v60, 1
    %v899 = vsel %vm844, %v896, %v898
    %v900 = vrot.slane %v61, 1
    %v901 = vrot.slane %v62, 1
    %v902 = vsel %vm844, %v900, %v901
    %v903 = vrot.slane %v63, 1
    %v904 = vsel %vm844, %v901, %v903
    %v905 = vrot.slane %v64, 1
    %v906 = vrot.slane %v65, 1
    %v907 = vsel %vm844, %v905, %v906
    %v908 = vrot.slane %v66, 1
    %v909 = vsel %vm844, %v906, %v908
    %v910 = vrot.slane %v67, 1
    %v911 = vrot.slane %v68, 1
    %v912 = vsel %vm844, %v910, %v911
    %v913 = vrot.slane %v69, 1
    %v914 = vsel %vm844, %v911, %v913
    %v915 = vrot.slane %v70, 1
    %v916 = vrot.slane %v71, 1
    %v917 = vsel %vm844, %v915, %v916
    %v918 = vrot.slane %v72, 1
    %v919 = vsel %vm844, %v916, %v918
    %v920 = vrot.slane %v73, 1
    %v921 = vrot.slane %v74, 1
    %v922 = vsel %vm844, %v920, %v921
    %v923 = vrot.slane %v75, 1
    %v924 = vsel %vm844, %v921, %v923
    %v925 = vrot.slane %v82, 1
    %v926 = vrot.slane %v83, 1
    %v927 = vsel %vm844, %v925, %v926
    %v928 = vrot.slane %v84, 1
    %v929 = vsel %vm844, %v926, %v928
    %v930 = vrot.slane %v85, 1
    %v931 = vrot.slane %v86, 1
    %v932 = vsel %vm844, %v930, %v931
    %v933 = vrot.slane %v87, 1
    %v934 = vsel %vm844, %v931, %v933
    %v935 = vrot.slane %v88, 1
    %v936 = vrot.slane %v89, 1
    %v937 = vsel %vm844, %v935, %v936
    %v938 = vrot.slane %v90, 1
    %v939 = vsel %vm844, %v936, %v938
    %v940 = vrot.slane %v91, 1
    %v941 = vrot.slane %v92, 1
    %v942 = vsel %vm844, %v940, %v941
    %v943 = vrot.slane %v93, 1
    %v944 = vsel %vm844, %v941, %v943
    %v945 = vrot.slane %v94, 1
    %v946 = vrot.slane %v95, 1
    %v947 = vsel %vm844, %v945, %v946
    %v948 = vrot.slane %v96, 1
    %v949 = vsel %vm844, %v946, %v948
    %v950 = vrot.slane %v97, 1
    %v951 = vrot.slane %v98, 1
    %v952 = vsel %vm844, %v950, %v951
    %v953 = vrot.slane %v99, 1
    %v954 = vsel %vm844, %v951, %v953
    %v955 = vrot.slane %v100, 1
    %v956 = vrot.slane %v101, 1
    %v957 = vsel %vm844, %v955, %v956
    %v958 = vrot.slane %v102, 1
    %v959 = vsel %vm844, %v956, %v958
    %v960 = vrot.slane %v103, 1
    %v961 = vrot.slane %v104, 1
    %v962 = vsel %vm844, %v960, %v961
    %v963 = vrot.slane %v105, 1
    %v964 = vsel %vm844, %v961, %v963
    %v965 = vrot.slane %v106, 1
    %v966 = vrot.slane %v107, 1
    %v967 = vsel %vm844, %v965, %v966
    %v968 = vrot.slane %v108, 1
    %v969 = vsel %vm844, %v966, %v968
    %v970 = vrot.slane %v109, 1
    %v971 = vrot.slane %v110, 1
    %v972 = vsel %vm844, %v970, %v971
    %v973 = vrot.slane %v111, 1
    %v974 = vsel %vm844, %v971, %v973
    %v975 = vrot.slane %v112, 1
    %v976 = vrot.slane %v113, 1
    %v977 = vsel %vm844, %v975, %v976
    %v978 = vrot.slane %v114, 1
    %v979 = vsel %vm844, %v976, %v978
    %v980 = vrot.slane %v115, 1
    %v981 = vrot.slane %v116, 1
    %v982 = vsel %vm844, %v980, %v981
    %v983 = vrot.slane %v117, 1
    %v984 = vsel %vm844, %v981, %v983
    %v985 = vrot.slane %v118, 1
    %v986 = vrot.slane %v119, 1
    %v987 = vsel %vm844, %v985, %v986
    %v988 = vrot.slane %v120, 1
    %v989 = vsel %vm844, %v986, %v988
    %v990 = vrot.slane %v121, 1
    %v991 = vrot.slane %v122, 1
    %v992 = vsel %vm844, %v990, %v991
    %v993 = vrot.slane %v123, 1
    %v994 = vsel %vm844, %v991, %v993
    %v995 = vrot.slane %v124, 1
    %v996 = vrot.slane %v125, 1
    %v997 = vsel %vm844, %v995, %v996
    %v998 = vrot.slane %v126, 1
    %v999 = vsel %vm844, %v996, %v998
    %v1000 = vrot.slane %v127, 1
    %v1001 = vrot.slane %v128, 1
    %v1002 = vsel %vm844, %v1000, %v1001
    %v1003 = vrot.slane %v129, 1
    %v1004 = vsel %vm844, %v1001, %v1003
    %v1005 = vrot.slane %v136, 1
    %v1006 = vrot.slane %v137, 1
    %v1007 = vsel %vm844, %v1005, %v1006
    %v1008 = vrot.slane %v138, 1
    %v1009 = vsel %vm844, %v1006, %v1008
    %v1010 = vrot.slane %v139, 1
    %v1011 = vrot.slane %v140, 1
    %v1012 = vsel %vm844, %v1010, %v1011
    %v1013 = vrot.slane %v141, 1
    %v1014 = vsel %vm844, %v1011, %v1013
    %v1015 = vrot.slane %v142, 1
    %v1016 = vrot.slane %v143, 1
    %v1017 = vsel %vm844, %v1015, %v1016
    %v1018 = vrot.slane %v144, 1
    %v1019 = vsel %vm844, %v1016, %v1018
    %v1020 = vrot.slane %v145, 1
    %v1021 = vrot.slane %v146, 1
    %v1022 = vsel %vm844, %v1020, %v1021
    %v1023 = vrot.slane %v147, 1
    %v1024 = vsel %vm844, %v1021, %v1023
    %v1025 = vrot.slane %v148, 1
    %v1026 = vrot.slane %v149, 1
    %v1027 = vsel %vm844, %v1025, %v1026
    %v1028 = vrot.slane %v150, 1
    %v1029 = vsel %vm844, %v1026, %v1028
    %v1030 = vrot.slane %v151, 1
    %v1031 = vrot.slane %v152, 1
    %v1032 = vsel %vm844, %v1030, %v1031
    %v1033 = vrot.slane %v153, 1
    %v1034 = vsel %vm844, %v1031, %v1033
    %v1035 = vrot.slane %v154, 1
    %v1036 = vrot.slane %v155, 1
    %v1037 = vsel %vm844, %v1035, %v1036
    %v1038 = vrot.slane %v156, 1
    %v1039 = vsel %vm844, %v1036, %v1038
    %v1040 = vrot.slane %v157, 1
    %v1041 = vrot.slane %v158, 1
    %v1042 = vsel %vm844, %v1040, %v1041
    %v1043 = vrot.slane %v159, 1
    %v1044 = vsel %vm844, %v1041, %v1043
    %v1045 = vrot.slane %v160, 1
    %v1046 = vrot.slane %v161, 1
    %v1047 = vsel %vm844, %v1045, %v1046
    %v1048 = vrot.slane %v162, 1
    %v1049 = vsel %vm844, %v1046, %v1048
    %v1050 = vrot.slane %v163, 1
    %v1051 = vrot.slane %v164, 1
    %v1052 = vsel %vm844, %v1050, %v1051
    %v1053 = vrot.slane %v165, 1
    %v1054 = vsel %vm844, %v1051, %v1053
    %v1055 = vrot.slane %v166, 1
    %v1056 = vrot.slane %v167, 1
    %v1057 = vsel %vm844, %v1055, %v1056
    %v1058 = vrot.slane %v168, 1
    %v1059 = vsel %vm844, %v1056, %v1058
    %v1060 = vrot.slane %v169, 1
    %v1061 = vrot.slane %v170, 1
    %v1062 = vsel %vm844, %v1060, %v1061
    %v1063 = vrot.slane %v171, 1
    %v1064 = vsel %vm844, %v1061, %v1063
    %v1065 = vrot.slane %v172, 1
    %v1066 = vrot.slane %v173, 1
    %v1067 = vsel %vm844, %v1065, %v1066
    %v1068 = vrot.slane %v174, 1
    %v1069 = vsel %vm844, %v1066, %v1068
    %v1070 = vrot.slane %v175, 1
    %v1071 = vrot.slane %v176, 1
    %v1072 = vsel %vm844, %v1070, %v1071
    %v1073 = vrot.slane %v177, 1
    %v1074 = vsel %vm844, %v1071, %v1073
    %v1075 = vrot.slane %v178, 1
    %v1076 = vrot.slane %v179, 1
    %v1077 = vsel %vm844, %v1075, %v1076
    %v1078 = vrot.slane %v180, 1
    %v1079 = vsel %vm844, %v1076, %v1078
    %v1080 = vrot.slane %v181, 1
    %v1081 = vrot.slane %v182, 1
    %v1082 = vsel %vm844, %v1080, %v1081
    %v1083 = vrot.slane %v183, 1
    %v1084 = vsel %vm844, %v1081, %v1083
    %v1085 = vrot.slane %v190, 1
    %v1086 = vrot.slane %v191, 1
    %v1087 = vsel %vm844, %v1085, %v1086
    %v1088 = vrot.slane %v192, 1
    %v1089 = vsel %vm844, %v1086, %v1088
    %v1090 = vrot.slane %v193, 1
    %v1091 = vrot.slane %v194, 1
    %v1092 = vsel %vm844, %v1090, %v1091
    %v1093 = vrot.slane %v195, 1
    %v1094 = vsel %vm844, %v1091, %v1093
    %v1095 = vrot.slane %v196, 1
    %v1096 = vrot.slane %v197, 1
    %v1097 = vsel %vm844, %v1095, %v1096
    %v1098 = vrot.slane %v198, 1
    %v1099 = vsel %vm844, %v1096, %v1098
    %v1100 = vrot.slane %v199, 1
    %v1101 = vrot.slane %v200, 1
    %v1102 = vsel %vm844, %v1100, %v1101
    %v1103 = vrot.slane %v201, 1
    %v1104 = vsel %vm844, %v1101, %v1103
    %v1105 = vrot.slane %v202, 1
    %v1106 = vrot.slane %v203, 1
    %v1107 = vsel %vm844, %v1105, %v1106
    %v1108 = vrot.slane %v204, 1
    %v1109 = vsel %vm844, %v1106, %v1108
    %v1110 = vrot.slane %v205, 1
    %v1111 = vrot.slane %v206, 1
    %v1112 = vsel %vm844, %v1110, %v1111
    %v1113 = vrot.slane %v207, 1
    %v1114 = vsel %vm844, %v1111, %v1113
    %v1115 = vrot.slane %v208, 1
    %v1116 = vrot.slane %v209, 1
    %v1117 = vsel %vm844, %v1115, %v1116
    %v1118 = vrot.slane %v210, 1
    %v1119 = vsel %vm844, %v1116, %v1118
    %v1120 = vrot.slane %v211, 1
    %v1121 = vrot.slane %v212, 1
    %v1122 = vsel %vm844, %v1120, %v1121
    %v1123 = vrot.slane %v213, 1
    %v1124 = vsel %vm844, %v1121, %v1123
    %v1125 = vrot.slane %v214, 1
    %v1126 = vrot.slane %v215, 1
    %v1127 = vsel %vm844, %v1125, %v1126
    %v1128 = vrot.slane %v216, 1
    %v1129 = vsel %vm844, %v1126, %v1128
    %v1130 = vrot.slane %v217, 1
    %v1131 = vrot.slane %v218, 1
    %v1132 = vsel %vm844, %v1130, %v1131
    %v1133 = vrot.slane %v219, 1
    %v1134 = vsel %vm844, %v1131, %v1133
    %v1135 = vrot.slane %v220, 1
    %v1136 = vrot.slane %v221, 1
    %v1137 = vsel %vm844, %v1135, %v1136
    %v1138 = vrot.slane %v222, 1
    %v1139 = vsel %vm844, %v1136, %v1138
    %v1140 = vrot.slane %v223, 1
    %v1141 = vrot.slane %v224, 1
    %v1142 = vsel %vm844, %v1140, %v1141
    %v1143 = vrot.slane %v225, 1
    %v1144 = vsel %vm844, %v1141, %v1143
    %v1145 = vrot.slane %v226, 1
    %v1146 = vrot.slane %v227, 1
    %v1147 = vsel %vm844, %v1145, %v1146
    %v1148 = vrot.slane %v228, 1
    %v1149 = vsel %vm844, %v1146, %v1148
    %v1150 = vrot.slane %v229, 1
    %v1151 = vrot.slane %v230, 1
    %v1152 = vsel %vm844, %v1150, %v1151
    %v1153 = vrot.slane %v231, 1
    %v1154 = vsel %vm844, %v1151, %v1153
    %v1155 = vrot.slane %v232, 1
    %v1156 = vrot.slane %v233, 1
    %v1157 = vsel %vm844, %v1155, %v1156
    %v1158 = vrot.slane %v234, 1
    %v1159 = vsel %vm844, %v1156, %v1158
    %v1160 = vrot.slane %v235, 1
    %v1161 = vrot.slane %v236, 1
    %v1162 = vsel %vm844, %v1160, %v1161
    %v1163 = vrot.slane %v237, 1
    %v1164 = vsel %vm844, %v1161, %v1163
    %v1165 = vrot.slane %v244, 1
    %v1166 = vrot.slane %v245, 1
    %v1167 = vsel %vm844, %v1165, %v1166
    %v1168 = vrot.slane %v246, 1
    %v1169 = vsel %vm844, %v1166, %v1168
    %v1170 = vrot.slane %v247, 1
    %v1171 = vrot.slane %v248, 1
    %v1172 = vsel %vm844, %v1170, %v1171
    %v1173 = vrot.slane %v249, 1
    %v1174 = vsel %vm844, %v1171, %v1173
    %v1175 = vrot.slane %v250, 1
    %v1176 = vrot.slane %v251, 1
    %v1177 = vsel %vm844, %v1175, %v1176
    %v1178 = vrot.slane %v252, 1
    %v1179 = vsel %vm844, %v1176, %v1178
    %v1180 = vrot.slane %v253, 1
    %v1181 = vrot.slane %v254, 1
    %v1182 = vsel %vm844, %v1180, %v1181
    %v1183 = vrot.slane %v255, 1
    %v1184 = vsel %vm844, %v1181, %v1183
    %v1185 = vrot.slane %v256, 1
    %v1186 = vrot.slane %v257, 1
    %v1187 = vsel %vm844, %v1185, %v1186
    %v1188 = vrot.slane %v258, 1
    %v1189 = vsel %vm844, %v1186, %v1188
    %v1190 = vrot.slane %v259, 1
    %v1191 = vrot.slane %v260, 1
    %v1192 = vsel %vm844, %v1190, %v1191
    %v1193 = vrot.slane %v261, 1
    %v1194 = vsel %vm844, %v1191, %v1193
    %v1195 = vrot.slane %v262, 1
    %v1196 = vrot.slane %v263, 1
    %v1197 = vsel %vm844, %v1195, %v1196
    %v1198 = vrot.slane %v264, 1
    %v1199 = vsel %vm844, %v1196, %v1198
    %v1200 = vrot.slane %v265, 1
    %v1201 = vrot.slane %v266, 1
    %v1202 = vsel %vm844, %v1200, %v1201
    %v1203 = vrot.slane %v267, 1
    %v1204 = vsel %vm844, %v1201, %v1203
    %v1205 = vrot.slane %v268, 1
    %v1206 = vrot.slane %v269, 1
    %v1207 = vsel %vm844, %v1205, %v1206
    %v1208 = vrot.slane %v270, 1
    %v1209 = vsel %vm844, %v1206, %v1208
    %v1210 = vrot.slane %v271, 1
    %v1211 = vrot.slane %v272, 1
    %v1212 = vsel %vm844, %v1210, %v1211
    %v1213 = vrot.slane %v273, 1
    %v1214 = vsel %vm844, %v1211, %v1213
    %v1215 = vrot.slane %v274, 1
    %v1216 = vrot.slane %v275, 1
    %v1217 = vsel %vm844, %v1215, %v1216
    %v1218 = vrot.slane %v276, 1
    %v1219 = vsel %vm844, %v1216, %v1218
    %v1220 = vrot.slane %v277, 1
    %v1221 = vrot.slane %v278, 1
    %v1222 = vsel %vm844, %v1220, %v1221
    %v1223 = vrot.slane %v279, 1
    %v1224 = vsel %vm844, %v1221, %v1223
    %v1225 = vrot.slane %v280, 1
    %v1226 = vrot.slane %v281, 1
    %v1227 = vsel %vm844, %v1225, %v1226
    %v1228 = vrot.slane %v282, 1
    %v1229 = vsel %vm844, %v1226, %v1228
    %v1230 = vrot.slane %v283, 1
    %v1231 = vrot.slane %v284, 1
    %v1232 = vsel %vm844, %v1230, %v1231
    %v1233 = vrot.slane %v285, 1
    %v1234 = vsel %vm844, %v1231, %v1233
    %v1235 = vrot.slane %v286, 1
    %v1236 = vrot.slane %v287, 1
    %v1237 = vsel %vm844, %v1235, %v1236
    %v1238 = vrot.slane %v288, 1
    %v1239 = vsel %vm844, %v1236, %v1238
    %v1240 = vrot.slane %v289, 1
    %v1241 = vrot.slane %v290, 1
    %v1242 = vsel %vm844, %v1240, %v1241
    %v1243 = vrot.slane %v291, 1
    %v1244 = vsel %vm844, %v1241, %v1243
    %v1245 = vrot.slane %v298, 1
    %v1246 = vrot.slane %v299, 1
    %v1247 = vsel %vm844, %v1245, %v1246
    %v1248 = vrot.slane %v300, 1
    %v1249 = vsel %vm844, %v1246, %v1248
    %v1250 = vrot.slane %v301, 1
    %v1251 = vrot.slane %v302, 1
    %v1252 = vsel %vm844, %v1250, %v1251
    %v1253 = vrot.slane %v303, 1
    %v1254 = vsel %vm844, %v1251, %v1253
    %v1255 = vrot.slane %v304, 1
    %v1256 = vrot.slane %v305, 1
    %v1257 = vsel %vm844, %v1255, %v1256
    %v1258 = vrot.slane %v306, 1
    %v1259 = vsel %vm844, %v1256, %v1258
    %v1260 = vrot.slane %v307, 1
    %v1261 = vrot.slane %v308, 1
    %v1262 = vsel %vm844, %v1260, %v1261
    %v1263 = vrot.slane %v309, 1
    %v1264 = vsel %vm844, %v1261, %v1263
    %v1265 = vrot.slane %v310, 1
    %v1266 = vrot.slane %v311, 1
    %v1267 = vsel %vm844, %v1265, %v1266
    %v1268 = vrot.slane %v312, 1
    %v1269 = vsel %vm844, %v1266, %v1268
    %v1270 = vrot.slane %v313, 1
    %v1271 = vrot.slane %v314, 1
    %v1272 = vsel %vm844, %v1270, %v1271
    %v1273 = vrot.slane %v315, 1
    %v1274 = vsel %vm844, %v1271, %v1273
    %v1275 = vrot.slane %v316, 1
    %v1276 = vrot.slane %v317, 1
    %v1277 = vsel %vm844, %v1275, %v1276
    %v1278 = vrot.slane %v318, 1
    %v1279 = vsel %vm844, %v1276, %v1278
    %v1280 = vrot.slane %v319, 1
    %v1281 = vrot.slane %v320, 1
    %v1282 = vsel %vm844, %v1280, %v1281
    %v1283 = vrot.slane %v321, 1
    %v1284 = vsel %vm844, %v1281, %v1283
    %v1285 = vrot.slane %v322, 1
    %v1286 = vrot.slane %v323, 1
    %v1287 = vsel %vm844, %v1285, %v1286
    %v1288 = vrot.slane %v324, 1
    %v1289 = vsel %vm844, %v1286, %v1288
    %v1290 = vrot.slane %v325, 1
    %v1291 = vrot.slane %v326, 1
    %v1292 = vsel %vm844, %v1290, %v1291
    %v1293 = vrot.slane %v327, 1
    %v1294 = vsel %vm844, %v1291, %v1293
    %v1295 = vrot.slane %v328, 1
    %v1296 = vrot.slane %v329, 1
    %v1297 = vsel %vm844, %v1295, %v1296
    %v1298 = vrot.slane %v330, 1
    %v1299 = vsel %vm844, %v1296, %v1298
    %v1300 = vrot.slane %v331, 1
    %v1301 = vrot.slane %v332, 1
    %v1302 = vsel %vm844, %v1300, %v1301
    %v1303 = vrot.slane %v333, 1
    %v1304 = vsel %vm844, %v1301, %v1303
    %v1305 = vrot.slane %v334, 1
    %v1306 = vrot.slane %v335, 1
    %v1307 = vsel %vm844, %v1305, %v1306
    %v1308 = vrot.slane %v336, 1
    %v1309 = vsel %vm844, %v1306, %v1308
    %v1310 = vrot.slane %v337, 1
    %v1311 = vrot.slane %v338, 1
    %v1312 = vsel %vm844, %v1310, %v1311
    %v1313 = vrot.slane %v339, 1
    %v1314 = vsel %vm844, %v1311, %v1313
    %v1315 = vrot.slane %v340, 1
    %v1316 = vrot.slane %v341, 1
    %v1317 = vsel %vm844, %v1315, %v1316
    %v1318 = vrot.slane %v342, 1
    %v1319 = vsel %vm844, %v1316, %v1318
    %v1320 = vrot.slane %v343, 1
    %v1321 = vrot.slane %v344, 1
    %v1322 = vsel %vm844, %v1320, %v1321
    %v1323 = vrot.slane %v345, 1
    %v1324 = vsel %vm844, %v1321, %v1323
    %v1325 = vrot.slane %v352, 1
    %v1326 = vrot.slane %v353, 1
    %v1327 = vsel %vm844, %v1325, %v1326
    %v1328 = vrot.slane %v354, 1
    %v1329 = vsel %vm844, %v1326, %v1328
    %v1330 = vrot.slane %v355, 1
    %v1331 = vrot.slane %v356, 1
    %v1332 = vsel %vm844, %v1330, %v1331
    %v1333 = vrot.slane %v357, 1
    %v1334 = vsel %vm844, %v1331, %v1333
    %v1335 = vrot.slane %v358, 1
    %v1336 = vrot.slane %v359, 1
    %v1337 = vsel %vm844, %v1335, %v1336
    %v1338 = vrot.slane %v360, 1
    %v1339 = vsel %vm844, %v1336, %v1338
    %v1340 = vrot.slane %v361, 1
    %v1341 = vrot.slane %v362, 1
    %v1342 = vsel %vm844, %v1340, %v1341
    %v1343 = vrot.slane %v363, 1
    %v1344 = vsel %vm844, %v1341, %v1343
    %v1345 = vrot.slane %v364, 1
    %v1346 = vrot.slane %v365, 1
    %v1347 = vsel %vm844, %v1345, %v1346
    %v1348 = vrot.slane %v366, 1
    %v1349 = vsel %vm844, %v1346, %v1348
    %v1350 = vrot.slane %v367, 1
    %v1351 = vrot.slane %v368, 1
    %v1352 = vsel %vm844, %v1350, %v1351
    %v1353 = vrot.slane %v369, 1
    %v1354 = vsel %vm844, %v1351, %v1353
    %v1355 = vrot.slane %v370, 1
    %v1356 = vrot.slane %v371, 1
    %v1357 = vsel %vm844, %v1355, %v1356
    %v1358 = vrot.slane %v372, 1
    %v1359 = vsel %vm844, %v1356, %v1358
    %v1360 = vrot.slane %v373, 1
    %v1361 = vrot.slane %v374, 1
    %v1362 = vsel %vm844, %v1360, %v1361
    %v1363 = vrot.slane %v375, 1
    %v1364 = vsel %vm844, %v1361, %v1363
    %v1365 = vrot.slane %v376, 1
    %v1366 = vrot.slane %v377, 1
    %v1367 = vsel %vm844, %v1365, %v1366
    %v1368 = vrot.slane %v378, 1
    %v1369 = vsel %vm844, %v1366, %v1368
    %v1370 = vrot.slane %v379, 1
    %v1371 = vrot.slane %v380, 1
    %v1372 = vsel %vm844, %v1370, %v1371
    %v1373 = vrot.slane %v381, 1
    %v1374 = vsel %vm844, %v1371, %v1373
    %v1375 = vrot.slane %v382, 1
    %v1376 = vrot.slane %v383, 1
    %v1377 = vsel %vm844, %v1375, %v1376
    %v1378 = vrot.slane %v384, 1
    %v1379 = vsel %vm844, %v1376, %v1378
    %v1380 = vrot.slane %v385, 1
    %v1381 = vrot.slane %v386, 1
    %v1382 = vsel %vm844, %v1380, %v1381
    %v1383 = vrot.slane %v387, 1
    %v1384 = vsel %vm844, %v1381, %v1383
    %v1385 = vrot.slane %v388, 1
    %v1386 = vrot.slane %v389, 1
    %v1387 = vsel %vm844, %v1385, %v1386
    %v1388 = vrot.slane %v390, 1
    %v1389 = vsel %vm844, %v1386, %v1388
    %v1390 = vrot.slane %v391, 1
    %v1391 = vrot.slane %v392, 1
    %v1392 = vsel %vm844, %v1390, %v1391
    %v1393 = vrot.slane %v393, 1
    %v1394 = vsel %vm844, %v1391, %v1393
    %v1395 = vrot.slane %v394, 1
    %v1396 = vrot.slane %v395, 1
    %v1397 = vsel %vm844, %v1395, %v1396
    %v1398 = vrot.slane %v396, 1
    %v1399 = vsel %vm844, %v1396, %v1398
    %v1400 = vrot.slane %v397, 1
    %v1401 = vrot.slane %v398, 1
    %v1402 = vsel %vm844, %v1400, %v1401
    %v1403 = vrot.slane %v399, 1
    %v1404 = vsel %vm844, %v1401, %v1403
    %v1405 = vrot.slane %v406, 1
    %v1406 = vrot.slane %v407, 1
    %v1407 = vsel %vm844, %v1405, %v1406
    %v1408 = vrot.slane %v408, 1
    %v1409 = vsel %vm844, %v1406, %v1408
    %v1410 = vrot.slane %v409, 1
    %v1411 = vrot.slane %v410, 1
    %v1412 = vsel %vm844, %v1410, %v1411
    %v1413 = vrot.slane %v411, 1
    %v1414 = vsel %vm844, %v1411, %v1413
    %v1415 = vrot.slane %v412, 1
    %v1416 = vrot.slane %v413, 1
    %v1417 = vsel %vm844, %v1415, %v1416
    %v1418 = vrot.slane %v414, 1
    %v1419 = vsel %vm844, %v1416, %v1418
    %v1420 = vrot.slane %v415, 1
    %v1421 = vrot.slane %v416, 1
    %v1422 = vsel %vm844, %v1420, %v1421
    %v1423 = vrot.slane %v417, 1
    %v1424 = vsel %vm844, %v1421, %v1423
    %v1425 = vrot.slane %v418, 1
    %v1426 = vrot.slane %v419, 1
    %v1427 = vsel %vm844, %v1425, %v1426
    %v1428 = vrot.slane %v420, 1
    %v1429 = vsel %vm844, %v1426, %v1428
    %v1430 = vrot.slane %v421, 1
    %v1431 = vrot.slane %v422, 1
    %v1432 = vsel %vm844, %v1430, %v1431
    %v1433 = vrot.slane %v423, 1
    %v1434 = vsel %vm844, %v1431, %v1433
    %v1435 = vrot.slane %v424, 1
    %v1436 = vrot.slane %v425, 1
    %v1437 = vsel %vm844, %v1435, %v1436
    %v1438 = vrot.slane %v426, 1
    %v1439 = vsel %vm844, %v1436, %v1438
    %v1440 = vrot.slane %v427, 1
    %v1441 = vrot.slane %v428, 1
    %v1442 = vsel %vm844, %v1440, %v1441
    %v1443 = vrot.slane %v429, 1
    %v1444 = vsel %vm844, %v1441, %v1443
    %v1445 = vrot.slane %v430, 1
    %v1446 = vrot.slane %v431, 1
    %v1447 = vsel %vm844, %v1445, %v1446
    %v1448 = vrot.slane %v432, 1
    %v1449 = vsel %vm844, %v1446, %v1448
    %v1450 = vrot.slane %v433, 1
    %v1451 = vrot.slane %v434, 1
    %v1452 = vsel %vm844, %v1450, %v1451
    %v1453 = vrot.slane %v435, 1
    %v1454 = vsel %vm844, %v1451, %v1453
    %v1455 = vrot.slane %v436, 1
    %v1456 = vrot.slane %v437, 1
    %v1457 = vsel %vm844, %v1455, %v1456
    %v1458 = vrot.slane %v438, 1
    %v1459 = vsel %vm844, %v1456, %v1458
    %v1460 = vrot.slane %v439, 1
    %v1461 = vrot.slane %v440, 1
    %v1462 = vsel %vm844, %v1460, %v1461
    %v1463 = vrot.slane %v441, 1
    %v1464 = vsel %vm844, %v1461, %v1463
    %v1465 = vrot.slane %v442, 1
    %v1466 = vrot.slane %v443, 1
    %v1467 = vsel %vm844, %v1465, %v1466
    %v1468 = vrot.slane %v444, 1
    %v1469 = vsel %vm844, %v1466, %v1468
    %v1470 = vrot.slane %v445, 1
    %v1471 = vrot.slane %v446, 1
    %v1472 = vsel %vm844, %v1470, %v1471
    %v1473 = vrot.slane %v447, 1
    %v1474 = vsel %vm844, %v1471, %v1473
    %v1475 = vrot.slane %v448, 1
    %v1476 = vrot.slane %v449, 1
    %v1477 = vsel %vm844, %v1475, %v1476
    %v1478 = vrot.slane %v450, 1
    %v1479 = vsel %vm844, %v1476, %v1478
    %v1480 = vrot.slane %v451, 1
    %v1481 = vrot.slane %v452, 1
    %v1482 = vsel %vm844, %v1480, %v1481
    %v1483 = vrot.slane %v453, 1
    %v1484 = vsel %vm844, %v1481, %v1483
    %1485 = vrot.lane.b32.xlu0 %v847, 8
    %v1486 = vpop.permute.xlu0 %1485
    %1487 = vrot.lane.b32.xlu0 %v849, 8
    %v1488 = vpop.permute.xlu0 %1487
    %1489 = vrot.lane.b32.xlu0 %v852, 8
    %v1490 = vpop.permute.xlu0 %1489
    %1491 = vrot.lane.b32.xlu0 %v854, 8
    %v1492 = vpop.permute.xlu0 %1491
    %1493 = vrot.lane.b32.xlu0 %v857, 8
    %v1494 = vpop.permute.xlu0 %1493
    %1495 = vrot.lane.b32.xlu0 %v859, 8
    %v1496 = vpop.permute.xlu0 %1495
    %1497 = vrot.lane.b32.xlu0 %v862, 8
    %v1498 = vpop.permute.xlu0 %1497
    %1499 = vrot.lane.b32.xlu0 %v864, 8
    %v1500 = vpop.permute.xlu0 %1499
    %1501 = vrot.lane.b32.xlu0 %v867, 8
    %v1502 = vpop.permute.xlu0 %1501
    %1503 = vrot.lane.b32.xlu0 %v869, 8
    %v1504 = vpop.permute.xlu0 %1503
    %1505 = vrot.lane.b32.xlu0 %v872, 8
    %v1506 = vpop.permute.xlu0 %1505
    %1507 = vrot.lane.b32.xlu0 %v874, 8
    %v1508 = vpop.permute.xlu0 %1507
    %1509 = vrot.lane.b32.xlu0 %v877, 8
    %v1510 = vpop.permute.xlu0 %1509
    %1511 = vrot.lane.b32.xlu0 %v879, 8
    %v1512 = vpop.permute.xlu0 %1511
    %1513 = vrot.lane.b32.xlu0 %v882, 8
    %v1514 = vpop.permute.xlu0 %1513
    %1515 = vrot.lane.b32.xlu0 %v884, 8
    %v1516 = vpop.permute.xlu0 %1515
    %1517 = vrot.lane.b32.xlu0 %v887, 8
    %v1518 = vpop.permute.xlu0 %1517
    %1519 = vrot.lane.b32.xlu0 %v889, 8
    %v1520 = vpop.permute.xlu0 %1519
    %1521 = vrot.lane.b32.xlu0 %v892, 8
    %v1522 = vpop.permute.xlu0 %1521
    %1523 = vrot.lane.b32.xlu0 %v894, 8
    %v1524 = vpop.permute.xlu0 %1523
    %1525 = vrot.lane.b32.xlu0 %v897, 8
    %v1526 = vpop.permute.xlu0 %1525
    %1527 = vrot.lane.b32.xlu0 %v899, 8
    %v1528 = vpop.permute.xlu0 %1527
    %1529 = vrot.lane.b32.xlu0 %v902, 8
    %v1530 = vpop.permute.xlu0 %1529
    %1531 = vrot.lane.b32.xlu0 %v904, 8
    %v1532 = vpop.permute.xlu0 %1531
    %1533 = vrot.lane.b32.xlu0 %v907, 8
    %v1534 = vpop.permute.xlu0 %1533
    %1535 = vrot.lane.b32.xlu0 %v909, 8
    %v1536 = vpop.permute.xlu0 %1535
    %1537 = vrot.lane.b32.xlu0 %v912, 8
    %v1538 = vpop.permute.xlu0 %1537
    %1539 = vrot.lane.b32.xlu0 %v914, 8
    %v1540 = vpop.permute.xlu0 %1539
    %1541 = vrot.lane.b32.xlu0 %v917, 8
    %v1542 = vpop.permute.xlu0 %1541
    %1543 = vrot.lane.b32.xlu0 %v919, 8
    %v1544 = vpop.permute.xlu0 %1543
    %1545 = vrot.lane.b32.xlu0 %v922, 8
    %v1546 = vpop.permute.xlu0 %1545
    %1547 = vrot.lane.b32.xlu0 %v924, 8
    %v1548 = vpop.permute.xlu0 %1547
    %1549 = vrot.lane.b32.xlu0 %v927, 8
    %v1550 = vpop.permute.xlu0 %1549
    %1551 = vrot.lane.b32.xlu0 %v929, 8
    %v1552 = vpop.permute.xlu0 %1551
    %1553 = vrot.lane.b32.xlu0 %v932, 8
    %v1554 = vpop.permute.xlu0 %1553
    %1555 = vrot.lane.b32.xlu0 %v934, 8
    %v1556 = vpop.permute.xlu0 %1555
    %1557 = vrot.lane.b32.xlu0 %v937, 8
    %v1558 = vpop.permute.xlu0 %1557
    %1559 = vrot.lane.b32.xlu0 %v939, 8
    %v1560 = vpop.permute.xlu0 %1559
    %1561 = vrot.lane.b32.xlu0 %v942, 8
    %v1562 = vpop.permute.xlu0 %1561
    %1563 = vrot.lane.b32.xlu0 %v944, 8
    %v1564 = vpop.permute.xlu0 %1563
    %1565 = vrot.lane.b32.xlu0 %v947, 8
    %v1566 = vpop.permute.xlu0 %1565
    %1567 = vrot.lane.b32.xlu0 %v949, 8
    %v1568 = vpop.permute.xlu0 %1567
    %1569 = vrot.lane.b32.xlu0 %v952, 8
    %v1570 = vpop.permute.xlu0 %1569
    %1571 = vrot.lane.b32.xlu0 %v954, 8
    %v1572 = vpop.permute.xlu0 %1571
    %1573 = vrot.lane.b32.xlu0 %v957, 8
    %v1574 = vpop.permute.xlu0 %1573
    %1575 = vrot.lane.b32.xlu0 %v959, 8
    %v1576 = vpop.permute.xlu0 %1575
    %1577 = vrot.lane.b32.xlu0 %v962, 8
    %v1578 = vpop.permute.xlu0 %1577
    %1579 = vrot.lane.b32.xlu0 %v964, 8
    %v1580 = vpop.permute.xlu0 %1579
    %1581 = vrot.lane.b32.xlu0 %v967, 8
    %v1582 = vpop.permute.xlu0 %1581
    %1583 = vrot.lane.b32.xlu0 %v969, 8
    %v1584 = vpop.permute.xlu0 %1583
    %1585 = vrot.lane.b32.xlu0 %v972, 8
    %v1586 = vpop.permute.xlu0 %1585
    %1587 = vrot.lane.b32.xlu0 %v974, 8
    %v1588 = vpop.permute.xlu0 %1587
    %1589 = vrot.lane.b32.xlu0 %v977, 8
    %v1590 = vpop.permute.xlu0 %1589
    %1591 = vrot.lane.b32.xlu0 %v979, 8
    %v1592 = vpop.permute.xlu0 %1591
    %1593 = vrot.lane.b32.xlu0 %v982, 8
    %v1594 = vpop.permute.xlu0 %1593
    %1595 = vrot.lane.b32.xlu0 %v984, 8
    %v1596 = vpop.permute.xlu0 %1595
    %1597 = vrot.lane.b32.xlu0 %v987, 8
    %v1598 = vpop.permute.xlu0 %1597
    %1599 = vrot.lane.b32.xlu0 %v989, 8
    %v1600 = vpop.permute.xlu0 %1599
    %1601 = vrot.lane.b32.xlu0 %v992, 8
    %v1602 = vpop.permute.xlu0 %1601
    %1603 = vrot.lane.b32.xlu0 %v994, 8
    %v1604 = vpop.permute.xlu0 %1603
    %1605 = vrot.lane.b32.xlu0 %v997, 8
    %v1606 = vpop.permute.xlu0 %1605
    %1607 = vrot.lane.b32.xlu0 %v999, 8
    %v1608 = vpop.permute.xlu0 %1607
    %1609 = vrot.lane.b32.xlu0 %v1002, 8
    %v1610 = vpop.permute.xlu0 %1609
    %1611 = vrot.lane.b32.xlu0 %v1004, 8
    %v1612 = vpop.permute.xlu0 %1611
    %1613 = vrot.lane.b32.xlu0 %v1007, 8
    %v1614 = vpop.permute.xlu0 %1613
    %1615 = vrot.lane.b32.xlu0 %v1009, 8
    %v1616 = vpop.permute.xlu0 %1615
    %1617 = vrot.lane.b32.xlu0 %v1012, 8
    %v1618 = vpop.permute.xlu0 %1617
    %1619 = vrot.lane.b32.xlu0 %v1014, 8
    %v1620 = vpop.permute.xlu0 %1619
    %1621 = vrot.lane.b32.xlu0 %v1017, 8
    %v1622 = vpop.permute.xlu0 %1621
    %1623 = vrot.lane.b32.xlu0 %v1019, 8
    %v1624 = vpop.permute.xlu0 %1623
    %1625 = vrot.lane.b32.xlu0 %v1022, 8
    %v1626 = vpop.permute.xlu0 %1625
    %1627 = vrot.lane.b32.xlu0 %v1024, 8
    %v1628 = vpop.permute.xlu0 %1627
    %1629 = vrot.lane.b32.xlu0 %v1027, 8
    %v1630 = vpop.permute.xlu0 %1629
    %1631 = vrot.lane.b32.xlu0 %v1029, 8
    %v1632 = vpop.permute.xlu0 %1631
    %1633 = vrot.lane.b32.xlu0 %v1032, 8
    %v1634 = vpop.permute.xlu0 %1633
    %1635 = vrot.lane.b32.xlu0 %v1034, 8
    %v1636 = vpop.permute.xlu0 %1635
    %1637 = vrot.lane.b32.xlu0 %v1037, 8
    %v1638 = vpop.permute.xlu0 %1637
    %1639 = vrot.lane.b32.xlu0 %v1039, 8
    %v1640 = vpop.permute.xlu0 %1639
    %1641 = vrot.lane.b32.xlu0 %v1042, 8
    %v1642 = vpop.permute.xlu0 %1641
    %1643 = vrot.lane.b32.xlu0 %v1044, 8
    %v1644 = vpop.permute.xlu0 %1643
    %1645 = vrot.lane.b32.xlu0 %v1047, 8
    %v1646 = vpop.permute.xlu0 %1645
    %1647 = vrot.lane.b32.xlu0 %v1049, 8
    %v1648 = vpop.permute.xlu0 %1647
    %1649 = vrot.lane.b32.xlu0 %v1052, 8
    %v1650 = vpop.permute.xlu0 %1649
    %1651 = vrot.lane.b32.xlu0 %v1054, 8
    %v1652 = vpop.permute.xlu0 %1651
    %1653 = vrot.lane.b32.xlu0 %v1057, 8
    %v1654 = vpop.permute.xlu0 %1653
    %1655 = vrot.lane.b32.xlu0 %v1059, 8
    %v1656 = vpop.permute.xlu0 %1655
    %1657 = vrot.lane.b32.xlu0 %v1062, 8
    %v1658 = vpop.permute.xlu0 %1657
    %1659 = vrot.lane.b32.xlu0 %v1064, 8
    %v1660 = vpop.permute.xlu0 %1659
    %1661 = vrot.lane.b32.xlu0 %v1067, 8
    %v1662 = vpop.permute.xlu0 %1661
    %1663 = vrot.lane.b32.xlu0 %v1069, 8
    %v1664 = vpop.permute.xlu0 %1663
    %1665 = vrot.lane.b32.xlu0 %v1072, 8
    %v1666 = vpop.permute.xlu0 %1665
    %1667 = vrot.lane.b32.xlu0 %v1074, 8
    %v1668 = vpop.permute.xlu0 %1667
    %1669 = vrot.lane.b32.xlu0 %v1077, 8
    %v1670 = vpop.permute.xlu0 %1669
    %1671 = vrot.lane.b32.xlu0 %v1079, 8
    %v1672 = vpop.permute.xlu0 %1671
    %1673 = vrot.lane.b32.xlu0 %v1082, 8
    %v1674 = vpop.permute.xlu0 %1673
    %1675 = vrot.lane.b32.xlu0 %v1084, 8
    %v1676 = vpop.permute.xlu0 %1675
    %1677 = vrot.lane.b32.xlu0 %v1087, 8
    %v1678 = vpop.permute.xlu0 %1677
    %1679 = vrot.lane.b32.xlu0 %v1089, 8
    %v1680 = vpop.permute.xlu0 %1679
    %1681 = vrot.lane.b32.xlu0 %v1092, 8
    %v1682 = vpop.permute.xlu0 %1681
    %1683 = vrot.lane.b32.xlu0 %v1094, 8
    %v1684 = vpop.permute.xlu0 %1683
    %1685 = vrot.lane.b32.xlu0 %v1097, 8
    %v1686 = vpop.permute.xlu0 %1685
    %1687 = vrot.lane.b32.xlu0 %v1099, 8
    %v1688 = vpop.permute.xlu0 %1687
    %1689 = vrot.lane.b32.xlu0 %v1102, 8
    %v1690 = vpop.permute.xlu0 %1689
    %1691 = vrot.lane.b32.xlu0 %v1104, 8
    %v1692 = vpop.permute.xlu0 %1691
    %1693 = vrot.lane.b32.xlu0 %v1107, 8
    %v1694 = vpop.permute.xlu0 %1693
    %1695 = vrot.lane.b32.xlu0 %v1109, 8
    %v1696 = vpop.permute.xlu0 %1695
    %1697 = vrot.lane.b32.xlu0 %v1112, 8
    %v1698 = vpop.permute.xlu0 %1697
    %1699 = vrot.lane.b32.xlu0 %v1114, 8
    %v1700 = vpop.permute.xlu0 %1699
    %1701 = vrot.lane.b32.xlu0 %v1117, 8
    %v1702 = vpop.permute.xlu0 %1701
    %1703 = vrot.lane.b32.xlu0 %v1119, 8
    %v1704 = vpop.permute.xlu0 %1703
    %1705 = vrot.lane.b32.xlu0 %v1122, 8
    %v1706 = vpop.permute.xlu0 %1705
    %1707 = vrot.lane.b32.xlu0 %v1124, 8
    %v1708 = vpop.permute.xlu0 %1707
    %1709 = vrot.lane.b32.xlu0 %v1127, 8
    %v1710 = vpop.permute.xlu0 %1709
    %1711 = vrot.lane.b32.xlu0 %v1129, 8
    %v1712 = vpop.permute.xlu0 %1711
    %1713 = vrot.lane.b32.xlu0 %v1132, 8
    %v1714 = vpop.permute.xlu0 %1713
    %1715 = vrot.lane.b32.xlu0 %v1134, 8
    %v1716 = vpop.permute.xlu0 %1715
    %1717 = vrot.lane.b32.xlu0 %v1137, 8
    %v1718 = vpop.permute.xlu0 %1717
    %1719 = vrot.lane.b32.xlu0 %v1139, 8
    %v1720 = vpop.permute.xlu0 %1719
    %1721 = vrot.lane.b32.xlu0 %v1142, 8
    %v1722 = vpop.permute.xlu0 %1721
    %1723 = vrot.lane.b32.xlu0 %v1144, 8
    %v1724 = vpop.permute.xlu0 %1723
    %1725 = vrot.lane.b32.xlu0 %v1147, 8
    %v1726 = vpop.permute.xlu0 %1725
    %1727 = vrot.lane.b32.xlu0 %v1149, 8
    %v1728 = vpop.permute.xlu0 %1727
    %1729 = vrot.lane.b32.xlu0 %v1152, 8
    %v1730 = vpop.permute.xlu0 %1729
    %1731 = vrot.lane.b32.xlu0 %v1154, 8
    %v1732 = vpop.permute.xlu0 %1731
    %1733 = vrot.lane.b32.xlu0 %v1157, 8
    %v1734 = vpop.permute.xlu0 %1733
    %1735 = vrot.lane.b32.xlu0 %v1159, 8
    %v1736 = vpop.permute.xlu0 %1735
    %1737 = vrot.lane.b32.xlu0 %v1162, 8
    %v1738 = vpop.permute.xlu0 %1737
    %1739 = vrot.lane.b32.xlu0 %v1164, 8
    %v1740 = vpop.permute.xlu0 %1739
    %1741 = vrot.lane.b32.xlu0 %v1167, 8
    %v1742 = vpop.permute.xlu0 %1741
    %1743 = vrot.lane.b32.xlu0 %v1169, 8
    %v1744 = vpop.permute.xlu0 %1743
    %1745 = vrot.lane.b32.xlu0 %v1172, 8
    %v1746 = vpop.permute.xlu0 %1745
    %1747 = vrot.lane.b32.xlu0 %v1174, 8
    %v1748 = vpop.permute.xlu0 %1747
    %1749 = vrot.lane.b32.xlu0 %v1177, 8
    %v1750 = vpop.permute.xlu0 %1749
    %1751 = vrot.lane.b32.xlu0 %v1179, 8
    %v1752 = vpop.permute.xlu0 %1751
    %1753 = vrot.lane.b32.xlu0 %v1182, 8
    %v1754 = vpop.permute.xlu0 %1753
    %1755 = vrot.lane.b32.xlu0 %v1184, 8
    %v1756 = vpop.permute.xlu0 %1755
    %1757 = vrot.lane.b32.xlu0 %v1187, 8
    %v1758 = vpop.permute.xlu0 %1757
    %1759 = vrot.lane.b32.xlu0 %v1189, 8
    %v1760 = vpop.permute.xlu0 %1759
    %1761 = vrot.lane.b32.xlu0 %v1192, 8
    %v1762 = vpop.permute.xlu0 %1761
    %1763 = vrot.lane.b32.xlu0 %v1194, 8
    %v1764 = vpop.permute.xlu0 %1763
    %1765 = vrot.lane.b32.xlu0 %v1197, 8
    %v1766 = vpop.permute.xlu0 %1765
    %1767 = vrot.lane.b32.xlu0 %v1199, 8
    %v1768 = vpop.permute.xlu0 %1767
    %1769 = vrot.lane.b32.xlu0 %v1202, 8
    %v1770 = vpop.permute.xlu0 %1769
    %1771 = vrot.lane.b32.xlu0 %v1204, 8
    %v1772 = vpop.permute.xlu0 %1771
    %1773 = vrot.lane.b32.xlu0 %v1207, 8
    %v1774 = vpop.permute.xlu0 %1773
    %1775 = vrot.lane.b32.xlu0 %v1209, 8
    %v1776 = vpop.permute.xlu0 %1775
    %1777 = vrot.lane.b32.xlu0 %v1212, 8
    %v1778 = vpop.permute.xlu0 %1777
    %1779 = vrot.lane.b32.xlu0 %v1214, 8
    %v1780 = vpop.permute.xlu0 %1779
    %1781 = vrot.lane.b32.xlu0 %v1217, 8
    %v1782 = vpop.permute.xlu0 %1781
    %1783 = vrot.lane.b32.xlu0 %v1219, 8
    %v1784 = vpop.permute.xlu0 %1783
    %1785 = vrot.lane.b32.xlu0 %v1222, 8
    %v1786 = vpop.permute.xlu0 %1785
    %1787 = vrot.lane.b32.xlu0 %v1224, 8
    %v1788 = vpop.permute.xlu0 %1787
    %1789 = vrot.lane.b32.xlu0 %v1227, 8
    %v1790 = vpop.permute.xlu0 %1789
    %1791 = vrot.lane.b32.xlu0 %v1229, 8
    %v1792 = vpop.permute.xlu0 %1791
    %1793 = vrot.lane.b32.xlu0 %v1232, 8
    %v1794 = vpop.permute.xlu0 %1793
    %1795 = vrot.lane.b32.xlu0 %v1234, 8
    %v1796 = vpop.permute.xlu0 %1795
    %1797 = vrot.lane.b32.xlu0 %v1237, 8
    %v1798 = vpop.permute.xlu0 %1797
    %1799 = vrot.lane.b32.xlu0 %v1239, 8
    %v1800 = vpop.permute.xlu0 %1799
    %1801 = vrot.lane.b32.xlu0 %v1242, 8
    %v1802 = vpop.permute.xlu0 %1801
    %1803 = vrot.lane.b32.xlu0 %v1244, 8
    %v1804 = vpop.permute.xlu0 %1803
    %1805 = vrot.lane.b32.xlu0 %v1247, 8
    %v1806 = vpop.permute.xlu0 %1805
    %1807 = vrot.lane.b32.xlu0 %v1249, 8
    %v1808 = vpop.permute.xlu0 %1807
    %1809 = vrot.lane.b32.xlu0 %v1252, 8
    %v1810 = vpop.permute.xlu0 %1809
    %1811 = vrot.lane.b32.xlu0 %v1254, 8
    %v1812 = vpop.permute.xlu0 %1811
    %1813 = vrot.lane.b32.xlu0 %v1257, 8
    %v1814 = vpop.permute.xlu0 %1813
    %1815 = vrot.lane.b32.xlu0 %v1259, 8
    %v1816 = vpop.permute.xlu0 %1815
    %1817 = vrot.lane.b32.xlu0 %v1262, 8
    %v1818 = vpop.permute.xlu0 %1817
    %1819 = vrot.lane.b32.xlu0 %v1264, 8
    %v1820 = vpop.permute.xlu0 %1819
    %1821 = vrot.lane.b32.xlu0 %v1267, 8
    %v1822 = vpop.permute.xlu0 %1821
    %1823 = vrot.lane.b32.xlu0 %v1269, 8
    %v1824 = vpop.permute.xlu0 %1823
    %1825 = vrot.lane.b32.xlu0 %v1272, 8
    %v1826 = vpop.permute.xlu0 %1825
    %1827 = vrot.lane.b32.xlu0 %v1274, 8
    %v1828 = vpop.permute.xlu0 %1827
    %1829 = vrot.lane.b32.xlu0 %v1277, 8
    %v1830 = vpop.permute.xlu0 %1829
    %1831 = vrot.lane.b32.xlu0 %v1279, 8
    %v1832 = vpop.permute.xlu0 %1831
    %1833 = vrot.lane.b32.xlu0 %v1282, 8
    %v1834 = vpop.permute.xlu0 %1833
    %1835 = vrot.lane.b32.xlu0 %v1284, 8
    %v1836 = vpop.permute.xlu0 %1835
    %1837 = vrot.lane.b32.xlu0 %v1287, 8
    %v1838 = vpop.permute.xlu0 %1837
    %1839 = vrot.lane.b32.xlu0 %v1289, 8
    %v1840 = vpop.permute.xlu0 %1839
    %1841 = vrot.lane.b32.xlu0 %v1292, 8
    %v1842 = vpop.permute.xlu0 %1841
    %1843 = vrot.lane.b32.xlu0 %v1294, 8
    %v1844 = vpop.permute.xlu0 %1843
    %1845 = vrot.lane.b32.xlu0 %v1297, 8
    %v1846 = vpop.permute.xlu0 %1845
    %1847 = vrot.lane.b32.xlu0 %v1299, 8
    %v1848 = vpop.permute.xlu0 %1847
    %1849 = vrot.lane.b32.xlu0 %v1302, 8
    %v1850 = vpop.permute.xlu0 %1849
    %1851 = vrot.lane.b32.xlu0 %v1304, 8
    %v1852 = vpop.permute.xlu0 %1851
    %1853 = vrot.lane.b32.xlu0 %v1307, 8
    %v1854 = vpop.permute.xlu0 %1853
    %1855 = vrot.lane.b32.xlu0 %v1309, 8
    %v1856 = vpop.permute.xlu0 %1855
    %1857 = vrot.lane.b32.xlu0 %v1312, 8
    %v1858 = vpop.permute.xlu0 %1857
    %1859 = vrot.lane.b32.xlu0 %v1314, 8
    %v1860 = vpop.permute.xlu0 %1859
    %1861 = vrot.lane.b32.xlu0 %v1317, 8
    %v1862 = vpop.permute.xlu0 %1861
    %1863 = vrot.lane.b32.xlu0 %v1319, 8
    %v1864 = vpop.permute.xlu0 %1863
    %1865 = vrot.lane.b32.xlu0 %v1322, 8
    %v1866 = vpop.permute.xlu0 %1865
    %1867 = vrot.lane.b32.xlu0 %v1324, 8
    %v1868 = vpop.permute.xlu0 %1867
    %1869 = vrot.lane.b32.xlu0 %v1327, 8
    %v1870 = vpop.permute.xlu0 %1869
    %1871 = vrot.lane.b32.xlu0 %v1329, 8
    %v1872 = vpop.permute.xlu0 %1871
    %1873 = vrot.lane.b32.xlu0 %v1332, 8
    %v1874 = vpop.permute.xlu0 %1873
    %1875 = vrot.lane.b32.xlu0 %v1334, 8
    %v1876 = vpop.permute.xlu0 %1875
    %1877 = vrot.lane.b32.xlu0 %v1337, 8
    %v1878 = vpop.permute.xlu0 %1877
    %1879 = vrot.lane.b32.xlu0 %v1339, 8
    %v1880 = vpop.permute.xlu0 %1879
    %1881 = vrot.lane.b32.xlu0 %v1342, 8
    %v1882 = vpop.permute.xlu0 %1881
    %1883 = vrot.lane.b32.xlu0 %v1344, 8
    %v1884 = vpop.permute.xlu0 %1883
    %1885 = vrot.lane.b32.xlu0 %v1347, 8
    %v1886 = vpop.permute.xlu0 %1885
    %1887 = vrot.lane.b32.xlu0 %v1349, 8
    %v1888 = vpop.permute.xlu0 %1887
    %1889 = vrot.lane.b32.xlu0 %v1352, 8
    %v1890 = vpop.permute.xlu0 %1889
    %1891 = vrot.lane.b32.xlu0 %v1354, 8
    %v1892 = vpop.permute.xlu0 %1891
    %1893 = vrot.lane.b32.xlu0 %v1357, 8
    %v1894 = vpop.permute.xlu0 %1893
    %1895 = vrot.lane.b32.xlu0 %v1359, 8
    %v1896 = vpop.permute.xlu0 %1895
    %1897 = vrot.lane.b32.xlu0 %v1362, 8
    %v1898 = vpop.permute.xlu0 %1897
    %1899 = vrot.lane.b32.xlu0 %v1364, 8
    %v1900 = vpop.permute.xlu0 %1899
    %1901 = vrot.lane.b32.xlu0 %v1367, 8
    %v1902 = vpop.permute.xlu0 %1901
    %1903 = vrot.lane.b32.xlu0 %v1369, 8
    %v1904 = vpop.permute.xlu0 %1903
    %1905 = vrot.lane.b32.xlu0 %v1372, 8
    %v1906 = vpop.permute.xlu0 %1905
    %1907 = vrot.lane.b32.xlu0 %v1374, 8
    %v1908 = vpop.permute.xlu0 %1907
    %1909 = vrot.lane.b32.xlu0 %v1377, 8
    %v1910 = vpop.permute.xlu0 %1909
    %1911 = vrot.lane.b32.xlu0 %v1379, 8
    %v1912 = vpop.permute.xlu0 %1911
    %1913 = vrot.lane.b32.xlu0 %v1382, 8
    %v1914 = vpop.permute.xlu0 %1913
    %1915 = vrot.lane.b32.xlu0 %v1384, 8
    %v1916 = vpop.permute.xlu0 %1915
    %1917 = vrot.lane.b32.xlu0 %v1387, 8
    %v1918 = vpop.permute.xlu0 %1917
    %1919 = vrot.lane.b32.xlu0 %v1389, 8
    %v1920 = vpop.permute.xlu0 %1919
    %1921 = vrot.lane.b32.xlu0 %v1392, 8
    %v1922 = vpop.permute.xlu0 %1921
    %1923 = vrot.lane.b32.xlu0 %v1394, 8
    %v1924 = vpop.permute.xlu0 %1923
    %1925 = vrot.lane.b32.xlu0 %v1397, 8
    %v1926 = vpop.permute.xlu0 %1925
    %1927 = vrot.lane.b32.xlu0 %v1399, 8
    %v1928 = vpop.permute.xlu0 %1927
    %1929 = vrot.lane.b32.xlu0 %v1402, 8
    %v1930 = vpop.permute.xlu0 %1929
    %1931 = vrot.lane.b32.xlu0 %v1404, 8
    %v1932 = vpop.permute.xlu0 %1931
    %1933 = vrot.lane.b32.xlu0 %v1407, 8
    %v1934 = vpop.permute.xlu0 %1933
    %1935 = vrot.lane.b32.xlu0 %v1409, 8
    %v1936 = vpop.permute.xlu0 %1935
    %1937 = vrot.lane.b32.xlu0 %v1412, 8
    %v1938 = vpop.permute.xlu0 %1937
    %1939 = vrot.lane.b32.xlu0 %v1414, 8
    %v1940 = vpop.permute.xlu0 %1939
    %1941 = vrot.lane.b32.xlu0 %v1417, 8
    %v1942 = vpop.permute.xlu0 %1941
    %1943 = vrot.lane.b32.xlu0 %v1419, 8
    %v1944 = vpop.permute.xlu0 %1943
    %1945 = vrot.lane.b32.xlu0 %v1422, 8
    %v1946 = vpop.permute.xlu0 %1945
    %1947 = vrot.lane.b32.xlu0 %v1424, 8
    %v1948 = vpop.permute.xlu0 %1947
    %1949 = vrot.lane.b32.xlu0 %v1427, 8
    %v1950 = vpop.permute.xlu0 %1949
    %1951 = vrot.lane.b32.xlu0 %v1429, 8
    %v1952 = vpop.permute.xlu0 %1951
    %1953 = vrot.lane.b32.xlu0 %v1432, 8
    %v1954 = vpop.permute.xlu0 %1953
    %1955 = vrot.lane.b32.xlu0 %v1434, 8
    %v1956 = vpop.permute.xlu0 %1955
    %1957 = vrot.lane.b32.xlu0 %v1437, 8
    %v1958 = vpop.permute.xlu0 %1957
    %1959 = vrot.lane.b32.xlu0 %v1439, 8
    %v1960 = vpop.permute.xlu0 %1959
    %1961 = vrot.lane.b32.xlu0 %v1442, 8
    %v1962 = vpop.permute.xlu0 %1961
    %1963 = vrot.lane.b32.xlu0 %v1444, 8
    %v1964 = vpop.permute.xlu0 %1963
    %1965 = vrot.lane.b32.xlu0 %v1447, 8
    %v1966 = vpop.permute.xlu0 %1965
    %1967 = vrot.lane.b32.xlu0 %v1449, 8
    %v1968 = vpop.permute.xlu0 %1967
    %1969 = vrot.lane.b32.xlu0 %v1452, 8
    %v1970 = vpop.permute.xlu0 %1969
    %1971 = vrot.lane.b32.xlu0 %v1454, 8
    %v1972 = vpop.permute.xlu0 %1971
    %1973 = vrot.lane.b32.xlu0 %v1457, 8
    %v1974 = vpop.permute.xlu0 %1973
    %1975 = vrot.lane.b32.xlu0 %v1459, 8
    %v1976 = vpop.permute.xlu0 %1975
    %1977 = vrot.lane.b32.xlu0 %v1462, 8
    %v1978 = vpop.permute.xlu0 %1977
    %1979 = vrot.lane.b32.xlu0 %v1464, 8
    %v1980 = vpop.permute.xlu0 %1979
    %1981 = vrot.lane.b32.xlu0 %v1467, 8
    %v1982 = vpop.permute.xlu0 %1981
    %1983 = vrot.lane.b32.xlu0 %v1469, 8
    %v1984 = vpop.permute.xlu0 %1983
    %1985 = vrot.lane.b32.xlu0 %v1472, 8
    %v1986 = vpop.permute.xlu0 %1985
    %1987 = vrot.lane.b32.xlu0 %v1474, 8
    %v1988 = vpop.permute.xlu0 %1987
    %1989 = vrot.lane.b32.xlu0 %v1477, 8
    %v1990 = vpop.permute.xlu0 %1989
    %1991 = vrot.lane.b32.xlu0 %v1479, 8
    %v1992 = vpop.permute.xlu0 %1991
    %1993 = vrot.lane.b32.xlu0 %v1482, 8
    %v1994 = vpop.permute.xlu0 %1993
    %1995 = vrot.lane.b32.xlu0 %v1484, 8
    %v1996 = vpop.permute.xlu0 %1995
    %vm2253 = vcmask 1045504
    %v2254 = vrot.slane %v28, 2
    %v2255 = vrot.slane %v29, 2
    %v2256 = vsel %vm2253, %v2254, %v2255
    %v2257 = vrot.slane %v30, 2
    %v2258 = vsel %vm2253, %v2255, %v2257
    %v2259 = vrot.slane %v31, 2
    %v2260 = vrot.slane %v32, 2
    %v2261 = vsel %vm2253, %v2259, %v2260
    %v2262 = vrot.slane %v33, 2
    %v2263 = vsel %vm2253, %v2260, %v2262
    %v2264 = vrot.slane %v34, 2
    %v2265 = vrot.slane %v35, 2
    %v2266 = vsel %vm2253, %v2264, %v2265
    %v2267 = vrot.slane %v36, 2
    %v2268 = vsel %vm2253, %v2265, %v2267
    %v2269 = vrot.slane %v37, 2
    %v2270 = vrot.slane %v38, 2
    %v2271 = vsel %vm2253, %v2269, %v2270
    %v2272 = vrot.slane %v39, 2
    %v2273 = vsel %vm2253, %v2270, %v2272
    %v2274 = vrot.slane %v40, 2
    %v2275 = vrot.slane %v41, 2
    %v2276 = vsel %vm2253, %v2274, %v2275
    %v2277 = vrot.slane %v42, 2
    %v2278 = vsel %vm2253, %v2275, %v2277
    %v2279 = vrot.slane %v43, 2
    %v2280 = vrot.slane %v44, 2
    %v2281 = vsel %vm2253, %v2279, %v2280
    %v2282 = vrot.slane %v45, 2
    %v2283 = vsel %vm2253, %v2280, %v2282
    %v2284 = vrot.slane %v46, 2
    %v2285 = vrot.slane %v47, 2
    %v2286 = vsel %vm2253, %v2284, %v2285
    %v2287 = vrot.slane %v48, 2
    %v2288 = vsel %vm2253, %v2285, %v2287
    %v2289 = vrot.slane %v49, 2
    %v2290 = vrot.slane %v50, 2
    %v2291 = vsel %vm2253, %v2289, %v2290
    %v2292 = vrot.slane %v51, 2
    %v2293 = vsel %vm2253, %v2290, %v2292
    %v2294 = vrot.slane %v52, 2
    %v2295 = vrot.slane %v53, 2
    %v2296 = vsel %vm2253, %v2294, %v2295
    %v2297 = vrot.slane %v54, 2
    %v2298 = vsel %vm2253, %v2295, %v2297
    %v2299 = vrot.slane %v55, 2
    %v2300 = vrot.slane %v56, 2
    %v2301 = vsel %vm2253, %v2299, %v2300
    %v2302 = vrot.slane %v57, 2
    %v2303 = vsel %vm2253, %v2300, %v2302
    %v2304 = vrot.slane %v58, 2
    %v2305 = vrot.slane %v59, 2
    %v2306 = vsel %vm2253, %v2304, %v2305
    %v2307 = vrot.slane %v60, 2
    %v2308 = vsel %vm2253, %v2305, %v2307
    %v2309 = vrot.slane %v61, 2
    %v2310 = vrot.slane %v62, 2
    %v2311 = vsel %vm2253, %v2309, %v2310
    %v2312 = vrot.slane %v63, 2
    %v2313 = vsel %vm2253, %v2310, %v2312
    %v2314 = vrot.slane %v64, 2
    %v2315 = vrot.slane %v65, 2
    %v2316 = vsel %vm2253, %v2314, %v2315
    %v2317 = vrot.slane %v66, 2
    %v2318 = vsel %vm2253, %v2315, %v2317
    %v2319 = vrot.slane %v67, 2
    %v2320 = vrot.slane %v68, 2
    %v2321 = vsel %vm2253, %v2319, %v2320
    %v2322 = vrot.slane %v69, 2
    %v2323 = vsel %vm2253, %v2320, %v2322
    %v2324 = vrot.slane %v70, 2
    %v2325 = vrot.slane %v71, 2
    %v2326 = vsel %vm2253, %v2324, %v2325
    %v2327 = vrot.slane %v72, 2
    %v2328 = vsel %vm2253, %v2325, %v2327
    %v2329 = vrot.slane %v73, 2
    %v2330 = vrot.slane %v74, 2
    %v2331 = vsel %vm2253, %v2329, %v2330
    %v2332 = vrot.slane %v75, 2
    %v2333 = vsel %vm2253, %v2330, %v2332
    %v2334 = vrot.slane %v82, 2
    %v2335 = vrot.slane %v83, 2
    %v2336 = vsel %vm2253, %v2334, %v2335
    %v2337 = vrot.slane %v84, 2
    %v2338 = vsel %vm2253, %v2335, %v2337
    %v2339 = vrot.slane %v85, 2
    %v2340 = vrot.slane %v86, 2
    %v2341 = vsel %vm2253, %v2339, %v2340
    %v2342 = vrot.slane %v87, 2
    %v2343 = vsel %vm2253, %v2340, %v2342
    %v2344 = vrot.slane %v88, 2
    %v2345 = vrot.slane %v89, 2
    %v2346 = vsel %vm2253, %v2344, %v2345
    %v2347 = vrot.slane %v90, 2
    %v2348 = vsel %vm2253, %v2345, %v2347
    %v2349 = vrot.slane %v91, 2
    %v2350 = vrot.slane %v92, 2
    %v2351 = vsel %vm2253, %v2349, %v2350
    %v2352 = vrot.slane %v93, 2
    %v2353 = vsel %vm2253, %v2350, %v2352
    %v2354 = vrot.slane %v94, 2
    %v2355 = vrot.slane %v95, 2
    %v2356 = vsel %vm2253, %v2354, %v2355
    %v2357 = vrot.slane %v96, 2
    %v2358 = vsel %vm2253, %v2355, %v2357
    %v2359 = vrot.slane %v97, 2
    %v2360 = vrot.slane %v98, 2
    %v2361 = vsel %vm2253, %v2359, %v2360
    %v2362 = vrot.slane %v99, 2
    %v2363 = vsel %vm2253, %v2360, %v2362
    %v2364 = vrot.slane %v100, 2
    %v2365 = vrot.slane %v101, 2
    %v2366 = vsel %vm2253, %v2364, %v2365
    %v2367 = vrot.slane %v102, 2
    %v2368 = vsel %vm2253, %v2365, %v2367
    %v2369 = vrot.slane %v103, 2
    %v2370 = vrot.slane %v104, 2
    %v2371 = vsel %vm2253, %v2369, %v2370
    %v2372 = vrot.slane %v105, 2
    %v2373 = vsel %vm2253, %v2370, %v2372
    %v2374 = vrot.slane %v106, 2
    %v2375 = vrot.slane %v107, 2
    %v2376 = vsel %vm2253, %v2374, %v2375
    %v2377 = vrot.slane %v108, 2
    %v2378 = vsel %vm2253, %v2375, %v2377
    %v2379 = vrot.slane %v109, 2
    %v2380 = vrot.slane %v110, 2
    %v2381 = vsel %vm2253, %v2379, %v2380
    %v2382 = vrot.slane %v111, 2
    %v2383 = vsel %vm2253, %v2380, %v2382
    %v2384 = vrot.slane %v112, 2
    %v2385 = vrot.slane %v113, 2
    %v2386 = vsel %vm2253, %v2384, %v2385
    %v2387 = vrot.slane %v114, 2
    %v2388 = vsel %vm2253, %v2385, %v2387
    %v2389 = vrot.slane %v115, 2
    %v2390 = vrot.slane %v116, 2
    %v2391 = vsel %vm2253, %v2389, %v2390
    %v2392 = vrot.slane %v117, 2
    %v2393 = vsel %vm2253, %v2390, %v2392
    %v2394 = vrot.slane %v118, 2
    %v2395 = vrot.slane %v119, 2
    %v2396 = vsel %vm2253, %v2394, %v2395
    %v2397 = vrot.slane %v120, 2
    %v2398 = vsel %vm2253, %v2395, %v2397
    %v2399 = vrot.slane %v121, 2
    %v2400 = vrot.slane %v122, 2
    %v2401 = vsel %vm2253, %v2399, %v2400
    %v2402 = vrot.slane %v123, 2
    %v2403 = vsel %vm2253, %v2400, %v2402
    %v2404 = vrot.slane %v124, 2
    %v2405 = vrot.slane %v125, 2
    %v2406 = vsel %vm2253, %v2404, %v2405
    %v2407 = vrot.slane %v126, 2
    %v2408 = vsel %vm2253, %v2405, %v2407
    %v2409 = vrot.slane %v127, 2
    %v2410 = vrot.slane %v128, 2
    %v2411 = vsel %vm2253, %v2409, %v2410
    %v2412 = vrot.slane %v129, 2
    %v2413 = vsel %vm2253, %v2410, %v2412
    %v2414 = vrot.slane %v136, 2
    %v2415 = vrot.slane %v137, 2
    %v2416 = vsel %vm2253, %v2414, %v2415
    %v2417 = vrot.slane %v138, 2
    %v2418 = vsel %vm2253, %v2415, %v2417
    %v2419 = vrot.slane %v139, 2
    %v2420 = vrot.slane %v140, 2
    %v2421 = vsel %vm2253, %v2419, %v2420
    %v2422 = vrot.slane %v141, 2
    %v2423 = vsel %vm2253, %v2420, %v2422
    %v2424 = vrot.slane %v142, 2
    %v2425 = vrot.slane %v143, 2
    %v2426 = vsel %vm2253, %v2424, %v2425
    %v2427 = vrot.slane %v144, 2
    %v2428 = vsel %vm2253, %v2425, %v2427
    %v2429 = vrot.slane %v145, 2
    %v2430 = vrot.slane %v146, 2
    %v2431 = vsel %vm2253, %v2429, %v2430
    %v2432 = vrot.slane %v147, 2
    %v2433 = vsel %vm2253, %v2430, %v2432
    %v2434 = vrot.slane %v148, 2
    %v2435 = vrot.slane %v149, 2
    %v2436 = vsel %vm2253, %v2434, %v2435
    %v2437 = vrot.slane %v150, 2
    %v2438 = vsel %vm2253, %v2435, %v2437
    %v2439 = vrot.slane %v151, 2
    %v2440 = vrot.slane %v152, 2
    %v2441 = vsel %vm2253, %v2439, %v2440
    %v2442 = vrot.slane %v153, 2
    %v2443 = vsel %vm2253, %v2440, %v2442
    %v2444 = vrot.slane %v154, 2
    %v2445 = vrot.slane %v155, 2
    %v2446 = vsel %vm2253, %v2444, %v2445
    %v2447 = vrot.slane %v156, 2
    %v2448 = vsel %vm2253, %v2445, %v2447
    %v2449 = vrot.slane %v157, 2
    %v2450 = vrot.slane %v158, 2
    %v2451 = vsel %vm2253, %v2449, %v2450
    %v2452 = vrot.slane %v159, 2
    %v2453 = vsel %vm2253, %v2450, %v2452
    %v2454 = vrot.slane %v160, 2
    %v2455 = vrot.slane %v161, 2
    %v2456 = vsel %vm2253, %v2454, %v2455
    %v2457 = vrot.slane %v162, 2
    %v2458 = vsel %vm2253, %v2455, %v2457
    %v2459 = vrot.slane %v163, 2
    %v2460 = vrot.slane %v164, 2
    %v2461 = vsel %vm2253, %v2459, %v2460
    %v2462 = vrot.slane %v165, 2
    %v2463 = vsel %vm2253, %v2460, %v2462
    %v2464 = vrot.slane %v166, 2
    %v2465 = vrot.slane %v167, 2
    %v2466 = vsel %vm2253, %v2464, %v2465
    %v2467 = vrot.slane %v168, 2
    %v2468 = vsel %vm2253, %v2465, %v2467
    %v2469 = vrot.slane %v169, 2
    %v2470 = vrot.slane %v170, 2
    %v2471 = vsel %vm2253, %v2469, %v2470
    %v2472 = vrot.slane %v171, 2
    %v2473 = vsel %vm2253, %v2470, %v2472
    %v2474 = vrot.slane %v172, 2
    %v2475 = vrot.slane %v173, 2
    %v2476 = vsel %vm2253, %v2474, %v2475
    %v2477 = vrot.slane %v174, 2
    %v2478 = vsel %vm2253, %v2475, %v2477
    %v2479 = vrot.slane %v175, 2
    %v2480 = vrot.slane %v176, 2
    %v2481 = vsel %vm2253, %v2479, %v2480
    %v2482 = vrot.slane %v177, 2
    %v2483 = vsel %vm2253, %v2480, %v2482
    %v2484 = vrot.slane %v178, 2
    %v2485 = vrot.slane %v179, 2
    %v2486 = vsel %vm2253, %v2484, %v2485
    %v2487 = vrot.slane %v180, 2
    %v2488 = vsel %vm2253, %v2485, %v2487
    %v2489 = vrot.slane %v181, 2
    %v2490 = vrot.slane %v182, 2
    %v2491 = vsel %vm2253, %v2489, %v2490
    %v2492 = vrot.slane %v183, 2
    %v2493 = vsel %vm2253, %v2490, %v2492
    %v2494 = vrot.slane %v190, 2
    %v2495 = vrot.slane %v191, 2
    %v2496 = vsel %vm2253, %v2494, %v2495
    %v2497 = vrot.slane %v192, 2
    %v2498 = vsel %vm2253, %v2495, %v2497
    %v2499 = vrot.slane %v193, 2
    %v2500 = vrot.slane %v194, 2
    %v2501 = vsel %vm2253, %v2499, %v2500
    %v2502 = vrot.slane %v195, 2
    %v2503 = vsel %vm2253, %v2500, %v2502
    %v2504 = vrot.slane %v196, 2
    %v2505 = vrot.slane %v197, 2
    %v2506 = vsel %vm2253, %v2504, %v2505
    %v2507 = vrot.slane %v198, 2
    %v2508 = vsel %vm2253, %v2505, %v2507
    %v2509 = vrot.slane %v199, 2
    %v2510 = vrot.slane %v200, 2
    %v2511 = vsel %vm2253, %v2509, %v2510
    %v2512 = vrot.slane %v201, 2
    %v2513 = vsel %vm2253, %v2510, %v2512
    %v2514 = vrot.slane %v202, 2
    %v2515 = vrot.slane %v203, 2
    %v2516 = vsel %vm2253, %v2514, %v2515
    %v2517 = vrot.slane %v204, 2
    %v2518 = vsel %vm2253, %v2515, %v2517
    %v2519 = vrot.slane %v205, 2
    %v2520 = vrot.slane %v206, 2
    %v2521 = vsel %vm2253, %v2519, %v2520
    %v2522 = vrot.slane %v207, 2
    %v2523 = vsel %vm2253, %v2520, %v2522
    %v2524 = vrot.slane %v208, 2
    %v2525 = vrot.slane %v209, 2
    %v2526 = vsel %vm2253, %v2524, %v2525
    %v2527 = vrot.slane %v210, 2
    %v2528 = vsel %vm2253, %v2525, %v2527
    %v2529 = vrot.slane %v211, 2
    %v2530 = vrot.slane %v212, 2
    %v2531 = vsel %vm2253, %v2529, %v2530
    %v2532 = vrot.slane %v213, 2
    %v2533 = vsel %vm2253, %v2530, %v2532
    %v2534 = vrot.slane %v214, 2
    %v2535 = vrot.slane %v215, 2
    %v2536 = vsel %vm2253, %v2534, %v2535
    %v2537 = vrot.slane %v216, 2
    %v2538 = vsel %vm2253, %v2535, %v2537
    %v2539 = vrot.slane %v217, 2
    %v2540 = vrot.slane %v218, 2
    %v2541 = vsel %vm2253, %v2539, %v2540
    %v2542 = vrot.slane %v219, 2
    %v2543 = vsel %vm2253, %v2540, %v2542
    %v2544 = vrot.slane %v220, 2
    %v2545 = vrot.slane %v221, 2
    %v2546 = vsel %vm2253, %v2544, %v2545
    %v2547 = vrot.slane %v222, 2
    %v2548 = vsel %vm2253, %v2545, %v2547
    %v2549 = vrot.slane %v223, 2
    %v2550 = vrot.slane %v224, 2
    %v2551 = vsel %vm2253, %v2549, %v2550
    %v2552 = vrot.slane %v225, 2
    %v2553 = vsel %vm2253, %v2550, %v2552
    %v2554 = vrot.slane %v226, 2
    %v2555 = vrot.slane %v227, 2
    %v2556 = vsel %vm2253, %v2554, %v2555
    %v2557 = vrot.slane %v228, 2
    %v2558 = vsel %vm2253, %v2555, %v2557
    %v2559 = vrot.slane %v229, 2
    %v2560 = vrot.slane %v230, 2
    %v2561 = vsel %vm2253, %v2559, %v2560
    %v2562 = vrot.slane %v231, 2
    %v2563 = vsel %vm2253, %v2560, %v2562
    %v2564 = vrot.slane %v232, 2
    %v2565 = vrot.slane %v233, 2
    %v2566 = vsel %vm2253, %v2564, %v2565
    %v2567 = vrot.slane %v234, 2
    %v2568 = vsel %vm2253, %v2565, %v2567
    %v2569 = vrot.slane %v235, 2
    %v2570 = vrot.slane %v236, 2
    %v2571 = vsel %vm2253, %v2569, %v2570
    %v2572 = vrot.slane %v237, 2
    %v2573 = vsel %vm2253, %v2570, %v2572
    %v2574 = vrot.slane %v244, 2
    %v2575 = vrot.slane %v245, 2
    %v2576 = vsel %vm2253, %v2574, %v2575
    %v2577 = vrot.slane %v246, 2
    %v2578 = vsel %vm2253, %v2575, %v2577
    %v2579 = vrot.slane %v247, 2
    %v2580 = vrot.slane %v248, 2
    %v2581 = vsel %vm2253, %v2579, %v2580
    %v2582 = vrot.slane %v249, 2
    %v2583 = vsel %vm2253, %v2580, %v2582
    %v2584 = vrot.slane %v250, 2
    %v2585 = vrot.slane %v251, 2
    %v2586 = vsel %vm2253, %v2584, %v2585
    %v2587 = vrot.slane %v252, 2
    %v2588 = vsel %vm2253, %v2585, %v2587
    %v2589 = vrot.slane %v253, 2
    %v2590 = vrot.slane %v254, 2
    %v2591 = vsel %vm2253, %v2589, %v2590
    %v2592 = vrot.slane %v255, 2
    %v2593 = vsel %vm2253, %v2590, %v2592
    %v2594 = vrot.slane %v256, 2
    %v2595 = vrot.slane %v257, 2
    %v2596 = vsel %vm2253, %v2594, %v2595
    %v2597 = vrot.slane %v258, 2
    %v2598 = vsel %vm2253, %v2595, %v2597
    %v2599 = vrot.slane %v259, 2
    %v2600 = vrot.slane %v260, 2
    %v2601 = vsel %vm2253, %v2599, %v2600
    %v2602 = vrot.slane %v261, 2
    %v2603 = vsel %vm2253, %v2600, %v2602
    %v2604 = vrot.slane %v262, 2
    %v2605 = vrot.slane %v263, 2
    %v2606 = vsel %vm2253, %v2604, %v2605
    %v2607 = vrot.slane %v264, 2
    %v2608 = vsel %vm2253, %v2605, %v2607
    %v2609 = vrot.slane %v265, 2
    %v2610 = vrot.slane %v266, 2
    %v2611 = vsel %vm2253, %v2609, %v2610
    %v2612 = vrot.slane %v267, 2
    %v2613 = vsel %vm2253, %v2610, %v2612
    %v2614 = vrot.slane %v268, 2
    %v2615 = vrot.slane %v269, 2
    %v2616 = vsel %vm2253, %v2614, %v2615
    %v2617 = vrot.slane %v270, 2
    %v2618 = vsel %vm2253, %v2615, %v2617
    %v2619 = vrot.slane %v271, 2
    %v2620 = vrot.slane %v272, 2
    %v2621 = vsel %vm2253, %v2619, %v2620
    %v2622 = vrot.slane %v273, 2
    %v2623 = vsel %vm2253, %v2620, %v2622
    %v2624 = vrot.slane %v274, 2
    %v2625 = vrot.slane %v275, 2
    %v2626 = vsel %vm2253, %v2624, %v2625
    %v2627 = vrot.slane %v276, 2
    %v2628 = vsel %vm2253, %v2625, %v2627
    %v2629 = vrot.slane %v277, 2
    %v2630 = vrot.slane %v278, 2
    %v2631 = vsel %vm2253, %v2629, %v2630
    %v2632 = vrot.slane %v279, 2
    %v2633 = vsel %vm2253, %v2630, %v2632
    %v2634 = vrot.slane %v280, 2
    %v2635 = vrot.slane %v281, 2
    %v2636 = vsel %vm2253, %v2634, %v2635
    %v2637 = vrot.slane %v282, 2
    %v2638 = vsel %vm2253, %v2635, %v2637
    %v2639 = vrot.slane %v283, 2
    %v2640 = vrot.slane %v284, 2
    %v2641 = vsel %vm2253, %v2639, %v2640
    %v2642 = vrot.slane %v285, 2
    %v2643 = vsel %vm2253, %v2640, %v2642
    %v2644 = vrot.slane %v286, 2
    %v2645 = vrot.slane %v287, 2
    %v2646 = vsel %vm2253, %v2644, %v2645
    %v2647 = vrot.slane %v288, 2
    %v2648 = vsel %vm2253, %v2645, %v2647
    %v2649 = vrot.slane %v289, 2
    %v2650 = vrot.slane %v290, 2
    %v2651 = vsel %vm2253, %v2649, %v2650
    %v2652 = vrot.slane %v291, 2
    %v2653 = vsel %vm2253, %v2650, %v2652
    %v2654 = vrot.slane %v298, 2
    %v2655 = vrot.slane %v299, 2
    %v2656 = vsel %vm2253, %v2654, %v2655
    %v2657 = vrot.slane %v300, 2
    %v2658 = vsel %vm2253, %v2655, %v2657
    %v2659 = vrot.slane %v301, 2
    %v2660 = vrot.slane %v302, 2
    %v2661 = vsel %vm2253, %v2659, %v2660
    %v2662 = vrot.slane %v303, 2
    %v2663 = vsel %vm2253, %v2660, %v2662
    %v2664 = vrot.slane %v304, 2
    %v2665 = vrot.slane %v305, 2
    %v2666 = vsel %vm2253, %v2664, %v2665
    %v2667 = vrot.slane %v306, 2
    %v2668 = vsel %vm2253, %v2665, %v2667
    %v2669 = vrot.slane %v307, 2
    %v2670 = vrot.slane %v308, 2
    %v2671 = vsel %vm2253, %v2669, %v2670
    %v2672 = vrot.slane %v309, 2
    %v2673 = vsel %vm2253, %v2670, %v2672
    %v2674 = vrot.slane %v310, 2
    %v2675 = vrot.slane %v311, 2
    %v2676 = vsel %vm2253, %v2674, %v2675
    %v2677 = vrot.slane %v312, 2
    %v2678 = vsel %vm2253, %v2675, %v2677
    %v2679 = vrot.slane %v313, 2
    %v2680 = vrot.slane %v314, 2
    %v2681 = vsel %vm2253, %v2679, %v2680
    %v2682 = vrot.slane %v315, 2
    %v2683 = vsel %vm2253, %v2680, %v2682
    %v2684 = vrot.slane %v316, 2
    %v2685 = vrot.slane %v317, 2
    %v2686 = vsel %vm2253, %v2684, %v2685
    %v2687 = vrot.slane %v318, 2
    %v2688 = vsel %vm2253, %v2685, %v2687
    %v2689 = vrot.slane %v319, 2
    %v2690 = vrot.slane %v320, 2
    %v2691 = vsel %vm2253, %v2689, %v2690
    %v2692 = vrot.slane %v321, 2
    %v2693 = vsel %vm2253, %v2690, %v2692
    %v2694 = vrot.slane %v322, 2
    %v2695 = vrot.slane %v323, 2
    %v2696 = vsel %vm2253, %v2694, %v2695
    %v2697 = vrot.slane %v324, 2
    %v2698 = vsel %vm2253, %v2695, %v2697
    %v2699 = vrot.slane %v325, 2
    %v2700 = vrot.slane %v326, 2
    %v2701 = vsel %vm2253, %v2699, %v2700
    %v2702 = vrot.slane %v327, 2
    %v2703 = vsel %vm2253, %v2700, %v2702
    %v2704 = vrot.slane %v328, 2
    %v2705 = vrot.slane %v329, 2
    %v2706 = vsel %vm2253, %v2704, %v2705
    %v2707 = vrot.slane %v330, 2
    %v2708 = vsel %vm2253, %v2705, %v2707
    %v2709 = vrot.slane %v331, 2
    %v2710 = vrot.slane %v332, 2
    %v2711 = vsel %vm2253, %v2709, %v2710
    %v2712 = vrot.slane %v333, 2
    %v2713 = vsel %vm2253, %v2710, %v2712
    %v2714 = vrot.slane %v334, 2
    %v2715 = vrot.slane %v335, 2
    %v2716 = vsel %vm2253, %v2714, %v2715
    %v2717 = vrot.slane %v336, 2
    %v2718 = vsel %vm2253, %v2715, %v2717
    %v2719 = vrot.slane %v337, 2
    %v2720 = vrot.slane %v338, 2
    %v2721 = vsel %vm2253, %v2719, %v2720
    %v2722 = vrot.slane %v339, 2
    %v2723 = vsel %vm2253, %v2720, %v2722
    %v2724 = vrot.slane %v340, 2
    %v2725 = vrot.slane %v341, 2
    %v2726 = vsel %vm2253, %v2724, %v2725
    %v2727 = vrot.slane %v342, 2
    %v2728 = vsel %vm2253, %v2725, %v2727
    %v2729 = vrot.slane %v343, 2
    %v2730 = vrot.slane %v344, 2
    %v2731 = vsel %vm2253, %v2729, %v2730
    %v2732 = vrot.slane %v345, 2
    %v2733 = vsel %vm2253, %v2730, %v2732
    %v2734 = vrot.slane %v352, 2
    %v2735 = vrot.slane %v353, 2
    %v2736 = vsel %vm2253, %v2734, %v2735
    %v2737 = vrot.slane %v354, 2
    %v2738 = vsel %vm2253, %v2735, %v2737
    %v2739 = vrot.slane %v355, 2
    %v2740 = vrot.slane %v356, 2
    %v2741 = vsel %vm2253, %v2739, %v2740
    %v2742 = vrot.slane %v357, 2
    %v2743 = vsel %vm2253, %v2740, %v2742
    %v2744 = vrot.slane %v358, 2
    %v2745 = vrot.slane %v359, 2
    %v2746 = vsel %vm2253, %v2744, %v2745
    %v2747 = vrot.slane %v360, 2
    %v2748 = vsel %vm2253, %v2745, %v2747
    %v2749 = vrot.slane %v361, 2
    %v2750 = vrot.slane %v362, 2
    %v2751 = vsel %vm2253, %v2749, %v2750
    %v2752 = vrot.slane %v363, 2
    %v2753 = vsel %vm2253, %v2750, %v2752
    %v2754 = vrot.slane %v364, 2
    %v2755 = vrot.slane %v365, 2
    %v2756 = vsel %vm2253, %v2754, %v2755
    %v2757 = vrot.slane %v366, 2
    %v2758 = vsel %vm2253, %v2755, %v2757
    %v2759 = vrot.slane %v367, 2
    %v2760 = vrot.slane %v368, 2
    %v2761 = vsel %vm2253, %v2759, %v2760
    %v2762 = vrot.slane %v369, 2
    %v2763 = vsel %vm2253, %v2760, %v2762
    %v2764 = vrot.slane %v370, 2
    %v2765 = vrot.slane %v371, 2
    %v2766 = vsel %vm2253, %v2764, %v2765
    %v2767 = vrot.slane %v372, 2
    %v2768 = vsel %vm2253, %v2765, %v2767
    %v2769 = vrot.slane %v373, 2
    %v2770 = vrot.slane %v374, 2
    %v2771 = vsel %vm2253, %v2769, %v2770
    %v2772 = vrot.slane %v375, 2
    %v2773 = vsel %vm2253, %v2770, %v2772
    %v2774 = vrot.slane %v376, 2
    %v2775 = vrot.slane %v377, 2
    %v2776 = vsel %vm2253, %v2774, %v2775
    %v2777 = vrot.slane %v378, 2
    %v2778 = vsel %vm2253, %v2775, %v2777
    %v2779 = vrot.slane %v379, 2
    %v2780 = vrot.slane %v380, 2
    %v2781 = vsel %vm2253, %v2779, %v2780
    %v2782 = vrot.slane %v381, 2
    %v2783 = vsel %vm2253, %v2780, %v2782
    %v2784 = vrot.slane %v382, 2
    %v2785 = vrot.slane %v383, 2
    %v2786 = vsel %vm2253, %v2784, %v2785
    %v2787 = vrot.slane %v384, 2
    %v2788 = vsel %vm2253, %v2785, %v2787
    %v2789 = vrot.slane %v385, 2
    %v2790 = vrot.slane %v386, 2
    %v2791 = vsel %vm2253, %v2789, %v2790
    %v2792 = vrot.slane %v387, 2
    %v2793 = vsel %vm2253, %v2790, %v2792
    %v2794 = vrot.slane %v388, 2
    %v2795 = vrot.slane %v389, 2
    %v2796 = vsel %vm2253, %v2794, %v2795
    %v2797 = vrot.slane %v390, 2
    %v2798 = vsel %vm2253, %v2795, %v2797
    %v2799 = vrot.slane %v391, 2
    %v2800 = vrot.slane %v392, 2
    %v2801 = vsel %vm2253, %v2799, %v2800
    %v2802 = vrot.slane %v393, 2
    %v2803 = vsel %vm2253, %v2800, %v2802
    %v2804 = vrot.slane %v394, 2
    %v2805 = vrot.slane %v395, 2
    %v2806 = vsel %vm2253, %v2804, %v2805
    %v2807 = vrot.slane %v396, 2
    %v2808 = vsel %vm2253, %v2805, %v2807
    %v2809 = vrot.slane %v397, 2
    %v2810 = vrot.slane %v398, 2
    %v2811 = vsel %vm2253, %v2809, %v2810
    %v2812 = vrot.slane %v399, 2
    %v2813 = vsel %vm2253, %v2810, %v2812
    %v2814 = vrot.slane %v406, 2
    %v2815 = vrot.slane %v407, 2
    %v2816 = vsel %vm2253, %v2814, %v2815
    %v2817 = vrot.slane %v408, 2
    %v2818 = vsel %vm2253, %v2815, %v2817
    %v2819 = vrot.slane %v409, 2
    %v2820 = vrot.slane %v410, 2
    %v2821 = vsel %vm2253, %v2819, %v2820
    %v2822 = vrot.slane %v411, 2
    %v2823 = vsel %vm2253, %v2820, %v2822
    %v2824 = vrot.slane %v412, 2
    %v2825 = vrot.slane %v413, 2
    %v2826 = vsel %vm2253, %v2824, %v2825
    %v2827 = vrot.slane %v414, 2
    %v2828 = vsel %vm2253, %v2825, %v2827
    %v2829 = vrot.slane %v415, 2
    %v2830 = vrot.slane %v416, 2
    %v2831 = vsel %vm2253, %v2829, %v2830
    %v2832 = vrot.slane %v417, 2
    %v2833 = vsel %vm2253, %v2830, %v2832
    %v2834 = vrot.slane %v418, 2
    %v2835 = vrot.slane %v419, 2
    %v2836 = vsel %vm2253, %v2834, %v2835
    %v2837 = vrot.slane %v420, 2
    %v2838 = vsel %vm2253, %v2835, %v2837
    %v2839 = vrot.slane %v421, 2
    %v2840 = vrot.slane %v422, 2
    %v2841 = vsel %vm2253, %v2839, %v2840
    %v2842 = vrot.slane %v423, 2
    %v2843 = vsel %vm2253, %v2840, %v2842
    %v2844 = vrot.slane %v424, 2
    %v2845 = vrot.slane %v425, 2
    %v2846 = vsel %vm2253, %v2844, %v2845
    %v2847 = vrot.slane %v426, 2
    %v2848 = vsel %vm2253, %v2845, %v2847
    %v2849 = vrot.slane %v427, 2
    %v2850 = vrot.slane %v428, 2
    %v2851 = vsel %vm2253, %v2849, %v2850
    %v2852 = vrot.slane %v429, 2
    %v2853 = vsel %vm2253, %v2850, %v2852
    %v2854 = vrot.slane %v430, 2
    %v2855 = vrot.slane %v431, 2
    %v2856 = vsel %vm2253, %v2854, %v2855
    %v2857 = vrot.slane %v432, 2
    %v2858 = vsel %vm2253, %v2855, %v2857
    %v2859 = vrot.slane %v433, 2
    %v2860 = vrot.slane %v434, 2
    %v2861 = vsel %vm2253, %v2859, %v2860
    %v2862 = vrot.slane %v435, 2
    %v2863 = vsel %vm2253, %v2860, %v2862
    %v2864 = vrot.slane %v436, 2
    %v2865 = vrot.slane %v437, 2
    %v2866 = vsel %vm2253, %v2864, %v2865
    %v2867 = vrot.slane %v438, 2
    %v2868 = vsel %vm2253, %v2865, %v2867
    %v2869 = vrot.slane %v439, 2
    %v2870 = vrot.slane %v440, 2
    %v2871 = vsel %vm2253, %v2869, %v2870
    %v2872 = vrot.slane %v441, 2
    %v2873 = vsel %vm2253, %v2870, %v2872
    %v2874 = vrot.slane %v442, 2
    %v2875 = vrot.slane %v443, 2
    %v2876 = vsel %vm2253, %v2874, %v2875
    %v2877 = vrot.slane %v444, 2
    %v2878 = vsel %vm2253, %v2875, %v2877
    %v2879 = vrot.slane %v445, 2
    %v2880 = vrot.slane %v446, 2
    %v2881 = vsel %vm2253, %v2879, %v2880
    %v2882 = vrot.slane %v447, 2
    %v2883 = vsel %vm2253, %v2880, %v2882
    %v2884 = vrot.slane %v448, 2
    %v2885 = vrot.slane %v449, 2
    %v2886 = vsel %vm2253, %v2884, %v2885
    %v2887 = vrot.slane %v450, 2
    %v2888 = vsel %vm2253, %v2885, %v2887
    %v2889 = vrot.slane %v451, 2
    %v2890 = vrot.slane %v452, 2
    %v2891 = vsel %vm2253, %v2889, %v2890
    %v2892 = vrot.slane %v453, 2
    %v2893 = vsel %vm2253, %v2890, %v2892
    %2894 = vrot.lane.b32.xlu0 %v2256, 16
    %v2895 = vpop.permute.xlu0 %2894
    %2896 = vrot.lane.b32.xlu0 %v2258, 16
    %v2897 = vpop.permute.xlu0 %2896
    %2898 = vrot.lane.b32.xlu0 %v2261, 16
    %v2899 = vpop.permute.xlu0 %2898
    %2900 = vrot.lane.b32.xlu0 %v2263, 16
    %v2901 = vpop.permute.xlu0 %2900
    %2902 = vrot.lane.b32.xlu0 %v2266, 16
    %v2903 = vpop.permute.xlu0 %2902
    %2904 = vrot.lane.b32.xlu0 %v2268, 16
    %v2905 = vpop.permute.xlu0 %2904
    %2906 = vrot.lane.b32.xlu0 %v2271, 16
    %v2907 = vpop.permute.xlu0 %2906
    %2908 = vrot.lane.b32.xlu0 %v2273, 16
    %v2909 = vpop.permute.xlu0 %2908
    %2910 = vrot.lane.b32.xlu0 %v2276, 16
    %v2911 = vpop.permute.xlu0 %2910
    %2912 = vrot.lane.b32.xlu0 %v2278, 16
    %v2913 = vpop.permute.xlu0 %2912
    %2914 = vrot.lane.b32.xlu0 %v2281, 16
    %v2915 = vpop.permute.xlu0 %2914
    %2916 = vrot.lane.b32.xlu0 %v2283, 16
    %v2917 = vpop.permute.xlu0 %2916
    %2918 = vrot.lane.b32.xlu0 %v2286, 16
    %v2919 = vpop.permute.xlu0 %2918
    %2920 = vrot.lane.b32.xlu0 %v2288, 16
    %v2921 = vpop.permute.xlu0 %2920
    %2922 = vrot.lane.b32.xlu0 %v2291, 16
    %v2923 = vpop.permute.xlu0 %2922
    %2924 = vrot.lane.b32.xlu0 %v2293, 16
    %v2925 = vpop.permute.xlu0 %2924
    %2926 = vrot.lane.b32.xlu0 %v2296, 16
    %v2927 = vpop.permute.xlu0 %2926
    %2928 = vrot.lane.b32.xlu0 %v2298, 16
    %v2929 = vpop.permute.xlu0 %2928
    %2930 = vrot.lane.b32.xlu0 %v2301, 16
    %v2931 = vpop.permute.xlu0 %2930
    %2932 = vrot.lane.b32.xlu0 %v2303, 16
    %v2933 = vpop.permute.xlu0 %2932
    %2934 = vrot.lane.b32.xlu0 %v2306, 16
    %v2935 = vpop.permute.xlu0 %2934
    %2936 = vrot.lane.b32.xlu0 %v2308, 16
    %v2937 = vpop.permute.xlu0 %2936
    %2938 = vrot.lane.b32.xlu0 %v2311, 16
    %v2939 = vpop.permute.xlu0 %2938
    %2940 = vrot.lane.b32.xlu0 %v2313, 16
    %v2941 = vpop.permute.xlu0 %2940
    %2942 = vrot.lane.b32.xlu0 %v2316, 16
    %v2943 = vpop.permute.xlu0 %2942
    %2944 = vrot.lane.b32.xlu0 %v2318, 16
    %v2945 = vpop.permute.xlu0 %2944
    %2946 = vrot.lane.b32.xlu0 %v2321, 16
    %v2947 = vpop.permute.xlu0 %2946
    %2948 = vrot.lane.b32.xlu0 %v2323, 16
    %v2949 = vpop.permute.xlu0 %2948
    %2950 = vrot.lane.b32.xlu0 %v2326, 16
    %v2951 = vpop.permute.xlu0 %2950
    %2952 = vrot.lane.b32.xlu0 %v2328, 16
    %v2953 = vpop.permute.xlu0 %2952
    %2954 = vrot.lane.b32.xlu0 %v2331, 16
    %v2955 = vpop.permute.xlu0 %2954
    %2956 = vrot.lane.b32.xlu0 %v2333, 16
    %v2957 = vpop.permute.xlu0 %2956
    %2958 = vrot.lane.b32.xlu0 %v2336, 16
    %v2959 = vpop.permute.xlu0 %2958
    %2960 = vrot.lane.b32.xlu0 %v2338, 16
    %v2961 = vpop.permute.xlu0 %2960
    %2962 = vrot.lane.b32.xlu0 %v2341, 16
    %v2963 = vpop.permute.xlu0 %2962
    %2964 = vrot.lane.b32.xlu0 %v2343, 16
    %v2965 = vpop.permute.xlu0 %2964
    %2966 = vrot.lane.b32.xlu0 %v2346, 16
    %v2967 = vpop.permute.xlu0 %2966
    %2968 = vrot.lane.b32.xlu0 %v2348, 16
    %v2969 = vpop.permute.xlu0 %2968
    %2970 = vrot.lane.b32.xlu0 %v2351, 16
    %v2971 = vpop.permute.xlu0 %2970
    %2972 = vrot.lane.b32.xlu0 %v2353, 16
    %v2973 = vpop.permute.xlu0 %2972
    %2974 = vrot.lane.b32.xlu0 %v2356, 16
    %v2975 = vpop.permute.xlu0 %2974
    %2976 = vrot.lane.b32.xlu0 %v2358, 16
    %v2977 = vpop.permute.xlu0 %2976
    %2978 = vrot.lane.b32.xlu0 %v2361, 16
    %v2979 = vpop.permute.xlu0 %2978
    %2980 = vrot.lane.b32.xlu0 %v2363, 16
    %v2981 = vpop.permute.xlu0 %2980
    %2982 = vrot.lane.b32.xlu0 %v2366, 16
    %v2983 = vpop.permute.xlu0 %2982
    %2984 = vrot.lane.b32.xlu0 %v2368, 16
    %v2985 = vpop.permute.xlu0 %2984
    %2986 = vrot.lane.b32.xlu0 %v2371, 16
    %v2987 = vpop.permute.xlu0 %2986
    %2988 = vrot.lane.b32.xlu0 %v2373, 16
    %v2989 = vpop.permute.xlu0 %2988
    %2990 = vrot.lane.b32.xlu0 %v2376, 16
    %v2991 = vpop.permute.xlu0 %2990
    %2992 = vrot.lane.b32.xlu0 %v2378, 16
    %v2993 = vpop.permute.xlu0 %2992
    %2994 = vrot.lane.b32.xlu0 %v2381, 16
    %v2995 = vpop.permute.xlu0 %2994
    %2996 = vrot.lane.b32.xlu0 %v2383, 16
    %v2997 = vpop.permute.xlu0 %2996
    %2998 = vrot.lane.b32.xlu0 %v2386, 16
    %v2999 = vpop.permute.xlu0 %2998
    %3000 = vrot.lane.b32.xlu0 %v2388, 16
    %v3001 = vpop.permute.xlu0 %3000
    %3002 = vrot.lane.b32.xlu0 %v2391, 16
    %v3003 = vpop.permute.xlu0 %3002
    %3004 = vrot.lane.b32.xlu0 %v2393, 16
    %v3005 = vpop.permute.xlu0 %3004
    %3006 = vrot.lane.b32.xlu0 %v2396, 16
    %v3007 = vpop.permute.xlu0 %3006
    %3008 = vrot.lane.b32.xlu0 %v2398, 16
    %v3009 = vpop.permute.xlu0 %3008
    %3010 = vrot.lane.b32.xlu0 %v2401, 16
    %v3011 = vpop.permute.xlu0 %3010
    %3012 = vrot.lane.b32.xlu0 %v2403, 16
    %v3013 = vpop.permute.xlu0 %3012
    %3014 = vrot.lane.b32.xlu0 %v2406, 16
    %v3015 = vpop.permute.xlu0 %3014
    %3016 = vrot.lane.b32.xlu0 %v2408, 16
    %v3017 = vpop.permute.xlu0 %3016
    %3018 = vrot.lane.b32.xlu0 %v2411, 16
    %v3019 = vpop.permute.xlu0 %3018
    %3020 = vrot.lane.b32.xlu0 %v2413, 16
    %v3021 = vpop.permute.xlu0 %3020
    %3022 = vrot.lane.b32.xlu0 %v2416, 16
    %v3023 = vpop.permute.xlu0 %3022
    %3024 = vrot.lane.b32.xlu0 %v2418, 16
    %v3025 = vpop.permute.xlu0 %3024
    %3026 = vrot.lane.b32.xlu0 %v2421, 16
    %v3027 = vpop.permute.xlu0 %3026
    %3028 = vrot.lane.b32.xlu0 %v2423, 16
    %v3029 = vpop.permute.xlu0 %3028
    %3030 = vrot.lane.b32.xlu0 %v2426, 16
    %v3031 = vpop.permute.xlu0 %3030
    %3032 = vrot.lane.b32.xlu0 %v2428, 16
    %v3033 = vpop.permute.xlu0 %3032
    %3034 = vrot.lane.b32.xlu0 %v2431, 16
    %v3035 = vpop.permute.xlu0 %3034
    %3036 = vrot.lane.b32.xlu0 %v2433, 16
    %v3037 = vpop.permute.xlu0 %3036
    %3038 = vrot.lane.b32.xlu0 %v2436, 16
    %v3039 = vpop.permute.xlu0 %3038
    %3040 = vrot.lane.b32.xlu0 %v2438, 16
    %v3041 = vpop.permute.xlu0 %3040
    %3042 = vrot.lane.b32.xlu0 %v2441, 16
    %v3043 = vpop.permute.xlu0 %3042
    %3044 = vrot.lane.b32.xlu0 %v2443, 16
    %v3045 = vpop.permute.xlu0 %3044
    %3046 = vrot.lane.b32.xlu0 %v2446, 16
    %v3047 = vpop.permute.xlu0 %3046
    %3048 = vrot.lane.b32.xlu0 %v2448, 16
    %v3049 = vpop.permute.xlu0 %3048
    %3050 = vrot.lane.b32.xlu0 %v2451, 16
    %v3051 = vpop.permute.xlu0 %3050
    %3052 = vrot.lane.b32.xlu0 %v2453, 16
    %v3053 = vpop.permute.xlu0 %3052
    %3054 = vrot.lane.b32.xlu0 %v2456, 16
    %v3055 = vpop.permute.xlu0 %3054
    %3056 = vrot.lane.b32.xlu0 %v2458, 16
    %v3057 = vpop.permute.xlu0 %3056
    %3058 = vrot.lane.b32.xlu0 %v2461, 16
    %v3059 = vpop.permute.xlu0 %3058
    %3060 = vrot.lane.b32.xlu0 %v2463, 16
    %v3061 = vpop.permute.xlu0 %3060
    %3062 = vrot.lane.b32.xlu0 %v2466, 16
    %v3063 = vpop.permute.xlu0 %3062
    %3064 = vrot.lane.b32.xlu0 %v2468, 16
    %v3065 = vpop.permute.xlu0 %3064
    %3066 = vrot.lane.b32.xlu0 %v2471, 16
    %v3067 = vpop.permute.xlu0 %3066
    %3068 = vrot.lane.b32.xlu0 %v2473, 16
    %v3069 = vpop.permute.xlu0 %3068
    %3070 = vrot.lane.b32.xlu0 %v2476, 16
    %v3071 = vpop.permute.xlu0 %3070
    %3072 = vrot.lane.b32.xlu0 %v2478, 16
    %v3073 = vpop.permute.xlu0 %3072
    %3074 = vrot.lane.b32.xlu0 %v2481, 16
    %v3075 = vpop.permute.xlu0 %3074
    %3076 = vrot.lane.b32.xlu0 %v2483, 16
    %v3077 = vpop.permute.xlu0 %3076
    %3078 = vrot.lane.b32.xlu0 %v2486, 16
    %v3079 = vpop.permute.xlu0 %3078
    %3080 = vrot.lane.b32.xlu0 %v2488, 16
    %v3081 = vpop.permute.xlu0 %3080
    %3082 = vrot.lane.b32.xlu0 %v2491, 16
    %v3083 = vpop.permute.xlu0 %3082
    %3084 = vrot.lane.b32.xlu0 %v2493, 16
    %v3085 = vpop.permute.xlu0 %3084
    %3086 = vrot.lane.b32.xlu0 %v2496, 16
    %v3087 = vpop.permute.xlu0 %3086
    %3088 = vrot.lane.b32.xlu0 %v2498, 16
    %v3089 = vpop.permute.xlu0 %3088
    %3090 = vrot.lane.b32.xlu0 %v2501, 16
    %v3091 = vpop.permute.xlu0 %3090
    %3092 = vrot.lane.b32.xlu0 %v2503, 16
    %v3093 = vpop.permute.xlu0 %3092
    %3094 = vrot.lane.b32.xlu0 %v2506, 16
    %v3095 = vpop.permute.xlu0 %3094
    %3096 = vrot.lane.b32.xlu0 %v2508, 16
    %v3097 = vpop.permute.xlu0 %3096
    %3098 = vrot.lane.b32.xlu0 %v2511, 16
    %v3099 = vpop.permute.xlu0 %3098
    %3100 = vrot.lane.b32.xlu0 %v2513, 16
    %v3101 = vpop.permute.xlu0 %3100
    %3102 = vrot.lane.b32.xlu0 %v2516, 16
    %v3103 = vpop.permute.xlu0 %3102
    %3104 = vrot.lane.b32.xlu0 %v2518, 16
    %v3105 = vpop.permute.xlu0 %3104
    %3106 = vrot.lane.b32.xlu0 %v2521, 16
    %v3107 = vpop.permute.xlu0 %3106
    %3108 = vrot.lane.b32.xlu0 %v2523, 16
    %v3109 = vpop.permute.xlu0 %3108
    %3110 = vrot.lane.b32.xlu0 %v2526, 16
    %v3111 = vpop.permute.xlu0 %3110
    %3112 = vrot.lane.b32.xlu0 %v2528, 16
    %v3113 = vpop.permute.xlu0 %3112
    %3114 = vrot.lane.b32.xlu0 %v2531, 16
    %v3115 = vpop.permute.xlu0 %3114
    %3116 = vrot.lane.b32.xlu0 %v2533, 16
    %v3117 = vpop.permute.xlu0 %3116
    %3118 = vrot.lane.b32.xlu0 %v2536, 16
    %v3119 = vpop.permute.xlu0 %3118
    %3120 = vrot.lane.b32.xlu0 %v2538, 16
    %v3121 = vpop.permute.xlu0 %3120
    %3122 = vrot.lane.b32.xlu0 %v2541, 16
    %v3123 = vpop.permute.xlu0 %3122
    %3124 = vrot.lane.b32.xlu0 %v2543, 16
    %v3125 = vpop.permute.xlu0 %3124
    %3126 = vrot.lane.b32.xlu0 %v2546, 16
    %v3127 = vpop.permute.xlu0 %3126
    %3128 = vrot.lane.b32.xlu0 %v2548, 16
    %v3129 = vpop.permute.xlu0 %3128
    %3130 = vrot.lane.b32.xlu0 %v2551, 16
    %v3131 = vpop.permute.xlu0 %3130
    %3132 = vrot.lane.b32.xlu0 %v2553, 16
    %v3133 = vpop.permute.xlu0 %3132
    %3134 = vrot.lane.b32.xlu0 %v2556, 16
    %v3135 = vpop.permute.xlu0 %3134
    %3136 = vrot.lane.b32.xlu0 %v2558, 16
    %v3137 = vpop.permute.xlu0 %3136
    %3138 = vrot.lane.b32.xlu0 %v2561, 16
    %v3139 = vpop.permute.xlu0 %3138
    %3140 = vrot.lane.b32.xlu0 %v2563, 16
    %v3141 = vpop.permute.xlu0 %3140
    %3142 = vrot.lane.b32.xlu0 %v2566, 16
    %v3143 = vpop.permute.xlu0 %3142
    %3144 = vrot.lane.b32.xlu0 %v2568, 16
    %v3145 = vpop.permute.xlu0 %3144
    %3146 = vrot.lane.b32.xlu0 %v2571, 16
    %v3147 = vpop.permute.xlu0 %3146
    %3148 = vrot.lane.b32.xlu0 %v2573, 16
    %v3149 = vpop.permute.xlu0 %3148
    %3150 = vrot.lane.b32.xlu0 %v2576, 16
    %v3151 = vpop.permute.xlu0 %3150
    %3152 = vrot.lane.b32.xlu0 %v2578, 16
    %v3153 = vpop.permute.xlu0 %3152
    %3154 = vrot.lane.b32.xlu0 %v2581, 16
    %v3155 = vpop.permute.xlu0 %3154
    %3156 = vrot.lane.b32.xlu0 %v2583, 16
    %v3157 = vpop.permute.xlu0 %3156
    %3158 = vrot.lane.b32.xlu0 %v2586, 16
    %v3159 = vpop.permute.xlu0 %3158
    %3160 = vrot.lane.b32.xlu0 %v2588, 16
    %v3161 = vpop.permute.xlu0 %3160
    %3162 = vrot.lane.b32.xlu0 %v2591, 16
    %v3163 = vpop.permute.xlu0 %3162
    %3164 = vrot.lane.b32.xlu0 %v2593, 16
    %v3165 = vpop.permute.xlu0 %3164
    %3166 = vrot.lane.b32.xlu0 %v2596, 16
    %v3167 = vpop.permute.xlu0 %3166
    %3168 = vrot.lane.b32.xlu0 %v2598, 16
    %v3169 = vpop.permute.xlu0 %3168
    %3170 = vrot.lane.b32.xlu0 %v2601, 16
    %v3171 = vpop.permute.xlu0 %3170
    %3172 = vrot.lane.b32.xlu0 %v2603, 16
    %v3173 = vpop.permute.xlu0 %3172
    %3174 = vrot.lane.b32.xlu0 %v2606, 16
    %v3175 = vpop.permute.xlu0 %3174
    %3176 = vrot.lane.b32.xlu0 %v2608, 16
    %v3177 = vpop.permute.xlu0 %3176
    %3178 = vrot.lane.b32.xlu0 %v2611, 16
    %v3179 = vpop.permute.xlu0 %3178
    %3180 = vrot.lane.b32.xlu0 %v2613, 16
    %v3181 = vpop.permute.xlu0 %3180
    %3182 = vrot.lane.b32.xlu0 %v2616, 16
    %v3183 = vpop.permute.xlu0 %3182
    %3184 = vrot.lane.b32.xlu0 %v2618, 16
    %v3185 = vpop.permute.xlu0 %3184
    %3186 = vrot.lane.b32.xlu0 %v2621, 16
    %v3187 = vpop.permute.xlu0 %3186
    %3188 = vrot.lane.b32.xlu0 %v2623, 16
    %v3189 = vpop.permute.xlu0 %3188
    %3190 = vrot.lane.b32.xlu0 %v2626, 16
    %v3191 = vpop.permute.xlu0 %3190
    %3192 = vrot.lane.b32.xlu0 %v2628, 16
    %v3193 = vpop.permute.xlu0 %3192
    %3194 = vrot.lane.b32.xlu0 %v2631, 16
    %v3195 = vpop.permute.xlu0 %3194
    %3196 = vrot.lane.b32.xlu0 %v2633, 16
    %v3197 = vpop.permute.xlu0 %3196
    %3198 = vrot.lane.b32.xlu0 %v2636, 16
    %v3199 = vpop.permute.xlu0 %3198
    %3200 = vrot.lane.b32.xlu0 %v2638, 16
    %v3201 = vpop.permute.xlu0 %3200
    %3202 = vrot.lane.b32.xlu0 %v2641, 16
    %v3203 = vpop.permute.xlu0 %3202
    %3204 = vrot.lane.b32.xlu0 %v2643, 16
    %v3205 = vpop.permute.xlu0 %3204
    %3206 = vrot.lane.b32.xlu0 %v2646, 16
    %v3207 = vpop.permute.xlu0 %3206
    %3208 = vrot.lane.b32.xlu0 %v2648, 16
    %v3209 = vpop.permute.xlu0 %3208
    %3210 = vrot.lane.b32.xlu0 %v2651, 16
    %v3211 = vpop.permute.xlu0 %3210
    %3212 = vrot.lane.b32.xlu0 %v2653, 16
    %v3213 = vpop.permute.xlu0 %3212
    %3214 = vrot.lane.b32.xlu0 %v2656, 16
    %v3215 = vpop.permute.xlu0 %3214
    %3216 = vrot.lane.b32.xlu0 %v2658, 16
    %v3217 = vpop.permute.xlu0 %3216
    %3218 = vrot.lane.b32.xlu0 %v2661, 16
    %v3219 = vpop.permute.xlu0 %3218
    %3220 = vrot.lane.b32.xlu0 %v2663, 16
    %v3221 = vpop.permute.xlu0 %3220
    %3222 = vrot.lane.b32.xlu0 %v2666, 16
    %v3223 = vpop.permute.xlu0 %3222
    %3224 = vrot.lane.b32.xlu0 %v2668, 16
    %v3225 = vpop.permute.xlu0 %3224
    %3226 = vrot.lane.b32.xlu0 %v2671, 16
    %v3227 = vpop.permute.xlu0 %3226
    %3228 = vrot.lane.b32.xlu0 %v2673, 16
    %v3229 = vpop.permute.xlu0 %3228
    %3230 = vrot.lane.b32.xlu0 %v2676, 16
    %v3231 = vpop.permute.xlu0 %3230
    %3232 = vrot.lane.b32.xlu0 %v2678, 16
    %v3233 = vpop.permute.xlu0 %3232
    %3234 = vrot.lane.b32.xlu0 %v2681, 16
    %v3235 = vpop.permute.xlu0 %3234
    %3236 = vrot.lane.b32.xlu0 %v2683, 16
    %v3237 = vpop.permute.xlu0 %3236
    %3238 = vrot.lane.b32.xlu0 %v2686, 16
    %v3239 = vpop.permute.xlu0 %3238
    %3240 = vrot.lane.b32.xlu0 %v2688, 16
    %v3241 = vpop.permute.xlu0 %3240
    %3242 = vrot.lane.b32.xlu0 %v2691, 16
    %v3243 = vpop.permute.xlu0 %3242
    %3244 = vrot.lane.b32.xlu0 %v2693, 16
    %v3245 = vpop.permute.xlu0 %3244
    %3246 = vrot.lane.b32.xlu0 %v2696, 16
    %v3247 = vpop.permute.xlu0 %3246
    %3248 = vrot.lane.b32.xlu0 %v2698, 16
    %v3249 = vpop.permute.xlu0 %3248
    %3250 = vrot.lane.b32.xlu0 %v2701, 16
    %v3251 = vpop.permute.xlu0 %3250
    %3252 = vrot.lane.b32.xlu0 %v2703, 16
    %v3253 = vpop.permute.xlu0 %3252
    %3254 = vrot.lane.b32.xlu0 %v2706, 16
    %v3255 = vpop.permute.xlu0 %3254
    %3256 = vrot.lane.b32.xlu0 %v2708, 16
    %v3257 = vpop.permute.xlu0 %3256
    %3258 = vrot.lane.b32.xlu0 %v2711, 16
    %v3259 = vpop.permute.xlu0 %3258
    %3260 = vrot.lane.b32.xlu0 %v2713, 16
    %v3261 = vpop.permute.xlu0 %3260
    %3262 = vrot.lane.b32.xlu0 %v2716, 16
    %v3263 = vpop.permute.xlu0 %3262
    %3264 = vrot.lane.b32.xlu0 %v2718, 16
    %v3265 = vpop.permute.xlu0 %3264
    %3266 = vrot.lane.b32.xlu0 %v2721, 16
    %v3267 = vpop.permute.xlu0 %3266
    %3268 = vrot.lane.b32.xlu0 %v2723, 16
    %v3269 = vpop.permute.xlu0 %3268
    %3270 = vrot.lane.b32.xlu0 %v2726, 16
    %v3271 = vpop.permute.xlu0 %3270
    %3272 = vrot.lane.b32.xlu0 %v2728, 16
    %v3273 = vpop.permute.xlu0 %3272
    %3274 = vrot.lane.b32.xlu0 %v2731, 16
    %v3275 = vpop.permute.xlu0 %3274
    %3276 = vrot.lane.b32.xlu0 %v2733, 16
    %v3277 = vpop.permute.xlu0 %3276
    %3278 = vrot.lane.b32.xlu0 %v2736, 16
    %v3279 = vpop.permute.xlu0 %3278
    %3280 = vrot.lane.b32.xlu0 %v2738, 16
    %v3281 = vpop.permute.xlu0 %3280
    %3282 = vrot.lane.b32.xlu0 %v2741, 16
    %v3283 = vpop.permute.xlu0 %3282
    %3284 = vrot.lane.b32.xlu0 %v2743, 16
    %v3285 = vpop.permute.xlu0 %3284
    %3286 = vrot.lane.b32.xlu0 %v2746, 16
    %v3287 = vpop.permute.xlu0 %3286
    %3288 = vrot.lane.b32.xlu0 %v2748, 16
    %v3289 = vpop.permute.xlu0 %3288
    %3290 = vrot.lane.b32.xlu0 %v2751, 16
    %v3291 = vpop.permute.xlu0 %3290
    %3292 = vrot.lane.b32.xlu0 %v2753, 16
    %v3293 = vpop.permute.xlu0 %3292
    %3294 = vrot.lane.b32.xlu0 %v2756, 16
    %v3295 = vpop.permute.xlu0 %3294
    %3296 = vrot.lane.b32.xlu0 %v2758, 16
    %v3297 = vpop.permute.xlu0 %3296
    %3298 = vrot.lane.b32.xlu0 %v2761, 16
    %v3299 = vpop.permute.xlu0 %3298
    %3300 = vrot.lane.b32.xlu0 %v2763, 16
    %v3301 = vpop.permute.xlu0 %3300
    %3302 = vrot.lane.b32.xlu0 %v2766, 16
    %v3303 = vpop.permute.xlu0 %3302
    %3304 = vrot.lane.b32.xlu0 %v2768, 16
    %v3305 = vpop.permute.xlu0 %3304
    %3306 = vrot.lane.b32.xlu0 %v2771, 16
    %v3307 = vpop.permute.xlu0 %3306
    %3308 = vrot.lane.b32.xlu0 %v2773, 16
    %v3309 = vpop.permute.xlu0 %3308
    %3310 = vrot.lane.b32.xlu0 %v2776, 16
    %v3311 = vpop.permute.xlu0 %3310
    %3312 = vrot.lane.b32.xlu0 %v2778, 16
    %v3313 = vpop.permute.xlu0 %3312
    %3314 = vrot.lane.b32.xlu0 %v2781, 16
    %v3315 = vpop.permute.xlu0 %3314
    %3316 = vrot.lane.b32.xlu0 %v2783, 16
    %v3317 = vpop.permute.xlu0 %3316
    %3318 = vrot.lane.b32.xlu0 %v2786, 16
    %v3319 = vpop.permute.xlu0 %3318
    %3320 = vrot.lane.b32.xlu0 %v2788, 16
    %v3321 = vpop.permute.xlu0 %3320
    %3322 = vrot.lane.b32.xlu0 %v2791, 16
    %v3323 = vpop.permute.xlu0 %3322
    %3324 = vrot.lane.b32.xlu0 %v2793, 16
    %v3325 = vpop.permute.xlu0 %3324
    %3326 = vrot.lane.b32.xlu0 %v2796, 16
    %v3327 = vpop.permute.xlu0 %3326
    %3328 = vrot.lane.b32.xlu0 %v2798, 16
    %v3329 = vpop.permute.xlu0 %3328
    %3330 = vrot.lane.b32.xlu0 %v2801, 16
    %v3331 = vpop.permute.xlu0 %3330
    %3332 = vrot.lane.b32.xlu0 %v2803, 16
    %v3333 = vpop.permute.xlu0 %3332
    %3334 = vrot.lane.b32.xlu0 %v2806, 16
    %v3335 = vpop.permute.xlu0 %3334
    %3336 = vrot.lane.b32.xlu0 %v2808, 16
    %v3337 = vpop.permute.xlu0 %3336
    %3338 = vrot.lane.b32.xlu0 %v2811, 16
    %v3339 = vpop.permute.xlu0 %3338
    %3340 = vrot.lane.b32.xlu0 %v2813, 16
    %v3341 = vpop.permute.xlu0 %3340
    %3342 = vrot.lane.b32.xlu0 %v2816, 16
    %v3343 = vpop.permute.xlu0 %3342
    %3344 = vrot.lane.b32.xlu0 %v2818, 16
    %v3345 = vpop.permute.xlu0 %3344
    %3346 = vrot.lane.b32.xlu0 %v2821, 16
    %v3347 = vpop.permute.xlu0 %3346
    %3348 = vrot.lane.b32.xlu0 %v2823, 16
    %v3349 = vpop.permute.xlu0 %3348
    %3350 = vrot.lane.b32.xlu0 %v2826, 16
    %v3351 = vpop.permute.xlu0 %3350
    %3352 = vrot.lane.b32.xlu0 %v2828, 16
    %v3353 = vpop.permute.xlu0 %3352
    %3354 = vrot.lane.b32.xlu0 %v2831, 16
    %v3355 = vpop.permute.xlu0 %3354
    %3356 = vrot.lane.b32.xlu0 %v2833, 16
    %v3357 = vpop.permute.xlu0 %3356
    %3358 = vrot.lane.b32.xlu0 %v2836, 16
    %v3359 = vpop.permute.xlu0 %3358
    %3360 = vrot.lane.b32.xlu0 %v2838, 16
    %v3361 = vpop.permute.xlu0 %3360
    %3362 = vrot.lane.b32.xlu0 %v2841, 16
    %v3363 = vpop.permute.xlu0 %3362
    %3364 = vrot.lane.b32.xlu0 %v2843, 16
    %v3365 = vpop.permute.xlu0 %3364
    %3366 = vrot.lane.b32.xlu0 %v2846, 16
    %v3367 = vpop.permute.xlu0 %3366
    %3368 = vrot.lane.b32.xlu0 %v2848, 16
    %v3369 = vpop.permute.xlu0 %3368
    %3370 = vrot.lane.b32.xlu0 %v2851, 16
    %v3371 = vpop.permute.xlu0 %3370
    %3372 = vrot.lane.b32.xlu0 %v2853, 16
    %v3373 = vpop.permute.xlu0 %3372
    %3374 = vrot.lane.b32.xlu0 %v2856, 16
    %v3375 = vpop.permute.xlu0 %3374
    %3376 = vrot.lane.b32.xlu0 %v2858, 16
    %v3377 = vpop.permute.xlu0 %3376
    %3378 = vrot.lane.b32.xlu0 %v2861, 16
    %v3379 = vpop.permute.xlu0 %3378
    %3380 = vrot.lane.b32.xlu0 %v2863, 16
    %v3381 = vpop.permute.xlu0 %3380
    %3382 = vrot.lane.b32.xlu0 %v2866, 16
    %v3383 = vpop.permute.xlu0 %3382
    %3384 = vrot.lane.b32.xlu0 %v2868, 16
    %v3385 = vpop.permute.xlu0 %3384
    %3386 = vrot.lane.b32.xlu0 %v2871, 16
    %v3387 = vpop.permute.xlu0 %3386
    %3388 = vrot.lane.b32.xlu0 %v2873, 16
    %v3389 = vpop.permute.xlu0 %3388
    %3390 = vrot.lane.b32.xlu0 %v2876, 16
    %v3391 = vpop.permute.xlu0 %3390
    %3392 = vrot.lane.b32.xlu0 %v2878, 16
    %v3393 = vpop.permute.xlu0 %3392
    %3394 = vrot.lane.b32.xlu0 %v2881, 16
    %v3395 = vpop.permute.xlu0 %3394
    %3396 = vrot.lane.b32.xlu0 %v2883, 16
    %v3397 = vpop.permute.xlu0 %3396
    %3398 = vrot.lane.b32.xlu0 %v2886, 16
    %v3399 = vpop.permute.xlu0 %3398
    %3400 = vrot.lane.b32.xlu0 %v2888, 16
    %v3401 = vpop.permute.xlu0 %3400
    %3402 = vrot.lane.b32.xlu0 %v2891, 16
    %v3403 = vpop.permute.xlu0 %3402
    %3404 = vrot.lane.b32.xlu0 %v2893, 16
    %v3405 = vpop.permute.xlu0 %3404
    %3678 = vrot.lane.b32.xlu0 %v31, 24
    %v3679 = vpop.permute.xlu0 %3678
    %3680 = vrot.lane.b32.xlu0 %v32, 24
    %v3681 = vpop.permute.xlu0 %3680
    %3682 = vrot.lane.b32.xlu0 %v34, 24
    %v3683 = vpop.permute.xlu0 %3682
    %3684 = vrot.lane.b32.xlu0 %v35, 24
    %v3685 = vpop.permute.xlu0 %3684
    %3686 = vrot.lane.b32.xlu0 %v37, 24
    %v3687 = vpop.permute.xlu0 %3686
    %3688 = vrot.lane.b32.xlu0 %v38, 24
    %v3689 = vpop.permute.xlu0 %3688
    %3690 = vrot.lane.b32.xlu0 %v40, 24
    %v3691 = vpop.permute.xlu0 %3690
    %3692 = vrot.lane.b32.xlu0 %v41, 24
    %v3693 = vpop.permute.xlu0 %3692
    %3694 = vrot.lane.b32.xlu0 %v43, 24
    %v3695 = vpop.permute.xlu0 %3694
    %3696 = vrot.lane.b32.xlu0 %v44, 24
    %v3697 = vpop.permute.xlu0 %3696
    %3698 = vrot.lane.b32.xlu0 %v46, 24
    %v3699 = vpop.permute.xlu0 %3698
    %3700 = vrot.lane.b32.xlu0 %v47, 24
    %v3701 = vpop.permute.xlu0 %3700
    %3702 = vrot.lane.b32.xlu0 %v49, 24
    %v3703 = vpop.permute.xlu0 %3702
    %3704 = vrot.lane.b32.xlu0 %v50, 24
    %v3705 = vpop.permute.xlu0 %3704
    %3706 = vrot.lane.b32.xlu0 %v52, 24
    %v3707 = vpop.permute.xlu0 %3706
    %3708 = vrot.lane.b32.xlu0 %v53, 24
    %v3709 = vpop.permute.xlu0 %3708
    %3710 = vrot.lane.b32.xlu0 %v55, 24
    %v3711 = vpop.permute.xlu0 %3710
    %3712 = vrot.lane.b32.xlu0 %v56, 24
    %v3713 = vpop.permute.xlu0 %3712
    %3714 = vrot.lane.b32.xlu0 %v58, 24
    %v3715 = vpop.permute.xlu0 %3714
    %3716 = vrot.lane.b32.xlu0 %v59, 24
    %v3717 = vpop.permute.xlu0 %3716
    %3718 = vrot.lane.b32.xlu0 %v61, 24
    %v3719 = vpop.permute.xlu0 %3718
    %3720 = vrot.lane.b32.xlu0 %v62, 24
    %v3721 = vpop.permute.xlu0 %3720
    %3722 = vrot.lane.b32.xlu0 %v64, 24
    %v3723 = vpop.permute.xlu0 %3722
    %3724 = vrot.lane.b32.xlu0 %v65, 24
    %v3725 = vpop.permute.xlu0 %3724
    %3726 = vrot.lane.b32.xlu0 %v67, 24
    %v3727 = vpop.permute.xlu0 %3726
    %3728 = vrot.lane.b32.xlu0 %v68, 24
    %v3729 = vpop.permute.xlu0 %3728
    %3730 = vrot.lane.b32.xlu0 %v70, 24
    %v3731 = vpop.permute.xlu0 %3730
    %3732 = vrot.lane.b32.xlu0 %v71, 24
    %v3733 = vpop.permute.xlu0 %3732
    %3734 = vrot.lane.b32.xlu0 %v73, 24
    %v3735 = vpop.permute.xlu0 %3734
    %3736 = vrot.lane.b32.xlu0 %v74, 24
    %v3737 = vpop.permute.xlu0 %3736
    %3738 = vrot.lane.b32.xlu0 %v76, 24
    %v3739 = vpop.permute.xlu0 %3738
    %3740 = vrot.lane.b32.xlu0 %v77, 24
    %v3741 = vpop.permute.xlu0 %3740
    %3742 = vrot.lane.b32.xlu0 %v85, 24
    %v3743 = vpop.permute.xlu0 %3742
    %3744 = vrot.lane.b32.xlu0 %v86, 24
    %v3745 = vpop.permute.xlu0 %3744
    %3746 = vrot.lane.b32.xlu0 %v88, 24
    %v3747 = vpop.permute.xlu0 %3746
    %3748 = vrot.lane.b32.xlu0 %v89, 24
    %v3749 = vpop.permute.xlu0 %3748
    %3750 = vrot.lane.b32.xlu0 %v91, 24
    %v3751 = vpop.permute.xlu0 %3750
    %3752 = vrot.lane.b32.xlu0 %v92, 24
    %v3753 = vpop.permute.xlu0 %3752
    %3754 = vrot.lane.b32.xlu0 %v94, 24
    %v3755 = vpop.permute.xlu0 %3754
    %3756 = vrot.lane.b32.xlu0 %v95, 24
    %v3757 = vpop.permute.xlu0 %3756
    %3758 = vrot.lane.b32.xlu0 %v97, 24
    %v3759 = vpop.permute.xlu0 %3758
    %3760 = vrot.lane.b32.xlu0 %v98, 24
    %v3761 = vpop.permute.xlu0 %3760
    %3762 = vrot.lane.b32.xlu0 %v100, 24
    %v3763 = vpop.permute.xlu0 %3762
    %3764 = vrot.lane.b32.xlu0 %v101, 24
    %v3765 = vpop.permute.xlu0 %3764
    %3766 = vrot.lane.b32.xlu0 %v103, 24
    %v3767 = vpop.permute.xlu0 %3766
    %3768 = vrot.lane.b32.xlu0 %v104, 24
    %v3769 = vpop.permute.xlu0 %3768
    %3770 = vrot.lane.b32.xlu0 %v106, 24
    %v3771 = vpop.permute.xlu0 %3770
    %3772 = vrot.lane.b32.xlu0 %v107, 24
    %v3773 = vpop.permute.xlu0 %3772
    %3774 = vrot.lane.b32.xlu0 %v109, 24
    %v3775 = vpop.permute.xlu0 %3774
    %3776 = vrot.lane.b32.xlu0 %v110, 24
    %v3777 = vpop.permute.xlu0 %3776
    %3778 = vrot.lane.b32.xlu0 %v112, 24
    %v3779 = vpop.permute.xlu0 %3778
    %3780 = vrot.lane.b32.xlu0 %v113, 24
    %v3781 = vpop.permute.xlu0 %3780
    %3782 = vrot.lane.b32.xlu0 %v115, 24
    %v3783 = vpop.permute.xlu0 %3782
    %3784 = vrot.lane.b32.xlu0 %v116, 24
    %v3785 = vpop.permute.xlu0 %3784
    %3786 = vrot.lane.b32.xlu0 %v118, 24
    %v3787 = vpop.permute.xlu0 %3786
    %3788 = vrot.lane.b32.xlu0 %v119, 24
    %v3789 = vpop.permute.xlu0 %3788
    %3790 = vrot.lane.b32.xlu0 %v121, 24
    %v3791 = vpop.permute.xlu0 %3790
    %3792 = vrot.lane.b32.xlu0 %v122, 24
    %v3793 = vpop.permute.xlu0 %3792
    %3794 = vrot.lane.b32.xlu0 %v124, 24
    %v3795 = vpop.permute.xlu0 %3794
    %3796 = vrot.lane.b32.xlu0 %v125, 24
    %v3797 = vpop.permute.xlu0 %3796
    %3798 = vrot.lane.b32.xlu0 %v127, 24
    %v3799 = vpop.permute.xlu0 %3798
    %3800 = vrot.lane.b32.xlu0 %v128, 24
    %v3801 = vpop.permute.xlu0 %3800
    %3802 = vrot.lane.b32.xlu0 %v130, 24
    %v3803 = vpop.permute.xlu0 %3802
    %3804 = vrot.lane.b32.xlu0 %v131, 24
    %v3805 = vpop.permute.xlu0 %3804
    %3806 = vrot.lane.b32.xlu0 %v139, 24
    %v3807 = vpop.permute.xlu0 %3806
    %3808 = vrot.lane.b32.xlu0 %v140, 24
    %v3809 = vpop.permute.xlu0 %3808
    %3810 = vrot.lane.b32.xlu0 %v142, 24
    %v3811 = vpop.permute.xlu0 %3810
    %3812 = vrot.lane.b32.xlu0 %v143, 24
    %v3813 = vpop.permute.xlu0 %3812
    %3814 = vrot.lane.b32.xlu0 %v145, 24
    %v3815 = vpop.permute.xlu0 %3814
    %3816 = vrot.lane.b32.xlu0 %v146, 24
    %v3817 = vpop.permute.xlu0 %3816
    %3818 = vrot.lane.b32.xlu0 %v148, 24
    %v3819 = vpop.permute.xlu0 %3818
    %3820 = vrot.lane.b32.xlu0 %v149, 24
    %v3821 = vpop.permute.xlu0 %3820
    %3822 = vrot.lane.b32.xlu0 %v151, 24
    %v3823 = vpop.permute.xlu0 %3822
    %3824 = vrot.lane.b32.xlu0 %v152, 24
    %v3825 = vpop.permute.xlu0 %3824
    %3826 = vrot.lane.b32.xlu0 %v154, 24
    %v3827 = vpop.permute.xlu0 %3826
    %3828 = vrot.lane.b32.xlu0 %v155, 24
    %v3829 = vpop.permute.xlu0 %3828
    %3830 = vrot.lane.b32.xlu0 %v157, 24
    %v3831 = vpop.permute.xlu0 %3830
    %3832 = vrot.lane.b32.xlu0 %v158, 24
    %v3833 = vpop.permute.xlu0 %3832
    %3834 = vrot.lane.b32.xlu0 %v160, 24
    %v3835 = vpop.permute.xlu0 %3834
    %3836 = vrot.lane.b32.xlu0 %v161, 24
    %v3837 = vpop.permute.xlu0 %3836
    %3838 = vrot.lane.b32.xlu0 %v163, 24
    %v3839 = vpop.permute.xlu0 %3838
    %3840 = vrot.lane.b32.xlu0 %v164, 24
    %v3841 = vpop.permute.xlu0 %3840
    %3842 = vrot.lane.b32.xlu0 %v166, 24
    %v3843 = vpop.permute.xlu0 %3842
    %3844 = vrot.lane.b32.xlu0 %v167, 24
    %v3845 = vpop.permute.xlu0 %3844
    %3846 = vrot.lane.b32.xlu0 %v169, 24
    %v3847 = vpop.permute.xlu0 %3846
    %3848 = vrot.lane.b32.xlu0 %v170, 24
    %v3849 = vpop.permute.xlu0 %3848
    %3850 = vrot.lane.b32.xlu0 %v172, 24
    %v3851 = vpop.permute.xlu0 %3850
    %3852 = vrot.lane.b32.xlu0 %v173, 24
    %v3853 = vpop.permute.xlu0 %3852
    %3854 = vrot.lane.b32.xlu0 %v175, 24
    %v3855 = vpop.permute.xlu0 %3854
    %3856 = vrot.lane.b32.xlu0 %v176, 24
    %v3857 = vpop.permute.xlu0 %3856
    %3858 = vrot.lane.b32.xlu0 %v178, 24
    %v3859 = vpop.permute.xlu0 %3858
    %3860 = vrot.lane.b32.xlu0 %v179, 24
    %v3861 = vpop.permute.xlu0 %3860
    %3862 = vrot.lane.b32.xlu0 %v181, 24
    %v3863 = vpop.permute.xlu0 %3862
    %3864 = vrot.lane.b32.xlu0 %v182, 24
    %v3865 = vpop.permute.xlu0 %3864
    %3866 = vrot.lane.b32.xlu0 %v184, 24
    %v3867 = vpop.permute.xlu0 %3866
    %3868 = vrot.lane.b32.xlu0 %v185, 24
    %v3869 = vpop.permute.xlu0 %3868
    %3870 = vrot.lane.b32.xlu0 %v193, 24
    %v3871 = vpop.permute.xlu0 %3870
    %3872 = vrot.lane.b32.xlu0 %v194, 24
    %v3873 = vpop.permute.xlu0 %3872
    %3874 = vrot.lane.b32.xlu0 %v196, 24
    %v3875 = vpop.permute.xlu0 %3874
    %3876 = vrot.lane.b32.xlu0 %v197, 24
    %v3877 = vpop.permute.xlu0 %3876
    %3878 = vrot.lane.b32.xlu0 %v199, 24
    %v3879 = vpop.permute.xlu0 %3878
    %3880 = vrot.lane.b32.xlu0 %v200, 24
    %v3881 = vpop.permute.xlu0 %3880
    %3882 = vrot.lane.b32.xlu0 %v202, 24
    %v3883 = vpop.permute.xlu0 %3882
    %3884 = vrot.lane.b32.xlu0 %v203, 24
    %v3885 = vpop.permute.xlu0 %3884
    %3886 = vrot.lane.b32.xlu0 %v205, 24
    %v3887 = vpop.permute.xlu0 %3886
    %3888 = vrot.lane.b32.xlu0 %v206, 24
    %v3889 = vpop.permute.xlu0 %3888
    %3890 = vrot.lane.b32.xlu0 %v208, 24
    %v3891 = vpop.permute.xlu0 %3890
    %3892 = vrot.lane.b32.xlu0 %v209, 24
    %v3893 = vpop.permute.xlu0 %3892
    %3894 = vrot.lane.b32.xlu0 %v211, 24
    %v3895 = vpop.permute.xlu0 %3894
    %3896 = vrot.lane.b32.xlu0 %v212, 24
    %v3897 = vpop.permute.xlu0 %3896
    %3898 = vrot.lane.b32.xlu0 %v214, 24
    %v3899 = vpop.permute.xlu0 %3898
    %3900 = vrot.lane.b32.xlu0 %v215, 24
    %v3901 = vpop.permute.xlu0 %3900
    %3902 = vrot.lane.b32.xlu0 %v217, 24
    %v3903 = vpop.permute.xlu0 %3902
    %3904 = vrot.lane.b32.xlu0 %v218, 24
    %v3905 = vpop.permute.xlu0 %3904
    %3906 = vrot.lane.b32.xlu0 %v220, 24
    %v3907 = vpop.permute.xlu0 %3906
    %3908 = vrot.lane.b32.xlu0 %v221, 24
    %v3909 = vpop.permute.xlu0 %3908
    %3910 = vrot.lane.b32.xlu0 %v223, 24
    %v3911 = vpop.permute.xlu0 %3910
    %3912 = vrot.lane.b32.xlu0 %v224, 24
    %v3913 = vpop.permute.xlu0 %3912
    %3914 = vrot.lane.b32.xlu0 %v226, 24
    %v3915 = vpop.permute.xlu0 %3914
    %3916 = vrot.lane.b32.xlu0 %v227, 24
    %v3917 = vpop.permute.xlu0 %3916
    %3918 = vrot.lane.b32.xlu0 %v229, 24
    %v3919 = vpop.permute.xlu0 %3918
    %3920 = vrot.lane.b32.xlu0 %v230, 24
    %v3921 = vpop.permute.xlu0 %3920
    %3922 = vrot.lane.b32.xlu0 %v232, 24
    %v3923 = vpop.permute.xlu0 %3922
    %3924 = vrot.lane.b32.xlu0 %v233, 24
    %v3925 = vpop.permute.xlu0 %3924
    %3926 = vrot.lane.b32.xlu0 %v235, 24
    %v3927 = vpop.permute.xlu0 %3926
    %3928 = vrot.lane.b32.xlu0 %v236, 24
    %v3929 = vpop.permute.xlu0 %3928
    %3930 = vrot.lane.b32.xlu0 %v238, 24
    %v3931 = vpop.permute.xlu0 %3930
    %3932 = vrot.lane.b32.xlu0 %v239, 24
    %v3933 = vpop.permute.xlu0 %3932
    %3934 = vrot.lane.b32.xlu0 %v247, 24
    %v3935 = vpop.permute.xlu0 %3934
    %3936 = vrot.lane.b32.xlu0 %v248, 24
    %v3937 = vpop.permute.xlu0 %3936
    %3938 = vrot.lane.b32.xlu0 %v250, 24
    %v3939 = vpop.permute.xlu0 %3938
    %3940 = vrot.lane.b32.xlu0 %v251, 24
    %v3941 = vpop.permute.xlu0 %3940
    %3942 = vrot.lane.b32.xlu0 %v253, 24
    %v3943 = vpop.permute.xlu0 %3942
    %3944 = vrot.lane.b32.xlu0 %v254, 24
    %v3945 = vpop.permute.xlu0 %3944
    %3946 = vrot.lane.b32.xlu0 %v256, 24
    %v3947 = vpop.permute.xlu0 %3946
    %3948 = vrot.lane.b32.xlu0 %v257, 24
    %v3949 = vpop.permute.xlu0 %3948
    %3950 = vrot.lane.b32.xlu0 %v259, 24
    %v3951 = vpop.permute.xlu0 %3950
    %3952 = vrot.lane.b32.xlu0 %v260, 24
    %v3953 = vpop.permute.xlu0 %3952
    %3954 = vrot.lane.b32.xlu0 %v262, 24
    %v3955 = vpop.permute.xlu0 %3954
    %3956 = vrot.lane.b32.xlu0 %v263, 24
    %v3957 = vpop.permute.xlu0 %3956
    %3958 = vrot.lane.b32.xlu0 %v265, 24
    %v3959 = vpop.permute.xlu0 %3958
    %3960 = vrot.lane.b32.xlu0 %v266, 24
    %v3961 = vpop.permute.xlu0 %3960
    %3962 = vrot.lane.b32.xlu0 %v268, 24
    %v3963 = vpop.permute.xlu0 %3962
    %3964 = vrot.lane.b32.xlu0 %v269, 24
    %v3965 = vpop.permute.xlu0 %3964
    %3966 = vrot.lane.b32.xlu0 %v271, 24
    %v3967 = vpop.permute.xlu0 %3966
    %3968 = vrot.lane.b32.xlu0 %v272, 24
    %v3969 = vpop.permute.xlu0 %3968
    %3970 = vrot.lane.b32.xlu0 %v274, 24
    %v3971 = vpop.permute.xlu0 %3970
    %3972 = vrot.lane.b32.xlu0 %v275, 24
    %v3973 = vpop.permute.xlu0 %3972
    %3974 = vrot.lane.b32.xlu0 %v277, 24
    %v3975 = vpop.permute.xlu0 %3974
    %3976 = vrot.lane.b32.xlu0 %v278, 24
    %v3977 = vpop.permute.xlu0 %3976
    %3978 = vrot.lane.b32.xlu0 %v280, 24
    %v3979 = vpop.permute.xlu0 %3978
    %3980 = vrot.lane.b32.xlu0 %v281, 24
    %v3981 = vpop.permute.xlu0 %3980
    %3982 = vrot.lane.b32.xlu0 %v283, 24
    %v3983 = vpop.permute.xlu0 %3982
    %3984 = vrot.lane.b32.xlu0 %v284, 24
    %v3985 = vpop.permute.xlu0 %3984
    %3986 = vrot.lane.b32.xlu0 %v286, 24
    %v3987 = vpop.permute.xlu0 %3986
    %3988 = vrot.lane.b32.xlu0 %v287, 24
    %v3989 = vpop.permute.xlu0 %3988
    %3990 = vrot.lane.b32.xlu0 %v289, 24
    %v3991 = vpop.permute.xlu0 %3990
    %3992 = vrot.lane.b32.xlu0 %v290, 24
    %v3993 = vpop.permute.xlu0 %3992
    %3994 = vrot.lane.b32.xlu0 %v292, 24
    %v3995 = vpop.permute.xlu0 %3994
    %3996 = vrot.lane.b32.xlu0 %v293, 24
    %v3997 = vpop.permute.xlu0 %3996
    %3998 = vrot.lane.b32.xlu0 %v301, 24
    %v3999 = vpop.permute.xlu0 %3998
    %4000 = vrot.lane.b32.xlu0 %v302, 24
    %v4001 = vpop.permute.xlu0 %4000
    %4002 = vrot.lane.b32.xlu0 %v304, 24
    %v4003 = vpop.permute.xlu0 %4002
    %4004 = vrot.lane.b32.xlu0 %v305, 24
    %v4005 = vpop.permute.xlu0 %4004
    %4006 = vrot.lane.b32.xlu0 %v307, 24
    %v4007 = vpop.permute.xlu0 %4006
    %4008 = vrot.lane.b32.xlu0 %v308, 24
    %v4009 = vpop.permute.xlu0 %4008
    %4010 = vrot.lane.b32.xlu0 %v310, 24
    %v4011 = vpop.permute.xlu0 %4010
    %4012 = vrot.lane.b32.xlu0 %v311, 24
    %v4013 = vpop.permute.xlu0 %4012
    %4014 = vrot.lane.b32.xlu0 %v313, 24
    %v4015 = vpop.permute.xlu0 %4014
    %4016 = vrot.lane.b32.xlu0 %v314, 24
    %v4017 = vpop.permute.xlu0 %4016
    %4018 = vrot.lane.b32.xlu0 %v316, 24
    %v4019 = vpop.permute.xlu0 %4018
    %4020 = vrot.lane.b32.xlu0 %v317, 24
    %v4021 = vpop.permute.xlu0 %4020
    %4022 = vrot.lane.b32.xlu0 %v319, 24
    %v4023 = vpop.permute.xlu0 %4022
    %4024 = vrot.lane.b32.xlu0 %v320, 24
    %v4025 = vpop.permute.xlu0 %4024
    %4026 = vrot.lane.b32.xlu0 %v322, 24
    %v4027 = vpop.permute.xlu0 %4026
    %4028 = vrot.lane.b32.xlu0 %v323, 24
    %v4029 = vpop.permute.xlu0 %4028
    %4030 = vrot.lane.b32.xlu0 %v325, 24
    %v4031 = vpop.permute.xlu0 %4030
    %4032 = vrot.lane.b32.xlu0 %v326, 24
    %v4033 = vpop.permute.xlu0 %4032
    %4034 = vrot.lane.b32.xlu0 %v328, 24
    %v4035 = vpop.permute.xlu0 %4034
    %4036 = vrot.lane.b32.xlu0 %v329, 24
    %v4037 = vpop.permute.xlu0 %4036
    %4038 = vrot.lane.b32.xlu0 %v331, 24
    %v4039 = vpop.permute.xlu0 %4038
    %4040 = vrot.lane.b32.xlu0 %v332, 24
    %v4041 = vpop.permute.xlu0 %4040
    %4042 = vrot.lane.b32.xlu0 %v334, 24
    %v4043 = vpop.permute.xlu0 %4042
    %4044 = vrot.lane.b32.xlu0 %v335, 24
    %v4045 = vpop.permute.xlu0 %4044
    %4046 = vrot.lane.b32.xlu0 %v337, 24
    %v4047 = vpop.permute.xlu0 %4046
    %4048 = vrot.lane.b32.xlu0 %v338, 24
    %v4049 = vpop.permute.xlu0 %4048
    %4050 = vrot.lane.b32.xlu0 %v340, 24
    %v4051 = vpop.permute.xlu0 %4050
    %4052 = vrot.lane.b32.xlu0 %v341, 24
    %v4053 = vpop.permute.xlu0 %4052
    %4054 = vrot.lane.b32.xlu0 %v343, 24
    %v4055 = vpop.permute.xlu0 %4054
    %4056 = vrot.lane.b32.xlu0 %v344, 24
    %v4057 = vpop.permute.xlu0 %4056
    %4058 = vrot.lane.b32.xlu0 %v346, 24
    %v4059 = vpop.permute.xlu0 %4058
    %4060 = vrot.lane.b32.xlu0 %v347, 24
    %v4061 = vpop.permute.xlu0 %4060
    %4062 = vrot.lane.b32.xlu0 %v355, 24
    %v4063 = vpop.permute.xlu0 %4062
    %4064 = vrot.lane.b32.xlu0 %v356, 24
    %v4065 = vpop.permute.xlu0 %4064
    %4066 = vrot.lane.b32.xlu0 %v358, 24
    %v4067 = vpop.permute.xlu0 %4066
    %4068 = vrot.lane.b32.xlu0 %v359, 24
    %v4069 = vpop.permute.xlu0 %4068
    %4070 = vrot.lane.b32.xlu0 %v361, 24
    %v4071 = vpop.permute.xlu0 %4070
    %4072 = vrot.lane.b32.xlu0 %v362, 24
    %v4073 = vpop.permute.xlu0 %4072
    %4074 = vrot.lane.b32.xlu0 %v364, 24
    %v4075 = vpop.permute.xlu0 %4074
    %4076 = vrot.lane.b32.xlu0 %v365, 24
    %v4077 = vpop.permute.xlu0 %4076
    %4078 = vrot.lane.b32.xlu0 %v367, 24
    %v4079 = vpop.permute.xlu0 %4078
    %4080 = vrot.lane.b32.xlu0 %v368, 24
    %v4081 = vpop.permute.xlu0 %4080
    %4082 = vrot.lane.b32.xlu0 %v370, 24
    %v4083 = vpop.permute.xlu0 %4082
    %4084 = vrot.lane.b32.xlu0 %v371, 24
    %v4085 = vpop.permute.xlu0 %4084
    %4086 = vrot.lane.b32.xlu0 %v373, 24
    %v4087 = vpop.permute.xlu0 %4086
    %4088 = vrot.lane.b32.xlu0 %v374, 24
    %v4089 = vpop.permute.xlu0 %4088
    %4090 = vrot.lane.b32.xlu0 %v376, 24
    %v4091 = vpop.permute.xlu0 %4090
    %4092 = vrot.lane.b32.xlu0 %v377, 24
    %v4093 = vpop.permute.xlu0 %4092
    %4094 = vrot.lane.b32.xlu0 %v379, 24
    %v4095 = vpop.permute.xlu0 %4094
    %4096 = vrot.lane.b32.xlu0 %v380, 24
    %v4097 = vpop.permute.xlu0 %4096
    %4098 = vrot.lane.b32.xlu0 %v382, 24
    %v4099 = vpop.permute.xlu0 %4098
    %4100 = vrot.lane.b32.xlu0 %v383, 24
    %v4101 = vpop.permute.xlu0 %4100
    %4102 = vrot.lane.b32.xlu0 %v385, 24
    %v4103 = vpop.permute.xlu0 %4102
    %4104 = vrot.lane.b32.xlu0 %v386, 24
    %v4105 = vpop.permute.xlu0 %4104
    %4106 = vrot.lane.b32.xlu0 %v388, 24
    %v4107 = vpop.permute.xlu0 %4106
    %4108 = vrot.lane.b32.xlu0 %v389, 24
    %v4109 = vpop.permute.xlu0 %4108
    %4110 = vrot.lane.b32.xlu0 %v391, 24
    %v4111 = vpop.permute.xlu0 %4110
    %4112 = vrot.lane.b32.xlu0 %v392, 24
    %v4113 = vpop.permute.xlu0 %4112
    %4114 = vrot.lane.b32.xlu0 %v394, 24
    %v4115 = vpop.permute.xlu0 %4114
    %4116 = vrot.lane.b32.xlu0 %v395, 24
    %v4117 = vpop.permute.xlu0 %4116
    %4118 = vrot.lane.b32.xlu0 %v397, 24
    %v4119 = vpop.permute.xlu0 %4118
    %4120 = vrot.lane.b32.xlu0 %v398, 24
    %v4121 = vpop.permute.xlu0 %4120
    %4122 = vrot.lane.b32.xlu0 %v400, 24
    %v4123 = vpop.permute.xlu0 %4122
    %4124 = vrot.lane.b32.xlu0 %v401, 24
    %v4125 = vpop.permute.xlu0 %4124
    %4126 = vrot.lane.b32.xlu0 %v409, 24
    %v4127 = vpop.permute.xlu0 %4126
    %4128 = vrot.lane.b32.xlu0 %v410, 24
    %v4129 = vpop.permute.xlu0 %4128
    %4130 = vrot.lane.b32.xlu0 %v412, 24
    %v4131 = vpop.permute.xlu0 %4130
    %4132 = vrot.lane.b32.xlu0 %v413, 24
    %v4133 = vpop.permute.xlu0 %4132
    %4134 = vrot.lane.b32.xlu0 %v415, 24
    %v4135 = vpop.permute.xlu0 %4134
    %4136 = vrot.lane.b32.xlu0 %v416, 24
    %v4137 = vpop.permute.xlu0 %4136
    %4138 = vrot.lane.b32.xlu0 %v418, 24
    %v4139 = vpop.permute.xlu0 %4138
    %4140 = vrot.lane.b32.xlu0 %v419, 24
    %v4141 = vpop.permute.xlu0 %4140
    %4142 = vrot.lane.b32.xlu0 %v421, 24
    %v4143 = vpop.permute.xlu0 %4142
    %4144 = vrot.lane.b32.xlu0 %v422, 24
    %v4145 = vpop.permute.xlu0 %4144
    %4146 = vrot.lane.b32.xlu0 %v424, 24
    %v4147 = vpop.permute.xlu0 %4146
    %4148 = vrot.lane.b32.xlu0 %v425, 24
    %v4149 = vpop.permute.xlu0 %4148
    %4150 = vrot.lane.b32.xlu0 %v427, 24
    %v4151 = vpop.permute.xlu0 %4150
    %4152 = vrot.lane.b32.xlu0 %v428, 24
    %v4153 = vpop.permute.xlu0 %4152
    %4154 = vrot.lane.b32.xlu0 %v430, 24
    %v4155 = vpop.permute.xlu0 %4154
    %4156 = vrot.lane.b32.xlu0 %v431, 24
    %v4157 = vpop.permute.xlu0 %4156
    %4158 = vrot.lane.b32.xlu0 %v433, 24
    %v4159 = vpop.permute.xlu0 %4158
    %4160 = vrot.lane.b32.xlu0 %v434, 24
    %v4161 = vpop.permute.xlu0 %4160
    %4162 = vrot.lane.b32.xlu0 %v436, 24
    %v4163 = vpop.permute.xlu0 %4162
    %4164 = vrot.lane.b32.xlu0 %v437, 24
    %v4165 = vpop.permute.xlu0 %4164
    %4166 = vrot.lane.b32.xlu0 %v439, 24
    %v4167 = vpop.permute.xlu0 %4166
    %4168 = vrot.lane.b32.xlu0 %v440, 24
    %v4169 = vpop.permute.xlu0 %4168
    %4170 = vrot.lane.b32.xlu0 %v442, 24
    %v4171 = vpop.permute.xlu0 %4170
    %4172 = vrot.lane.b32.xlu0 %v443, 24
    %v4173 = vpop.permute.xlu0 %4172
    %4174 = vrot.lane.b32.xlu0 %v445, 24
    %v4175 = vpop.permute.xlu0 %4174
    %4176 = vrot.lane.b32.xlu0 %v446, 24
    %v4177 = vpop.permute.xlu0 %4176
    %4178 = vrot.lane.b32.xlu0 %v448, 24
    %v4179 = vpop.permute.xlu0 %4178
    %4180 = vrot.lane.b32.xlu0 %v449, 24
    %v4181 = vpop.permute.xlu0 %4180
    %4182 = vrot.lane.b32.xlu0 %v451, 24
    %v4183 = vpop.permute.xlu0 %4182
    %4184 = vrot.lane.b32.xlu0 %v452, 24
    %v4185 = vpop.permute.xlu0 %4184
    %4186 = vrot.lane.b32.xlu0 %v454, 24
    %v4187 = vpop.permute.xlu0 %4186
    %4188 = vrot.lane.b32.xlu0 %v455, 24
    %v4189 = vpop.permute.xlu0 %4188
    %v4454 = vrot.slane %v76, 1
    %v4455 = vrot.slane %v77, 1
    %v4456 = vsel %vm844, %v4454, %v4455
    %v4457 = vrot.slane %v78, 1
    %v4458 = vsel %vm844, %v4455, %v4457
    %v4459 = vrot.slane %v130, 1
    %v4460 = vrot.slane %v131, 1
    %v4461 = vsel %vm844, %v4459, %v4460
    %v4462 = vrot.slane %v132, 1
    %v4463 = vsel %vm844, %v4460, %v4462
    %v4464 = vrot.slane %v184, 1
    %v4465 = vrot.slane %v185, 1
    %v4466 = vsel %vm844, %v4464, %v4465
    %v4467 = vrot.slane %v186, 1
    %v4468 = vsel %vm844, %v4465, %v4467
    %v4469 = vrot.slane %v238, 1
    %v4470 = vrot.slane %v239, 1
    %v4471 = vsel %vm844, %v4469, %v4470
    %v4472 = vrot.slane %v240, 1
    %v4473 = vsel %vm844, %v4470, %v4472
    %v4474 = vrot.slane %v292, 1
    %v4475 = vrot.slane %v293, 1
    %v4476 = vsel %vm844, %v4474, %v4475
    %v4477 = vrot.slane %v294, 1
    %v4478 = vsel %vm844, %v4475, %v4477
    %v4479 = vrot.slane %v346, 1
    %v4480 = vrot.slane %v347, 1
    %v4481 = vsel %vm844, %v4479, %v4480
    %v4482 = vrot.slane %v348, 1
    %v4483 = vsel %vm844, %v4480, %v4482
    %v4484 = vrot.slane %v400, 1
    %v4485 = vrot.slane %v401, 1
    %v4486 = vsel %vm844, %v4484, %v4485
    %v4487 = vrot.slane %v402, 1
    %v4488 = vsel %vm844, %v4485, %v4487
    %v4489 = vrot.slane %v454, 1
    %v4490 = vrot.slane %v455, 1
    %v4491 = vsel %vm844, %v4489, %v4490
    %v4492 = vrot.slane %v456, 1
    %v4493 = vsel %vm844, %v4490, %v4492
    %4494 = vrot.lane.b32.xlu0 %v852, 32
    %v4495 = vpop.permute.xlu0 %4494
    %4496 = vrot.lane.b32.xlu0 %v854, 32
    %v4497 = vpop.permute.xlu0 %4496
    %4498 = vrot.lane.b32.xlu0 %v857, 32
    %v4499 = vpop.permute.xlu0 %4498
    %4500 = vrot.lane.b32.xlu0 %v859, 32
    %v4501 = vpop.permute.xlu0 %4500
    %4502 = vrot.lane.b32.xlu0 %v862, 32
    %v4503 = vpop.permute.xlu0 %4502
    %4504 = vrot.lane.b32.xlu0 %v864, 32
    %v4505 = vpop.permute.xlu0 %4504
    %4506 = vrot.lane.b32.xlu0 %v867, 32
    %v4507 = vpop.permute.xlu0 %4506
    %4508 = vrot.lane.b32.xlu0 %v869, 32
    %v4509 = vpop.permute.xlu0 %4508
    %4510 = vrot.lane.b32.xlu0 %v872, 32
    %v4511 = vpop.permute.xlu0 %4510
    %4512 = vrot.lane.b32.xlu0 %v874, 32
    %v4513 = vpop.permute.xlu0 %4512
    %4514 = vrot.lane.b32.xlu0 %v877, 32
    %v4515 = vpop.permute.xlu0 %4514
    %4516 = vrot.lane.b32.xlu0 %v879, 32
    %v4517 = vpop.permute.xlu0 %4516
    %4518 = vrot.lane.b32.xlu0 %v882, 32
    %v4519 = vpop.permute.xlu0 %4518
    %4520 = vrot.lane.b32.xlu0 %v884, 32
    %v4521 = vpop.permute.xlu0 %4520
    %4522 = vrot.lane.b32.xlu0 %v887, 32
    %v4523 = vpop.permute.xlu0 %4522
    %4524 = vrot.lane.b32.xlu0 %v889, 32
    %v4525 = vpop.permute.xlu0 %4524
    %4526 = vrot.lane.b32.xlu0 %v892, 32
    %v4527 = vpop.permute.xlu0 %4526
    %4528 = vrot.lane.b32.xlu0 %v894, 32
    %v4529 = vpop.permute.xlu0 %4528
    %4530 = vrot.lane.b32.xlu0 %v897, 32
    %v4531 = vpop.permute.xlu0 %4530
    %4532 = vrot.lane.b32.xlu0 %v899, 32
    %v4533 = vpop.permute.xlu0 %4532
    %4534 = vrot.lane.b32.xlu0 %v902, 32
    %v4535 = vpop.permute.xlu0 %4534
    %4536 = vrot.lane.b32.xlu0 %v904, 32
    %v4537 = vpop.permute.xlu0 %4536
    %4538 = vrot.lane.b32.xlu0 %v907, 32
    %v4539 = vpop.permute.xlu0 %4538
    %4540 = vrot.lane.b32.xlu0 %v909, 32
    %v4541 = vpop.permute.xlu0 %4540
    %4542 = vrot.lane.b32.xlu0 %v912, 32
    %v4543 = vpop.permute.xlu0 %4542
    %4544 = vrot.lane.b32.xlu0 %v914, 32
    %v4545 = vpop.permute.xlu0 %4544
    %4546 = vrot.lane.b32.xlu0 %v917, 32
    %v4547 = vpop.permute.xlu0 %4546
    %4548 = vrot.lane.b32.xlu0 %v919, 32
    %v4549 = vpop.permute.xlu0 %4548
    %4550 = vrot.lane.b32.xlu0 %v922, 32
    %v4551 = vpop.permute.xlu0 %4550
    %4552 = vrot.lane.b32.xlu0 %v924, 32
    %v4553 = vpop.permute.xlu0 %4552
    %4554 = vrot.lane.b32.xlu0 %v4456, 32
    %v4555 = vpop.permute.xlu0 %4554
    %4556 = vrot.lane.b32.xlu0 %v4458, 32
    %v4557 = vpop.permute.xlu0 %4556
    %4558 = vrot.lane.b32.xlu0 %v932, 32
    %v4559 = vpop.permute.xlu0 %4558
    %4560 = vrot.lane.b32.xlu0 %v934, 32
    %v4561 = vpop.permute.xlu0 %4560
    %4562 = vrot.lane.b32.xlu0 %v937, 32
    %v4563 = vpop.permute.xlu0 %4562
    %4564 = vrot.lane.b32.xlu0 %v939, 32
    %v4565 = vpop.permute.xlu0 %4564
    %4566 = vrot.lane.b32.xlu0 %v942, 32
    %v4567 = vpop.permute.xlu0 %4566
    %4568 = vrot.lane.b32.xlu0 %v944, 32
    %v4569 = vpop.permute.xlu0 %4568
    %4570 = vrot.lane.b32.xlu0 %v947, 32
    %v4571 = vpop.permute.xlu0 %4570
    %4572 = vrot.lane.b32.xlu0 %v949, 32
    %v4573 = vpop.permute.xlu0 %4572
    %4574 = vrot.lane.b32.xlu0 %v952, 32
    %v4575 = vpop.permute.xlu0 %4574
    %4576 = vrot.lane.b32.xlu0 %v954, 32
    %v4577 = vpop.permute.xlu0 %4576
    %4578 = vrot.lane.b32.xlu0 %v957, 32
    %v4579 = vpop.permute.xlu0 %4578
    %4580 = vrot.lane.b32.xlu0 %v959, 32
    %v4581 = vpop.permute.xlu0 %4580
    %4582 = vrot.lane.b32.xlu0 %v962, 32
    %v4583 = vpop.permute.xlu0 %4582
    %4584 = vrot.lane.b32.xlu0 %v964, 32
    %v4585 = vpop.permute.xlu0 %4584
    %4586 = vrot.lane.b32.xlu0 %v967, 32
    %v4587 = vpop.permute.xlu0 %4586
    %4588 = vrot.lane.b32.xlu0 %v969, 32
    %v4589 = vpop.permute.xlu0 %4588
    %4590 = vrot.lane.b32.xlu0 %v972, 32
    %v4591 = vpop.permute.xlu0 %4590
    %4592 = vrot.lane.b32.xlu0 %v974, 32
    %v4593 = vpop.permute.xlu0 %4592
    %4594 = vrot.lane.b32.xlu0 %v977, 32
    %v4595 = vpop.permute.xlu0 %4594
    %4596 = vrot.lane.b32.xlu0 %v979, 32
    %v4597 = vpop.permute.xlu0 %4596
    %4598 = vrot.lane.b32.xlu0 %v982, 32
    %v4599 = vpop.permute.xlu0 %4598
    %4600 = vrot.lane.b32.xlu0 %v984, 32
    %v4601 = vpop.permute.xlu0 %4600
    %4602 = vrot.lane.b32.xlu0 %v987, 32
    %v4603 = vpop.permute.xlu0 %4602
    %4604 = vrot.lane.b32.xlu0 %v989, 32
    %v4605 = vpop.permute.xlu0 %4604
    %4606 = vrot.lane.b32.xlu0 %v992, 32
    %v4607 = vpop.permute.xlu0 %4606
    %4608 = vrot.lane.b32.xlu0 %v994, 32
    %v4609 = vpop.permute.xlu0 %4608
    %4610 = vrot.lane.b32.xlu0 %v997, 32
    %v4611 = vpop.permute.xlu0 %4610
    %4612 = vrot.lane.b32.xlu0 %v999, 32
    %v4613 = vpop.permute.xlu0 %4612
    %4614 = vrot.lane.b32.xlu0 %v1002, 32
    %v4615 = vpop.permute.xlu0 %4614
    %4616 = vrot.lane.b32.xlu0 %v1004, 32
    %v4617 = vpop.permute.xlu0 %4616
    %4618 = vrot.lane.b32.xlu0 %v4461, 32
    %v4619 = vpop.permute.xlu0 %4618
    %4620 = vrot.lane.b32.xlu0 %v4463, 32
    %v4621 = vpop.permute.xlu0 %4620
    %4622 = vrot.lane.b32.xlu0 %v1012, 32
    %v4623 = vpop.permute.xlu0 %4622
    %4624 = vrot.lane.b32.xlu0 %v1014, 32
    %v4625 = vpop.permute.xlu0 %4624
    %4626 = vrot.lane.b32.xlu0 %v1017, 32
    %v4627 = vpop.permute.xlu0 %4626
    %4628 = vrot.lane.b32.xlu0 %v1019, 32
    %v4629 = vpop.permute.xlu0 %4628
    %4630 = vrot.lane.b32.xlu0 %v1022, 32
    %v4631 = vpop.permute.xlu0 %4630
    %4632 = vrot.lane.b32.xlu0 %v1024, 32
    %v4633 = vpop.permute.xlu0 %4632
    %4634 = vrot.lane.b32.xlu0 %v1027, 32
    %v4635 = vpop.permute.xlu0 %4634
    %4636 = vrot.lane.b32.xlu0 %v1029, 32
    %v4637 = vpop.permute.xlu0 %4636
    %4638 = vrot.lane.b32.xlu0 %v1032, 32
    %v4639 = vpop.permute.xlu0 %4638
    %4640 = vrot.lane.b32.xlu0 %v1034, 32
    %v4641 = vpop.permute.xlu0 %4640
    %4642 = vrot.lane.b32.xlu0 %v1037, 32
    %v4643 = vpop.permute.xlu0 %4642
    %4644 = vrot.lane.b32.xlu0 %v1039, 32
    %v4645 = vpop.permute.xlu0 %4644
    %4646 = vrot.lane.b32.xlu0 %v1042, 32
    %v4647 = vpop.permute.xlu0 %4646
    %4648 = vrot.lane.b32.xlu0 %v1044, 32
    %v4649 = vpop.permute.xlu0 %4648
    %4650 = vrot.lane.b32.xlu0 %v1047, 32
    %v4651 = vpop.permute.xlu0 %4650
    %4652 = vrot.lane.b32.xlu0 %v1049, 32
    %v4653 = vpop.permute.xlu0 %4652
    %4654 = vrot.lane.b32.xlu0 %v1052, 32
    %v4655 = vpop.permute.xlu0 %4654
    %4656 = vrot.lane.b32.xlu0 %v1054, 32
    %v4657 = vpop.permute.xlu0 %4656
    %4658 = vrot.lane.b32.xlu0 %v1057, 32
    %v4659 = vpop.permute.xlu0 %4658
    %4660 = vrot.lane.b32.xlu0 %v1059, 32
    %v4661 = vpop.permute.xlu0 %4660
    %4662 = vrot.lane.b32.xlu0 %v1062, 32
    %v4663 = vpop.permute.xlu0 %4662
    %4664 = vrot.lane.b32.xlu0 %v1064, 32
    %v4665 = vpop.permute.xlu0 %4664
    %4666 = vrot.lane.b32.xlu0 %v1067, 32
    %v4667 = vpop.permute.xlu0 %4666
    %4668 = vrot.lane.b32.xlu0 %v1069, 32
    %v4669 = vpop.permute.xlu0 %4668
    %4670 = vrot.lane.b32.xlu0 %v1072, 32
    %v4671 = vpop.permute.xlu0 %4670
    %4672 = vrot.lane.b32.xlu0 %v1074, 32
    %v4673 = vpop.permute.xlu0 %4672
    %4674 = vrot.lane.b32.xlu0 %v1077, 32
    %v4675 = vpop.permute.xlu0 %4674
    %4676 = vrot.lane.b32.xlu0 %v1079, 32
    %v4677 = vpop.permute.xlu0 %4676
    %4678 = vrot.lane.b32.xlu0 %v1082, 32
    %v4679 = vpop.permute.xlu0 %4678
    %4680 = vrot.lane.b32.xlu0 %v1084, 32
    %v4681 = vpop.permute.xlu0 %4680
    %4682 = vrot.lane.b32.xlu0 %v4466, 32
    %v4683 = vpop.permute.xlu0 %4682
    %4684 = vrot.lane.b32.xlu0 %v4468, 32
    %v4685 = vpop.permute.xlu0 %4684
    %4686 = vrot.lane.b32.xlu0 %v1092, 32
    %v4687 = vpop.permute.xlu0 %4686
    %4688 = vrot.lane.b32.xlu0 %v1094, 32
    %v4689 = vpop.permute.xlu0 %4688
    %4690 = vrot.lane.b32.xlu0 %v1097, 32
    %v4691 = vpop.permute.xlu0 %4690
    %4692 = vrot.lane.b32.xlu0 %v1099, 32
    %v4693 = vpop.permute.xlu0 %4692
    %4694 = vrot.lane.b32.xlu0 %v1102, 32
    %v4695 = vpop.permute.xlu0 %4694
    %4696 = vrot.lane.b32.xlu0 %v1104, 32
    %v4697 = vpop.permute.xlu0 %4696
    %4698 = vrot.lane.b32.xlu0 %v1107, 32
    %v4699 = vpop.permute.xlu0 %4698
    %4700 = vrot.lane.b32.xlu0 %v1109, 32
    %v4701 = vpop.permute.xlu0 %4700
    %4702 = vrot.lane.b32.xlu0 %v1112, 32
    %v4703 = vpop.permute.xlu0 %4702
    %4704 = vrot.lane.b32.xlu0 %v1114, 32
    %v4705 = vpop.permute.xlu0 %4704
    %4706 = vrot.lane.b32.xlu0 %v1117, 32
    %v4707 = vpop.permute.xlu0 %4706
    %4708 = vrot.lane.b32.xlu0 %v1119, 32
    %v4709 = vpop.permute.xlu0 %4708
    %4710 = vrot.lane.b32.xlu0 %v1122, 32
    %v4711 = vpop.permute.xlu0 %4710
    %4712 = vrot.lane.b32.xlu0 %v1124, 32
    %v4713 = vpop.permute.xlu0 %4712
    %4714 = vrot.lane.b32.xlu0 %v1127, 32
    %v4715 = vpop.permute.xlu0 %4714
    %4716 = vrot.lane.b32.xlu0 %v1129, 32
    %v4717 = vpop.permute.xlu0 %4716
    %4718 = vrot.lane.b32.xlu0 %v1132, 32
    %v4719 = vpop.permute.xlu0 %4718
    %4720 = vrot.lane.b32.xlu0 %v1134, 32
    %v4721 = vpop.permute.xlu0 %4720
    %4722 = vrot.lane.b32.xlu0 %v1137, 32
    %v4723 = vpop.permute.xlu0 %4722
    %4724 = vrot.lane.b32.xlu0 %v1139, 32
    %v4725 = vpop.permute.xlu0 %4724
    %4726 = vrot.lane.b32.xlu0 %v1142, 32
    %v4727 = vpop.permute.xlu0 %4726
    %4728 = vrot.lane.b32.xlu0 %v1144, 32
    %v4729 = vpop.permute.xlu0 %4728
    %4730 = vrot.lane.b32.xlu0 %v1147, 32
    %v4731 = vpop.permute.xlu0 %4730
    %4732 = vrot.lane.b32.xlu0 %v1149, 32
    %v4733 = vpop.permute.xlu0 %4732
    %4734 = vrot.lane.b32.xlu0 %v1152, 32
    %v4735 = vpop.permute.xlu0 %4734
    %4736 = vrot.lane.b32.xlu0 %v1154, 32
    %v4737 = vpop.permute.xlu0 %4736
    %4738 = vrot.lane.b32.xlu0 %v1157, 32
    %v4739 = vpop.permute.xlu0 %4738
    %4740 = vrot.lane.b32.xlu0 %v1159, 32
    %v4741 = vpop.permute.xlu0 %4740
    %4742 = vrot.lane.b32.xlu0 %v1162, 32
    %v4743 = vpop.permute.xlu0 %4742
    %4744 = vrot.lane.b32.xlu0 %v1164, 32
    %v4745 = vpop.permute.xlu0 %4744
    %4746 = vrot.lane.b32.xlu0 %v4471, 32
    %v4747 = vpop.permute.xlu0 %4746
    %4748 = vrot.lane.b32.xlu0 %v4473, 32
    %v4749 = vpop.permute.xlu0 %4748
    %4750 = vrot.lane.b32.xlu0 %v1172, 32
    %v4751 = vpop.permute.xlu0 %4750
    %4752 = vrot.lane.b32.xlu0 %v1174, 32
    %v4753 = vpop.permute.xlu0 %4752
    %4754 = vrot.lane.b32.xlu0 %v1177, 32
    %v4755 = vpop.permute.xlu0 %4754
    %4756 = vrot.lane.b32.xlu0 %v1179, 32
    %v4757 = vpop.permute.xlu0 %4756
    %4758 = vrot.lane.b32.xlu0 %v1182, 32
    %v4759 = vpop.permute.xlu0 %4758
    %4760 = vrot.lane.b32.xlu0 %v1184, 32
    %v4761 = vpop.permute.xlu0 %4760
    %4762 = vrot.lane.b32.xlu0 %v1187, 32
    %v4763 = vpop.permute.xlu0 %4762
    %4764 = vrot.lane.b32.xlu0 %v1189, 32
    %v4765 = vpop.permute.xlu0 %4764
    %4766 = vrot.lane.b32.xlu0 %v1192, 32
    %v4767 = vpop.permute.xlu0 %4766
    %4768 = vrot.lane.b32.xlu0 %v1194, 32
    %v4769 = vpop.permute.xlu0 %4768
    %4770 = vrot.lane.b32.xlu0 %v1197, 32
    %v4771 = vpop.permute.xlu0 %4770
    %4772 = vrot.lane.b32.xlu0 %v1199, 32
    %v4773 = vpop.permute.xlu0 %4772
    %4774 = vrot.lane.b32.xlu0 %v1202, 32
    %v4775 = vpop.permute.xlu0 %4774
    %4776 = vrot.lane.b32.xlu0 %v1204, 32
    %v4777 = vpop.permute.xlu0 %4776
    %4778 = vrot.lane.b32.xlu0 %v1207, 32
    %v4779 = vpop.permute.xlu0 %4778
    %4780 = vrot.lane.b32.xlu0 %v1209, 32
    %v4781 = vpop.permute.xlu0 %4780
    %4782 = vrot.lane.b32.xlu0 %v1212, 32
    %v4783 = vpop.permute.xlu0 %4782
    %4784 = vrot.lane.b32.xlu0 %v1214, 32
    %v4785 = vpop.permute.xlu0 %4784
    %4786 = vrot.lane.b32.xlu0 %v1217, 32
    %v4787 = vpop.permute.xlu0 %4786
    %4788 = vrot.lane.b32.xlu0 %v1219, 32
    %v4789 = vpop.permute.xlu0 %4788
    %4790 = vrot.lane.b32.xlu0 %v1222, 32
    %v4791 = vpop.permute.xlu0 %4790
    %4792 = vrot.lane.b32.xlu0 %v1224, 32
    %v4793 = vpop.permute.xlu0 %4792
    %4794 = vrot.lane.b32.xlu0 %v1227, 32
    %v4795 = vpop.permute.xlu0 %4794
    %4796 = vrot.lane.b32.xlu0 %v1229, 32
    %v4797 = vpop.permute.xlu0 %4796
    %4798 = vrot.lane.b32.xlu0 %v1232, 32
    %v4799 = vpop.permute.xlu0 %4798
    %4800 = vrot.lane.b32.xlu0 %v1234, 32
    %v4801 = vpop.permute.xlu0 %4800
    %4802 = vrot.lane.b32.xlu0 %v1237, 32
    %v4803 = vpop.permute.xlu0 %4802
    %4804 = vrot.lane.b32.xlu0 %v1239, 32
    %v4805 = vpop.permute.xlu0 %4804
    %4806 = vrot.lane.b32.xlu0 %v1242, 32
    %v4807 = vpop.permute.xlu0 %4806
    %4808 = vrot.lane.b32.xlu0 %v1244, 32
    %v4809 = vpop.permute.xlu0 %4808
    %4810 = vrot.lane.b32.xlu0 %v4476, 32
    %v4811 = vpop.permute.xlu0 %4810
    %4812 = vrot.lane.b32.xlu0 %v4478, 32
    %v4813 = vpop.permute.xlu0 %4812
    %4814 = vrot.lane.b32.xlu0 %v1252, 32
    %v4815 = vpop.permute.xlu0 %4814
    %4816 = vrot.lane.b32.xlu0 %v1254, 32
    %v4817 = vpop.permute.xlu0 %4816
    %4818 = vrot.lane.b32.xlu0 %v1257, 32
    %v4819 = vpop.permute.xlu0 %4818
    %4820 = vrot.lane.b32.xlu0 %v1259, 32
    %v4821 = vpop.permute.xlu0 %4820
    %4822 = vrot.lane.b32.xlu0 %v1262, 32
    %v4823 = vpop.permute.xlu0 %4822
    %4824 = vrot.lane.b32.xlu0 %v1264, 32
    %v4825 = vpop.permute.xlu0 %4824
    %4826 = vrot.lane.b32.xlu0 %v1267, 32
    %v4827 = vpop.permute.xlu0 %4826
    %4828 = vrot.lane.b32.xlu0 %v1269, 32
    %v4829 = vpop.permute.xlu0 %4828
    %4830 = vrot.lane.b32.xlu0 %v1272, 32
    %v4831 = vpop.permute.xlu0 %4830
    %4832 = vrot.lane.b32.xlu0 %v1274, 32
    %v4833 = vpop.permute.xlu0 %4832
    %4834 = vrot.lane.b32.xlu0 %v1277, 32
    %v4835 = vpop.permute.xlu0 %4834
    %4836 = vrot.lane.b32.xlu0 %v1279, 32
    %v4837 = vpop.permute.xlu0 %4836
    %4838 = vrot.lane.b32.xlu0 %v1282, 32
    %v4839 = vpop.permute.xlu0 %4838
    %4840 = vrot.lane.b32.xlu0 %v1284, 32
    %v4841 = vpop.permute.xlu0 %4840
    %4842 = vrot.lane.b32.xlu0 %v1287, 32
    %v4843 = vpop.permute.xlu0 %4842
    %4844 = vrot.lane.b32.xlu0 %v1289, 32
    %v4845 = vpop.permute.xlu0 %4844
    %4846 = vrot.lane.b32.xlu0 %v1292, 32
    %v4847 = vpop.permute.xlu0 %4846
    %4848 = vrot.lane.b32.xlu0 %v1294, 32
    %v4849 = vpop.permute.xlu0 %4848
    %4850 = vrot.lane.b32.xlu0 %v1297, 32
    %v4851 = vpop.permute.xlu0 %4850
    %4852 = vrot.lane.b32.xlu0 %v1299, 32
    %v4853 = vpop.permute.xlu0 %4852
    %4854 = vrot.lane.b32.xlu0 %v1302, 32
    %v4855 = vpop.permute.xlu0 %4854
    %4856 = vrot.lane.b32.xlu0 %v1304, 32
    %v4857 = vpop.permute.xlu0 %4856
    %4858 = vrot.lane.b32.xlu0 %v1307, 32
    %v4859 = vpop.permute.xlu0 %4858
    %4860 = vrot.lane.b32.xlu0 %v1309, 32
    %v4861 = vpop.permute.xlu0 %4860
    %4862 = vrot.lane.b32.xlu0 %v1312, 32
    %v4863 = vpop.permute.xlu0 %4862
    %4864 = vrot.lane.b32.xlu0 %v1314, 32
    %v4865 = vpop.permute.xlu0 %4864
    %4866 = vrot.lane.b32.xlu0 %v1317, 32
    %v4867 = vpop.permute.xlu0 %4866
    %4868 = vrot.lane.b32.xlu0 %v1319, 32
    %v4869 = vpop.permute.xlu0 %4868
    %4870 = vrot.lane.b32.xlu0 %v1322, 32
    %v4871 = vpop.permute.xlu0 %4870
    %4872 = vrot.lane.b32.xlu0 %v1324, 32
    %v4873 = vpop.permute.xlu0 %4872
    %4874 = vrot.lane.b32.xlu0 %v4481, 32
    %v4875 = vpop.permute.xlu0 %4874
    %4876 = vrot.lane.b32.xlu0 %v4483, 32
    %v4877 = vpop.permute.xlu0 %4876
    %4878 = vrot.lane.b32.xlu0 %v1332, 32
    %v4879 = vpop.permute.xlu0 %4878
    %4880 = vrot.lane.b32.xlu0 %v1334, 32
    %v4881 = vpop.permute.xlu0 %4880
    %4882 = vrot.lane.b32.xlu0 %v1337, 32
    %v4883 = vpop.permute.xlu0 %4882
    %4884 = vrot.lane.b32.xlu0 %v1339, 32
    %v4885 = vpop.permute.xlu0 %4884
    %4886 = vrot.lane.b32.xlu0 %v1342, 32
    %v4887 = vpop.permute.xlu0 %4886
    %4888 = vrot.lane.b32.xlu0 %v1344, 32
    %v4889 = vpop.permute.xlu0 %4888
    %4890 = vrot.lane.b32.xlu0 %v1347, 32
    %v4891 = vpop.permute.xlu0 %4890
    %4892 = vrot.lane.b32.xlu0 %v1349, 32
    %v4893 = vpop.permute.xlu0 %4892
    %4894 = vrot.lane.b32.xlu0 %v1352, 32
    %v4895 = vpop.permute.xlu0 %4894
    %4896 = vrot.lane.b32.xlu0 %v1354, 32
    %v4897 = vpop.permute.xlu0 %4896
    %4898 = vrot.lane.b32.xlu0 %v1357, 32
    %v4899 = vpop.permute.xlu0 %4898
    %4900 = vrot.lane.b32.xlu0 %v1359, 32
    %v4901 = vpop.permute.xlu0 %4900
    %4902 = vrot.lane.b32.xlu0 %v1362, 32
    %v4903 = vpop.permute.xlu0 %4902
    %4904 = vrot.lane.b32.xlu0 %v1364, 32
    %v4905 = vpop.permute.xlu0 %4904
    %4906 = vrot.lane.b32.xlu0 %v1367, 32
    %v4907 = vpop.permute.xlu0 %4906
    %4908 = vrot.lane.b32.xlu0 %v1369, 32
    %v4909 = vpop.permute.xlu0 %4908
    %4910 = vrot.lane.b32.xlu0 %v1372, 32
    %v4911 = vpop.permute.xlu0 %4910
    %4912 = vrot.lane.b32.xlu0 %v1374, 32
    %v4913 = vpop.permute.xlu0 %4912
    %4914 = vrot.lane.b32.xlu0 %v1377, 32
    %v4915 = vpop.permute.xlu0 %4914
    %4916 = vrot.lane.b32.xlu0 %v1379, 32
    %v4917 = vpop.permute.xlu0 %4916
    %4918 = vrot.lane.b32.xlu0 %v1382, 32
    %v4919 = vpop.permute.xlu0 %4918
    %4920 = vrot.lane.b32.xlu0 %v1384, 32
    %v4921 = vpop.permute.xlu0 %4920
    %4922 = vrot.lane.b32.xlu0 %v1387, 32
    %v4923 = vpop.permute.xlu0 %4922
    %4924 = vrot.lane.b32.xlu0 %v1389, 32
    %v4925 = vpop.permute.xlu0 %4924
    %4926 = vrot.lane.b32.xlu0 %v1392, 32
    %v4927 = vpop.permute.xlu0 %4926
    %4928 = vrot.lane.b32.xlu0 %v1394, 32
    %v4929 = vpop.permute.xlu0 %4928
    %4930 = vrot.lane.b32.xlu0 %v1397, 32
    %v4931 = vpop.permute.xlu0 %4930
    %4932 = vrot.lane.b32.xlu0 %v1399, 32
    %v4933 = vpop.permute.xlu0 %4932
    %4934 = vrot.lane.b32.xlu0 %v1402, 32
    %v4935 = vpop.permute.xlu0 %4934
    %4936 = vrot.lane.b32.xlu0 %v1404, 32
    %v4937 = vpop.permute.xlu0 %4936
    %4938 = vrot.lane.b32.xlu0 %v4486, 32
    %v4939 = vpop.permute.xlu0 %4938
    %4940 = vrot.lane.b32.xlu0 %v4488, 32
    %v4941 = vpop.permute.xlu0 %4940
    %4942 = vrot.lane.b32.xlu0 %v1412, 32
    %v4943 = vpop.permute.xlu0 %4942
    %4944 = vrot.lane.b32.xlu0 %v1414, 32
    %v4945 = vpop.permute.xlu0 %4944
    %4946 = vrot.lane.b32.xlu0 %v1417, 32
    %v4947 = vpop.permute.xlu0 %4946
    %4948 = vrot.lane.b32.xlu0 %v1419, 32
    %v4949 = vpop.permute.xlu0 %4948
    %4950 = vrot.lane.b32.xlu0 %v1422, 32
    %v4951 = vpop.permute.xlu0 %4950
    %4952 = vrot.lane.b32.xlu0 %v1424, 32
    %v4953 = vpop.permute.xlu0 %4952
    %4954 = vrot.lane.b32.xlu0 %v1427, 32
    %v4955 = vpop.permute.xlu0 %4954
    %4956 = vrot.lane.b32.xlu0 %v1429, 32
    %v4957 = vpop.permute.xlu0 %4956
    %4958 = vrot.lane.b32.xlu0 %v1432, 32
    %v4959 = vpop.permute.xlu0 %4958
    %4960 = vrot.lane.b32.xlu0 %v1434, 32
    %v4961 = vpop.permute.xlu0 %4960
    %4962 = vrot.lane.b32.xlu0 %v1437, 32
    %v4963 = vpop.permute.xlu0 %4962
    %4964 = vrot.lane.b32.xlu0 %v1439, 32
    %v4965 = vpop.permute.xlu0 %4964
    %4966 = vrot.lane.b32.xlu0 %v1442, 32
    %v4967 = vpop.permute.xlu0 %4966
    %4968 = vrot.lane.b32.xlu0 %v1444, 32
    %v4969 = vpop.permute.xlu0 %4968
    %4970 = vrot.lane.b32.xlu0 %v1447, 32
    %v4971 = vpop.permute.xlu0 %4970
    %4972 = vrot.lane.b32.xlu0 %v1449, 32
    %v4973 = vpop.permute.xlu0 %4972
    %4974 = vrot.lane.b32.xlu0 %v1452, 32
    %v4975 = vpop.permute.xlu0 %4974
    %4976 = vrot.lane.b32.xlu0 %v1454, 32
    %v4977 = vpop.permute.xlu0 %4976
    %4978 = vrot.lane.b32.xlu0 %v1457, 32
    %v4979 = vpop.permute.xlu0 %4978
    %4980 = vrot.lane.b32.xlu0 %v1459, 32
    %v4981 = vpop.permute.xlu0 %4980
    %4982 = vrot.lane.b32.xlu0 %v1462, 32
    %v4983 = vpop.permute.xlu0 %4982
    %4984 = vrot.lane.b32.xlu0 %v1464, 32
    %v4985 = vpop.permute.xlu0 %4984
    %4986 = vrot.lane.b32.xlu0 %v1467, 32
    %v4987 = vpop.permute.xlu0 %4986
    %4988 = vrot.lane.b32.xlu0 %v1469, 32
    %v4989 = vpop.permute.xlu0 %4988
    %4990 = vrot.lane.b32.xlu0 %v1472, 32
    %v4991 = vpop.permute.xlu0 %4990
    %4992 = vrot.lane.b32.xlu0 %v1474, 32
    %v4993 = vpop.permute.xlu0 %4992
    %4994 = vrot.lane.b32.xlu0 %v1477, 32
    %v4995 = vpop.permute.xlu0 %4994
    %4996 = vrot.lane.b32.xlu0 %v1479, 32
    %v4997 = vpop.permute.xlu0 %4996
    %4998 = vrot.lane.b32.xlu0 %v1482, 32
    %v4999 = vpop.permute.xlu0 %4998
    %5000 = vrot.lane.b32.xlu0 %v1484, 32
    %v5001 = vpop.permute.xlu0 %5000
    %5002 = vrot.lane.b32.xlu0 %v4491, 32
    %v5003 = vpop.permute.xlu0 %5002
    %5004 = vrot.lane.b32.xlu0 %v4493, 32
    %v5005 = vpop.permute.xlu0 %5004
    %v5262 = vrot.slane %v76, 2
    %v5263 = vrot.slane %v77, 2
    %v5264 = vsel %vm2253, %v5262, %v5263
    %v5265 = vrot.slane %v78, 2
    %v5266 = vsel %vm2253, %v5263, %v5265
    %v5267 = vrot.slane %v130, 2
    %v5268 = vrot.slane %v131, 2
    %v5269 = vsel %vm2253, %v5267, %v5268
    %v5270 = vrot.slane %v132, 2
    %v5271 = vsel %vm2253, %v5268, %v5270
    %v5272 = vrot.slane %v184, 2
    %v5273 = vrot.slane %v185, 2
    %v5274 = vsel %vm2253, %v5272, %v5273
    %v5275 = vrot.slane %v186, 2
    %v5276 = vsel %vm2253, %v5273, %v5275
    %v5277 = vrot.slane %v238, 2
    %v5278 = vrot.slane %v239, 2
    %v5279 = vsel %vm2253, %v5277, %v5278
    %v5280 = vrot.slane %v240, 2
    %v5281 = vsel %vm2253, %v5278, %v5280
    %v5282 = vrot.slane %v292, 2
    %v5283 = vrot.slane %v293, 2
    %v5284 = vsel %vm2253, %v5282, %v5283
    %v5285 = vrot.slane %v294, 2
    %v5286 = vsel %vm2253, %v5283, %v5285
    %v5287 = vrot.slane %v346, 2
    %v5288 = vrot.slane %v347, 2
    %v5289 = vsel %vm2253, %v5287, %v5288
    %v5290 = vrot.slane %v348, 2
    %v5291 = vsel %vm2253, %v5288, %v5290
    %v5292 = vrot.slane %v400, 2
    %v5293 = vrot.slane %v401, 2
    %v5294 = vsel %vm2253, %v5292, %v5293
    %v5295 = vrot.slane %v402, 2
    %v5296 = vsel %vm2253, %v5293, %v5295
    %v5297 = vrot.slane %v454, 2
    %v5298 = vrot.slane %v455, 2
    %v5299 = vsel %vm2253, %v5297, %v5298
    %v5300 = vrot.slane %v456, 2
    %v5301 = vsel %vm2253, %v5298, %v5300
    %5302 = vrot.lane.b32.xlu0 %v2261, 40
    %v5303 = vpop.permute.xlu0 %5302
    %5304 = vrot.lane.b32.xlu0 %v2263, 40
    %v5305 = vpop.permute.xlu0 %5304
    %5306 = vrot.lane.b32.xlu0 %v2266, 40
    %v5307 = vpop.permute.xlu0 %5306
    %5308 = vrot.lane.b32.xlu0 %v2268, 40
    %v5309 = vpop.permute.xlu0 %5308
    %5310 = vrot.lane.b32.xlu0 %v2271, 40
    %v5311 = vpop.permute.xlu0 %5310
    %5312 = vrot.lane.b32.xlu0 %v2273, 40
    %v5313 = vpop.permute.xlu0 %5312
    %5314 = vrot.lane.b32.xlu0 %v2276, 40
    %v5315 = vpop.permute.xlu0 %5314
    %5316 = vrot.lane.b32.xlu0 %v2278, 40
    %v5317 = vpop.permute.xlu0 %5316
    %5318 = vrot.lane.b32.xlu0 %v2281, 40
    %v5319 = vpop.permute.xlu0 %5318
    %5320 = vrot.lane.b32.xlu0 %v2283, 40
    %v5321 = vpop.permute.xlu0 %5320
    %5322 = vrot.lane.b32.xlu0 %v2286, 40
    %v5323 = vpop.permute.xlu0 %5322
    %5324 = vrot.lane.b32.xlu0 %v2288, 40
    %v5325 = vpop.permute.xlu0 %5324
    %5326 = vrot.lane.b32.xlu0 %v2291, 40
    %v5327 = vpop.permute.xlu0 %5326
    %5328 = vrot.lane.b32.xlu0 %v2293, 40
    %v5329 = vpop.permute.xlu0 %5328
    %5330 = vrot.lane.b32.xlu0 %v2296, 40
    %v5331 = vpop.permute.xlu0 %5330
    %5332 = vrot.lane.b32.xlu0 %v2298, 40
    %v5333 = vpop.permute.xlu0 %5332
    %5334 = vrot.lane.b32.xlu0 %v2301, 40
    %v5335 = vpop.permute.xlu0 %5334
    %5336 = vrot.lane.b32.xlu0 %v2303, 40
    %v5337 = vpop.permute.xlu0 %5336
    %5338 = vrot.lane.b32.xlu0 %v2306, 40
    %v5339 = vpop.permute.xlu0 %5338
    %5340 = vrot.lane.b32.xlu0 %v2308, 40
    %v5341 = vpop.permute.xlu0 %5340
    %5342 = vrot.lane.b32.xlu0 %v2311, 40
    %v5343 = vpop.permute.xlu0 %5342
    %5344 = vrot.lane.b32.xlu0 %v2313, 40
    %v5345 = vpop.permute.xlu0 %5344
    %5346 = vrot.lane.b32.xlu0 %v2316, 40
    %v5347 = vpop.permute.xlu0 %5346
    %5348 = vrot.lane.b32.xlu0 %v2318, 40
    %v5349 = vpop.permute.xlu0 %5348
    %5350 = vrot.lane.b32.xlu0 %v2321, 40
    %v5351 = vpop.permute.xlu0 %5350
    %5352 = vrot.lane.b32.xlu0 %v2323, 40
    %v5353 = vpop.permute.xlu0 %5352
    %5354 = vrot.lane.b32.xlu0 %v2326, 40
    %v5355 = vpop.permute.xlu0 %5354
    %5356 = vrot.lane.b32.xlu0 %v2328, 40
    %v5357 = vpop.permute.xlu0 %5356
    %5358 = vrot.lane.b32.xlu0 %v2331, 40
    %v5359 = vpop.permute.xlu0 %5358
    %5360 = vrot.lane.b32.xlu0 %v2333, 40
    %v5361 = vpop.permute.xlu0 %5360
    %5362 = vrot.lane.b32.xlu0 %v5264, 40
    %v5363 = vpop.permute.xlu0 %5362
    %5364 = vrot.lane.b32.xlu0 %v5266, 40
    %v5365 = vpop.permute.xlu0 %5364
    %5366 = vrot.lane.b32.xlu0 %v2341, 40
    %v5367 = vpop.permute.xlu0 %5366
    %5368 = vrot.lane.b32.xlu0 %v2343, 40
    %v5369 = vpop.permute.xlu0 %5368
    %5370 = vrot.lane.b32.xlu0 %v2346, 40
    %v5371 = vpop.permute.xlu0 %5370
    %5372 = vrot.lane.b32.xlu0 %v2348, 40
    %v5373 = vpop.permute.xlu0 %5372
    %5374 = vrot.lane.b32.xlu0 %v2351, 40
    %v5375 = vpop.permute.xlu0 %5374
    %5376 = vrot.lane.b32.xlu0 %v2353, 40
    %v5377 = vpop.permute.xlu0 %5376
    %5378 = vrot.lane.b32.xlu0 %v2356, 40
    %v5379 = vpop.permute.xlu0 %5378
    %5380 = vrot.lane.b32.xlu0 %v2358, 40
    %v5381 = vpop.permute.xlu0 %5380
    %5382 = vrot.lane.b32.xlu0 %v2361, 40
    %v5383 = vpop.permute.xlu0 %5382
    %5384 = vrot.lane.b32.xlu0 %v2363, 40
    %v5385 = vpop.permute.xlu0 %5384
    %5386 = vrot.lane.b32.xlu0 %v2366, 40
    %v5387 = vpop.permute.xlu0 %5386
    %5388 = vrot.lane.b32.xlu0 %v2368, 40
    %v5389 = vpop.permute.xlu0 %5388
    %5390 = vrot.lane.b32.xlu0 %v2371, 40
    %v5391 = vpop.permute.xlu0 %5390
    %5392 = vrot.lane.b32.xlu0 %v2373, 40
    %v5393 = vpop.permute.xlu0 %5392
    %5394 = vrot.lane.b32.xlu0 %v2376, 40
    %v5395 = vpop.permute.xlu0 %5394
    %5396 = vrot.lane.b32.xlu0 %v2378, 40
    %v5397 = vpop.permute.xlu0 %5396
    %5398 = vrot.lane.b32.xlu0 %v2381, 40
    %v5399 = vpop.permute.xlu0 %5398
    %5400 = vrot.lane.b32.xlu0 %v2383, 40
    %v5401 = vpop.permute.xlu0 %5400
    %5402 = vrot.lane.b32.xlu0 %v2386, 40
    %v5403 = vpop.permute.xlu0 %5402
    %5404 = vrot.lane.b32.xlu0 %v2388, 40
    %v5405 = vpop.permute.xlu0 %5404
    %5406 = vrot.lane.b32.xlu0 %v2391, 40
    %v5407 = vpop.permute.xlu0 %5406
    %5408 = vrot.lane.b32.xlu0 %v2393, 40
    %v5409 = vpop.permute.xlu0 %5408
    %5410 = vrot.lane.b32.xlu0 %v2396, 40
    %v5411 = vpop.permute.xlu0 %5410
    %5412 = vrot.lane.b32.xlu0 %v2398, 40
    %v5413 = vpop.permute.xlu0 %5412
    %5414 = vrot.lane.b32.xlu0 %v2401, 40
    %v5415 = vpop.permute.xlu0 %5414
    %5416 = vrot.lane.b32.xlu0 %v2403, 40
    %v5417 = vpop.permute.xlu0 %5416
    %5418 = vrot.lane.b32.xlu0 %v2406, 40
    %v5419 = vpop.permute.xlu0 %5418
    %5420 = vrot.lane.b32.xlu0 %v2408, 40
    %v5421 = vpop.permute.xlu0 %5420
    %5422 = vrot.lane.b32.xlu0 %v2411, 40
    %v5423 = vpop.permute.xlu0 %5422
    %5424 = vrot.lane.b32.xlu0 %v2413, 40
    %v5425 = vpop.permute.xlu0 %5424
    %5426 = vrot.lane.b32.xlu0 %v5269, 40
    %v5427 = vpop.permute.xlu0 %5426
    %5428 = vrot.lane.b32.xlu0 %v5271, 40
    %v5429 = vpop.permute.xlu0 %5428
    %5430 = vrot.lane.b32.xlu0 %v2421, 40
    %v5431 = vpop.permute.xlu0 %5430
    %5432 = vrot.lane.b32.xlu0 %v2423, 40
    %v5433 = vpop.permute.xlu0 %5432
    %5434 = vrot.lane.b32.xlu0 %v2426, 40
    %v5435 = vpop.permute.xlu0 %5434
    %5436 = vrot.lane.b32.xlu0 %v2428, 40
    %v5437 = vpop.permute.xlu0 %5436
    %5438 = vrot.lane.b32.xlu0 %v2431, 40
    %v5439 = vpop.permute.xlu0 %5438
    %5440 = vrot.lane.b32.xlu0 %v2433, 40
    %v5441 = vpop.permute.xlu0 %5440
    %5442 = vrot.lane.b32.xlu0 %v2436, 40
    %v5443 = vpop.permute.xlu0 %5442
    %5444 = vrot.lane.b32.xlu0 %v2438, 40
    %v5445 = vpop.permute.xlu0 %5444
    %5446 = vrot.lane.b32.xlu0 %v2441, 40
    %v5447 = vpop.permute.xlu0 %5446
    %5448 = vrot.lane.b32.xlu0 %v2443, 40
    %v5449 = vpop.permute.xlu0 %5448
    %5450 = vrot.lane.b32.xlu0 %v2446, 40
    %v5451 = vpop.permute.xlu0 %5450
    %5452 = vrot.lane.b32.xlu0 %v2448, 40
    %v5453 = vpop.permute.xlu0 %5452
    %5454 = vrot.lane.b32.xlu0 %v2451, 40
    %v5455 = vpop.permute.xlu0 %5454
    %5456 = vrot.lane.b32.xlu0 %v2453, 40
    %v5457 = vpop.permute.xlu0 %5456
    %5458 = vrot.lane.b32.xlu0 %v2456, 40
    %v5459 = vpop.permute.xlu0 %5458
    %5460 = vrot.lane.b32.xlu0 %v2458, 40
    %v5461 = vpop.permute.xlu0 %5460
    %5462 = vrot.lane.b32.xlu0 %v2461, 40
    %v5463 = vpop.permute.xlu0 %5462
    %5464 = vrot.lane.b32.xlu0 %v2463, 40
    %v5465 = vpop.permute.xlu0 %5464
    %5466 = vrot.lane.b32.xlu0 %v2466, 40
    %v5467 = vpop.permute.xlu0 %5466
    %5468 = vrot.lane.b32.xlu0 %v2468, 40
    %v5469 = vpop.permute.xlu0 %5468
    %5470 = vrot.lane.b32.xlu0 %v2471, 40
    %v5471 = vpop.permute.xlu0 %5470
    %5472 = vrot.lane.b32.xlu0 %v2473, 40
    %v5473 = vpop.permute.xlu0 %5472
    %5474 = vrot.lane.b32.xlu0 %v2476, 40
    %v5475 = vpop.permute.xlu0 %5474
    %5476 = vrot.lane.b32.xlu0 %v2478, 40
    %v5477 = vpop.permute.xlu0 %5476
    %5478 = vrot.lane.b32.xlu0 %v2481, 40
    %v5479 = vpop.permute.xlu0 %5478
    %5480 = vrot.lane.b32.xlu0 %v2483, 40
    %v5481 = vpop.permute.xlu0 %5480
    %5482 = vrot.lane.b32.xlu0 %v2486, 40
    %v5483 = vpop.permute.xlu0 %5482
    %5484 = vrot.lane.b32.xlu0 %v2488, 40
    %v5485 = vpop.permute.xlu0 %5484
    %5486 = vrot.lane.b32.xlu0 %v2491, 40
    %v5487 = vpop.permute.xlu0 %5486
    %5488 = vrot.lane.b32.xlu0 %v2493, 40
    %v5489 = vpop.permute.xlu0 %5488
    %5490 = vrot.lane.b32.xlu0 %v5274, 40
    %v5491 = vpop.permute.xlu0 %5490
    %5492 = vrot.lane.b32.xlu0 %v5276, 40
    %v5493 = vpop.permute.xlu0 %5492
    %5494 = vrot.lane.b32.xlu0 %v2501, 40
    %v5495 = vpop.permute.xlu0 %5494
    %5496 = vrot.lane.b32.xlu0 %v2503, 40
    %v5497 = vpop.permute.xlu0 %5496
    %5498 = vrot.lane.b32.xlu0 %v2506, 40
    %v5499 = vpop.permute.xlu0 %5498
    %5500 = vrot.lane.b32.xlu0 %v2508, 40
    %v5501 = vpop.permute.xlu0 %5500
    %5502 = vrot.lane.b32.xlu0 %v2511, 40
    %v5503 = vpop.permute.xlu0 %5502
    %5504 = vrot.lane.b32.xlu0 %v2513, 40
    %v5505 = vpop.permute.xlu0 %5504
    %5506 = vrot.lane.b32.xlu0 %v2516, 40
    %v5507 = vpop.permute.xlu0 %5506
    %5508 = vrot.lane.b32.xlu0 %v2518, 40
    %v5509 = vpop.permute.xlu0 %5508
    %5510 = vrot.lane.b32.xlu0 %v2521, 40
    %v5511 = vpop.permute.xlu0 %5510
    %5512 = vrot.lane.b32.xlu0 %v2523, 40
    %v5513 = vpop.permute.xlu0 %5512
    %5514 = vrot.lane.b32.xlu0 %v2526, 40
    %v5515 = vpop.permute.xlu0 %5514
    %5516 = vrot.lane.b32.xlu0 %v2528, 40
    %v5517 = vpop.permute.xlu0 %5516
    %5518 = vrot.lane.b32.xlu0 %v2531, 40
    %v5519 = vpop.permute.xlu0 %5518
    %5520 = vrot.lane.b32.xlu0 %v2533, 40
    %v5521 = vpop.permute.xlu0 %5520
    %5522 = vrot.lane.b32.xlu0 %v2536, 40
    %v5523 = vpop.permute.xlu0 %5522
    %5524 = vrot.lane.b32.xlu0 %v2538, 40
    %v5525 = vpop.permute.xlu0 %5524
    %5526 = vrot.lane.b32.xlu0 %v2541, 40
    %v5527 = vpop.permute.xlu0 %5526
    %5528 = vrot.lane.b32.xlu0 %v2543, 40
    %v5529 = vpop.permute.xlu0 %5528
    %5530 = vrot.lane.b32.xlu0 %v2546, 40
    %v5531 = vpop.permute.xlu0 %5530
    %5532 = vrot.lane.b32.xlu0 %v2548, 40
    %v5533 = vpop.permute.xlu0 %5532
    %5534 = vrot.lane.b32.xlu0 %v2551, 40
    %v5535 = vpop.permute.xlu0 %5534
    %5536 = vrot.lane.b32.xlu0 %v2553, 40
    %v5537 = vpop.permute.xlu0 %5536
    %5538 = vrot.lane.b32.xlu0 %v2556, 40
    %v5539 = vpop.permute.xlu0 %5538
    %5540 = vrot.lane.b32.xlu0 %v2558, 40
    %v5541 = vpop.permute.xlu0 %5540
    %5542 = vrot.lane.b32.xlu0 %v2561, 40
    %v5543 = vpop.permute.xlu0 %5542
    %5544 = vrot.lane.b32.xlu0 %v2563, 40
    %v5545 = vpop.permute.xlu0 %5544
    %5546 = vrot.lane.b32.xlu0 %v2566, 40
    %v5547 = vpop.permute.xlu0 %5546
    %5548 = vrot.lane.b32.xlu0 %v2568, 40
    %v5549 = vpop.permute.xlu0 %5548
    %5550 = vrot.lane.b32.xlu0 %v2571, 40
    %v5551 = vpop.permute.xlu0 %5550
    %5552 = vrot.lane.b32.xlu0 %v2573, 40
    %v5553 = vpop.permute.xlu0 %5552
    %5554 = vrot.lane.b32.xlu0 %v5279, 40
    %v5555 = vpop.permute.xlu0 %5554
    %5556 = vrot.lane.b32.xlu0 %v5281, 40
    %v5557 = vpop.permute.xlu0 %5556
    %5558 = vrot.lane.b32.xlu0 %v2581, 40
    %v5559 = vpop.permute.xlu0 %5558
    %5560 = vrot.lane.b32.xlu0 %v2583, 40
    %v5561 = vpop.permute.xlu0 %5560
    %5562 = vrot.lane.b32.xlu0 %v2586, 40
    %v5563 = vpop.permute.xlu0 %5562
    %5564 = vrot.lane.b32.xlu0 %v2588, 40
    %v5565 = vpop.permute.xlu0 %5564
    %5566 = vrot.lane.b32.xlu0 %v2591, 40
    %v5567 = vpop.permute.xlu0 %5566
    %5568 = vrot.lane.b32.xlu0 %v2593, 40
    %v5569 = vpop.permute.xlu0 %5568
    %5570 = vrot.lane.b32.xlu0 %v2596, 40
    %v5571 = vpop.permute.xlu0 %5570
    %5572 = vrot.lane.b32.xlu0 %v2598, 40
    %v5573 = vpop.permute.xlu0 %5572
    %5574 = vrot.lane.b32.xlu0 %v2601, 40
    %v5575 = vpop.permute.xlu0 %5574
    %5576 = vrot.lane.b32.xlu0 %v2603, 40
    %v5577 = vpop.permute.xlu0 %5576
    %5578 = vrot.lane.b32.xlu0 %v2606, 40
    %v5579 = vpop.permute.xlu0 %5578
    %5580 = vrot.lane.b32.xlu0 %v2608, 40
    %v5581 = vpop.permute.xlu0 %5580
    %5582 = vrot.lane.b32.xlu0 %v2611, 40
    %v5583 = vpop.permute.xlu0 %5582
    %5584 = vrot.lane.b32.xlu0 %v2613, 40
    %v5585 = vpop.permute.xlu0 %5584
    %5586 = vrot.lane.b32.xlu0 %v2616, 40
    %v5587 = vpop.permute.xlu0 %5586
    %5588 = vrot.lane.b32.xlu0 %v2618, 40
    %v5589 = vpop.permute.xlu0 %5588
    %5590 = vrot.lane.b32.xlu0 %v2621, 40
    %v5591 = vpop.permute.xlu0 %5590
    %5592 = vrot.lane.b32.xlu0 %v2623, 40
    %v5593 = vpop.permute.xlu0 %5592
    %5594 = vrot.lane.b32.xlu0 %v2626, 40
    %v5595 = vpop.permute.xlu0 %5594
    %5596 = vrot.lane.b32.xlu0 %v2628, 40
    %v5597 = vpop.permute.xlu0 %5596
    %5598 = vrot.lane.b32.xlu0 %v2631, 40
    %v5599 = vpop.permute.xlu0 %5598
    %5600 = vrot.lane.b32.xlu0 %v2633, 40
    %v5601 = vpop.permute.xlu0 %5600
    %5602 = vrot.lane.b32.xlu0 %v2636, 40
    %v5603 = vpop.permute.xlu0 %5602
    %5604 = vrot.lane.b32.xlu0 %v2638, 40
    %v5605 = vpop.permute.xlu0 %5604
    %5606 = vrot.lane.b32.xlu0 %v2641, 40
    %v5607 = vpop.permute.xlu0 %5606
    %5608 = vrot.lane.b32.xlu0 %v2643, 40
    %v5609 = vpop.permute.xlu0 %5608
    %5610 = vrot.lane.b32.xlu0 %v2646, 40
    %v5611 = vpop.permute.xlu0 %5610
    %5612 = vrot.lane.b32.xlu0 %v2648, 40
    %v5613 = vpop.permute.xlu0 %5612
    %5614 = vrot.lane.b32.xlu0 %v2651, 40
    %v5615 = vpop.permute.xlu0 %5614
    %5616 = vrot.lane.b32.xlu0 %v2653, 40
    %v5617 = vpop.permute.xlu0 %5616
    %5618 = vrot.lane.b32.xlu0 %v5284, 40
    %v5619 = vpop.permute.xlu0 %5618
    %5620 = vrot.lane.b32.xlu0 %v5286, 40
    %v5621 = vpop.permute.xlu0 %5620
    %5622 = vrot.lane.b32.xlu0 %v2661, 40
    %v5623 = vpop.permute.xlu0 %5622
    %5624 = vrot.lane.b32.xlu0 %v2663, 40
    %v5625 = vpop.permute.xlu0 %5624
    %5626 = vrot.lane.b32.xlu0 %v2666, 40
    %v5627 = vpop.permute.xlu0 %5626
    %5628 = vrot.lane.b32.xlu0 %v2668, 40
    %v5629 = vpop.permute.xlu0 %5628
    %5630 = vrot.lane.b32.xlu0 %v2671, 40
    %v5631 = vpop.permute.xlu0 %5630
    %5632 = vrot.lane.b32.xlu0 %v2673, 40
    %v5633 = vpop.permute.xlu0 %5632
    %5634 = vrot.lane.b32.xlu0 %v2676, 40
    %v5635 = vpop.permute.xlu0 %5634
    %5636 = vrot.lane.b32.xlu0 %v2678, 40
    %v5637 = vpop.permute.xlu0 %5636
    %5638 = vrot.lane.b32.xlu0 %v2681, 40
    %v5639 = vpop.permute.xlu0 %5638
    %5640 = vrot.lane.b32.xlu0 %v2683, 40
    %v5641 = vpop.permute.xlu0 %5640
    %5642 = vrot.lane.b32.xlu0 %v2686, 40
    %v5643 = vpop.permute.xlu0 %5642
    %5644 = vrot.lane.b32.xlu0 %v2688, 40
    %v5645 = vpop.permute.xlu0 %5644
    %5646 = vrot.lane.b32.xlu0 %v2691, 40
    %v5647 = vpop.permute.xlu0 %5646
    %5648 = vrot.lane.b32.xlu0 %v2693, 40
    %v5649 = vpop.permute.xlu0 %5648
    %5650 = vrot.lane.b32.xlu0 %v2696, 40
    %v5651 = vpop.permute.xlu0 %5650
    %5652 = vrot.lane.b32.xlu0 %v2698, 40
    %v5653 = vpop.permute.xlu0 %5652
    %5654 = vrot.lane.b32.xlu0 %v2701, 40
    %v5655 = vpop.permute.xlu0 %5654
    %5656 = vrot.lane.b32.xlu0 %v2703, 40
    %v5657 = vpop.permute.xlu0 %5656
    %5658 = vrot.lane.b32.xlu0 %v2706, 40
    %v5659 = vpop.permute.xlu0 %5658
    %5660 = vrot.lane.b32.xlu0 %v2708, 40
    %v5661 = vpop.permute.xlu0 %5660
    %5662 = vrot.lane.b32.xlu0 %v2711, 40
    %v5663 = vpop.permute.xlu0 %5662
    %5664 = vrot.lane.b32.xlu0 %v2713, 40
    %v5665 = vpop.permute.xlu0 %5664
    %5666 = vrot.lane.b32.xlu0 %v2716, 40
    %v5667 = vpop.permute.xlu0 %5666
    %5668 = vrot.lane.b32.xlu0 %v2718, 40
    %v5669 = vpop.permute.xlu0 %5668
    %5670 = vrot.lane.b32.xlu0 %v2721, 40
    %v5671 = vpop.permute.xlu0 %5670
    %5672 = vrot.lane.b32.xlu0 %v2723, 40
    %v5673 = vpop.permute.xlu0 %5672
    %5674 = vrot.lane.b32.xlu0 %v2726, 40
    %v5675 = vpop.permute.xlu0 %5674
    %5676 = vrot.lane.b32.xlu0 %v2728, 40
    %v5677 = vpop.permute.xlu0 %5676
    %5678 = vrot.lane.b32.xlu0 %v2731, 40
    %v5679 = vpop.permute.xlu0 %5678
    %5680 = vrot.lane.b32.xlu0 %v2733, 40
    %v5681 = vpop.permute.xlu0 %5680
    %5682 = vrot.lane.b32.xlu0 %v5289, 40
    %v5683 = vpop.permute.xlu0 %5682
    %5684 = vrot.lane.b32.xlu0 %v5291, 40
    %v5685 = vpop.permute.xlu0 %5684
    %5686 = vrot.lane.b32.xlu0 %v2741, 40
    %v5687 = vpop.permute.xlu0 %5686
    %5688 = vrot.lane.b32.xlu0 %v2743, 40
    %v5689 = vpop.permute.xlu0 %5688
    %5690 = vrot.lane.b32.xlu0 %v2746, 40
    %v5691 = vpop.permute.xlu0 %5690
    %5692 = vrot.lane.b32.xlu0 %v2748, 40
    %v5693 = vpop.permute.xlu0 %5692
    %5694 = vrot.lane.b32.xlu0 %v2751, 40
    %v5695 = vpop.permute.xlu0 %5694
    %5696 = vrot.lane.b32.xlu0 %v2753, 40
    %v5697 = vpop.permute.xlu0 %5696
    %5698 = vrot.lane.b32.xlu0 %v2756, 40
    %v5699 = vpop.permute.xlu0 %5698
    %5700 = vrot.lane.b32.xlu0 %v2758, 40
    %v5701 = vpop.permute.xlu0 %5700
    %5702 = vrot.lane.b32.xlu0 %v2761, 40
    %v5703 = vpop.permute.xlu0 %5702
    %5704 = vrot.lane.b32.xlu0 %v2763, 40
    %v5705 = vpop.permute.xlu0 %5704
    %5706 = vrot.lane.b32.xlu0 %v2766, 40
    %v5707 = vpop.permute.xlu0 %5706
    %5708 = vrot.lane.b32.xlu0 %v2768, 40
    %v5709 = vpop.permute.xlu0 %5708
    %5710 = vrot.lane.b32.xlu0 %v2771, 40
    %v5711 = vpop.permute.xlu0 %5710
    %5712 = vrot.lane.b32.xlu0 %v2773, 40
    %v5713 = vpop.permute.xlu0 %5712
    %5714 = vrot.lane.b32.xlu0 %v2776, 40
    %v5715 = vpop.permute.xlu0 %5714
    %5716 = vrot.lane.b32.xlu0 %v2778, 40
    %v5717 = vpop.permute.xlu0 %5716
    %5718 = vrot.lane.b32.xlu0 %v2781, 40
    %v5719 = vpop.permute.xlu0 %5718
    %5720 = vrot.lane.b32.xlu0 %v2783, 40
    %v5721 = vpop.permute.xlu0 %5720
    %5722 = vrot.lane.b32.xlu0 %v2786, 40
    %v5723 = vpop.permute.xlu0 %5722
    %5724 = vrot.lane.b32.xlu0 %v2788, 40
    %v5725 = vpop.permute.xlu0 %5724
    %5726 = vrot.lane.b32.xlu0 %v2791, 40
    %v5727 = vpop.permute.xlu0 %5726
    %5728 = vrot.lane.b32.xlu0 %v2793, 40
    %v5729 = vpop.permute.xlu0 %5728
    %5730 = vrot.lane.b32.xlu0 %v2796, 40
    %v5731 = vpop.permute.xlu0 %5730
    %5732 = vrot.lane.b32.xlu0 %v2798, 40
    %v5733 = vpop.permute.xlu0 %5732
    %5734 = vrot.lane.b32.xlu0 %v2801, 40
    %v5735 = vpop.permute.xlu0 %5734
    %5736 = vrot.lane.b32.xlu0 %v2803, 40
    %v5737 = vpop.permute.xlu0 %5736
    %5738 = vrot.lane.b32.xlu0 %v2806, 40
    %v5739 = vpop.permute.xlu0 %5738
    %5740 = vrot.lane.b32.xlu0 %v2808, 40
    %v5741 = vpop.permute.xlu0 %5740
    %5742 = vrot.lane.b32.xlu0 %v2811, 40
    %v5743 = vpop.permute.xlu0 %5742
    %5744 = vrot.lane.b32.xlu0 %v2813, 40
    %v5745 = vpop.permute.xlu0 %5744
    %5746 = vrot.lane.b32.xlu0 %v5294, 40
    %v5747 = vpop.permute.xlu0 %5746
    %5748 = vrot.lane.b32.xlu0 %v5296, 40
    %v5749 = vpop.permute.xlu0 %5748
    %5750 = vrot.lane.b32.xlu0 %v2821, 40
    %v5751 = vpop.permute.xlu0 %5750
    %5752 = vrot.lane.b32.xlu0 %v2823, 40
    %v5753 = vpop.permute.xlu0 %5752
    %5754 = vrot.lane.b32.xlu0 %v2826, 40
    %v5755 = vpop.permute.xlu0 %5754
    %5756 = vrot.lane.b32.xlu0 %v2828, 40
    %v5757 = vpop.permute.xlu0 %5756
    %5758 = vrot.lane.b32.xlu0 %v2831, 40
    %v5759 = vpop.permute.xlu0 %5758
    %5760 = vrot.lane.b32.xlu0 %v2833, 40
    %v5761 = vpop.permute.xlu0 %5760
    %5762 = vrot.lane.b32.xlu0 %v2836, 40
    %v5763 = vpop.permute.xlu0 %5762
    %5764 = vrot.lane.b32.xlu0 %v2838, 40
    %v5765 = vpop.permute.xlu0 %5764
    %5766 = vrot.lane.b32.xlu0 %v2841, 40
    %v5767 = vpop.permute.xlu0 %5766
    %5768 = vrot.lane.b32.xlu0 %v2843, 40
    %v5769 = vpop.permute.xlu0 %5768
    %5770 = vrot.lane.b32.xlu0 %v2846, 40
    %v5771 = vpop.permute.xlu0 %5770
    %5772 = vrot.lane.b32.xlu0 %v2848, 40
    %v5773 = vpop.permute.xlu0 %5772
    %5774 = vrot.lane.b32.xlu0 %v2851, 40
    %v5775 = vpop.permute.xlu0 %5774
    %5776 = vrot.lane.b32.xlu0 %v2853, 40
    %v5777 = vpop.permute.xlu0 %5776
    %5778 = vrot.lane.b32.xlu0 %v2856, 40
    %v5779 = vpop.permute.xlu0 %5778
    %5780 = vrot.lane.b32.xlu0 %v2858, 40
    %v5781 = vpop.permute.xlu0 %5780
    %5782 = vrot.lane.b32.xlu0 %v2861, 40
    %v5783 = vpop.permute.xlu0 %5782
    %5784 = vrot.lane.b32.xlu0 %v2863, 40
    %v5785 = vpop.permute.xlu0 %5784
    %5786 = vrot.lane.b32.xlu0 %v2866, 40
    %v5787 = vpop.permute.xlu0 %5786
    %5788 = vrot.lane.b32.xlu0 %v2868, 40
    %v5789 = vpop.permute.xlu0 %5788
    %5790 = vrot.lane.b32.xlu0 %v2871, 40
    %v5791 = vpop.permute.xlu0 %5790
    %5792 = vrot.lane.b32.xlu0 %v2873, 40
    %v5793 = vpop.permute.xlu0 %5792
    %5794 = vrot.lane.b32.xlu0 %v2876, 40
    %v5795 = vpop.permute.xlu0 %5794
    %5796 = vrot.lane.b32.xlu0 %v2878, 40
    %v5797 = vpop.permute.xlu0 %5796
    %5798 = vrot.lane.b32.xlu0 %v2881, 40
    %v5799 = vpop.permute.xlu0 %5798
    %5800 = vrot.lane.b32.xlu0 %v2883, 40
    %v5801 = vpop.permute.xlu0 %5800
    %5802 = vrot.lane.b32.xlu0 %v2886, 40
    %v5803 = vpop.permute.xlu0 %5802
    %5804 = vrot.lane.b32.xlu0 %v2888, 40
    %v5805 = vpop.permute.xlu0 %5804
    %5806 = vrot.lane.b32.xlu0 %v2891, 40
    %v5807 = vpop.permute.xlu0 %5806
    %5808 = vrot.lane.b32.xlu0 %v2893, 40
    %v5809 = vpop.permute.xlu0 %5808
    %5810 = vrot.lane.b32.xlu0 %v5299, 40
    %v5811 = vpop.permute.xlu0 %5810
    %5812 = vrot.lane.b32.xlu0 %v5301, 40
    %v5813 = vpop.permute.xlu0 %5812
    %6086 = vrot.lane.b32.xlu0 %v34, 48
    %v6087 = vpop.permute.xlu0 %6086
    %6088 = vrot.lane.b32.xlu0 %v35, 48
    %v6089 = vpop.permute.xlu0 %6088
    %6090 = vrot.lane.b32.xlu0 %v37, 48
    %v6091 = vpop.permute.xlu0 %6090
    %6092 = vrot.lane.b32.xlu0 %v38, 48
    %v6093 = vpop.permute.xlu0 %6092
    %6094 = vrot.lane.b32.xlu0 %v40, 48
    %v6095 = vpop.permute.xlu0 %6094
    %6096 = vrot.lane.b32.xlu0 %v41, 48
    %v6097 = vpop.permute.xlu0 %6096
    %6098 = vrot.lane.b32.xlu0 %v43, 48
    %v6099 = vpop.permute.xlu0 %6098
    %6100 = vrot.lane.b32.xlu0 %v44, 48
    %v6101 = vpop.permute.xlu0 %6100
    %6102 = vrot.lane.b32.xlu0 %v46, 48
    %v6103 = vpop.permute.xlu0 %6102
    %6104 = vrot.lane.b32.xlu0 %v47, 48
    %v6105 = vpop.permute.xlu0 %6104
    %6106 = vrot.lane.b32.xlu0 %v49, 48
    %v6107 = vpop.permute.xlu0 %6106
    %6108 = vrot.lane.b32.xlu0 %v50, 48
    %v6109 = vpop.permute.xlu0 %6108
    %6110 = vrot.lane.b32.xlu0 %v52, 48
    %v6111 = vpop.permute.xlu0 %6110
    %6112 = vrot.lane.b32.xlu0 %v53, 48
    %v6113 = vpop.permute.xlu0 %6112
    %6114 = vrot.lane.b32.xlu0 %v55, 48
    %v6115 = vpop.permute.xlu0 %6114
    %6116 = vrot.lane.b32.xlu0 %v56, 48
    %v6117 = vpop.permute.xlu0 %6116
    %6118 = vrot.lane.b32.xlu0 %v58, 48
    %v6119 = vpop.permute.xlu0 %6118
    %6120 = vrot.lane.b32.xlu0 %v59, 48
    %v6121 = vpop.permute.xlu0 %6120
    %6122 = vrot.lane.b32.xlu0 %v61, 48
    %v6123 = vpop.permute.xlu0 %6122
    %6124 = vrot.lane.b32.xlu0 %v62, 48
    %v6125 = vpop.permute.xlu0 %6124
    %6126 = vrot.lane.b32.xlu0 %v64, 48
    %v6127 = vpop.permute.xlu0 %6126
    %6128 = vrot.lane.b32.xlu0 %v65, 48
    %v6129 = vpop.permute.xlu0 %6128
    %6130 = vrot.lane.b32.xlu0 %v67, 48
    %v6131 = vpop.permute.xlu0 %6130
    %6132 = vrot.lane.b32.xlu0 %v68, 48
    %v6133 = vpop.permute.xlu0 %6132
    %6134 = vrot.lane.b32.xlu0 %v70, 48
    %v6135 = vpop.permute.xlu0 %6134
    %6136 = vrot.lane.b32.xlu0 %v71, 48
    %v6137 = vpop.permute.xlu0 %6136
    %6138 = vrot.lane.b32.xlu0 %v73, 48
    %v6139 = vpop.permute.xlu0 %6138
    %6140 = vrot.lane.b32.xlu0 %v74, 48
    %v6141 = vpop.permute.xlu0 %6140
    %6142 = vrot.lane.b32.xlu0 %v76, 48
    %v6143 = vpop.permute.xlu0 %6142
    %6144 = vrot.lane.b32.xlu0 %v77, 48
    %v6145 = vpop.permute.xlu0 %6144
    %6146 = vrot.lane.b32.xlu0 %v79, 48
    %v6147 = vpop.permute.xlu0 %6146
    %6148 = vrot.lane.b32.xlu0 %v80, 48
    %v6149 = vpop.permute.xlu0 %6148
    %6150 = vrot.lane.b32.xlu0 %v88, 48
    %v6151 = vpop.permute.xlu0 %6150
    %6152 = vrot.lane.b32.xlu0 %v89, 48
    %v6153 = vpop.permute.xlu0 %6152
    %6154 = vrot.lane.b32.xlu0 %v91, 48
    %v6155 = vpop.permute.xlu0 %6154
    %6156 = vrot.lane.b32.xlu0 %v92, 48
    %v6157 = vpop.permute.xlu0 %6156
    %6158 = vrot.lane.b32.xlu0 %v94, 48
    %v6159 = vpop.permute.xlu0 %6158
    %6160 = vrot.lane.b32.xlu0 %v95, 48
    %v6161 = vpop.permute.xlu0 %6160
    %6162 = vrot.lane.b32.xlu0 %v97, 48
    %v6163 = vpop.permute.xlu0 %6162
    %6164 = vrot.lane.b32.xlu0 %v98, 48
    %v6165 = vpop.permute.xlu0 %6164
    %6166 = vrot.lane.b32.xlu0 %v100, 48
    %v6167 = vpop.permute.xlu0 %6166
    %6168 = vrot.lane.b32.xlu0 %v101, 48
    %v6169 = vpop.permute.xlu0 %6168
    %6170 = vrot.lane.b32.xlu0 %v103, 48
    %v6171 = vpop.permute.xlu0 %6170
    %6172 = vrot.lane.b32.xlu0 %v104, 48
    %v6173 = vpop.permute.xlu0 %6172
    %6174 = vrot.lane.b32.xlu0 %v106, 48
    %v6175 = vpop.permute.xlu0 %6174
    %6176 = vrot.lane.b32.xlu0 %v107, 48
    %v6177 = vpop.permute.xlu0 %6176
    %6178 = vrot.lane.b32.xlu0 %v109, 48
    %v6179 = vpop.permute.xlu0 %6178
    %6180 = vrot.lane.b32.xlu0 %v110, 48
    %v6181 = vpop.permute.xlu0 %6180
    %6182 = vrot.lane.b32.xlu0 %v112, 48
    %v6183 = vpop.permute.xlu0 %6182
    %6184 = vrot.lane.b32.xlu0 %v113, 48
    %v6185 = vpop.permute.xlu0 %6184
    %6186 = vrot.lane.b32.xlu0 %v115, 48
    %v6187 = vpop.permute.xlu0 %6186
    %6188 = vrot.lane.b32.xlu0 %v116, 48
    %v6189 = vpop.permute.xlu0 %6188
    %6190 = vrot.lane.b32.xlu0 %v118, 48
    %v6191 = vpop.permute.xlu0 %6190
    %6192 = vrot.lane.b32.xlu0 %v119, 48
    %v6193 = vpop.permute.xlu0 %6192
    %6194 = vrot.lane.b32.xlu0 %v121, 48
    %v6195 = vpop.permute.xlu0 %6194
    %6196 = vrot.lane.b32.xlu0 %v122, 48
    %v6197 = vpop.permute.xlu0 %6196
    %6198 = vrot.lane.b32.xlu0 %v124, 48
    %v6199 = vpop.permute.xlu0 %6198
    %6200 = vrot.lane.b32.xlu0 %v125, 48
    %v6201 = vpop.permute.xlu0 %6200
    %6202 = vrot.lane.b32.xlu0 %v127, 48
    %v6203 = vpop.permute.xlu0 %6202
    %6204 = vrot.lane.b32.xlu0 %v128, 48
    %v6205 = vpop.permute.xlu0 %6204
    %6206 = vrot.lane.b32.xlu0 %v130, 48
    %v6207 = vpop.permute.xlu0 %6206
    %6208 = vrot.lane.b32.xlu0 %v131, 48
    %v6209 = vpop.permute.xlu0 %6208
    %6210 = vrot.lane.b32.xlu0 %v133, 48
    %v6211 = vpop.permute.xlu0 %6210
    %6212 = vrot.lane.b32.xlu0 %v134, 48
    %v6213 = vpop.permute.xlu0 %6212
    %6214 = vrot.lane.b32.xlu0 %v142, 48
    %v6215 = vpop.permute.xlu0 %6214
    %6216 = vrot.lane.b32.xlu0 %v143, 48
    %v6217 = vpop.permute.xlu0 %6216
    %6218 = vrot.lane.b32.xlu0 %v145, 48
    %v6219 = vpop.permute.xlu0 %6218
    %6220 = vrot.lane.b32.xlu0 %v146, 48
    %v6221 = vpop.permute.xlu0 %6220
    %6222 = vrot.lane.b32.xlu0 %v148, 48
    %v6223 = vpop.permute.xlu0 %6222
    %6224 = vrot.lane.b32.xlu0 %v149, 48
    %v6225 = vpop.permute.xlu0 %6224
    %6226 = vrot.lane.b32.xlu0 %v151, 48
    %v6227 = vpop.permute.xlu0 %6226
    %6228 = vrot.lane.b32.xlu0 %v152, 48
    %v6229 = vpop.permute.xlu0 %6228
    %6230 = vrot.lane.b32.xlu0 %v154, 48
    %v6231 = vpop.permute.xlu0 %6230
    %6232 = vrot.lane.b32.xlu0 %v155, 48
    %v6233 = vpop.permute.xlu0 %6232
    %6234 = vrot.lane.b32.xlu0 %v157, 48
    %v6235 = vpop.permute.xlu0 %6234
    %6236 = vrot.lane.b32.xlu0 %v158, 48
    %v6237 = vpop.permute.xlu0 %6236
    %6238 = vrot.lane.b32.xlu0 %v160, 48
    %v6239 = vpop.permute.xlu0 %6238
    %6240 = vrot.lane.b32.xlu0 %v161, 48
    %v6241 = vpop.permute.xlu0 %6240
    %6242 = vrot.lane.b32.xlu0 %v163, 48
    %v6243 = vpop.permute.xlu0 %6242
    %6244 = vrot.lane.b32.xlu0 %v164, 48
    %v6245 = vpop.permute.xlu0 %6244
    %6246 = vrot.lane.b32.xlu0 %v166, 48
    %v6247 = vpop.permute.xlu0 %6246
    %6248 = vrot.lane.b32.xlu0 %v167, 48
    %v6249 = vpop.permute.xlu0 %6248
    %6250 = vrot.lane.b32.xlu0 %v169, 48
    %v6251 = vpop.permute.xlu0 %6250
    %6252 = vrot.lane.b32.xlu0 %v170, 48
    %v6253 = vpop.permute.xlu0 %6252
    %6254 = vrot.lane.b32.xlu0 %v172, 48
    %v6255 = vpop.permute.xlu0 %6254
    %6256 = vrot.lane.b32.xlu0 %v173, 48
    %v6257 = vpop.permute.xlu0 %6256
    %6258 = vrot.lane.b32.xlu0 %v175, 48
    %v6259 = vpop.permute.xlu0 %6258
    %6260 = vrot.lane.b32.xlu0 %v176, 48
    %v6261 = vpop.permute.xlu0 %6260
    %6262 = vrot.lane.b32.xlu0 %v178, 48
    %v6263 = vpop.permute.xlu0 %6262
    %6264 = vrot.lane.b32.xlu0 %v179, 48
    %v6265 = vpop.permute.xlu0 %6264
    %6266 = vrot.lane.b32.xlu0 %v181, 48
    %v6267 = vpop.permute.xlu0 %6266
    %6268 = vrot.lane.b32.xlu0 %v182, 48
    %v6269 = vpop.permute.xlu0 %6268
    %6270 = vrot.lane.b32.xlu0 %v184, 48
    %v6271 = vpop.permute.xlu0 %6270
    %6272 = vrot.lane.b32.xlu0 %v185, 48
    %v6273 = vpop.permute.xlu0 %6272
    %6274 = vrot.lane.b32.xlu0 %v187, 48
    %v6275 = vpop.permute.xlu0 %6274
    %6276 = vrot.lane.b32.xlu0 %v188, 48
    %v6277 = vpop.permute.xlu0 %6276
    %6278 = vrot.lane.b32.xlu0 %v196, 48
    %v6279 = vpop.permute.xlu0 %6278
    %6280 = vrot.lane.b32.xlu0 %v197, 48
    %v6281 = vpop.permute.xlu0 %6280
    %6282 = vrot.lane.b32.xlu0 %v199, 48
    %v6283 = vpop.permute.xlu0 %6282
    %6284 = vrot.lane.b32.xlu0 %v200, 48
    %v6285 = vpop.permute.xlu0 %6284
    %6286 = vrot.lane.b32.xlu0 %v202, 48
    %v6287 = vpop.permute.xlu0 %6286
    %6288 = vrot.lane.b32.xlu0 %v203, 48
    %v6289 = vpop.permute.xlu0 %6288
    %6290 = vrot.lane.b32.xlu0 %v205, 48
    %v6291 = vpop.permute.xlu0 %6290
    %6292 = vrot.lane.b32.xlu0 %v206, 48
    %v6293 = vpop.permute.xlu0 %6292
    %6294 = vrot.lane.b32.xlu0 %v208, 48
    %v6295 = vpop.permute.xlu0 %6294
    %6296 = vrot.lane.b32.xlu0 %v209, 48
    %v6297 = vpop.permute.xlu0 %6296
    %6298 = vrot.lane.b32.xlu0 %v211, 48
    %v6299 = vpop.permute.xlu0 %6298
    %6300 = vrot.lane.b32.xlu0 %v212, 48
    %v6301 = vpop.permute.xlu0 %6300
    %6302 = vrot.lane.b32.xlu0 %v214, 48
    %v6303 = vpop.permute.xlu0 %6302
    %6304 = vrot.lane.b32.xlu0 %v215, 48
    %v6305 = vpop.permute.xlu0 %6304
    %6306 = vrot.lane.b32.xlu0 %v217, 48
    %v6307 = vpop.permute.xlu0 %6306
    %6308 = vrot.lane.b32.xlu0 %v218, 48
    %v6309 = vpop.permute.xlu0 %6308
    %6310 = vrot.lane.b32.xlu0 %v220, 48
    %v6311 = vpop.permute.xlu0 %6310
    %6312 = vrot.lane.b32.xlu0 %v221, 48
    %v6313 = vpop.permute.xlu0 %6312
    %6314 = vrot.lane.b32.xlu0 %v223, 48
    %v6315 = vpop.permute.xlu0 %6314
    %6316 = vrot.lane.b32.xlu0 %v224, 48
    %v6317 = vpop.permute.xlu0 %6316
    %6318 = vrot.lane.b32.xlu0 %v226, 48
    %v6319 = vpop.permute.xlu0 %6318
    %6320 = vrot.lane.b32.xlu0 %v227, 48
    %v6321 = vpop.permute.xlu0 %6320
    %6322 = vrot.lane.b32.xlu0 %v229, 48
    %v6323 = vpop.permute.xlu0 %6322
    %6324 = vrot.lane.b32.xlu0 %v230, 48
    %v6325 = vpop.permute.xlu0 %6324
    %6326 = vrot.lane.b32.xlu0 %v232, 48
    %v6327 = vpop.permute.xlu0 %6326
    %6328 = vrot.lane.b32.xlu0 %v233, 48
    %v6329 = vpop.permute.xlu0 %6328
    %6330 = vrot.lane.b32.xlu0 %v235, 48
    %v6331 = vpop.permute.xlu0 %6330
    %6332 = vrot.lane.b32.xlu0 %v236, 48
    %v6333 = vpop.permute.xlu0 %6332
    %6334 = vrot.lane.b32.xlu0 %v238, 48
    %v6335 = vpop.permute.xlu0 %6334
    %6336 = vrot.lane.b32.xlu0 %v239, 48
    %v6337 = vpop.permute.xlu0 %6336
    %6338 = vrot.lane.b32.xlu0 %v241, 48
    %v6339 = vpop.permute.xlu0 %6338
    %6340 = vrot.lane.b32.xlu0 %v242, 48
    %v6341 = vpop.permute.xlu0 %6340
    %6342 = vrot.lane.b32.xlu0 %v250, 48
    %v6343 = vpop.permute.xlu0 %6342
    %6344 = vrot.lane.b32.xlu0 %v251, 48
    %v6345 = vpop.permute.xlu0 %6344
    %6346 = vrot.lane.b32.xlu0 %v253, 48
    %v6347 = vpop.permute.xlu0 %6346
    %6348 = vrot.lane.b32.xlu0 %v254, 48
    %v6349 = vpop.permute.xlu0 %6348
    %6350 = vrot.lane.b32.xlu0 %v256, 48
    %v6351 = vpop.permute.xlu0 %6350
    %6352 = vrot.lane.b32.xlu0 %v257, 48
    %v6353 = vpop.permute.xlu0 %6352
    %6354 = vrot.lane.b32.xlu0 %v259, 48
    %v6355 = vpop.permute.xlu0 %6354
    %6356 = vrot.lane.b32.xlu0 %v260, 48
    %v6357 = vpop.permute.xlu0 %6356
    %6358 = vrot.lane.b32.xlu0 %v262, 48
    %v6359 = vpop.permute.xlu0 %6358
    %6360 = vrot.lane.b32.xlu0 %v263, 48
    %v6361 = vpop.permute.xlu0 %6360
    %6362 = vrot.lane.b32.xlu0 %v265, 48
    %v6363 = vpop.permute.xlu0 %6362
    %6364 = vrot.lane.b32.xlu0 %v266, 48
    %v6365 = vpop.permute.xlu0 %6364
    %6366 = vrot.lane.b32.xlu0 %v268, 48
    %v6367 = vpop.permute.xlu0 %6366
    %6368 = vrot.lane.b32.xlu0 %v269, 48
    %v6369 = vpop.permute.xlu0 %6368
    %6370 = vrot.lane.b32.xlu0 %v271, 48
    %v6371 = vpop.permute.xlu0 %6370
    %6372 = vrot.lane.b32.xlu0 %v272, 48
    %v6373 = vpop.permute.xlu0 %6372
    %6374 = vrot.lane.b32.xlu0 %v274, 48
    %v6375 = vpop.permute.xlu0 %6374
    %6376 = vrot.lane.b32.xlu0 %v275, 48
    %v6377 = vpop.permute.xlu0 %6376
    %6378 = vrot.lane.b32.xlu0 %v277, 48
    %v6379 = vpop.permute.xlu0 %6378
    %6380 = vrot.lane.b32.xlu0 %v278, 48
    %v6381 = vpop.permute.xlu0 %6380
    %6382 = vrot.lane.b32.xlu0 %v280, 48
    %v6383 = vpop.permute.xlu0 %6382
    %6384 = vrot.lane.b32.xlu0 %v281, 48
    %v6385 = vpop.permute.xlu0 %6384
    %6386 = vrot.lane.b32.xlu0 %v283, 48
    %v6387 = vpop.permute.xlu0 %6386
    %6388 = vrot.lane.b32.xlu0 %v284, 48
    %v6389 = vpop.permute.xlu0 %6388
    %6390 = vrot.lane.b32.xlu0 %v286, 48
    %v6391 = vpop.permute.xlu0 %6390
    %6392 = vrot.lane.b32.xlu0 %v287, 48
    %v6393 = vpop.permute.xlu0 %6392
    %6394 = vrot.lane.b32.xlu0 %v289, 48
    %v6395 = vpop.permute.xlu0 %6394
    %6396 = vrot.lane.b32.xlu0 %v290, 48
    %v6397 = vpop.permute.xlu0 %6396
    %6398 = vrot.lane.b32.xlu0 %v292, 48
    %v6399 = vpop.permute.xlu0 %6398
    %6400 = vrot.lane.b32.xlu0 %v293, 48
    %v6401 = vpop.permute.xlu0 %6400
    %6402 = vrot.lane.b32.xlu0 %v295, 48
    %v6403 = vpop.permute.xlu0 %6402
    %6404 = vrot.lane.b32.xlu0 %v296, 48
    %v6405 = vpop.permute.xlu0 %6404
    %6406 = vrot.lane.b32.xlu0 %v304, 48
    %v6407 = vpop.permute.xlu0 %6406
    %6408 = vrot.lane.b32.xlu0 %v305, 48
    %v6409 = vpop.permute.xlu0 %6408
    %6410 = vrot.lane.b32.xlu0 %v307, 48
    %v6411 = vpop.permute.xlu0 %6410
    %6412 = vrot.lane.b32.xlu0 %v308, 48
    %v6413 = vpop.permute.xlu0 %6412
    %6414 = vrot.lane.b32.xlu0 %v310, 48
    %v6415 = vpop.permute.xlu0 %6414
    %6416 = vrot.lane.b32.xlu0 %v311, 48
    %v6417 = vpop.permute.xlu0 %6416
    %6418 = vrot.lane.b32.xlu0 %v313, 48
    %v6419 = vpop.permute.xlu0 %6418
    %6420 = vrot.lane.b32.xlu0 %v314, 48
    %v6421 = vpop.permute.xlu0 %6420
    %6422 = vrot.lane.b32.xlu0 %v316, 48
    %v6423 = vpop.permute.xlu0 %6422
    %6424 = vrot.lane.b32.xlu0 %v317, 48
    %v6425 = vpop.permute.xlu0 %6424
    %6426 = vrot.lane.b32.xlu0 %v319, 48
    %v6427 = vpop.permute.xlu0 %6426
    %6428 = vrot.lane.b32.xlu0 %v320, 48
    %v6429 = vpop.permute.xlu0 %6428
    %6430 = vrot.lane.b32.xlu0 %v322, 48
    %v6431 = vpop.permute.xlu0 %6430
    %6432 = vrot.lane.b32.xlu0 %v323, 48
    %v6433 = vpop.permute.xlu0 %6432
    %6434 = vrot.lane.b32.xlu0 %v325, 48
    %v6435 = vpop.permute.xlu0 %6434
    %6436 = vrot.lane.b32.xlu0 %v326, 48
    %v6437 = vpop.permute.xlu0 %6436
    %6438 = vrot.lane.b32.xlu0 %v328, 48
    %v6439 = vpop.permute.xlu0 %6438
    %6440 = vrot.lane.b32.xlu0 %v329, 48
    %v6441 = vpop.permute.xlu0 %6440
    %6442 = vrot.lane.b32.xlu0 %v331, 48
    %v6443 = vpop.permute.xlu0 %6442
    %6444 = vrot.lane.b32.xlu0 %v332, 48
    %v6445 = vpop.permute.xlu0 %6444
    %6446 = vrot.lane.b32.xlu0 %v334, 48
    %v6447 = vpop.permute.xlu0 %6446
    %6448 = vrot.lane.b32.xlu0 %v335, 48
    %v6449 = vpop.permute.xlu0 %6448
    %6450 = vrot.lane.b32.xlu0 %v337, 48
    %v6451 = vpop.permute.xlu0 %6450
    %6452 = vrot.lane.b32.xlu0 %v338, 48
    %v6453 = vpop.permute.xlu0 %6452
    %6454 = vrot.lane.b32.xlu0 %v340, 48
    %v6455 = vpop.permute.xlu0 %6454
    %6456 = vrot.lane.b32.xlu0 %v341, 48
    %v6457 = vpop.permute.xlu0 %6456
    %6458 = vrot.lane.b32.xlu0 %v343, 48
    %v6459 = vpop.permute.xlu0 %6458
    %6460 = vrot.lane.b32.xlu0 %v344, 48
    %v6461 = vpop.permute.xlu0 %6460
    %6462 = vrot.lane.b32.xlu0 %v346, 48
    %v6463 = vpop.permute.xlu0 %6462
    %6464 = vrot.lane.b32.xlu0 %v347, 48
    %v6465 = vpop.permute.xlu0 %6464
    %6466 = vrot.lane.b32.xlu0 %v349, 48
    %v6467 = vpop.permute.xlu0 %6466
    %6468 = vrot.lane.b32.xlu0 %v350, 48
    %v6469 = vpop.permute.xlu0 %6468
    %6470 = vrot.lane.b32.xlu0 %v358, 48
    %v6471 = vpop.permute.xlu0 %6470
    %6472 = vrot.lane.b32.xlu0 %v359, 48
    %v6473 = vpop.permute.xlu0 %6472
    %6474 = vrot.lane.b32.xlu0 %v361, 48
    %v6475 = vpop.permute.xlu0 %6474
    %6476 = vrot.lane.b32.xlu0 %v362, 48
    %v6477 = vpop.permute.xlu0 %6476
    %6478 = vrot.lane.b32.xlu0 %v364, 48
    %v6479 = vpop.permute.xlu0 %6478
    %6480 = vrot.lane.b32.xlu0 %v365, 48
    %v6481 = vpop.permute.xlu0 %6480
    %6482 = vrot.lane.b32.xlu0 %v367, 48
    %v6483 = vpop.permute.xlu0 %6482
    %6484 = vrot.lane.b32.xlu0 %v368, 48
    %v6485 = vpop.permute.xlu0 %6484
    %6486 = vrot.lane.b32.xlu0 %v370, 48
    %v6487 = vpop.permute.xlu0 %6486
    %6488 = vrot.lane.b32.xlu0 %v371, 48
    %v6489 = vpop.permute.xlu0 %6488
    %6490 = vrot.lane.b32.xlu0 %v373, 48
    %v6491 = vpop.permute.xlu0 %6490
    %6492 = vrot.lane.b32.xlu0 %v374, 48
    %v6493 = vpop.permute.xlu0 %6492
    %6494 = vrot.lane.b32.xlu0 %v376, 48
    %v6495 = vpop.permute.xlu0 %6494
    %6496 = vrot.lane.b32.xlu0 %v377, 48
    %v6497 = vpop.permute.xlu0 %6496
    %6498 = vrot.lane.b32.xlu0 %v379, 48
    %v6499 = vpop.permute.xlu0 %6498
    %6500 = vrot.lane.b32.xlu0 %v380, 48
    %v6501 = vpop.permute.xlu0 %6500
    %6502 = vrot.lane.b32.xlu0 %v382, 48
    %v6503 = vpop.permute.xlu0 %6502
    %6504 = vrot.lane.b32.xlu0 %v383, 48
    %v6505 = vpop.permute.xlu0 %6504
    %6506 = vrot.lane.b32.xlu0 %v385, 48
    %v6507 = vpop.permute.xlu0 %6506
    %6508 = vrot.lane.b32.xlu0 %v386, 48
    %v6509 = vpop.permute.xlu0 %6508
    %6510 = vrot.lane.b32.xlu0 %v388, 48
    %v6511 = vpop.permute.xlu0 %6510
    %6512 = vrot.lane.b32.xlu0 %v389, 48
    %v6513 = vpop.permute.xlu0 %6512
    %6514 = vrot.lane.b32.xlu0 %v391, 48
    %v6515 = vpop.permute.xlu0 %6514
    %6516 = vrot.lane.b32.xlu0 %v392, 48
    %v6517 = vpop.permute.xlu0 %6516
    %6518 = vrot.lane.b32.xlu0 %v394, 48
    %v6519 = vpop.permute.xlu0 %6518
    %6520 = vrot.lane.b32.xlu0 %v395, 48
    %v6521 = vpop.permute.xlu0 %6520
    %6522 = vrot.lane.b32.xlu0 %v397, 48
    %v6523 = vpop.permute.xlu0 %6522
    %6524 = vrot.lane.b32.xlu0 %v398, 48
    %v6525 = vpop.permute.xlu0 %6524
    %6526 = vrot.lane.b32.xlu0 %v400, 48
    %v6527 = vpop.permute.xlu0 %6526
    %6528 = vrot.lane.b32.xlu0 %v401, 48
    %v6529 = vpop.permute.xlu0 %6528
    %6530 = vrot.lane.b32.xlu0 %v403, 48
    %v6531 = vpop.permute.xlu0 %6530
    %6532 = vrot.lane.b32.xlu0 %v404, 48
    %v6533 = vpop.permute.xlu0 %6532
    %6534 = vrot.lane.b32.xlu0 %v412, 48
    %v6535 = vpop.permute.xlu0 %6534
    %6536 = vrot.lane.b32.xlu0 %v413, 48
    %v6537 = vpop.permute.xlu0 %6536
    %6538 = vrot.lane.b32.xlu0 %v415, 48
    %v6539 = vpop.permute.xlu0 %6538
    %6540 = vrot.lane.b32.xlu0 %v416, 48
    %v6541 = vpop.permute.xlu0 %6540
    %6542 = vrot.lane.b32.xlu0 %v418, 48
    %v6543 = vpop.permute.xlu0 %6542
    %6544 = vrot.lane.b32.xlu0 %v419, 48
    %v6545 = vpop.permute.xlu0 %6544
    %6546 = vrot.lane.b32.xlu0 %v421, 48
    %v6547 = vpop.permute.xlu0 %6546
    %6548 = vrot.lane.b32.xlu0 %v422, 48
    %v6549 = vpop.permute.xlu0 %6548
    %6550 = vrot.lane.b32.xlu0 %v424, 48
    %v6551 = vpop.permute.xlu0 %6550
    %6552 = vrot.lane.b32.xlu0 %v425, 48
    %v6553 = vpop.permute.xlu0 %6552
    %6554 = vrot.lane.b32.xlu0 %v427, 48
    %v6555 = vpop.permute.xlu0 %6554
    %6556 = vrot.lane.b32.xlu0 %v428, 48
    %v6557 = vpop.permute.xlu0 %6556
    %6558 = vrot.lane.b32.xlu0 %v430, 48
    %v6559 = vpop.permute.xlu0 %6558
    %6560 = vrot.lane.b32.xlu0 %v431, 48
    %v6561 = vpop.permute.xlu0 %6560
    %6562 = vrot.lane.b32.xlu0 %v433, 48
    %v6563 = vpop.permute.xlu0 %6562
    %6564 = vrot.lane.b32.xlu0 %v434, 48
    %v6565 = vpop.permute.xlu0 %6564
    %6566 = vrot.lane.b32.xlu0 %v436, 48
    %v6567 = vpop.permute.xlu0 %6566
    %6568 = vrot.lane.b32.xlu0 %v437, 48
    %v6569 = vpop.permute.xlu0 %6568
    %6570 = vrot.lane.b32.xlu0 %v439, 48
    %v6571 = vpop.permute.xlu0 %6570
    %6572 = vrot.lane.b32.xlu0 %v440, 48
    %v6573 = vpop.permute.xlu0 %6572
    %6574 = vrot.lane.b32.xlu0 %v442, 48
    %v6575 = vpop.permute.xlu0 %6574
    %6576 = vrot.lane.b32.xlu0 %v443, 48
    %v6577 = vpop.permute.xlu0 %6576
    %6578 = vrot.lane.b32.xlu0 %v445, 48
    %v6579 = vpop.permute.xlu0 %6578
    %6580 = vrot.lane.b32.xlu0 %v446, 48
    %v6581 = vpop.permute.xlu0 %6580
    %6582 = vrot.lane.b32.xlu0 %v448, 48
    %v6583 = vpop.permute.xlu0 %6582
    %6584 = vrot.lane.b32.xlu0 %v449, 48
    %v6585 = vpop.permute.xlu0 %6584
    %6586 = vrot.lane.b32.xlu0 %v451, 48
    %v6587 = vpop.permute.xlu0 %6586
    %6588 = vrot.lane.b32.xlu0 %v452, 48
    %v6589 = vpop.permute.xlu0 %6588
    %6590 = vrot.lane.b32.xlu0 %v454, 48
    %v6591 = vpop.permute.xlu0 %6590
    %6592 = vrot.lane.b32.xlu0 %v455, 48
    %v6593 = vpop.permute.xlu0 %6592
    %6594 = vrot.lane.b32.xlu0 %v457, 48
    %v6595 = vpop.permute.xlu0 %6594
    %6596 = vrot.lane.b32.xlu0 %v458, 48
    %v6597 = vpop.permute.xlu0 %6596
    %v6862 = vrot.slane %v79, 1
    %v6863 = vrot.slane %v80, 1
    %v6864 = vsel %vm844, %v6862, %v6863
    %v6865 = vrot.slane %v81, 1
    %v6866 = vsel %vm844, %v6863, %v6865
    %v6867 = vrot.slane %v133, 1
    %v6868 = vrot.slane %v134, 1
    %v6869 = vsel %vm844, %v6867, %v6868
    %v6870 = vrot.slane %v135, 1
    %v6871 = vsel %vm844, %v6868, %v6870
    %v6872 = vrot.slane %v187, 1
    %v6873 = vrot.slane %v188, 1
    %v6874 = vsel %vm844, %v6872, %v6873
    %v6875 = vrot.slane %v189, 1
    %v6876 = vsel %vm844, %v6873, %v6875
    %v6877 = vrot.slane %v241, 1
    %v6878 = vrot.slane %v242, 1
    %v6879 = vsel %vm844, %v6877, %v6878
    %v6880 = vrot.slane %v243, 1
    %v6881 = vsel %vm844, %v6878, %v6880
    %v6882 = vrot.slane %v295, 1
    %v6883 = vrot.slane %v296, 1
    %v6884 = vsel %vm844, %v6882, %v6883
    %v6885 = vrot.slane %v297, 1
    %v6886 = vsel %vm844, %v6883, %v6885
    %v6887 = vrot.slane %v349, 1
    %v6888 = vrot.slane %v350, 1
    %v6889 = vsel %vm844, %v6887, %v6888
    %v6890 = vrot.slane %v351, 1
    %v6891 = vsel %vm844, %v6888, %v6890
    %v6892 = vrot.slane %v403, 1
    %v6893 = vrot.slane %v404, 1
    %v6894 = vsel %vm844, %v6892, %v6893
    %v6895 = vrot.slane %v405, 1
    %v6896 = vsel %vm844, %v6893, %v6895
    %v6897 = vrot.slane %v457, 1
    %v6898 = vrot.slane %v458, 1
    %v6899 = vsel %vm844, %v6897, %v6898
    %v6900 = vrot.slane %v459, 1
    %v6901 = vsel %vm844, %v6898, %v6900
    %6902 = vrot.lane.b32.xlu0 %v857, 56
    %v6903 = vpop.permute.xlu0 %6902
    %6904 = vrot.lane.b32.xlu0 %v859, 56
    %v6905 = vpop.permute.xlu0 %6904
    %6906 = vrot.lane.b32.xlu0 %v862, 56
    %v6907 = vpop.permute.xlu0 %6906
    %6908 = vrot.lane.b32.xlu0 %v864, 56
    %v6909 = vpop.permute.xlu0 %6908
    %6910 = vrot.lane.b32.xlu0 %v867, 56
    %v6911 = vpop.permute.xlu0 %6910
    %6912 = vrot.lane.b32.xlu0 %v869, 56
    %v6913 = vpop.permute.xlu0 %6912
    %6914 = vrot.lane.b32.xlu0 %v872, 56
    %v6915 = vpop.permute.xlu0 %6914
    %6916 = vrot.lane.b32.xlu0 %v874, 56
    %v6917 = vpop.permute.xlu0 %6916
    %6918 = vrot.lane.b32.xlu0 %v877, 56
    %v6919 = vpop.permute.xlu0 %6918
    %6920 = vrot.lane.b32.xlu0 %v879, 56
    %v6921 = vpop.permute.xlu0 %6920
    %6922 = vrot.lane.b32.xlu0 %v882, 56
    %v6923 = vpop.permute.xlu0 %6922
    %6924 = vrot.lane.b32.xlu0 %v884, 56
    %v6925 = vpop.permute.xlu0 %6924
    %6926 = vrot.lane.b32.xlu0 %v887, 56
    %v6927 = vpop.permute.xlu0 %6926
    %6928 = vrot.lane.b32.xlu0 %v889, 56
    %v6929 = vpop.permute.xlu0 %6928
    %6930 = vrot.lane.b32.xlu0 %v892, 56
    %v6931 = vpop.permute.xlu0 %6930
    %6932 = vrot.lane.b32.xlu0 %v894, 56
    %v6933 = vpop.permute.xlu0 %6932
    %6934 = vrot.lane.b32.xlu0 %v897, 56
    %v6935 = vpop.permute.xlu0 %6934
    %6936 = vrot.lane.b32.xlu0 %v899, 56
    %v6937 = vpop.permute.xlu0 %6936
    %6938 = vrot.lane.b32.xlu0 %v902, 56
    %v6939 = vpop.permute.xlu0 %6938
    %6940 = vrot.lane.b32.xlu0 %v904, 56
    %v6941 = vpop.permute.xlu0 %6940
    %6942 = vrot.lane.b32.xlu0 %v907, 56
    %v6943 = vpop.permute.xlu0 %6942
    %6944 = vrot.lane.b32.xlu0 %v909, 56
    %v6945 = vpop.permute.xlu0 %6944
    %6946 = vrot.lane.b32.xlu0 %v912, 56
    %v6947 = vpop.permute.xlu0 %6946
    %6948 = vrot.lane.b32.xlu0 %v914, 56
    %v6949 = vpop.permute.xlu0 %6948
    %6950 = vrot.lane.b32.xlu0 %v917, 56
    %v6951 = vpop.permute.xlu0 %6950
    %6952 = vrot.lane.b32.xlu0 %v919, 56
    %v6953 = vpop.permute.xlu0 %6952
    %6954 = vrot.lane.b32.xlu0 %v922, 56
    %v6955 = vpop.permute.xlu0 %6954
    %6956 = vrot.lane.b32.xlu0 %v924, 56
    %v6957 = vpop.permute.xlu0 %6956
    %6958 = vrot.lane.b32.xlu0 %v4456, 56
    %v6959 = vpop.permute.xlu0 %6958
    %6960 = vrot.lane.b32.xlu0 %v4458, 56
    %v6961 = vpop.permute.xlu0 %6960
    %6962 = vrot.lane.b32.xlu0 %v6864, 56
    %v6963 = vpop.permute.xlu0 %6962
    %6964 = vrot.lane.b32.xlu0 %v6866, 56
    %v6965 = vpop.permute.xlu0 %6964
    %6966 = vrot.lane.b32.xlu0 %v937, 56
    %v6967 = vpop.permute.xlu0 %6966
    %6968 = vrot.lane.b32.xlu0 %v939, 56
    %v6969 = vpop.permute.xlu0 %6968
    %6970 = vrot.lane.b32.xlu0 %v942, 56
    %v6971 = vpop.permute.xlu0 %6970
    %6972 = vrot.lane.b32.xlu0 %v944, 56
    %v6973 = vpop.permute.xlu0 %6972
    %6974 = vrot.lane.b32.xlu0 %v947, 56
    %v6975 = vpop.permute.xlu0 %6974
    %6976 = vrot.lane.b32.xlu0 %v949, 56
    %v6977 = vpop.permute.xlu0 %6976
    %6978 = vrot.lane.b32.xlu0 %v952, 56
    %v6979 = vpop.permute.xlu0 %6978
    %6980 = vrot.lane.b32.xlu0 %v954, 56
    %v6981 = vpop.permute.xlu0 %6980
    %6982 = vrot.lane.b32.xlu0 %v957, 56
    %v6983 = vpop.permute.xlu0 %6982
    %6984 = vrot.lane.b32.xlu0 %v959, 56
    %v6985 = vpop.permute.xlu0 %6984
    %6986 = vrot.lane.b32.xlu0 %v962, 56
    %v6987 = vpop.permute.xlu0 %6986
    %6988 = vrot.lane.b32.xlu0 %v964, 56
    %v6989 = vpop.permute.xlu0 %6988
    %6990 = vrot.lane.b32.xlu0 %v967, 56
    %v6991 = vpop.permute.xlu0 %6990
    %6992 = vrot.lane.b32.xlu0 %v969, 56
    %v6993 = vpop.permute.xlu0 %6992
    %6994 = vrot.lane.b32.xlu0 %v972, 56
    %v6995 = vpop.permute.xlu0 %6994
    %6996 = vrot.lane.b32.xlu0 %v974, 56
    %v6997 = vpop.permute.xlu0 %6996
    %6998 = vrot.lane.b32.xlu0 %v977, 56
    %v6999 = vpop.permute.xlu0 %6998
    %7000 = vrot.lane.b32.xlu0 %v979, 56
    %v7001 = vpop.permute.xlu0 %7000
    %7002 = vrot.lane.b32.xlu0 %v982, 56
    %v7003 = vpop.permute.xlu0 %7002
    %7004 = vrot.lane.b32.xlu0 %v984, 56
    %v7005 = vpop.permute.xlu0 %7004
    %7006 = vrot.lane.b32.xlu0 %v987, 56
    %v7007 = vpop.permute.xlu0 %7006
    %7008 = vrot.lane.b32.xlu0 %v989, 56
    %v7009 = vpop.permute.xlu0 %7008
    %7010 = vrot.lane.b32.xlu0 %v992, 56
    %v7011 = vpop.permute.xlu0 %7010
    %7012 = vrot.lane.b32.xlu0 %v994, 56
    %v7013 = vpop.permute.xlu0 %7012
    %7014 = vrot.lane.b32.xlu0 %v997, 56
    %v7015 = vpop.permute.xlu0 %7014
    %7016 = vrot.lane.b32.xlu0 %v999, 56
    %v7017 = vpop.permute.xlu0 %7016
    %7018 = vrot.lane.b32.xlu0 %v1002, 56
    %v7019 = vpop.permute.xlu0 %7018
    %7020 = vrot.lane.b32.xlu0 %v1004, 56
    %v7021 = vpop.permute.xlu0 %7020
    %7022 = vrot.lane.b32.xlu0 %v4461, 56
    %v7023 = vpop.permute.xlu0 %7022
    %7024 = vrot.lane.b32.xlu0 %v4463, 56
    %v7025 = vpop.permute.xlu0 %7024
    %7026 = vrot.lane.b32.xlu0 %v6869, 56
    %v7027 = vpop.permute.xlu0 %7026
    %7028 = vrot.lane.b32.xlu0 %v6871, 56
    %v7029 = vpop.permute.xlu0 %7028
    %7030 = vrot.lane.b32.xlu0 %v1017, 56
    %v7031 = vpop.permute.xlu0 %7030
    %7032 = vrot.lane.b32.xlu0 %v1019, 56
    %v7033 = vpop.permute.xlu0 %7032
    %7034 = vrot.lane.b32.xlu0 %v1022, 56
    %v7035 = vpop.permute.xlu0 %7034
    %7036 = vrot.lane.b32.xlu0 %v1024, 56
    %v7037 = vpop.permute.xlu0 %7036
    %7038 = vrot.lane.b32.xlu0 %v1027, 56
    %v7039 = vpop.permute.xlu0 %7038
    %7040 = vrot.lane.b32.xlu0 %v1029, 56
    %v7041 = vpop.permute.xlu0 %7040
    %7042 = vrot.lane.b32.xlu0 %v1032, 56
    %v7043 = vpop.permute.xlu0 %7042
    %7044 = vrot.lane.b32.xlu0 %v1034, 56
    %v7045 = vpop.permute.xlu0 %7044
    %7046 = vrot.lane.b32.xlu0 %v1037, 56
    %v7047 = vpop.permute.xlu0 %7046
    %7048 = vrot.lane.b32.xlu0 %v1039, 56
    %v7049 = vpop.permute.xlu0 %7048
    %7050 = vrot.lane.b32.xlu0 %v1042, 56
    %v7051 = vpop.permute.xlu0 %7050
    %7052 = vrot.lane.b32.xlu0 %v1044, 56
    %v7053 = vpop.permute.xlu0 %7052
    %7054 = vrot.lane.b32.xlu0 %v1047, 56
    %v7055 = vpop.permute.xlu0 %7054
    %7056 = vrot.lane.b32.xlu0 %v1049, 56
    %v7057 = vpop.permute.xlu0 %7056
    %7058 = vrot.lane.b32.xlu0 %v1052, 56
    %v7059 = vpop.permute.xlu0 %7058
    %7060 = vrot.lane.b32.xlu0 %v1054, 56
    %v7061 = vpop.permute.xlu0 %7060
    %7062 = vrot.lane.b32.xlu0 %v1057, 56
    %v7063 = vpop.permute.xlu0 %7062
    %7064 = vrot.lane.b32.xlu0 %v1059, 56
    %v7065 = vpop.permute.xlu0 %7064
    %7066 = vrot.lane.b32.xlu0 %v1062, 56
    %v7067 = vpop.permute.xlu0 %7066
    %7068 = vrot.lane.b32.xlu0 %v1064, 56
    %v7069 = vpop.permute.xlu0 %7068
    %7070 = vrot.lane.b32.xlu0 %v1067, 56
    %v7071 = vpop.permute.xlu0 %7070
    %7072 = vrot.lane.b32.xlu0 %v1069, 56
    %v7073 = vpop.permute.xlu0 %7072
    %7074 = vrot.lane.b32.xlu0 %v1072, 56
    %v7075 = vpop.permute.xlu0 %7074
    %7076 = vrot.lane.b32.xlu0 %v1074, 56
    %v7077 = vpop.permute.xlu0 %7076
    %7078 = vrot.lane.b32.xlu0 %v1077, 56
    %v7079 = vpop.permute.xlu0 %7078
    %7080 = vrot.lane.b32.xlu0 %v1079, 56
    %v7081 = vpop.permute.xlu0 %7080
    %7082 = vrot.lane.b32.xlu0 %v1082, 56
    %v7083 = vpop.permute.xlu0 %7082
    %7084 = vrot.lane.b32.xlu0 %v1084, 56
    %v7085 = vpop.permute.xlu0 %7084
    %7086 = vrot.lane.b32.xlu0 %v4466, 56
    %v7087 = vpop.permute.xlu0 %7086
    %7088 = vrot.lane.b32.xlu0 %v4468, 56
    %v7089 = vpop.permute.xlu0 %7088
    %7090 = vrot.lane.b32.xlu0 %v6874, 56
    %v7091 = vpop.permute.xlu0 %7090
    %7092 = vrot.lane.b32.xlu0 %v6876, 56
    %v7093 = vpop.permute.xlu0 %7092
    %7094 = vrot.lane.b32.xlu0 %v1097, 56
    %v7095 = vpop.permute.xlu0 %7094
    %7096 = vrot.lane.b32.xlu0 %v1099, 56
    %v7097 = vpop.permute.xlu0 %7096
    %7098 = vrot.lane.b32.xlu0 %v1102, 56
    %v7099 = vpop.permute.xlu0 %7098
    %7100 = vrot.lane.b32.xlu0 %v1104, 56
    %v7101 = vpop.permute.xlu0 %7100
    %7102 = vrot.lane.b32.xlu0 %v1107, 56
    %v7103 = vpop.permute.xlu0 %7102
    %7104 = vrot.lane.b32.xlu0 %v1109, 56
    %v7105 = vpop.permute.xlu0 %7104
    %7106 = vrot.lane.b32.xlu0 %v1112, 56
    %v7107 = vpop.permute.xlu0 %7106
    %7108 = vrot.lane.b32.xlu0 %v1114, 56
    %v7109 = vpop.permute.xlu0 %7108
    %7110 = vrot.lane.b32.xlu0 %v1117, 56
    %v7111 = vpop.permute.xlu0 %7110
    %7112 = vrot.lane.b32.xlu0 %v1119, 56
    %v7113 = vpop.permute.xlu0 %7112
    %7114 = vrot.lane.b32.xlu0 %v1122, 56
    %v7115 = vpop.permute.xlu0 %7114
    %7116 = vrot.lane.b32.xlu0 %v1124, 56
    %v7117 = vpop.permute.xlu0 %7116
    %7118 = vrot.lane.b32.xlu0 %v1127, 56
    %v7119 = vpop.permute.xlu0 %7118
    %7120 = vrot.lane.b32.xlu0 %v1129, 56
    %v7121 = vpop.permute.xlu0 %7120
    %7122 = vrot.lane.b32.xlu0 %v1132, 56
    %v7123 = vpop.permute.xlu0 %7122
    %7124 = vrot.lane.b32.xlu0 %v1134, 56
    %v7125 = vpop.permute.xlu0 %7124
    %7126 = vrot.lane.b32.xlu0 %v1137, 56
    %v7127 = vpop.permute.xlu0 %7126
    %7128 = vrot.lane.b32.xlu0 %v1139, 56
    %v7129 = vpop.permute.xlu0 %7128
    %7130 = vrot.lane.b32.xlu0 %v1142, 56
    %v7131 = vpop.permute.xlu0 %7130
    %7132 = vrot.lane.b32.xlu0 %v1144, 56
    %v7133 = vpop.permute.xlu0 %7132
    %7134 = vrot.lane.b32.xlu0 %v1147, 56
    %v7135 = vpop.permute.xlu0 %7134
    %7136 = vrot.lane.b32.xlu0 %v1149, 56
    %v7137 = vpop.permute.xlu0 %7136
    %7138 = vrot.lane.b32.xlu0 %v1152, 56
    %v7139 = vpop.permute.xlu0 %7138
    %7140 = vrot.lane.b32.xlu0 %v1154, 56
    %v7141 = vpop.permute.xlu0 %7140
    %7142 = vrot.lane.b32.xlu0 %v1157, 56
    %v7143 = vpop.permute.xlu0 %7142
    %7144 = vrot.lane.b32.xlu0 %v1159, 56
    %v7145 = vpop.permute.xlu0 %7144
    %7146 = vrot.lane.b32.xlu0 %v1162, 56
    %v7147 = vpop.permute.xlu0 %7146
    %7148 = vrot.lane.b32.xlu0 %v1164, 56
    %v7149 = vpop.permute.xlu0 %7148
    %7150 = vrot.lane.b32.xlu0 %v4471, 56
    %v7151 = vpop.permute.xlu0 %7150
    %7152 = vrot.lane.b32.xlu0 %v4473, 56
    %v7153 = vpop.permute.xlu0 %7152
    %7154 = vrot.lane.b32.xlu0 %v6879, 56
    %v7155 = vpop.permute.xlu0 %7154
    %7156 = vrot.lane.b32.xlu0 %v6881, 56
    %v7157 = vpop.permute.xlu0 %7156
    %7158 = vrot.lane.b32.xlu0 %v1177, 56
    %v7159 = vpop.permute.xlu0 %7158
    %7160 = vrot.lane.b32.xlu0 %v1179, 56
    %v7161 = vpop.permute.xlu0 %7160
    %7162 = vrot.lane.b32.xlu0 %v1182, 56
    %v7163 = vpop.permute.xlu0 %7162
    %7164 = vrot.lane.b32.xlu0 %v1184, 56
    %v7165 = vpop.permute.xlu0 %7164
    %7166 = vrot.lane.b32.xlu0 %v1187, 56
    %v7167 = vpop.permute.xlu0 %7166
    %7168 = vrot.lane.b32.xlu0 %v1189, 56
    %v7169 = vpop.permute.xlu0 %7168
    %7170 = vrot.lane.b32.xlu0 %v1192, 56
    %v7171 = vpop.permute.xlu0 %7170
    %7172 = vrot.lane.b32.xlu0 %v1194, 56
    %v7173 = vpop.permute.xlu0 %7172
    %7174 = vrot.lane.b32.xlu0 %v1197, 56
    %v7175 = vpop.permute.xlu0 %7174
    %7176 = vrot.lane.b32.xlu0 %v1199, 56
    %v7177 = vpop.permute.xlu0 %7176
    %7178 = vrot.lane.b32.xlu0 %v1202, 56
    %v7179 = vpop.permute.xlu0 %7178
    %7180 = vrot.lane.b32.xlu0 %v1204, 56
    %v7181 = vpop.permute.xlu0 %7180
    %7182 = vrot.lane.b32.xlu0 %v1207, 56
    %v7183 = vpop.permute.xlu0 %7182
    %7184 = vrot.lane.b32.xlu0 %v1209, 56
    %v7185 = vpop.permute.xlu0 %7184
    %7186 = vrot.lane.b32.xlu0 %v1212, 56
    %v7187 = vpop.permute.xlu0 %7186
    %7188 = vrot.lane.b32.xlu0 %v1214, 56
    %v7189 = vpop.permute.xlu0 %7188
    %7190 = vrot.lane.b32.xlu0 %v1217, 56
    %v7191 = vpop.permute.xlu0 %7190
    %7192 = vrot.lane.b32.xlu0 %v1219, 56
    %v7193 = vpop.permute.xlu0 %7192
    %7194 = vrot.lane.b32.xlu0 %v1222, 56
    %v7195 = vpop.permute.xlu0 %7194
    %7196 = vrot.lane.b32.xlu0 %v1224, 56
    %v7197 = vpop.permute.xlu0 %7196
    %7198 = vrot.lane.b32.xlu0 %v1227, 56
    %v7199 = vpop.permute.xlu0 %7198
    %7200 = vrot.lane.b32.xlu0 %v1229, 56
    %v7201 = vpop.permute.xlu0 %7200
    %7202 = vrot.lane.b32.xlu0 %v1232, 56
    %v7203 = vpop.permute.xlu0 %7202
    %7204 = vrot.lane.b32.xlu0 %v1234, 56
    %v7205 = vpop.permute.xlu0 %7204
    %7206 = vrot.lane.b32.xlu0 %v1237, 56
    %v7207 = vpop.permute.xlu0 %7206
    %7208 = vrot.lane.b32.xlu0 %v1239, 56
    %v7209 = vpop.permute.xlu0 %7208
    %7210 = vrot.lane.b32.xlu0 %v1242, 56
    %v7211 = vpop.permute.xlu0 %7210
    %7212 = vrot.lane.b32.xlu0 %v1244, 56
    %v7213 = vpop.permute.xlu0 %7212
    %7214 = vrot.lane.b32.xlu0 %v4476, 56
    %v7215 = vpop.permute.xlu0 %7214
    %7216 = vrot.lane.b32.xlu0 %v4478, 56
    %v7217 = vpop.permute.xlu0 %7216
    %7218 = vrot.lane.b32.xlu0 %v6884, 56
    %v7219 = vpop.permute.xlu0 %7218
    %7220 = vrot.lane.b32.xlu0 %v6886, 56
    %v7221 = vpop.permute.xlu0 %7220
    %7222 = vrot.lane.b32.xlu0 %v1257, 56
    %v7223 = vpop.permute.xlu0 %7222
    %7224 = vrot.lane.b32.xlu0 %v1259, 56
    %v7225 = vpop.permute.xlu0 %7224
    %7226 = vrot.lane.b32.xlu0 %v1262, 56
    %v7227 = vpop.permute.xlu0 %7226
    %7228 = vrot.lane.b32.xlu0 %v1264, 56
    %v7229 = vpop.permute.xlu0 %7228
    %7230 = vrot.lane.b32.xlu0 %v1267, 56
    %v7231 = vpop.permute.xlu0 %7230
    %7232 = vrot.lane.b32.xlu0 %v1269, 56
    %v7233 = vpop.permute.xlu0 %7232
    %7234 = vrot.lane.b32.xlu0 %v1272, 56
    %v7235 = vpop.permute.xlu0 %7234
    %7236 = vrot.lane.b32.xlu0 %v1274, 56
    %v7237 = vpop.permute.xlu0 %7236
    %7238 = vrot.lane.b32.xlu0 %v1277, 56
    %v7239 = vpop.permute.xlu0 %7238
    %7240 = vrot.lane.b32.xlu0 %v1279, 56
    %v7241 = vpop.permute.xlu0 %7240
    %7242 = vrot.lane.b32.xlu0 %v1282, 56
    %v7243 = vpop.permute.xlu0 %7242
    %7244 = vrot.lane.b32.xlu0 %v1284, 56
    %v7245 = vpop.permute.xlu0 %7244
    %7246 = vrot.lane.b32.xlu0 %v1287, 56
    %v7247 = vpop.permute.xlu0 %7246
    %7248 = vrot.lane.b32.xlu0 %v1289, 56
    %v7249 = vpop.permute.xlu0 %7248
    %7250 = vrot.lane.b32.xlu0 %v1292, 56
    %v7251 = vpop.permute.xlu0 %7250
    %7252 = vrot.lane.b32.xlu0 %v1294, 56
    %v7253 = vpop.permute.xlu0 %7252
    %7254 = vrot.lane.b32.xlu0 %v1297, 56
    %v7255 = vpop.permute.xlu0 %7254
    %7256 = vrot.lane.b32.xlu0 %v1299, 56
    %v7257 = vpop.permute.xlu0 %7256
    %7258 = vrot.lane.b32.xlu0 %v1302, 56
    %v7259 = vpop.permute.xlu0 %7258
    %7260 = vrot.lane.b32.xlu0 %v1304, 56
    %v7261 = vpop.permute.xlu0 %7260
    %7262 = vrot.lane.b32.xlu0 %v1307, 56
    %v7263 = vpop.permute.xlu0 %7262
    %7264 = vrot.lane.b32.xlu0 %v1309, 56
    %v7265 = vpop.permute.xlu0 %7264
    %7266 = vrot.lane.b32.xlu0 %v1312, 56
    %v7267 = vpop.permute.xlu0 %7266
    %7268 = vrot.lane.b32.xlu0 %v1314, 56
    %v7269 = vpop.permute.xlu0 %7268
    %7270 = vrot.lane.b32.xlu0 %v1317, 56
    %v7271 = vpop.permute.xlu0 %7270
    %7272 = vrot.lane.b32.xlu0 %v1319, 56
    %v7273 = vpop.permute.xlu0 %7272
    %7274 = vrot.lane.b32.xlu0 %v1322, 56
    %v7275 = vpop.permute.xlu0 %7274
    %7276 = vrot.lane.b32.xlu0 %v1324, 56
    %v7277 = vpop.permute.xlu0 %7276
    %7278 = vrot.lane.b32.xlu0 %v4481, 56
    %v7279 = vpop.permute.xlu0 %7278
    %7280 = vrot.lane.b32.xlu0 %v4483, 56
    %v7281 = vpop.permute.xlu0 %7280
    %7282 = vrot.lane.b32.xlu0 %v6889, 56
    %v7283 = vpop.permute.xlu0 %7282
    %7284 = vrot.lane.b32.xlu0 %v6891, 56
    %v7285 = vpop.permute.xlu0 %7284
    %7286 = vrot.lane.b32.xlu0 %v1337, 56
    %v7287 = vpop.permute.xlu0 %7286
    %7288 = vrot.lane.b32.xlu0 %v1339, 56
    %v7289 = vpop.permute.xlu0 %7288
    %7290 = vrot.lane.b32.xlu0 %v1342, 56
    %v7291 = vpop.permute.xlu0 %7290
    %7292 = vrot.lane.b32.xlu0 %v1344, 56
    %v7293 = vpop.permute.xlu0 %7292
    %7294 = vrot.lane.b32.xlu0 %v1347, 56
    %v7295 = vpop.permute.xlu0 %7294
    %7296 = vrot.lane.b32.xlu0 %v1349, 56
    %v7297 = vpop.permute.xlu0 %7296
    %7298 = vrot.lane.b32.xlu0 %v1352, 56
    %v7299 = vpop.permute.xlu0 %7298
    %7300 = vrot.lane.b32.xlu0 %v1354, 56
    %v7301 = vpop.permute.xlu0 %7300
    %7302 = vrot.lane.b32.xlu0 %v1357, 56
    %v7303 = vpop.permute.xlu0 %7302
    %7304 = vrot.lane.b32.xlu0 %v1359, 56
    %v7305 = vpop.permute.xlu0 %7304
    %7306 = vrot.lane.b32.xlu0 %v1362, 56
    %v7307 = vpop.permute.xlu0 %7306
    %7308 = vrot.lane.b32.xlu0 %v1364, 56
    %v7309 = vpop.permute.xlu0 %7308
    %7310 = vrot.lane.b32.xlu0 %v1367, 56
    %v7311 = vpop.permute.xlu0 %7310
    %7312 = vrot.lane.b32.xlu0 %v1369, 56
    %v7313 = vpop.permute.xlu0 %7312
    %7314 = vrot.lane.b32.xlu0 %v1372, 56
    %v7315 = vpop.permute.xlu0 %7314
    %7316 = vrot.lane.b32.xlu0 %v1374, 56
    %v7317 = vpop.permute.xlu0 %7316
    %7318 = vrot.lane.b32.xlu0 %v1377, 56
    %v7319 = vpop.permute.xlu0 %7318
    %7320 = vrot.lane.b32.xlu0 %v1379, 56
    %v7321 = vpop.permute.xlu0 %7320
    %7322 = vrot.lane.b32.xlu0 %v1382, 56
    %v7323 = vpop.permute.xlu0 %7322
    %7324 = vrot.lane.b32.xlu0 %v1384, 56
    %v7325 = vpop.permute.xlu0 %7324
    %7326 = vrot.lane.b32.xlu0 %v1387, 56
    %v7327 = vpop.permute.xlu0 %7326
    %7328 = vrot.lane.b32.xlu0 %v1389, 56
    %v7329 = vpop.permute.xlu0 %7328
    %7330 = vrot.lane.b32.xlu0 %v1392, 56
    %v7331 = vpop.permute.xlu0 %7330
    %7332 = vrot.lane.b32.xlu0 %v1394, 56
    %v7333 = vpop.permute.xlu0 %7332
    %7334 = vrot.lane.b32.xlu0 %v1397, 56
    %v7335 = vpop.permute.xlu0 %7334
    %7336 = vrot.lane.b32.xlu0 %v1399, 56
    %v7337 = vpop.permute.xlu0 %7336
    %7338 = vrot.lane.b32.xlu0 %v1402, 56
    %v7339 = vpop.permute.xlu0 %7338
    %7340 = vrot.lane.b32.xlu0 %v1404, 56
    %v7341 = vpop.permute.xlu0 %7340
    %7342 = vrot.lane.b32.xlu0 %v4486, 56
    %v7343 = vpop.permute.xlu0 %7342
    %7344 = vrot.lane.b32.xlu0 %v4488, 56
    %v7345 = vpop.permute.xlu0 %7344
    %7346 = vrot.lane.b32.xlu0 %v6894, 56
    %v7347 = vpop.permute.xlu0 %7346
    %7348 = vrot.lane.b32.xlu0 %v6896, 56
    %v7349 = vpop.permute.xlu0 %7348
    %7350 = vrot.lane.b32.xlu0 %v1417, 56
    %v7351 = vpop.permute.xlu0 %7350
    %7352 = vrot.lane.b32.xlu0 %v1419, 56
    %v7353 = vpop.permute.xlu0 %7352
    %7354 = vrot.lane.b32.xlu0 %v1422, 56
    %v7355 = vpop.permute.xlu0 %7354
    %7356 = vrot.lane.b32.xlu0 %v1424, 56
    %v7357 = vpop.permute.xlu0 %7356
    %7358 = vrot.lane.b32.xlu0 %v1427, 56
    %v7359 = vpop.permute.xlu0 %7358
    %7360 = vrot.lane.b32.xlu0 %v1429, 56
    %v7361 = vpop.permute.xlu0 %7360
    %7362 = vrot.lane.b32.xlu0 %v1432, 56
    %v7363 = vpop.permute.xlu0 %7362
    %7364 = vrot.lane.b32.xlu0 %v1434, 56
    %v7365 = vpop.permute.xlu0 %7364
    %7366 = vrot.lane.b32.xlu0 %v1437, 56
    %v7367 = vpop.permute.xlu0 %7366
    %7368 = vrot.lane.b32.xlu0 %v1439, 56
    %v7369 = vpop.permute.xlu0 %7368
    %7370 = vrot.lane.b32.xlu0 %v1442, 56
    %v7371 = vpop.permute.xlu0 %7370
    %7372 = vrot.lane.b32.xlu0 %v1444, 56
    %v7373 = vpop.permute.xlu0 %7372
    %7374 = vrot.lane.b32.xlu0 %v1447, 56
    %v7375 = vpop.permute.xlu0 %7374
    %7376 = vrot.lane.b32.xlu0 %v1449, 56
    %v7377 = vpop.permute.xlu0 %7376
    %7378 = vrot.lane.b32.xlu0 %v1452, 56
    %v7379 = vpop.permute.xlu0 %7378
    %7380 = vrot.lane.b32.xlu0 %v1454, 56
    %v7381 = vpop.permute.xlu0 %7380
    %7382 = vrot.lane.b32.xlu0 %v1457, 56
    %v7383 = vpop.permute.xlu0 %7382
    %7384 = vrot.lane.b32.xlu0 %v1459, 56
    %v7385 = vpop.permute.xlu0 %7384
    %7386 = vrot.lane.b32.xlu0 %v1462, 56
    %v7387 = vpop.permute.xlu0 %7386
    %7388 = vrot.lane.b32.xlu0 %v1464, 56
    %v7389 = vpop.permute.xlu0 %7388
    %7390 = vrot.lane.b32.xlu0 %v1467, 56
    %v7391 = vpop.permute.xlu0 %7390
    %7392 = vrot.lane.b32.xlu0 %v1469, 56
    %v7393 = vpop.permute.xlu0 %7392
    %7394 = vrot.lane.b32.xlu0 %v1472, 56
    %v7395 = vpop.permute.xlu0 %7394
    %7396 = vrot.lane.b32.xlu0 %v1474, 56
    %v7397 = vpop.permute.xlu0 %7396
    %7398 = vrot.lane.b32.xlu0 %v1477, 56
    %v7399 = vpop.permute.xlu0 %7398
    %7400 = vrot.lane.b32.xlu0 %v1479, 56
    %v7401 = vpop.permute.xlu0 %7400
    %7402 = vrot.lane.b32.xlu0 %v1482, 56
    %v7403 = vpop.permute.xlu0 %7402
    %7404 = vrot.lane.b32.xlu0 %v1484, 56
    %v7405 = vpop.permute.xlu0 %7404
    %7406 = vrot.lane.b32.xlu0 %v4491, 56
    %v7407 = vpop.permute.xlu0 %7406
    %7408 = vrot.lane.b32.xlu0 %v4493, 56
    %v7409 = vpop.permute.xlu0 %7408
    %7410 = vrot.lane.b32.xlu0 %v6899, 56
    %v7411 = vpop.permute.xlu0 %7410
    %7412 = vrot.lane.b32.xlu0 %v6901, 56
    %v7413 = vpop.permute.xlu0 %7412
    %v7670 = vrot.slane %v79, 2
    %v7671 = vrot.slane %v80, 2
    %v7672 = vsel %vm2253, %v7670, %v7671
    %v7673 = vrot.slane %v81, 2
    %v7674 = vsel %vm2253, %v7671, %v7673
    %v7675 = vrot.slane %v133, 2
    %v7676 = vrot.slane %v134, 2
    %v7677 = vsel %vm2253, %v7675, %v7676
    %v7678 = vrot.slane %v135, 2
    %v7679 = vsel %vm2253, %v7676, %v7678
    %v7680 = vrot.slane %v187, 2
    %v7681 = vrot.slane %v188, 2
    %v7682 = vsel %vm2253, %v7680, %v7681
    %v7683 = vrot.slane %v189, 2
    %v7684 = vsel %vm2253, %v7681, %v7683
    %v7685 = vrot.slane %v241, 2
    %v7686 = vrot.slane %v242, 2
    %v7687 = vsel %vm2253, %v7685, %v7686
    %v7688 = vrot.slane %v243, 2
    %v7689 = vsel %vm2253, %v7686, %v7688
    %v7690 = vrot.slane %v295, 2
    %v7691 = vrot.slane %v296, 2
    %v7692 = vsel %vm2253, %v7690, %v7691
    %v7693 = vrot.slane %v297, 2
    %v7694 = vsel %vm2253, %v7691, %v7693
    %v7695 = vrot.slane %v349, 2
    %v7696 = vrot.slane %v350, 2
    %v7697 = vsel %vm2253, %v7695, %v7696
    %v7698 = vrot.slane %v351, 2
    %v7699 = vsel %vm2253, %v7696, %v7698
    %v7700 = vrot.slane %v403, 2
    %v7701 = vrot.slane %v404, 2
    %v7702 = vsel %vm2253, %v7700, %v7701
    %v7703 = vrot.slane %v405, 2
    %v7704 = vsel %vm2253, %v7701, %v7703
    %v7705 = vrot.slane %v457, 2
    %v7706 = vrot.slane %v458, 2
    %v7707 = vsel %vm2253, %v7705, %v7706
    %v7708 = vrot.slane %v459, 2
    %v7709 = vsel %vm2253, %v7706, %v7708
    %7710 = vrot.lane.b32.xlu0 %v2266, 64
    %v7711 = vpop.permute.xlu0 %7710
    %7712 = vrot.lane.b32.xlu0 %v2268, 64
    %v7713 = vpop.permute.xlu0 %7712
    %7714 = vrot.lane.b32.xlu0 %v2271, 64
    %v7715 = vpop.permute.xlu0 %7714
    %7716 = vrot.lane.b32.xlu0 %v2273, 64
    %v7717 = vpop.permute.xlu0 %7716
    %7718 = vrot.lane.b32.xlu0 %v2276, 64
    %v7719 = vpop.permute.xlu0 %7718
    %7720 = vrot.lane.b32.xlu0 %v2278, 64
    %v7721 = vpop.permute.xlu0 %7720
    %7722 = vrot.lane.b32.xlu0 %v2281, 64
    %v7723 = vpop.permute.xlu0 %7722
    %7724 = vrot.lane.b32.xlu0 %v2283, 64
    %v7725 = vpop.permute.xlu0 %7724
    %7726 = vrot.lane.b32.xlu0 %v2286, 64
    %v7727 = vpop.permute.xlu0 %7726
    %7728 = vrot.lane.b32.xlu0 %v2288, 64
    %v7729 = vpop.permute.xlu0 %7728
    %7730 = vrot.lane.b32.xlu0 %v2291, 64
    %v7731 = vpop.permute.xlu0 %7730
    %7732 = vrot.lane.b32.xlu0 %v2293, 64
    %v7733 = vpop.permute.xlu0 %7732
    %7734 = vrot.lane.b32.xlu0 %v2296, 64
    %v7735 = vpop.permute.xlu0 %7734
    %7736 = vrot.lane.b32.xlu0 %v2298, 64
    %v7737 = vpop.permute.xlu0 %7736
    %7738 = vrot.lane.b32.xlu0 %v2301, 64
    %v7739 = vpop.permute.xlu0 %7738
    %7740 = vrot.lane.b32.xlu0 %v2303, 64
    %v7741 = vpop.permute.xlu0 %7740
    %7742 = vrot.lane.b32.xlu0 %v2306, 64
    %v7743 = vpop.permute.xlu0 %7742
    %7744 = vrot.lane.b32.xlu0 %v2308, 64
    %v7745 = vpop.permute.xlu0 %7744
    %7746 = vrot.lane.b32.xlu0 %v2311, 64
    %v7747 = vpop.permute.xlu0 %7746
    %7748 = vrot.lane.b32.xlu0 %v2313, 64
    %v7749 = vpop.permute.xlu0 %7748
    %7750 = vrot.lane.b32.xlu0 %v2316, 64
    %v7751 = vpop.permute.xlu0 %7750
    %7752 = vrot.lane.b32.xlu0 %v2318, 64
    %v7753 = vpop.permute.xlu0 %7752
    %7754 = vrot.lane.b32.xlu0 %v2321, 64
    %v7755 = vpop.permute.xlu0 %7754
    %7756 = vrot.lane.b32.xlu0 %v2323, 64
    %v7757 = vpop.permute.xlu0 %7756
    %7758 = vrot.lane.b32.xlu0 %v2326, 64
    %v7759 = vpop.permute.xlu0 %7758
    %7760 = vrot.lane.b32.xlu0 %v2328, 64
    %v7761 = vpop.permute.xlu0 %7760
    %7762 = vrot.lane.b32.xlu0 %v2331, 64
    %v7763 = vpop.permute.xlu0 %7762
    %7764 = vrot.lane.b32.xlu0 %v2333, 64
    %v7765 = vpop.permute.xlu0 %7764
    %7766 = vrot.lane.b32.xlu0 %v5264, 64
    %v7767 = vpop.permute.xlu0 %7766
    %7768 = vrot.lane.b32.xlu0 %v5266, 64
    %v7769 = vpop.permute.xlu0 %7768
    %7770 = vrot.lane.b32.xlu0 %v7672, 64
    %v7771 = vpop.permute.xlu0 %7770
    %7772 = vrot.lane.b32.xlu0 %v7674, 64
    %v7773 = vpop.permute.xlu0 %7772
    %7774 = vrot.lane.b32.xlu0 %v2346, 64
    %v7775 = vpop.permute.xlu0 %7774
    %7776 = vrot.lane.b32.xlu0 %v2348, 64
    %v7777 = vpop.permute.xlu0 %7776
    %7778 = vrot.lane.b32.xlu0 %v2351, 64
    %v7779 = vpop.permute.xlu0 %7778
    %7780 = vrot.lane.b32.xlu0 %v2353, 64
    %v7781 = vpop.permute.xlu0 %7780
    %7782 = vrot.lane.b32.xlu0 %v2356, 64
    %v7783 = vpop.permute.xlu0 %7782
    %7784 = vrot.lane.b32.xlu0 %v2358, 64
    %v7785 = vpop.permute.xlu0 %7784
    %7786 = vrot.lane.b32.xlu0 %v2361, 64
    %v7787 = vpop.permute.xlu0 %7786
    %7788 = vrot.lane.b32.xlu0 %v2363, 64
    %v7789 = vpop.permute.xlu0 %7788
    %7790 = vrot.lane.b32.xlu0 %v2366, 64
    %v7791 = vpop.permute.xlu0 %7790
    %7792 = vrot.lane.b32.xlu0 %v2368, 64
    %v7793 = vpop.permute.xlu0 %7792
    %7794 = vrot.lane.b32.xlu0 %v2371, 64
    %v7795 = vpop.permute.xlu0 %7794
    %7796 = vrot.lane.b32.xlu0 %v2373, 64
    %v7797 = vpop.permute.xlu0 %7796
    %7798 = vrot.lane.b32.xlu0 %v2376, 64
    %v7799 = vpop.permute.xlu0 %7798
    %7800 = vrot.lane.b32.xlu0 %v2378, 64
    %v7801 = vpop.permute.xlu0 %7800
    %7802 = vrot.lane.b32.xlu0 %v2381, 64
    %v7803 = vpop.permute.xlu0 %7802
    %7804 = vrot.lane.b32.xlu0 %v2383, 64
    %v7805 = vpop.permute.xlu0 %7804
    %7806 = vrot.lane.b32.xlu0 %v2386, 64
    %v7807 = vpop.permute.xlu0 %7806
    %7808 = vrot.lane.b32.xlu0 %v2388, 64
    %v7809 = vpop.permute.xlu0 %7808
    %7810 = vrot.lane.b32.xlu0 %v2391, 64
    %v7811 = vpop.permute.xlu0 %7810
    %7812 = vrot.lane.b32.xlu0 %v2393, 64
    %v7813 = vpop.permute.xlu0 %7812
    %7814 = vrot.lane.b32.xlu0 %v2396, 64
    %v7815 = vpop.permute.xlu0 %7814
    %7816 = vrot.lane.b32.xlu0 %v2398, 64
    %v7817 = vpop.permute.xlu0 %7816
    %7818 = vrot.lane.b32.xlu0 %v2401, 64
    %v7819 = vpop.permute.xlu0 %7818
    %7820 = vrot.lane.b32.xlu0 %v2403, 64
    %v7821 = vpop.permute.xlu0 %7820
    %7822 = vrot.lane.b32.xlu0 %v2406, 64
    %v7823 = vpop.permute.xlu0 %7822
    %7824 = vrot.lane.b32.xlu0 %v2408, 64
    %v7825 = vpop.permute.xlu0 %7824
    %7826 = vrot.lane.b32.xlu0 %v2411, 64
    %v7827 = vpop.permute.xlu0 %7826
    %7828 = vrot.lane.b32.xlu0 %v2413, 64
    %v7829 = vpop.permute.xlu0 %7828
    %7830 = vrot.lane.b32.xlu0 %v5269, 64
    %v7831 = vpop.permute.xlu0 %7830
    %7832 = vrot.lane.b32.xlu0 %v5271, 64
    %v7833 = vpop.permute.xlu0 %7832
    %7834 = vrot.lane.b32.xlu0 %v7677, 64
    %v7835 = vpop.permute.xlu0 %7834
    %7836 = vrot.lane.b32.xlu0 %v7679, 64
    %v7837 = vpop.permute.xlu0 %7836
    %7838 = vrot.lane.b32.xlu0 %v2426, 64
    %v7839 = vpop.permute.xlu0 %7838
    %7840 = vrot.lane.b32.xlu0 %v2428, 64
    %v7841 = vpop.permute.xlu0 %7840
    %7842 = vrot.lane.b32.xlu0 %v2431, 64
    %v7843 = vpop.permute.xlu0 %7842
    %7844 = vrot.lane.b32.xlu0 %v2433, 64
    %v7845 = vpop.permute.xlu0 %7844
    %7846 = vrot.lane.b32.xlu0 %v2436, 64
    %v7847 = vpop.permute.xlu0 %7846
    %7848 = vrot.lane.b32.xlu0 %v2438, 64
    %v7849 = vpop.permute.xlu0 %7848
    %7850 = vrot.lane.b32.xlu0 %v2441, 64
    %v7851 = vpop.permute.xlu0 %7850
    %7852 = vrot.lane.b32.xlu0 %v2443, 64
    %v7853 = vpop.permute.xlu0 %7852
    %7854 = vrot.lane.b32.xlu0 %v2446, 64
    %v7855 = vpop.permute.xlu0 %7854
    %7856 = vrot.lane.b32.xlu0 %v2448, 64
    %v7857 = vpop.permute.xlu0 %7856
    %7858 = vrot.lane.b32.xlu0 %v2451, 64
    %v7859 = vpop.permute.xlu0 %7858
    %7860 = vrot.lane.b32.xlu0 %v2453, 64
    %v7861 = vpop.permute.xlu0 %7860
    %7862 = vrot.lane.b32.xlu0 %v2456, 64
    %v7863 = vpop.permute.xlu0 %7862
    %7864 = vrot.lane.b32.xlu0 %v2458, 64
    %v7865 = vpop.permute.xlu0 %7864
    %7866 = vrot.lane.b32.xlu0 %v2461, 64
    %v7867 = vpop.permute.xlu0 %7866
    %7868 = vrot.lane.b32.xlu0 %v2463, 64
    %v7869 = vpop.permute.xlu0 %7868
    %7870 = vrot.lane.b32.xlu0 %v2466, 64
    %v7871 = vpop.permute.xlu0 %7870
    %7872 = vrot.lane.b32.xlu0 %v2468, 64
    %v7873 = vpop.permute.xlu0 %7872
    %7874 = vrot.lane.b32.xlu0 %v2471, 64
    %v7875 = vpop.permute.xlu0 %7874
    %7876 = vrot.lane.b32.xlu0 %v2473, 64
    %v7877 = vpop.permute.xlu0 %7876
    %7878 = vrot.lane.b32.xlu0 %v2476, 64
    %v7879 = vpop.permute.xlu0 %7878
    %7880 = vrot.lane.b32.xlu0 %v2478, 64
    %v7881 = vpop.permute.xlu0 %7880
    %7882 = vrot.lane.b32.xlu0 %v2481, 64
    %v7883 = vpop.permute.xlu0 %7882
    %7884 = vrot.lane.b32.xlu0 %v2483, 64
    %v7885 = vpop.permute.xlu0 %7884
    %7886 = vrot.lane.b32.xlu0 %v2486, 64
    %v7887 = vpop.permute.xlu0 %7886
    %7888 = vrot.lane.b32.xlu0 %v2488, 64
    %v7889 = vpop.permute.xlu0 %7888
    %7890 = vrot.lane.b32.xlu0 %v2491, 64
    %v7891 = vpop.permute.xlu0 %7890
    %7892 = vrot.lane.b32.xlu0 %v2493, 64
    %v7893 = vpop.permute.xlu0 %7892
    %7894 = vrot.lane.b32.xlu0 %v5274, 64
    %v7895 = vpop.permute.xlu0 %7894
    %7896 = vrot.lane.b32.xlu0 %v5276, 64
    %v7897 = vpop.permute.xlu0 %7896
    %7898 = vrot.lane.b32.xlu0 %v7682, 64
    %v7899 = vpop.permute.xlu0 %7898
    %7900 = vrot.lane.b32.xlu0 %v7684, 64
    %v7901 = vpop.permute.xlu0 %7900
    %7902 = vrot.lane.b32.xlu0 %v2506, 64
    %v7903 = vpop.permute.xlu0 %7902
    %7904 = vrot.lane.b32.xlu0 %v2508, 64
    %v7905 = vpop.permute.xlu0 %7904
    %7906 = vrot.lane.b32.xlu0 %v2511, 64
    %v7907 = vpop.permute.xlu0 %7906
    %7908 = vrot.lane.b32.xlu0 %v2513, 64
    %v7909 = vpop.permute.xlu0 %7908
    %7910 = vrot.lane.b32.xlu0 %v2516, 64
    %v7911 = vpop.permute.xlu0 %7910
    %7912 = vrot.lane.b32.xlu0 %v2518, 64
    %v7913 = vpop.permute.xlu0 %7912
    %7914 = vrot.lane.b32.xlu0 %v2521, 64
    %v7915 = vpop.permute.xlu0 %7914
    %7916 = vrot.lane.b32.xlu0 %v2523, 64
    %v7917 = vpop.permute.xlu0 %7916
    %7918 = vrot.lane.b32.xlu0 %v2526, 64
    %v7919 = vpop.permute.xlu0 %7918
    %7920 = vrot.lane.b32.xlu0 %v2528, 64
    %v7921 = vpop.permute.xlu0 %7920
    %7922 = vrot.lane.b32.xlu0 %v2531, 64
    %v7923 = vpop.permute.xlu0 %7922
    %7924 = vrot.lane.b32.xlu0 %v2533, 64
    %v7925 = vpop.permute.xlu0 %7924
    %7926 = vrot.lane.b32.xlu0 %v2536, 64
    %v7927 = vpop.permute.xlu0 %7926
    %7928 = vrot.lane.b32.xlu0 %v2538, 64
    %v7929 = vpop.permute.xlu0 %7928
    %7930 = vrot.lane.b32.xlu0 %v2541, 64
    %v7931 = vpop.permute.xlu0 %7930
    %7932 = vrot.lane.b32.xlu0 %v2543, 64
    %v7933 = vpop.permute.xlu0 %7932
    %7934 = vrot.lane.b32.xlu0 %v2546, 64
    %v7935 = vpop.permute.xlu0 %7934
    %7936 = vrot.lane.b32.xlu0 %v2548, 64
    %v7937 = vpop.permute.xlu0 %7936
    %7938 = vrot.lane.b32.xlu0 %v2551, 64
    %v7939 = vpop.permute.xlu0 %7938
    %7940 = vrot.lane.b32.xlu0 %v2553, 64
    %v7941 = vpop.permute.xlu0 %7940
    %7942 = vrot.lane.b32.xlu0 %v2556, 64
    %v7943 = vpop.permute.xlu0 %7942
    %7944 = vrot.lane.b32.xlu0 %v2558, 64
    %v7945 = vpop.permute.xlu0 %7944
    %7946 = vrot.lane.b32.xlu0 %v2561, 64
    %v7947 = vpop.permute.xlu0 %7946
    %7948 = vrot.lane.b32.xlu0 %v2563, 64
    %v7949 = vpop.permute.xlu0 %7948
    %7950 = vrot.lane.b32.xlu0 %v2566, 64
    %v7951 = vpop.permute.xlu0 %7950
    %7952 = vrot.lane.b32.xlu0 %v2568, 64
    %v7953 = vpop.permute.xlu0 %7952
    %7954 = vrot.lane.b32.xlu0 %v2571, 64
    %v7955 = vpop.permute.xlu0 %7954
    %7956 = vrot.lane.b32.xlu0 %v2573, 64
    %v7957 = vpop.permute.xlu0 %7956
    %7958 = vrot.lane.b32.xlu0 %v5279, 64
    %v7959 = vpop.permute.xlu0 %7958
    %7960 = vrot.lane.b32.xlu0 %v5281, 64
    %v7961 = vpop.permute.xlu0 %7960
    %7962 = vrot.lane.b32.xlu0 %v7687, 64
    %v7963 = vpop.permute.xlu0 %7962
    %7964 = vrot.lane.b32.xlu0 %v7689, 64
    %v7965 = vpop.permute.xlu0 %7964
    %7966 = vrot.lane.b32.xlu0 %v2586, 64
    %v7967 = vpop.permute.xlu0 %7966
    %7968 = vrot.lane.b32.xlu0 %v2588, 64
    %v7969 = vpop.permute.xlu0 %7968
    %7970 = vrot.lane.b32.xlu0 %v2591, 64
    %v7971 = vpop.permute.xlu0 %7970
    %7972 = vrot.lane.b32.xlu0 %v2593, 64
    %v7973 = vpop.permute.xlu0 %7972
    %7974 = vrot.lane.b32.xlu0 %v2596, 64
    %v7975 = vpop.permute.xlu0 %7974
    %7976 = vrot.lane.b32.xlu0 %v2598, 64
    %v7977 = vpop.permute.xlu0 %7976
    %7978 = vrot.lane.b32.xlu0 %v2601, 64
    %v7979 = vpop.permute.xlu0 %7978
    %7980 = vrot.lane.b32.xlu0 %v2603, 64
    %v7981 = vpop.permute.xlu0 %7980
    %7982 = vrot.lane.b32.xlu0 %v2606, 64
    %v7983 = vpop.permute.xlu0 %7982
    %7984 = vrot.lane.b32.xlu0 %v2608, 64
    %v7985 = vpop.permute.xlu0 %7984
    %7986 = vrot.lane.b32.xlu0 %v2611, 64
    %v7987 = vpop.permute.xlu0 %7986
    %7988 = vrot.lane.b32.xlu0 %v2613, 64
    %v7989 = vpop.permute.xlu0 %7988
    %7990 = vrot.lane.b32.xlu0 %v2616, 64
    %v7991 = vpop.permute.xlu0 %7990
    %7992 = vrot.lane.b32.xlu0 %v2618, 64
    %v7993 = vpop.permute.xlu0 %7992
    %7994 = vrot.lane.b32.xlu0 %v2621, 64
    %v7995 = vpop.permute.xlu0 %7994
    %7996 = vrot.lane.b32.xlu0 %v2623, 64
    %v7997 = vpop.permute.xlu0 %7996
    %7998 = vrot.lane.b32.xlu0 %v2626, 64
    %v7999 = vpop.permute.xlu0 %7998
    %8000 = vrot.lane.b32.xlu0 %v2628, 64
    %v8001 = vpop.permute.xlu0 %8000
    %8002 = vrot.lane.b32.xlu0 %v2631, 64
    %v8003 = vpop.permute.xlu0 %8002
    %8004 = vrot.lane.b32.xlu0 %v2633, 64
    %v8005 = vpop.permute.xlu0 %8004
    %8006 = vrot.lane.b32.xlu0 %v2636, 64
    %v8007 = vpop.permute.xlu0 %8006
    %8008 = vrot.lane.b32.xlu0 %v2638, 64
    %v8009 = vpop.permute.xlu0 %8008
    %8010 = vrot.lane.b32.xlu0 %v2641, 64
    %v8011 = vpop.permute.xlu0 %8010
    %8012 = vrot.lane.b32.xlu0 %v2643, 64
    %v8013 = vpop.permute.xlu0 %8012
    %8014 = vrot.lane.b32.xlu0 %v2646, 64
    %v8015 = vpop.permute.xlu0 %8014
    %8016 = vrot.lane.b32.xlu0 %v2648, 64
    %v8017 = vpop.permute.xlu0 %8016
    %8018 = vrot.lane.b32.xlu0 %v2651, 64
    %v8019 = vpop.permute.xlu0 %8018
    %8020 = vrot.lane.b32.xlu0 %v2653, 64
    %v8021 = vpop.permute.xlu0 %8020
    %8022 = vrot.lane.b32.xlu0 %v5284, 64
    %v8023 = vpop.permute.xlu0 %8022
    %8024 = vrot.lane.b32.xlu0 %v5286, 64
    %v8025 = vpop.permute.xlu0 %8024
    %8026 = vrot.lane.b32.xlu0 %v7692, 64
    %v8027 = vpop.permute.xlu0 %8026
    %8028 = vrot.lane.b32.xlu0 %v7694, 64
    %v8029 = vpop.permute.xlu0 %8028
    %8030 = vrot.lane.b32.xlu0 %v2666, 64
    %v8031 = vpop.permute.xlu0 %8030
    %8032 = vrot.lane.b32.xlu0 %v2668, 64
    %v8033 = vpop.permute.xlu0 %8032
    %8034 = vrot.lane.b32.xlu0 %v2671, 64
    %v8035 = vpop.permute.xlu0 %8034
    %8036 = vrot.lane.b32.xlu0 %v2673, 64
    %v8037 = vpop.permute.xlu0 %8036
    %8038 = vrot.lane.b32.xlu0 %v2676, 64
    %v8039 = vpop.permute.xlu0 %8038
    %8040 = vrot.lane.b32.xlu0 %v2678, 64
    %v8041 = vpop.permute.xlu0 %8040
    %8042 = vrot.lane.b32.xlu0 %v2681, 64
    %v8043 = vpop.permute.xlu0 %8042
    %8044 = vrot.lane.b32.xlu0 %v2683, 64
    %v8045 = vpop.permute.xlu0 %8044
    %8046 = vrot.lane.b32.xlu0 %v2686, 64
    %v8047 = vpop.permute.xlu0 %8046
    %8048 = vrot.lane.b32.xlu0 %v2688, 64
    %v8049 = vpop.permute.xlu0 %8048
    %8050 = vrot.lane.b32.xlu0 %v2691, 64
    %v8051 = vpop.permute.xlu0 %8050
    %8052 = vrot.lane.b32.xlu0 %v2693, 64
    %v8053 = vpop.permute.xlu0 %8052
    %8054 = vrot.lane.b32.xlu0 %v2696, 64
    %v8055 = vpop.permute.xlu0 %8054
    %8056 = vrot.lane.b32.xlu0 %v2698, 64
    %v8057 = vpop.permute.xlu0 %8056
    %8058 = vrot.lane.b32.xlu0 %v2701, 64
    %v8059 = vpop.permute.xlu0 %8058
    %8060 = vrot.lane.b32.xlu0 %v2703, 64
    %v8061 = vpop.permute.xlu0 %8060
    %8062 = vrot.lane.b32.xlu0 %v2706, 64
    %v8063 = vpop.permute.xlu0 %8062
    %8064 = vrot.lane.b32.xlu0 %v2708, 64
    %v8065 = vpop.permute.xlu0 %8064
    %8066 = vrot.lane.b32.xlu0 %v2711, 64
    %v8067 = vpop.permute.xlu0 %8066
    %8068 = vrot.lane.b32.xlu0 %v2713, 64
    %v8069 = vpop.permute.xlu0 %8068
    %8070 = vrot.lane.b32.xlu0 %v2716, 64
    %v8071 = vpop.permute.xlu0 %8070
    %8072 = vrot.lane.b32.xlu0 %v2718, 64
    %v8073 = vpop.permute.xlu0 %8072
    %8074 = vrot.lane.b32.xlu0 %v2721, 64
    %v8075 = vpop.permute.xlu0 %8074
    %8076 = vrot.lane.b32.xlu0 %v2723, 64
    %v8077 = vpop.permute.xlu0 %8076
    %8078 = vrot.lane.b32.xlu0 %v2726, 64
    %v8079 = vpop.permute.xlu0 %8078
    %8080 = vrot.lane.b32.xlu0 %v2728, 64
    %v8081 = vpop.permute.xlu0 %8080
    %8082 = vrot.lane.b32.xlu0 %v2731, 64
    %v8083 = vpop.permute.xlu0 %8082
    %8084 = vrot.lane.b32.xlu0 %v2733, 64
    %v8085 = vpop.permute.xlu0 %8084
    %8086 = vrot.lane.b32.xlu0 %v5289, 64
    %v8087 = vpop.permute.xlu0 %8086
    %8088 = vrot.lane.b32.xlu0 %v5291, 64
    %v8089 = vpop.permute.xlu0 %8088
    %8090 = vrot.lane.b32.xlu0 %v7697, 64
    %v8091 = vpop.permute.xlu0 %8090
    %8092 = vrot.lane.b32.xlu0 %v7699, 64
    %v8093 = vpop.permute.xlu0 %8092
    %8094 = vrot.lane.b32.xlu0 %v2746, 64
    %v8095 = vpop.permute.xlu0 %8094
    %8096 = vrot.lane.b32.xlu0 %v2748, 64
    %v8097 = vpop.permute.xlu0 %8096
    %8098 = vrot.lane.b32.xlu0 %v2751, 64
    %v8099 = vpop.permute.xlu0 %8098
    %8100 = vrot.lane.b32.xlu0 %v2753, 64
    %v8101 = vpop.permute.xlu0 %8100
    %8102 = vrot.lane.b32.xlu0 %v2756, 64
    %v8103 = vpop.permute.xlu0 %8102
    %8104 = vrot.lane.b32.xlu0 %v2758, 64
    %v8105 = vpop.permute.xlu0 %8104
    %8106 = vrot.lane.b32.xlu0 %v2761, 64
    %v8107 = vpop.permute.xlu0 %8106
    %8108 = vrot.lane.b32.xlu0 %v2763, 64
    %v8109 = vpop.permute.xlu0 %8108
    %8110 = vrot.lane.b32.xlu0 %v2766, 64
    %v8111 = vpop.permute.xlu0 %8110
    %8112 = vrot.lane.b32.xlu0 %v2768, 64
    %v8113 = vpop.permute.xlu0 %8112
    %8114 = vrot.lane.b32.xlu0 %v2771, 64
    %v8115 = vpop.permute.xlu0 %8114
    %8116 = vrot.lane.b32.xlu0 %v2773, 64
    %v8117 = vpop.permute.xlu0 %8116
    %8118 = vrot.lane.b32.xlu0 %v2776, 64
    %v8119 = vpop.permute.xlu0 %8118
    %8120 = vrot.lane.b32.xlu0 %v2778, 64
    %v8121 = vpop.permute.xlu0 %8120
    %8122 = vrot.lane.b32.xlu0 %v2781, 64
    %v8123 = vpop.permute.xlu0 %8122
    %8124 = vrot.lane.b32.xlu0 %v2783, 64
    %v8125 = vpop.permute.xlu0 %8124
    %8126 = vrot.lane.b32.xlu0 %v2786, 64
    %v8127 = vpop.permute.xlu0 %8126
    %8128 = vrot.lane.b32.xlu0 %v2788, 64
    %v8129 = vpop.permute.xlu0 %8128
    %8130 = vrot.lane.b32.xlu0 %v2791, 64
    %v8131 = vpop.permute.xlu0 %8130
    %8132 = vrot.lane.b32.xlu0 %v2793, 64
    %v8133 = vpop.permute.xlu0 %8132
    %8134 = vrot.lane.b32.xlu0 %v2796, 64
    %v8135 = vpop.permute.xlu0 %8134
    %8136 = vrot.lane.b32.xlu0 %v2798, 64
    %v8137 = vpop.permute.xlu0 %8136
    %8138 = vrot.lane.b32.xlu0 %v2801, 64
    %v8139 = vpop.permute.xlu0 %8138
    %8140 = vrot.lane.b32.xlu0 %v2803, 64
    %v8141 = vpop.permute.xlu0 %8140
    %8142 = vrot.lane.b32.xlu0 %v2806, 64
    %v8143 = vpop.permute.xlu0 %8142
    %8144 = vrot.lane.b32.xlu0 %v2808, 64
    %v8145 = vpop.permute.xlu0 %8144
    %8146 = vrot.lane.b32.xlu0 %v2811, 64
    %v8147 = vpop.permute.xlu0 %8146
    %8148 = vrot.lane.b32.xlu0 %v2813, 64
    %v8149 = vpop.permute.xlu0 %8148
    %8150 = vrot.lane.b32.xlu0 %v5294, 64
    %v8151 = vpop.permute.xlu0 %8150
    %8152 = vrot.lane.b32.xlu0 %v5296, 64
    %v8153 = vpop.permute.xlu0 %8152
    %8154 = vrot.lane.b32.xlu0 %v7702, 64
    %v8155 = vpop.permute.xlu0 %8154
    %8156 = vrot.lane.b32.xlu0 %v7704, 64
    %v8157 = vpop.permute.xlu0 %8156
    %8158 = vrot.lane.b32.xlu0 %v2826, 64
    %v8159 = vpop.permute.xlu0 %8158
    %8160 = vrot.lane.b32.xlu0 %v2828, 64
    %v8161 = vpop.permute.xlu0 %8160
    %8162 = vrot.lane.b32.xlu0 %v2831, 64
    %v8163 = vpop.permute.xlu0 %8162
    %8164 = vrot.lane.b32.xlu0 %v2833, 64
    %v8165 = vpop.permute.xlu0 %8164
    %8166 = vrot.lane.b32.xlu0 %v2836, 64
    %v8167 = vpop.permute.xlu0 %8166
    %8168 = vrot.lane.b32.xlu0 %v2838, 64
    %v8169 = vpop.permute.xlu0 %8168
    %8170 = vrot.lane.b32.xlu0 %v2841, 64
    %v8171 = vpop.permute.xlu0 %8170
    %8172 = vrot.lane.b32.xlu0 %v2843, 64
    %v8173 = vpop.permute.xlu0 %8172
    %8174 = vrot.lane.b32.xlu0 %v2846, 64
    %v8175 = vpop.permute.xlu0 %8174
    %8176 = vrot.lane.b32.xlu0 %v2848, 64
    %v8177 = vpop.permute.xlu0 %8176
    %8178 = vrot.lane.b32.xlu0 %v2851, 64
    %v8179 = vpop.permute.xlu0 %8178
    %8180 = vrot.lane.b32.xlu0 %v2853, 64
    %v8181 = vpop.permute.xlu0 %8180
    %8182 = vrot.lane.b32.xlu0 %v2856, 64
    %v8183 = vpop.permute.xlu0 %8182
    %8184 = vrot.lane.b32.xlu0 %v2858, 64
    %v8185 = vpop.permute.xlu0 %8184
    %8186 = vrot.lane.b32.xlu0 %v2861, 64
    %v8187 = vpop.permute.xlu0 %8186
    %8188 = vrot.lane.b32.xlu0 %v2863, 64
    %v8189 = vpop.permute.xlu0 %8188
    %8190 = vrot.lane.b32.xlu0 %v2866, 64
    %v8191 = vpop.permute.xlu0 %8190
    %8192 = vrot.lane.b32.xlu0 %v2868, 64
    %v8193 = vpop.permute.xlu0 %8192
    %8194 = vrot.lane.b32.xlu0 %v2871, 64
    %v8195 = vpop.permute.xlu0 %8194
    %8196 = vrot.lane.b32.xlu0 %v2873, 64
    %v8197 = vpop.permute.xlu0 %8196
    %8198 = vrot.lane.b32.xlu0 %v2876, 64
    %v8199 = vpop.permute.xlu0 %8198
    %8200 = vrot.lane.b32.xlu0 %v2878, 64
    %v8201 = vpop.permute.xlu0 %8200
    %8202 = vrot.lane.b32.xlu0 %v2881, 64
    %v8203 = vpop.permute.xlu0 %8202
    %8204 = vrot.lane.b32.xlu0 %v2883, 64
    %v8205 = vpop.permute.xlu0 %8204
    %8206 = vrot.lane.b32.xlu0 %v2886, 64
    %v8207 = vpop.permute.xlu0 %8206
    %8208 = vrot.lane.b32.xlu0 %v2888, 64
    %v8209 = vpop.permute.xlu0 %8208
    %8210 = vrot.lane.b32.xlu0 %v2891, 64
    %v8211 = vpop.permute.xlu0 %8210
    %8212 = vrot.lane.b32.xlu0 %v2893, 64
    %v8213 = vpop.permute.xlu0 %8212
    %8214 = vrot.lane.b32.xlu0 %v5299, 64
    %v8215 = vpop.permute.xlu0 %8214
    %8216 = vrot.lane.b32.xlu0 %v5301, 64
    %v8217 = vpop.permute.xlu0 %8216
    %8218 = vrot.lane.b32.xlu0 %v7707, 64
    %v8219 = vpop.permute.xlu0 %8218
    %8220 = vrot.lane.b32.xlu0 %v7709, 64
    %v8221 = vpop.permute.xlu0 %8220
    %vm8478 = vcmask 64512
    %v8479 = vsel %vm8478, %v28, %v1486
    %v8480 = vsel %vm8478, %v29, %v1488
    %v8481 = vsel %vm8478, %v31, %v1490
    %v8482 = vsel %vm8478, %v32, %v1492
    %v8483 = vsel %vm8478, %v34, %v1494
    %v8484 = vsel %vm8478, %v35, %v1496
    %v8485 = vsel %vm8478, %v37, %v1498
    %v8486 = vsel %vm8478, %v38, %v1500
    %v8487 = vsel %vm8478, %v40, %v1502
    %v8488 = vsel %vm8478, %v41, %v1504
    %v8489 = vsel %vm8478, %v43, %v1506
    %v8490 = vsel %vm8478, %v44, %v1508
    %v8491 = vsel %vm8478, %v46, %v1510
    %v8492 = vsel %vm8478, %v47, %v1512
    %v8493 = vsel %vm8478, %v49, %v1514
    %v8494 = vsel %vm8478, %v50, %v1516
    %v8495 = vsel %vm8478, %v52, %v1518
    %v8496 = vsel %vm8478, %v53, %v1520
    %v8497 = vsel %vm8478, %v55, %v1522
    %v8498 = vsel %vm8478, %v56, %v1524
    %v8499 = vsel %vm8478, %v58, %v1526
    %v8500 = vsel %vm8478, %v59, %v1528
    %v8501 = vsel %vm8478, %v61, %v1530
    %v8502 = vsel %vm8478, %v62, %v1532
    %v8503 = vsel %vm8478, %v64, %v1534
    %v8504 = vsel %vm8478, %v65, %v1536
    %v8505 = vsel %vm8478, %v67, %v1538
    %v8506 = vsel %vm8478, %v68, %v1540
    %v8507 = vsel %vm8478, %v70, %v1542
    %v8508 = vsel %vm8478, %v71, %v1544
    %v8509 = vsel %vm8478, %v73, %v1546
    %v8510 = vsel %vm8478, %v74, %v1548
    %v8511 = vsel %vm8478, %v82, %v1550
    %v8512 = vsel %vm8478, %v83, %v1552
    %v8513 = vsel %vm8478, %v85, %v1554
    %v8514 = vsel %vm8478, %v86, %v1556
    %v8515 = vsel %vm8478, %v88, %v1558
    %v8516 = vsel %vm8478, %v89, %v1560
    %v8517 = vsel %vm8478, %v91, %v1562
    %v8518 = vsel %vm8478, %v92, %v1564
    %v8519 = vsel %vm8478, %v94, %v1566
    %v8520 = vsel %vm8478, %v95, %v1568
    %v8521 = vsel %vm8478, %v97, %v1570
    %v8522 = vsel %vm8478, %v98, %v1572
    %v8523 = vsel %vm8478, %v100, %v1574
    %v8524 = vsel %vm8478, %v101, %v1576
    %v8525 = vsel %vm8478, %v103, %v1578
    %v8526 = vsel %vm8478, %v104, %v1580
    %v8527 = vsel %vm8478, %v106, %v1582
    %v8528 = vsel %vm8478, %v107, %v1584
    %v8529 = vsel %vm8478, %v109, %v1586
    %v8530 = vsel %vm8478, %v110, %v1588
    %v8531 = vsel %vm8478, %v112, %v1590
    %v8532 = vsel %vm8478, %v113, %v1592
    %v8533 = vsel %vm8478, %v115, %v1594
    %v8534 = vsel %vm8478, %v116, %v1596
    %v8535 = vsel %vm8478, %v118, %v1598
    %v8536 = vsel %vm8478, %v119, %v1600
    %v8537 = vsel %vm8478, %v121, %v1602
    %v8538 = vsel %vm8478, %v122, %v1604
    %v8539 = vsel %vm8478, %v124, %v1606
    %v8540 = vsel %vm8478, %v125, %v1608
    %v8541 = vsel %vm8478, %v127, %v1610
    %v8542 = vsel %vm8478, %v128, %v1612
    %v8543 = vsel %vm8478, %v136, %v1614
    %v8544 = vsel %vm8478, %v137, %v1616
    %v8545 = vsel %vm8478, %v139, %v1618
    %v8546 = vsel %vm8478, %v140, %v1620
    %v8547 = vsel %vm8478, %v142, %v1622
    %v8548 = vsel %vm8478, %v143, %v1624
    %v8549 = vsel %vm8478, %v145, %v1626
    %v8550 = vsel %vm8478, %v146, %v1628
    %v8551 = vsel %vm8478, %v148, %v1630
    %v8552 = vsel %vm8478, %v149, %v1632
    %v8553 = vsel %vm8478, %v151, %v1634
    %v8554 = vsel %vm8478, %v152, %v1636
    %v8555 = vsel %vm8478, %v154, %v1638
    %v8556 = vsel %vm8478, %v155, %v1640
    %v8557 = vsel %vm8478, %v157, %v1642
    %v8558 = vsel %vm8478, %v158, %v1644
    %v8559 = vsel %vm8478, %v160, %v1646
    %v8560 = vsel %vm8478, %v161, %v1648
    %v8561 = vsel %vm8478, %v163, %v1650
    %v8562 = vsel %vm8478, %v164, %v1652
    %v8563 = vsel %vm8478, %v166, %v1654
    %v8564 = vsel %vm8478, %v167, %v1656
    %v8565 = vsel %vm8478, %v169, %v1658
    %v8566 = vsel %vm8478, %v170, %v1660
    %v8567 = vsel %vm8478, %v172, %v1662
    %v8568 = vsel %vm8478, %v173, %v1664
    %v8569 = vsel %vm8478, %v175, %v1666
    %v8570 = vsel %vm8478, %v176, %v1668
    %v8571 = vsel %vm8478, %v178, %v1670
    %v8572 = vsel %vm8478, %v179, %v1672
    %v8573 = vsel %vm8478, %v181, %v1674
    %v8574 = vsel %vm8478, %v182, %v1676
    %v8575 = vsel %vm8478, %v190, %v1678
    %v8576 = vsel %vm8478, %v191, %v1680
    %v8577 = vsel %vm8478, %v193, %v1682
    %v8578 = vsel %vm8478, %v194, %v1684
    %v8579 = vsel %vm8478, %v196, %v1686
    %v8580 = vsel %vm8478, %v197, %v1688
    %v8581 = vsel %vm8478, %v199, %v1690
    %v8582 = vsel %vm8478, %v200, %v1692
    %v8583 = vsel %vm8478, %v202, %v1694
    %v8584 = vsel %vm8478, %v203, %v1696
    %v8585 = vsel %vm8478, %v205, %v1698
    %v8586 = vsel %vm8478, %v206, %v1700
    %v8587 = vsel %vm8478, %v208, %v1702
    %v8588 = vsel %vm8478, %v209, %v1704
    %v8589 = vsel %vm8478, %v211, %v1706
    %v8590 = vsel %vm8478, %v212, %v1708
    %v8591 = vsel %vm8478, %v214, %v1710
    %v8592 = vsel %vm8478, %v215, %v1712
    %v8593 = vsel %vm8478, %v217, %v1714
    %v8594 = vsel %vm8478, %v218, %v1716
    %v8595 = vsel %vm8478, %v220, %v1718
    %v8596 = vsel %vm8478, %v221, %v1720
    %v8597 = vsel %vm8478, %v223, %v1722
    %v8598 = vsel %vm8478, %v224, %v1724
    %v8599 = vsel %vm8478, %v226, %v1726
    %v8600 = vsel %vm8478, %v227, %v1728
    %v8601 = vsel %vm8478, %v229, %v1730
    %v8602 = vsel %vm8478, %v230, %v1732
    %v8603 = vsel %vm8478, %v232, %v1734
    %v8604 = vsel %vm8478, %v233, %v1736
    %v8605 = vsel %vm8478, %v235, %v1738
    %v8606 = vsel %vm8478, %v236, %v1740
    %v8607 = vsel %vm8478, %v244, %v1742
    %v8608 = vsel %vm8478, %v245, %v1744
    %v8609 = vsel %vm8478, %v247, %v1746
    %v8610 = vsel %vm8478, %v248, %v1748
    %v8611 = vsel %vm8478, %v250, %v1750
    %v8612 = vsel %vm8478, %v251, %v1752
    %v8613 = vsel %vm8478, %v253, %v1754
    %v8614 = vsel %vm8478, %v254, %v1756
    %v8615 = vsel %vm8478, %v256, %v1758
    %v8616 = vsel %vm8478, %v257, %v1760
    %v8617 = vsel %vm8478, %v259, %v1762
    %v8618 = vsel %vm8478, %v260, %v1764
    %v8619 = vsel %vm8478, %v262, %v1766
    %v8620 = vsel %vm8478, %v263, %v1768
    %v8621 = vsel %vm8478, %v265, %v1770
    %v8622 = vsel %vm8478, %v266, %v1772
    %v8623 = vsel %vm8478, %v268, %v1774
    %v8624 = vsel %vm8478, %v269, %v1776
    %v8625 = vsel %vm8478, %v271, %v1778
    %v8626 = vsel %vm8478, %v272, %v1780
    %v8627 = vsel %vm8478, %v274, %v1782
    %v8628 = vsel %vm8478, %v275, %v1784
    %v8629 = vsel %vm8478, %v277, %v1786
    %v8630 = vsel %vm8478, %v278, %v1788
    %v8631 = vsel %vm8478, %v280, %v1790
    %v8632 = vsel %vm8478, %v281, %v1792
    %v8633 = vsel %vm8478, %v283, %v1794
    %v8634 = vsel %vm8478, %v284, %v1796
    %v8635 = vsel %vm8478, %v286, %v1798
    %v8636 = vsel %vm8478, %v287, %v1800
    %v8637 = vsel %vm8478, %v289, %v1802
    %v8638 = vsel %vm8478, %v290, %v1804
    %v8639 = vsel %vm8478, %v298, %v1806
    %v8640 = vsel %vm8478, %v299, %v1808
    %v8641 = vsel %vm8478, %v301, %v1810
    %v8642 = vsel %vm8478, %v302, %v1812
    %v8643 = vsel %vm8478, %v304, %v1814
    %v8644 = vsel %vm8478, %v305, %v1816
    %v8645 = vsel %vm8478, %v307, %v1818
    %v8646 = vsel %vm8478, %v308, %v1820
    %v8647 = vsel %vm8478, %v310, %v1822
    %v8648 = vsel %vm8478, %v311, %v1824
    %v8649 = vsel %vm8478, %v313, %v1826
    %v8650 = vsel %vm8478, %v314, %v1828
    %v8651 = vsel %vm8478, %v316, %v1830
    %v8652 = vsel %vm8478, %v317, %v1832
    %v8653 = vsel %vm8478, %v319, %v1834
    %v8654 = vsel %vm8478, %v320, %v1836
    %v8655 = vsel %vm8478, %v322, %v1838
    %v8656 = vsel %vm8478, %v323, %v1840
    %v8657 = vsel %vm8478, %v325, %v1842
    %v8658 = vsel %vm8478, %v326, %v1844
    %v8659 = vsel %vm8478, %v328, %v1846
    %v8660 = vsel %vm8478, %v329, %v1848
    %v8661 = vsel %vm8478, %v331, %v1850
    %v8662 = vsel %vm8478, %v332, %v1852
    %v8663 = vsel %vm8478, %v334, %v1854
    %v8664 = vsel %vm8478, %v335, %v1856
    %v8665 = vsel %vm8478, %v337, %v1858
    %v8666 = vsel %vm8478, %v338, %v1860
    %v8667 = vsel %vm8478, %v340, %v1862
    %v8668 = vsel %vm8478, %v341, %v1864
    %v8669 = vsel %vm8478, %v343, %v1866
    %v8670 = vsel %vm8478, %v344, %v1868
    %v8671 = vsel %vm8478, %v352, %v1870
    %v8672 = vsel %vm8478, %v353, %v1872
    %v8673 = vsel %vm8478, %v355, %v1874
    %v8674 = vsel %vm8478, %v356, %v1876
    %v8675 = vsel %vm8478, %v358, %v1878
    %v8676 = vsel %vm8478, %v359, %v1880
    %v8677 = vsel %vm8478, %v361, %v1882
    %v8678 = vsel %vm8478, %v362, %v1884
    %v8679 = vsel %vm8478, %v364, %v1886
    %v8680 = vsel %vm8478, %v365, %v1888
    %v8681 = vsel %vm8478, %v367, %v1890
    %v8682 = vsel %vm8478, %v368, %v1892
    %v8683 = vsel %vm8478, %v370, %v1894
    %v8684 = vsel %vm8478, %v371, %v1896
    %v8685 = vsel %vm8478, %v373, %v1898
    %v8686 = vsel %vm8478, %v374, %v1900
    %v8687 = vsel %vm8478, %v376, %v1902
    %v8688 = vsel %vm8478, %v377, %v1904
    %v8689 = vsel %vm8478, %v379, %v1906
    %v8690 = vsel %vm8478, %v380, %v1908
    %v8691 = vsel %vm8478, %v382, %v1910
    %v8692 = vsel %vm8478, %v383, %v1912
    %v8693 = vsel %vm8478, %v385, %v1914
    %v8694 = vsel %vm8478, %v386, %v1916
    %v8695 = vsel %vm8478, %v388, %v1918
    %v8696 = vsel %vm8478, %v389, %v1920
    %v8697 = vsel %vm8478, %v391, %v1922
    %v8698 = vsel %vm8478, %v392, %v1924
    %v8699 = vsel %vm8478, %v394, %v1926
    %v8700 = vsel %vm8478, %v395, %v1928
    %v8701 = vsel %vm8478, %v397, %v1930
    %v8702 = vsel %vm8478, %v398, %v1932
    %v8703 = vsel %vm8478, %v406, %v1934
    %v8704 = vsel %vm8478, %v407, %v1936
    %v8705 = vsel %vm8478, %v409, %v1938
    %v8706 = vsel %vm8478, %v410, %v1940
    %v8707 = vsel %vm8478, %v412, %v1942
    %v8708 = vsel %vm8478, %v413, %v1944
    %v8709 = vsel %vm8478, %v415, %v1946
    %v8710 = vsel %vm8478, %v416, %v1948
    %v8711 = vsel %vm8478, %v418, %v1950
    %v8712 = vsel %vm8478, %v419, %v1952
    %v8713 = vsel %vm8478, %v421, %v1954
    %v8714 = vsel %vm8478, %v422, %v1956
    %v8715 = vsel %vm8478, %v424, %v1958
    %v8716 = vsel %vm8478, %v425, %v1960
    %v8717 = vsel %vm8478, %v427, %v1962
    %v8718 = vsel %vm8478, %v428, %v1964
    %v8719 = vsel %vm8478, %v430, %v1966
    %v8720 = vsel %vm8478, %v431, %v1968
    %v8721 = vsel %vm8478, %v433, %v1970
    %v8722 = vsel %vm8478, %v434, %v1972
    %v8723 = vsel %vm8478, %v436, %v1974
    %v8724 = vsel %vm8478, %v437, %v1976
    %v8725 = vsel %vm8478, %v439, %v1978
    %v8726 = vsel %vm8478, %v440, %v1980
    %v8727 = vsel %vm8478, %v442, %v1982
    %v8728 = vsel %vm8478, %v443, %v1984
    %v8729 = vsel %vm8478, %v445, %v1986
    %v8730 = vsel %vm8478, %v446, %v1988
    %v8731 = vsel %vm8478, %v448, %v1990
    %v8732 = vsel %vm8478, %v449, %v1992
    %v8733 = vsel %vm8478, %v451, %v1994
    %v8734 = vsel %vm8478, %v452, %v1996
    %vm8735 = vcmask 130048
    %v8736 = vsel %vm8735, %v8479, %v2895
    %v8737 = vsel %vm8735, %v8480, %v2897
    %v8738 = vsel %vm8735, %v8481, %v2899
    %v8739 = vsel %vm8735, %v8482, %v2901
    %v8740 = vsel %vm8735, %v8483, %v2903
    %v8741 = vsel %vm8735, %v8484, %v2905
    %v8742 = vsel %vm8735, %v8485, %v2907
    %v8743 = vsel %vm8735, %v8486, %v2909
    %v8744 = vsel %vm8735, %v8487, %v2911
    %v8745 = vsel %vm8735, %v8488, %v2913
    %v8746 = vsel %vm8735, %v8489, %v2915
    %v8747 = vsel %vm8735, %v8490, %v2917
    %v8748 = vsel %vm8735, %v8491, %v2919
    %v8749 = vsel %vm8735, %v8492, %v2921
    %v8750 = vsel %vm8735, %v8493, %v2923
    %v8751 = vsel %vm8735, %v8494, %v2925
    %v8752 = vsel %vm8735, %v8495, %v2927
    %v8753 = vsel %vm8735, %v8496, %v2929
    %v8754 = vsel %vm8735, %v8497, %v2931
    %v8755 = vsel %vm8735, %v8498, %v2933
    %v8756 = vsel %vm8735, %v8499, %v2935
    %v8757 = vsel %vm8735, %v8500, %v2937
    %v8758 = vsel %vm8735, %v8501, %v2939
    %v8759 = vsel %vm8735, %v8502, %v2941
    %v8760 = vsel %vm8735, %v8503, %v2943
    %v8761 = vsel %vm8735, %v8504, %v2945
    %v8762 = vsel %vm8735, %v8505, %v2947
    %v8763 = vsel %vm8735, %v8506, %v2949
    %v8764 = vsel %vm8735, %v8507, %v2951
    %v8765 = vsel %vm8735, %v8508, %v2953
    %v8766 = vsel %vm8735, %v8509, %v2955
    %v8767 = vsel %vm8735, %v8510, %v2957
    %v8768 = vsel %vm8735, %v8511, %v2959
    %v8769 = vsel %vm8735, %v8512, %v2961
    %v8770 = vsel %vm8735, %v8513, %v2963
    %v8771 = vsel %vm8735, %v8514, %v2965
    %v8772 = vsel %vm8735, %v8515, %v2967
    %v8773 = vsel %vm8735, %v8516, %v2969
    %v8774 = vsel %vm8735, %v8517, %v2971
    %v8775 = vsel %vm8735, %v8518, %v2973
    %v8776 = vsel %vm8735, %v8519, %v2975
    %v8777 = vsel %vm8735, %v8520, %v2977
    %v8778 = vsel %vm8735, %v8521, %v2979
    %v8779 = vsel %vm8735, %v8522, %v2981
    %v8780 = vsel %vm8735, %v8523, %v2983
    %v8781 = vsel %vm8735, %v8524, %v2985
    %v8782 = vsel %vm8735, %v8525, %v2987
    %v8783 = vsel %vm8735, %v8526, %v2989
    %v8784 = vsel %vm8735, %v8527, %v2991
    %v8785 = vsel %vm8735, %v8528, %v2993
    %v8786 = vsel %vm8735, %v8529, %v2995
    %v8787 = vsel %vm8735, %v8530, %v2997
    %v8788 = vsel %vm8735, %v8531, %v2999
    %v8789 = vsel %vm8735, %v8532, %v3001
    %v8790 = vsel %vm8735, %v8533, %v3003
    %v8791 = vsel %vm8735, %v8534, %v3005
    %v8792 = vsel %vm8735, %v8535, %v3007
    %v8793 = vsel %vm8735, %v8536, %v3009
    %v8794 = vsel %vm8735, %v8537, %v3011
    %v8795 = vsel %vm8735, %v8538, %v3013
    %v8796 = vsel %vm8735, %v8539, %v3015
    %v8797 = vsel %vm8735, %v8540, %v3017
    %v8798 = vsel %vm8735, %v8541, %v3019
    %v8799 = vsel %vm8735, %v8542, %v3021
    %v8800 = vsel %vm8735, %v8543, %v3023
    %v8801 = vsel %vm8735, %v8544, %v3025
    %v8802 = vsel %vm8735, %v8545, %v3027
    %v8803 = vsel %vm8735, %v8546, %v3029
    %v8804 = vsel %vm8735, %v8547, %v3031
    %v8805 = vsel %vm8735, %v8548, %v3033
    %v8806 = vsel %vm8735, %v8549, %v3035
    %v8807 = vsel %vm8735, %v8550, %v3037
    %v8808 = vsel %vm8735, %v8551, %v3039
    %v8809 = vsel %vm8735, %v8552, %v3041
    %v8810 = vsel %vm8735, %v8553, %v3043
    %v8811 = vsel %vm8735, %v8554, %v3045
    %v8812 = vsel %vm8735, %v8555, %v3047
    %v8813 = vsel %vm8735, %v8556, %v3049
    %v8814 = vsel %vm8735, %v8557, %v3051
    %v8815 = vsel %vm8735, %v8558, %v3053
    %v8816 = vsel %vm8735, %v8559, %v3055
    %v8817 = vsel %vm8735, %v8560, %v3057
    %v8818 = vsel %vm8735, %v8561, %v3059
    %v8819 = vsel %vm8735, %v8562, %v3061
    %v8820 = vsel %vm8735, %v8563, %v3063
    %v8821 = vsel %vm8735, %v8564, %v3065
    %v8822 = vsel %vm8735, %v8565, %v3067
    %v8823 = vsel %vm8735, %v8566, %v3069
    %v8824 = vsel %vm8735, %v8567, %v3071
    %v8825 = vsel %vm8735, %v8568, %v3073
    %v8826 = vsel %vm8735, %v8569, %v3075
    %v8827 = vsel %vm8735, %v8570, %v3077
    %v8828 = vsel %vm8735, %v8571, %v3079
    %v8829 = vsel %vm8735, %v8572, %v3081
    %v8830 = vsel %vm8735, %v8573, %v3083
    %v8831 = vsel %vm8735, %v8574, %v3085
    %v8832 = vsel %vm8735, %v8575, %v3087
    %v8833 = vsel %vm8735, %v8576, %v3089
    %v8834 = vsel %vm8735, %v8577, %v3091
    %v8835 = vsel %vm8735, %v8578, %v3093
    %v8836 = vsel %vm8735, %v8579, %v3095
    %v8837 = vsel %vm8735, %v8580, %v3097
    %v8838 = vsel %vm8735, %v8581, %v3099
    %v8839 = vsel %vm8735, %v8582, %v3101
    %v8840 = vsel %vm8735, %v8583, %v3103
    %v8841 = vsel %vm8735, %v8584, %v3105
    %v8842 = vsel %vm8735, %v8585, %v3107
    %v8843 = vsel %vm8735, %v8586, %v3109
    %v8844 = vsel %vm8735, %v8587, %v3111
    %v8845 = vsel %vm8735, %v8588, %v3113
    %v8846 = vsel %vm8735, %v8589, %v3115
    %v8847 = vsel %vm8735, %v8590, %v3117
    %v8848 = vsel %vm8735, %v8591, %v3119
    %v8849 = vsel %vm8735, %v8592, %v3121
    %v8850 = vsel %vm8735, %v8593, %v3123
    %v8851 = vsel %vm8735, %v8594, %v3125
    %v8852 = vsel %vm8735, %v8595, %v3127
    %v8853 = vsel %vm8735, %v8596, %v3129
    %v8854 = vsel %vm8735, %v8597, %v3131
    %v8855 = vsel %vm8735, %v8598, %v3133
    %v8856 = vsel %vm8735, %v8599, %v3135
    %v8857 = vsel %vm8735, %v8600, %v3137
    %v8858 = vsel %vm8735, %v8601, %v3139
    %v8859 = vsel %vm8735, %v8602, %v3141
    %v8860 = vsel %vm8735, %v8603, %v3143
    %v8861 = vsel %vm8735, %v8604, %v3145
    %v8862 = vsel %vm8735, %v8605, %v3147
    %v8863 = vsel %vm8735, %v8606, %v3149
    %v8864 = vsel %vm8735, %v8607, %v3151
    %v8865 = vsel %vm8735, %v8608, %v3153
    %v8866 = vsel %vm8735, %v8609, %v3155
    %v8867 = vsel %vm8735, %v8610, %v3157
    %v8868 = vsel %vm8735, %v8611, %v3159
    %v8869 = vsel %vm8735, %v8612, %v3161
    %v8870 = vsel %vm8735, %v8613, %v3163
    %v8871 = vsel %vm8735, %v8614, %v3165
    %v8872 = vsel %vm8735, %v8615, %v3167
    %v8873 = vsel %vm8735, %v8616, %v3169
    %v8874 = vsel %vm8735, %v8617, %v3171
    %v8875 = vsel %vm8735, %v8618, %v3173
    %v8876 = vsel %vm8735, %v8619, %v3175
    %v8877 = vsel %vm8735, %v8620, %v3177
    %v8878 = vsel %vm8735, %v8621, %v3179
    %v8879 = vsel %vm8735, %v8622, %v3181
    %v8880 = vsel %vm8735, %v8623, %v3183
    %v8881 = vsel %vm8735, %v8624, %v3185
    %v8882 = vsel %vm8735, %v8625, %v3187
    %v8883 = vsel %vm8735, %v8626, %v3189
    %v8884 = vsel %vm8735, %v8627, %v3191
    %v8885 = vsel %vm8735, %v8628, %v3193
    %v8886 = vsel %vm8735, %v8629, %v3195
    %v8887 = vsel %vm8735, %v8630, %v3197
    %v8888 = vsel %vm8735, %v8631, %v3199
    %v8889 = vsel %vm8735, %v8632, %v3201
    %v8890 = vsel %vm8735, %v8633, %v3203
    %v8891 = vsel %vm8735, %v8634, %v3205
    %v8892 = vsel %vm8735, %v8635, %v3207
    %v8893 = vsel %vm8735, %v8636, %v3209
    %v8894 = vsel %vm8735, %v8637, %v3211
    %v8895 = vsel %vm8735, %v8638, %v3213
    %v8896 = vsel %vm8735, %v8639, %v3215
    %v8897 = vsel %vm8735, %v8640, %v3217
    %v8898 = vsel %vm8735, %v8641, %v3219
    %v8899 = vsel %vm8735, %v8642, %v3221
    %v8900 = vsel %vm8735, %v8643, %v3223
    %v8901 = vsel %vm8735, %v8644, %v3225
    %v8902 = vsel %vm8735, %v8645, %v3227
    %v8903 = vsel %vm8735, %v8646, %v3229
    %v8904 = vsel %vm8735, %v8647, %v3231
    %v8905 = vsel %vm8735, %v8648, %v3233
    %v8906 = vsel %vm8735, %v8649, %v3235
    %v8907 = vsel %vm8735, %v8650, %v3237
    %v8908 = vsel %vm8735, %v8651, %v3239
    %v8909 = vsel %vm8735, %v8652, %v3241
    %v8910 = vsel %vm8735, %v8653, %v3243
    %v8911 = vsel %vm8735, %v8654, %v3245
    %v8912 = vsel %vm8735, %v8655, %v3247
    %v8913 = vsel %vm8735, %v8656, %v3249
    %v8914 = vsel %vm8735, %v8657, %v3251
    %v8915 = vsel %vm8735, %v8658, %v3253
    %v8916 = vsel %vm8735, %v8659, %v3255
    %v8917 = vsel %vm8735, %v8660, %v3257
    %v8918 = vsel %vm8735, %v8661, %v3259
    %v8919 = vsel %vm8735, %v8662, %v3261
    %v8920 = vsel %vm8735, %v8663, %v3263
    %v8921 = vsel %vm8735, %v8664, %v3265
    %v8922 = vsel %vm8735, %v8665, %v3267
    %v8923 = vsel %vm8735, %v8666, %v3269
    %v8924 = vsel %vm8735, %v8667, %v3271
    %v8925 = vsel %vm8735, %v8668, %v3273
    %v8926 = vsel %vm8735, %v8669, %v3275
    %v8927 = vsel %vm8735, %v8670, %v3277
    %v8928 = vsel %vm8735, %v8671, %v3279
    %v8929 = vsel %vm8735, %v8672, %v3281
    %v8930 = vsel %vm8735, %v8673, %v3283
    %v8931 = vsel %vm8735, %v8674, %v3285
    %v8932 = vsel %vm8735, %v8675, %v3287
    %v8933 = vsel %vm8735, %v8676, %v3289
    %v8934 = vsel %vm8735, %v8677, %v3291
    %v8935 = vsel %vm8735, %v8678, %v3293
    %v8936 = vsel %vm8735, %v8679, %v3295
    %v8937 = vsel %vm8735, %v8680, %v3297
    %v8938 = vsel %vm8735, %v8681, %v3299
    %v8939 = vsel %vm8735, %v8682, %v3301
    %v8940 = vsel %vm8735, %v8683, %v3303
    %v8941 = vsel %vm8735, %v8684, %v3305
    %v8942 = vsel %vm8735, %v8685, %v3307
    %v8943 = vsel %vm8735, %v8686, %v3309
    %v8944 = vsel %vm8735, %v8687, %v3311
    %v8945 = vsel %vm8735, %v8688, %v3313
    %v8946 = vsel %vm8735, %v8689, %v3315
    %v8947 = vsel %vm8735, %v8690, %v3317
    %v8948 = vsel %vm8735, %v8691, %v3319
    %v8949 = vsel %vm8735, %v8692, %v3321
    %v8950 = vsel %vm8735, %v8693, %v3323
    %v8951 = vsel %vm8735, %v8694, %v3325
    %v8952 = vsel %vm8735, %v8695, %v3327
    %v8953 = vsel %vm8735, %v8696, %v3329
    %v8954 = vsel %vm8735, %v8697, %v3331
    %v8955 = vsel %vm8735, %v8698, %v3333
    %v8956 = vsel %vm8735, %v8699, %v3335
    %v8957 = vsel %vm8735, %v8700, %v3337
    %v8958 = vsel %vm8735, %v8701, %v3339
    %v8959 = vsel %vm8735, %v8702, %v3341
    %v8960 = vsel %vm8735, %v8703, %v3343
    %v8961 = vsel %vm8735, %v8704, %v3345
    %v8962 = vsel %vm8735, %v8705, %v3347
    %v8963 = vsel %vm8735, %v8706, %v3349
    %v8964 = vsel %vm8735, %v8707, %v3351
    %v8965 = vsel %vm8735, %v8708, %v3353
    %v8966 = vsel %vm8735, %v8709, %v3355
    %v8967 = vsel %vm8735, %v8710, %v3357
    %v8968 = vsel %vm8735, %v8711, %v3359
    %v8969 = vsel %vm8735, %v8712, %v3361
    %v8970 = vsel %vm8735, %v8713, %v3363
    %v8971 = vsel %vm8735, %v8714, %v3365
    %v8972 = vsel %vm8735, %v8715, %v3367
    %v8973 = vsel %vm8735, %v8716, %v3369
    %v8974 = vsel %vm8735, %v8717, %v3371
    %v8975 = vsel %vm8735, %v8718, %v3373
    %v8976 = vsel %vm8735, %v8719, %v3375
    %v8977 = vsel %vm8735, %v8720, %v3377
    %v8978 = vsel %vm8735, %v8721, %v3379
    %v8979 = vsel %vm8735, %v8722, %v3381
    %v8980 = vsel %vm8735, %v8723, %v3383
    %v8981 = vsel %vm8735, %v8724, %v3385
    %v8982 = vsel %vm8735, %v8725, %v3387
    %v8983 = vsel %vm8735, %v8726, %v3389
    %v8984 = vsel %vm8735, %v8727, %v3391
    %v8985 = vsel %vm8735, %v8728, %v3393
    %v8986 = vsel %vm8735, %v8729, %v3395
    %v8987 = vsel %vm8735, %v8730, %v3397
    %v8988 = vsel %vm8735, %v8731, %v3399
    %v8989 = vsel %vm8735, %v8732, %v3401
    %v8990 = vsel %vm8735, %v8733, %v3403
    %v8991 = vsel %vm8735, %v8734, %v3405
    %vm8992 = vcmask 195584
    %v8993 = vsel %vm8992, %v8736, %v3679
    %v8994 = vsel %vm8992, %v8737, %v3681
    %v8995 = vsel %vm8992, %v8738, %v3683
    %v8996 = vsel %vm8992, %v8739, %v3685
    %v8997 = vsel %vm8992, %v8740, %v3687
    %v8998 = vsel %vm8992, %v8741, %v3689
    %v8999 = vsel %vm8992, %v8742, %v3691
    %v9000 = vsel %vm8992, %v8743, %v3693
    %v9001 = vsel %vm8992, %v8744, %v3695
    %v9002 = vsel %vm8992, %v8745, %v3697
    %v9003 = vsel %vm8992, %v8746, %v3699
    %v9004 = vsel %vm8992, %v8747, %v3701
    %v9005 = vsel %vm8992, %v8748, %v3703
    %v9006 = vsel %vm8992, %v8749, %v3705
    %v9007 = vsel %vm8992, %v8750, %v3707
    %v9008 = vsel %vm8992, %v8751, %v3709
    %v9009 = vsel %vm8992, %v8752, %v3711
    %v9010 = vsel %vm8992, %v8753, %v3713
    %v9011 = vsel %vm8992, %v8754, %v3715
    %v9012 = vsel %vm8992, %v8755, %v3717
    %v9013 = vsel %vm8992, %v8756, %v3719
    %v9014 = vsel %vm8992, %v8757, %v3721
    %v9015 = vsel %vm8992, %v8758, %v3723
    %v9016 = vsel %vm8992, %v8759, %v3725
    %v9017 = vsel %vm8992, %v8760, %v3727
    %v9018 = vsel %vm8992, %v8761, %v3729
    %v9019 = vsel %vm8992, %v8762, %v3731
    %v9020 = vsel %vm8992, %v8763, %v3733
    %v9021 = vsel %vm8992, %v8764, %v3735
    %v9022 = vsel %vm8992, %v8765, %v3737
    %v9023 = vsel %vm8992, %v8766, %v3739
    %v9024 = vsel %vm8992, %v8767, %v3741
    %v9025 = vsel %vm8992, %v8768, %v3743
    %v9026 = vsel %vm8992, %v8769, %v3745
    %v9027 = vsel %vm8992, %v8770, %v3747
    %v9028 = vsel %vm8992, %v8771, %v3749
    %v9029 = vsel %vm8992, %v8772, %v3751
    %v9030 = vsel %vm8992, %v8773, %v3753
    %v9031 = vsel %vm8992, %v8774, %v3755
    %v9032 = vsel %vm8992, %v8775, %v3757
    %v9033 = vsel %vm8992, %v8776, %v3759
    %v9034 = vsel %vm8992, %v8777, %v3761
    %v9035 = vsel %vm8992, %v8778, %v3763
    %v9036 = vsel %vm8992, %v8779, %v3765
    %v9037 = vsel %vm8992, %v8780, %v3767
    %v9038 = vsel %vm8992, %v8781, %v3769
    %v9039 = vsel %vm8992, %v8782, %v3771
    %v9040 = vsel %vm8992, %v8783, %v3773
    %v9041 = vsel %vm8992, %v8784, %v3775
    %v9042 = vsel %vm8992, %v8785, %v3777
    %v9043 = vsel %vm8992, %v8786, %v3779
    %v9044 = vsel %vm8992, %v8787, %v3781
    %v9045 = vsel %vm8992, %v8788, %v3783
    %v9046 = vsel %vm8992, %v8789, %v3785
    %v9047 = vsel %vm8992, %v8790, %v3787
    %v9048 = vsel %vm8992, %v8791, %v3789
    %v9049 = vsel %vm8992, %v8792, %v3791
    %v9050 = vsel %vm8992, %v8793, %v3793
    %v9051 = vsel %vm8992, %v8794, %v3795
    %v9052 = vsel %vm8992, %v8795, %v3797
    %v9053 = vsel %vm8992, %v8796, %v3799
    %v9054 = vsel %vm8992, %v8797, %v3801
    %v9055 = vsel %vm8992, %v8798, %v3803
    %v9056 = vsel %vm8992, %v8799, %v3805
    %v9057 = vsel %vm8992, %v8800, %v3807
    %v9058 = vsel %vm8992, %v8801, %v3809
    %v9059 = vsel %vm8992, %v8802, %v3811
    %v9060 = vsel %vm8992, %v8803, %v3813
    %v9061 = vsel %vm8992, %v8804, %v3815
    %v9062 = vsel %vm8992, %v8805, %v3817
    %v9063 = vsel %vm8992, %v8806, %v3819
    %v9064 = vsel %vm8992, %v8807, %v3821
    %v9065 = vsel %vm8992, %v8808, %v3823
    %v9066 = vsel %vm8992, %v8809, %v3825
    %v9067 = vsel %vm8992, %v8810, %v3827
    %v9068 = vsel %vm8992, %v8811, %v3829
    %v9069 = vsel %vm8992, %v8812, %v3831
    %v9070 = vsel %vm8992, %v8813, %v3833
    %v9071 = vsel %vm8992, %v8814, %v3835
    %v9072 = vsel %vm8992, %v8815, %v3837
    %v9073 = vsel %vm8992, %v8816, %v3839
    %v9074 = vsel %vm8992, %v8817, %v3841
    %v9075 = vsel %vm8992, %v8818, %v3843
    %v9076 = vsel %vm8992, %v8819, %v3845
    %v9077 = vsel %vm8992, %v8820, %v3847
    %v9078 = vsel %vm8992, %v8821, %v3849
    %v9079 = vsel %vm8992, %v8822, %v3851
    %v9080 = vsel %vm8992, %v8823, %v3853
    %v9081 = vsel %vm8992, %v8824, %v3855
    %v9082 = vsel %vm8992, %v8825, %v3857
    %v9083 = vsel %vm8992, %v8826, %v3859
    %v9084 = vsel %vm8992, %v8827, %v3861
    %v9085 = vsel %vm8992, %v8828, %v3863
    %v9086 = vsel %vm8992, %v8829, %v3865
    %v9087 = vsel %vm8992, %v8830, %v3867
    %v9088 = vsel %vm8992, %v8831, %v3869
    %v9089 = vsel %vm8992, %v8832, %v3871
    %v9090 = vsel %vm8992, %v8833, %v3873
    %v9091 = vsel %vm8992, %v8834, %v3875
    %v9092 = vsel %vm8992, %v8835, %v3877
    %v9093 = vsel %vm8992, %v8836, %v3879
    %v9094 = vsel %vm8992, %v8837, %v3881
    %v9095 = vsel %vm8992, %v8838, %v3883
    %v9096 = vsel %vm8992, %v8839, %v3885
    %v9097 = vsel %vm8992, %v8840, %v3887
    %v9098 = vsel %vm8992, %v8841, %v3889
    %v9099 = vsel %vm8992, %v8842, %v3891
    %v9100 = vsel %vm8992, %v8843, %v3893
    %v9101 = vsel %vm8992, %v8844, %v3895
    %v9102 = vsel %vm8992, %v8845, %v3897
    %v9103 = vsel %vm8992, %v8846, %v3899
    %v9104 = vsel %vm8992, %v8847, %v3901
    %v9105 = vsel %vm8992, %v8848, %v3903
    %v9106 = vsel %vm8992, %v8849, %v3905
    %v9107 = vsel %vm8992, %v8850, %v3907
    %v9108 = vsel %vm8992, %v8851, %v3909
    %v9109 = vsel %vm8992, %v8852, %v3911
    %v9110 = vsel %vm8992, %v8853, %v3913
    %v9111 = vsel %vm8992, %v8854, %v3915
    %v9112 = vsel %vm8992, %v8855, %v3917
    %v9113 = vsel %vm8992, %v8856, %v3919
    %v9114 = vsel %vm8992, %v8857, %v3921
    %v9115 = vsel %vm8992, %v8858, %v3923
    %v9116 = vsel %vm8992, %v8859, %v3925
    %v9117 = vsel %vm8992, %v8860, %v3927
    %v9118 = vsel %vm8992, %v8861, %v3929
    %v9119 = vsel %vm8992, %v8862, %v3931
    %v9120 = vsel %vm8992, %v8863, %v3933
    %v9121 = vsel %vm8992, %v8864, %v3935
    %v9122 = vsel %vm8992, %v8865, %v3937
    %v9123 = vsel %vm8992, %v8866, %v3939
    %v9124 = vsel %vm8992, %v8867, %v3941
    %v9125 = vsel %vm8992, %v8868, %v3943
    %v9126 = vsel %vm8992, %v8869, %v3945
    %v9127 = vsel %vm8992, %v8870, %v3947
    %v9128 = vsel %vm8992, %v8871, %v3949
    %v9129 = vsel %vm8992, %v8872, %v3951
    %v9130 = vsel %vm8992, %v8873, %v3953
    %v9131 = vsel %vm8992, %v8874, %v3955
    %v9132 = vsel %vm8992, %v8875, %v3957
    %v9133 = vsel %vm8992, %v8876, %v3959
    %v9134 = vsel %vm8992, %v8877, %v3961
    %v9135 = vsel %vm8992, %v8878, %v3963
    %v9136 = vsel %vm8992, %v8879, %v3965
    %v9137 = vsel %vm8992, %v8880, %v3967
    %v9138 = vsel %vm8992, %v8881, %v3969
    %v9139 = vsel %vm8992, %v8882, %v3971
    %v9140 = vsel %vm8992, %v8883, %v3973
    %v9141 = vsel %vm8992, %v8884, %v3975
    %v9142 = vsel %vm8992, %v8885, %v3977
    %v9143 = vsel %vm8992, %v8886, %v3979
    %v9144 = vsel %vm8992, %v8887, %v3981
    %v9145 = vsel %vm8992, %v8888, %v3983
    %v9146 = vsel %vm8992, %v8889, %v3985
    %v9147 = vsel %vm8992, %v8890, %v3987
    %v9148 = vsel %vm8992, %v8891, %v3989
    %v9149 = vsel %vm8992, %v8892, %v3991
    %v9150 = vsel %vm8992, %v8893, %v3993
    %v9151 = vsel %vm8992, %v8894, %v3995
    %v9152 = vsel %vm8992, %v8895, %v3997
    %v9153 = vsel %vm8992, %v8896, %v3999
    %v9154 = vsel %vm8992, %v8897, %v4001
    %v9155 = vsel %vm8992, %v8898, %v4003
    %v9156 = vsel %vm8992, %v8899, %v4005
    %v9157 = vsel %vm8992, %v8900, %v4007
    %v9158 = vsel %vm8992, %v8901, %v4009
    %v9159 = vsel %vm8992, %v8902, %v4011
    %v9160 = vsel %vm8992, %v8903, %v4013
    %v9161 = vsel %vm8992, %v8904, %v4015
    %v9162 = vsel %vm8992, %v8905, %v4017
    %v9163 = vsel %vm8992, %v8906, %v4019
    %v9164 = vsel %vm8992, %v8907, %v4021
    %v9165 = vsel %vm8992, %v8908, %v4023
    %v9166 = vsel %vm8992, %v8909, %v4025
    %v9167 = vsel %vm8992, %v8910, %v4027
    %v9168 = vsel %vm8992, %v8911, %v4029
    %v9169 = vsel %vm8992, %v8912, %v4031
    %v9170 = vsel %vm8992, %v8913, %v4033
    %v9171 = vsel %vm8992, %v8914, %v4035
    %v9172 = vsel %vm8992, %v8915, %v4037
    %v9173 = vsel %vm8992, %v8916, %v4039
    %v9174 = vsel %vm8992, %v8917, %v4041
    %v9175 = vsel %vm8992, %v8918, %v4043
    %v9176 = vsel %vm8992, %v8919, %v4045
    %v9177 = vsel %vm8992, %v8920, %v4047
    %v9178 = vsel %vm8992, %v8921, %v4049
    %v9179 = vsel %vm8992, %v8922, %v4051
    %v9180 = vsel %vm8992, %v8923, %v4053
    %v9181 = vsel %vm8992, %v8924, %v4055
    %v9182 = vsel %vm8992, %v8925, %v4057
    %v9183 = vsel %vm8992, %v8926, %v4059
    %v9184 = vsel %vm8992, %v8927, %v4061
    %v9185 = vsel %vm8992, %v8928, %v4063
    %v9186 = vsel %vm8992, %v8929, %v4065
    %v9187 = vsel %vm8992, %v8930, %v4067
    %v9188 = vsel %vm8992, %v8931, %v4069
    %v9189 = vsel %vm8992, %v8932, %v4071
    %v9190 = vsel %vm8992, %v8933, %v4073
    %v9191 = vsel %vm8992, %v8934, %v4075
    %v9192 = vsel %vm8992, %v8935, %v4077
    %v9193 = vsel %vm8992, %v8936, %v4079
    %v9194 = vsel %vm8992, %v8937, %v4081
    %v9195 = vsel %vm8992, %v8938, %v4083
    %v9196 = vsel %vm8992, %v8939, %v4085
    %v9197 = vsel %vm8992, %v8940, %v4087
    %v9198 = vsel %vm8992, %v8941, %v4089
    %v9199 = vsel %vm8992, %v8942, %v4091
    %v9200 = vsel %vm8992, %v8943, %v4093
    %v9201 = vsel %vm8992, %v8944, %v4095
    %v9202 = vsel %vm8992, %v8945, %v4097
    %v9203 = vsel %vm8992, %v8946, %v4099
    %v9204 = vsel %vm8992, %v8947, %v4101
    %v9205 = vsel %vm8992, %v8948, %v4103
    %v9206 = vsel %vm8992, %v8949, %v4105
    %v9207 = vsel %vm8992, %v8950, %v4107
    %v9208 = vsel %vm8992, %v8951, %v4109
    %v9209 = vsel %vm8992, %v8952, %v4111
    %v9210 = vsel %vm8992, %v8953, %v4113
    %v9211 = vsel %vm8992, %v8954, %v4115
    %v9212 = vsel %vm8992, %v8955, %v4117
    %v9213 = vsel %vm8992, %v8956, %v4119
    %v9214 = vsel %vm8992, %v8957, %v4121
    %v9215 = vsel %vm8992, %v8958, %v4123
    %v9216 = vsel %vm8992, %v8959, %v4125
    %v9217 = vsel %vm8992, %v8960, %v4127
    %v9218 = vsel %vm8992, %v8961, %v4129
    %v9219 = vsel %vm8992, %v8962, %v4131
    %v9220 = vsel %vm8992, %v8963, %v4133
    %v9221 = vsel %vm8992, %v8964, %v4135
    %v9222 = vsel %vm8992, %v8965, %v4137
    %v9223 = vsel %vm8992, %v8966, %v4139
    %v9224 = vsel %vm8992, %v8967, %v4141
    %v9225 = vsel %vm8992, %v8968, %v4143
    %v9226 = vsel %vm8992, %v8969, %v4145
    %v9227 = vsel %vm8992, %v8970, %v4147
    %v9228 = vsel %vm8992, %v8971, %v4149
    %v9229 = vsel %vm8992, %v8972, %v4151
    %v9230 = vsel %vm8992, %v8973, %v4153
    %v9231 = vsel %vm8992, %v8974, %v4155
    %v9232 = vsel %vm8992, %v8975, %v4157
    %v9233 = vsel %vm8992, %v8976, %v4159
    %v9234 = vsel %vm8992, %v8977, %v4161
    %v9235 = vsel %vm8992, %v8978, %v4163
    %v9236 = vsel %vm8992, %v8979, %v4165
    %v9237 = vsel %vm8992, %v8980, %v4167
    %v9238 = vsel %vm8992, %v8981, %v4169
    %v9239 = vsel %vm8992, %v8982, %v4171
    %v9240 = vsel %vm8992, %v8983, %v4173
    %v9241 = vsel %vm8992, %v8984, %v4175
    %v9242 = vsel %vm8992, %v8985, %v4177
    %v9243 = vsel %vm8992, %v8986, %v4179
    %v9244 = vsel %vm8992, %v8987, %v4181
    %v9245 = vsel %vm8992, %v8988, %v4183
    %v9246 = vsel %vm8992, %v8989, %v4185
    %v9247 = vsel %vm8992, %v8990, %v4187
    %v9248 = vsel %vm8992, %v8991, %v4189
    %vm9249 = vcmask 261120
    %v9250 = vsel %vm9249, %v8993, %v4495
    %v9251 = vsel %vm9249, %v8994, %v4497
    %v9252 = vsel %vm9249, %v8995, %v4499
    %v9253 = vsel %vm9249, %v8996, %v4501
    %v9254 = vsel %vm9249, %v8997, %v4503
    %v9255 = vsel %vm9249, %v8998, %v4505
    %v9256 = vsel %vm9249, %v8999, %v4507
    %v9257 = vsel %vm9249, %v9000, %v4509
    %v9258 = vsel %vm9249, %v9001, %v4511
    %v9259 = vsel %vm9249, %v9002, %v4513
    %v9260 = vsel %vm9249, %v9003, %v4515
    %v9261 = vsel %vm9249, %v9004, %v4517
    %v9262 = vsel %vm9249, %v9005, %v4519
    %v9263 = vsel %vm9249, %v9006, %v4521
    %v9264 = vsel %vm9249, %v9007, %v4523
    %v9265 = vsel %vm9249, %v9008, %v4525
    %v9266 = vsel %vm9249, %v9009, %v4527
    %v9267 = vsel %vm9249, %v9010, %v4529
    %v9268 = vsel %vm9249, %v9011, %v4531
    %v9269 = vsel %vm9249, %v9012, %v4533
    %v9270 = vsel %vm9249, %v9013, %v4535
    %v9271 = vsel %vm9249, %v9014, %v4537
    %v9272 = vsel %vm9249, %v9015, %v4539
    %v9273 = vsel %vm9249, %v9016, %v4541
    %v9274 = vsel %vm9249, %v9017, %v4543
    %v9275 = vsel %vm9249, %v9018, %v4545
    %v9276 = vsel %vm9249, %v9019, %v4547
    %v9277 = vsel %vm9249, %v9020, %v4549
    %v9278 = vsel %vm9249, %v9021, %v4551
    %v9279 = vsel %vm9249, %v9022, %v4553
    %v9280 = vsel %vm9249, %v9023, %v4555
    %v9281 = vsel %vm9249, %v9024, %v4557
    %v9282 = vsel %vm9249, %v9025, %v4559
    %v9283 = vsel %vm9249, %v9026, %v4561
    %v9284 = vsel %vm9249, %v9027, %v4563
    %v9285 = vsel %vm9249, %v9028, %v4565
    %v9286 = vsel %vm9249, %v9029, %v4567
    %v9287 = vsel %vm9249, %v9030, %v4569
    %v9288 = vsel %vm9249, %v9031, %v4571
    %v9289 = vsel %vm9249, %v9032, %v4573
    %v9290 = vsel %vm9249, %v9033, %v4575
    %v9291 = vsel %vm9249, %v9034, %v4577
    %v9292 = vsel %vm9249, %v9035, %v4579
    %v9293 = vsel %vm9249, %v9036, %v4581
    %v9294 = vsel %vm9249, %v9037, %v4583
    %v9295 = vsel %vm9249, %v9038, %v4585
    %v9296 = vsel %vm9249, %v9039, %v4587
    %v9297 = vsel %vm9249, %v9040, %v4589
    %v9298 = vsel %vm9249, %v9041, %v4591
    %v9299 = vsel %vm9249, %v9042, %v4593
    %v9300 = vsel %vm9249, %v9043, %v4595
    %v9301 = vsel %vm9249, %v9044, %v4597
    %v9302 = vsel %vm9249, %v9045, %v4599
    %v9303 = vsel %vm9249, %v9046, %v4601
    %v9304 = vsel %vm9249, %v9047, %v4603
    %v9305 = vsel %vm9249, %v9048, %v4605
    %v9306 = vsel %vm9249, %v9049, %v4607
    %v9307 = vsel %vm9249, %v9050, %v4609
    %v9308 = vsel %vm9249, %v9051, %v4611
    %v9309 = vsel %vm9249, %v9052, %v4613
    %v9310 = vsel %vm9249, %v9053, %v4615
    %v9311 = vsel %vm9249, %v9054, %v4617
    %v9312 = vsel %vm9249, %v9055, %v4619
    %v9313 = vsel %vm9249, %v9056, %v4621
    %v9314 = vsel %vm9249, %v9057, %v4623
    %v9315 = vsel %vm9249, %v9058, %v4625
    %v9316 = vsel %vm9249, %v9059, %v4627
    %v9317 = vsel %vm9249, %v9060, %v4629
    %v9318 = vsel %vm9249, %v9061, %v4631
    %v9319 = vsel %vm9249, %v9062, %v4633
    %v9320 = vsel %vm9249, %v9063, %v4635
    %v9321 = vsel %vm9249, %v9064, %v4637
    %v9322 = vsel %vm9249, %v9065, %v4639
    %v9323 = vsel %vm9249, %v9066, %v4641
    %v9324 = vsel %vm9249, %v9067, %v4643
    %v9325 = vsel %vm9249, %v9068, %v4645
    %v9326 = vsel %vm9249, %v9069, %v4647
    %v9327 = vsel %vm9249, %v9070, %v4649
    %v9328 = vsel %vm9249, %v9071, %v4651
    %v9329 = vsel %vm9249, %v9072, %v4653
    %v9330 = vsel %vm9249, %v9073, %v4655
    %v9331 = vsel %vm9249, %v9074, %v4657
    %v9332 = vsel %vm9249, %v9075, %v4659
    %v9333 = vsel %vm9249, %v9076, %v4661
    %v9334 = vsel %vm9249, %v9077, %v4663
    %v9335 = vsel %vm9249, %v9078, %v4665
    %v9336 = vsel %vm9249, %v9079, %v4667
    %v9337 = vsel %vm9249, %v9080, %v4669
    %v9338 = vsel %vm9249, %v9081, %v4671
    %v9339 = vsel %vm9249, %v9082, %v4673
    %v9340 = vsel %vm9249, %v9083, %v4675
    %v9341 = vsel %vm9249, %v9084, %v4677
    %v9342 = vsel %vm9249, %v9085, %v4679
    %v9343 = vsel %vm9249, %v9086, %v4681
    %v9344 = vsel %vm9249, %v9087, %v4683
    %v9345 = vsel %vm9249, %v9088, %v4685
    %v9346 = vsel %vm9249, %v9089, %v4687
    %v9347 = vsel %vm9249, %v9090, %v4689
    %v9348 = vsel %vm9249, %v9091, %v4691
    %v9349 = vsel %vm9249, %v9092, %v4693
    %v9350 = vsel %vm9249, %v9093, %v4695
    %v9351 = vsel %vm9249, %v9094, %v4697
    %v9352 = vsel %vm9249, %v9095, %v4699
    %v9353 = vsel %vm9249, %v9096, %v4701
    %v9354 = vsel %vm9249, %v9097, %v4703
    %v9355 = vsel %vm9249, %v9098, %v4705
    %v9356 = vsel %vm9249, %v9099, %v4707
    %v9357 = vsel %vm9249, %v9100, %v4709
    %v9358 = vsel %vm9249, %v9101, %v4711
    %v9359 = vsel %vm9249, %v9102, %v4713
    %v9360 = vsel %vm9249, %v9103, %v4715
    %v9361 = vsel %vm9249, %v9104, %v4717
    %v9362 = vsel %vm9249, %v9105, %v4719
    %v9363 = vsel %vm9249, %v9106, %v4721
    %v9364 = vsel %vm9249, %v9107, %v4723
    %v9365 = vsel %vm9249, %v9108, %v4725
    %v9366 = vsel %vm9249, %v9109, %v4727
    %v9367 = vsel %vm9249, %v9110, %v4729
    %v9368 = vsel %vm9249, %v9111, %v4731
    %v9369 = vsel %vm9249, %v9112, %v4733
    %v9370 = vsel %vm9249, %v9113, %v4735
    %v9371 = vsel %vm9249, %v9114, %v4737
    %v9372 = vsel %vm9249, %v9115, %v4739
    %v9373 = vsel %vm9249, %v9116, %v4741
    %v9374 = vsel %vm9249, %v9117, %v4743
    %v9375 = vsel %vm9249, %v9118, %v4745
    %v9376 = vsel %vm9249, %v9119, %v4747
    %v9377 = vsel %vm9249, %v9120, %v4749
    %v9378 = vsel %vm9249, %v9121, %v4751
    %v9379 = vsel %vm9249, %v9122, %v4753
    %v9380 = vsel %vm9249, %v9123, %v4755
    %v9381 = vsel %vm9249, %v9124, %v4757
    %v9382 = vsel %vm9249, %v9125, %v4759
    %v9383 = vsel %vm9249, %v9126, %v4761
    %v9384 = vsel %vm9249, %v9127, %v4763
    %v9385 = vsel %vm9249, %v9128, %v4765
    %v9386 = vsel %vm9249, %v9129, %v4767
    %v9387 = vsel %vm9249, %v9130, %v4769
    %v9388 = vsel %vm9249, %v9131, %v4771
    %v9389 = vsel %vm9249, %v9132, %v4773
    %v9390 = vsel %vm9249, %v9133, %v4775
    %v9391 = vsel %vm9249, %v9134, %v4777
    %v9392 = vsel %vm9249, %v9135, %v4779
    %v9393 = vsel %vm9249, %v9136, %v4781
    %v9394 = vsel %vm9249, %v9137, %v4783
    %v9395 = vsel %vm9249, %v9138, %v4785
    %v9396 = vsel %vm9249, %v9139, %v4787
    %v9397 = vsel %vm9249, %v9140, %v4789
    %v9398 = vsel %vm9249, %v9141, %v4791
    %v9399 = vsel %vm9249, %v9142, %v4793
    %v9400 = vsel %vm9249, %v9143, %v4795
    %v9401 = vsel %vm9249, %v9144, %v4797
    %v9402 = vsel %vm9249, %v9145, %v4799
    %v9403 = vsel %vm9249, %v9146, %v4801
    %v9404 = vsel %vm9249, %v9147, %v4803
    %v9405 = vsel %vm9249, %v9148, %v4805
    %v9406 = vsel %vm9249, %v9149, %v4807
    %v9407 = vsel %vm9249, %v9150, %v4809
    %v9408 = vsel %vm9249, %v9151, %v4811
    %v9409 = vsel %vm9249, %v9152, %v4813
    %v9410 = vsel %vm9249, %v9153, %v4815
    %v9411 = vsel %vm9249, %v9154, %v4817
    %v9412 = vsel %vm9249, %v9155, %v4819
    %v9413 = vsel %vm9249, %v9156, %v4821
    %v9414 = vsel %vm9249, %v9157, %v4823
    %v9415 = vsel %vm9249, %v9158, %v4825
    %v9416 = vsel %vm9249, %v9159, %v4827
    %v9417 = vsel %vm9249, %v9160, %v4829
    %v9418 = vsel %vm9249, %v9161, %v4831
    %v9419 = vsel %vm9249, %v9162, %v4833
    %v9420 = vsel %vm9249, %v9163, %v4835
    %v9421 = vsel %vm9249, %v9164, %v4837
    %v9422 = vsel %vm9249, %v9165, %v4839
    %v9423 = vsel %vm9249, %v9166, %v4841
    %v9424 = vsel %vm9249, %v9167, %v4843
    %v9425 = vsel %vm9249, %v9168, %v4845
    %v9426 = vsel %vm9249, %v9169, %v4847
    %v9427 = vsel %vm9249, %v9170, %v4849
    %v9428 = vsel %vm9249, %v9171, %v4851
    %v9429 = vsel %vm9249, %v9172, %v4853
    %v9430 = vsel %vm9249, %v9173, %v4855
    %v9431 = vsel %vm9249, %v9174, %v4857
    %v9432 = vsel %vm9249, %v9175, %v4859
    %v9433 = vsel %vm9249, %v9176, %v4861
    %v9434 = vsel %vm9249, %v9177, %v4863
    %v9435 = vsel %vm9249, %v9178, %v4865
    %v9436 = vsel %vm9249, %v9179, %v4867
    %v9437 = vsel %vm9249, %v9180, %v4869
    %v9438 = vsel %vm9249, %v9181, %v4871
    %v9439 = vsel %vm9249, %v9182, %v4873
    %v9440 = vsel %vm9249, %v9183, %v4875
    %v9441 = vsel %vm9249, %v9184, %v4877
    %v9442 = vsel %vm9249, %v9185, %v4879
    %v9443 = vsel %vm9249, %v9186, %v4881
    %v9444 = vsel %vm9249, %v9187, %v4883
    %v9445 = vsel %vm9249, %v9188, %v4885
    %v9446 = vsel %vm9249, %v9189, %v4887
    %v9447 = vsel %vm9249, %v9190, %v4889
    %v9448 = vsel %vm9249, %v9191, %v4891
    %v9449 = vsel %vm9249, %v9192, %v4893
    %v9450 = vsel %vm9249, %v9193, %v4895
    %v9451 = vsel %vm9249, %v9194, %v4897
    %v9452 = vsel %vm9249, %v9195, %v4899
    %v9453 = vsel %vm9249, %v9196, %v4901
    %v9454 = vsel %vm9249, %v9197, %v4903
    %v9455 = vsel %vm9249, %v9198, %v4905
    %v9456 = vsel %vm9249, %v9199, %v4907
    %v9457 = vsel %vm9249, %v9200, %v4909
    %v9458 = vsel %vm9249, %v9201, %v4911
    %v9459 = vsel %vm9249, %v9202, %v4913
    %v9460 = vsel %vm9249, %v9203, %v4915
    %v9461 = vsel %vm9249, %v9204, %v4917
    %v9462 = vsel %vm9249, %v9205, %v4919
    %v9463 = vsel %vm9249, %v9206, %v4921
    %v9464 = vsel %vm9249, %v9207, %v4923
    %v9465 = vsel %vm9249, %v9208, %v4925
    %v9466 = vsel %vm9249, %v9209, %v4927
    %v9467 = vsel %vm9249, %v9210, %v4929
    %v9468 = vsel %vm9249, %v9211, %v4931
    %v9469 = vsel %vm9249, %v9212, %v4933
    %v9470 = vsel %vm9249, %v9213, %v4935
    %v9471 = vsel %vm9249, %v9214, %v4937
    %v9472 = vsel %vm9249, %v9215, %v4939
    %v9473 = vsel %vm9249, %v9216, %v4941
    %v9474 = vsel %vm9249, %v9217, %v4943
    %v9475 = vsel %vm9249, %v9218, %v4945
    %v9476 = vsel %vm9249, %v9219, %v4947
    %v9477 = vsel %vm9249, %v9220, %v4949
    %v9478 = vsel %vm9249, %v9221, %v4951
    %v9479 = vsel %vm9249, %v9222, %v4953
    %v9480 = vsel %vm9249, %v9223, %v4955
    %v9481 = vsel %vm9249, %v9224, %v4957
    %v9482 = vsel %vm9249, %v9225, %v4959
    %v9483 = vsel %vm9249, %v9226, %v4961
    %v9484 = vsel %vm9249, %v9227, %v4963
    %v9485 = vsel %vm9249, %v9228, %v4965
    %v9486 = vsel %vm9249, %v9229, %v4967
    %v9487 = vsel %vm9249, %v9230, %v4969
    %v9488 = vsel %vm9249, %v9231, %v4971
    %v9489 = vsel %vm9249, %v9232, %v4973
    %v9490 = vsel %vm9249, %v9233, %v4975
    %v9491 = vsel %vm9249, %v9234, %v4977
    %v9492 = vsel %vm9249, %v9235, %v4979
    %v9493 = vsel %vm9249, %v9236, %v4981
    %v9494 = vsel %vm9249, %v9237, %v4983
    %v9495 = vsel %vm9249, %v9238, %v4985
    %v9496 = vsel %vm9249, %v9239, %v4987
    %v9497 = vsel %vm9249, %v9240, %v4989
    %v9498 = vsel %vm9249, %v9241, %v4991
    %v9499 = vsel %vm9249, %v9242, %v4993
    %v9500 = vsel %vm9249, %v9243, %v4995
    %v9501 = vsel %vm9249, %v9244, %v4997
    %v9502 = vsel %vm9249, %v9245, %v4999
    %v9503 = vsel %vm9249, %v9246, %v5001
    %v9504 = vsel %vm9249, %v9247, %v5003
    %v9505 = vsel %vm9249, %v9248, %v5005
    %vm9506 = vcmask 326656
    %v9507 = vsel %vm9506, %v9250, %v5303
    %v9508 = vsel %vm9506, %v9251, %v5305
    %v9509 = vsel %vm9506, %v9252, %v5307
    %v9510 = vsel %vm9506, %v9253, %v5309
    %v9511 = vsel %vm9506, %v9254, %v5311
    %v9512 = vsel %vm9506, %v9255, %v5313
    %v9513 = vsel %vm9506, %v9256, %v5315
    %v9514 = vsel %vm9506, %v9257, %v5317
    %v9515 = vsel %vm9506, %v9258, %v5319
    %v9516 = vsel %vm9506, %v9259, %v5321
    %v9517 = vsel %vm9506, %v9260, %v5323
    %v9518 = vsel %vm9506, %v9261, %v5325
    %v9519 = vsel %vm9506, %v9262, %v5327
    %v9520 = vsel %vm9506, %v9263, %v5329
    %v9521 = vsel %vm9506, %v9264, %v5331
    %v9522 = vsel %vm9506, %v9265, %v5333
    %v9523 = vsel %vm9506, %v9266, %v5335
    %v9524 = vsel %vm9506, %v9267, %v5337
    %v9525 = vsel %vm9506, %v9268, %v5339
    %v9526 = vsel %vm9506, %v9269, %v5341
    %v9527 = vsel %vm9506, %v9270, %v5343
    %v9528 = vsel %vm9506, %v9271, %v5345
    %v9529 = vsel %vm9506, %v9272, %v5347
    %v9530 = vsel %vm9506, %v9273, %v5349
    %v9531 = vsel %vm9506, %v9274, %v5351
    %v9532 = vsel %vm9506, %v9275, %v5353
    %v9533 = vsel %vm9506, %v9276, %v5355
    %v9534 = vsel %vm9506, %v9277, %v5357
    %v9535 = vsel %vm9506, %v9278, %v5359
    %v9536 = vsel %vm9506, %v9279, %v5361
    %v9537 = vsel %vm9506, %v9280, %v5363
    %v9538 = vsel %vm9506, %v9281, %v5365
    %v9539 = vsel %vm9506, %v9282, %v5367
    %v9540 = vsel %vm9506, %v9283, %v5369
    %v9541 = vsel %vm9506, %v9284, %v5371
    %v9542 = vsel %vm9506, %v9285, %v5373
    %v9543 = vsel %vm9506, %v9286, %v5375
    %v9544 = vsel %vm9506, %v9287, %v5377
    %v9545 = vsel %vm9506, %v9288, %v5379
    %v9546 = vsel %vm9506, %v9289, %v5381
    %v9547 = vsel %vm9506, %v9290, %v5383
    %v9548 = vsel %vm9506, %v9291, %v5385
    %v9549 = vsel %vm9506, %v9292, %v5387
    %v9550 = vsel %vm9506, %v9293, %v5389
    %v9551 = vsel %vm9506, %v9294, %v5391
    %v9552 = vsel %vm9506, %v9295, %v5393
    %v9553 = vsel %vm9506, %v9296, %v5395
    %v9554 = vsel %vm9506, %v9297, %v5397
    %v9555 = vsel %vm9506, %v9298, %v5399
    %v9556 = vsel %vm9506, %v9299, %v5401
    %v9557 = vsel %vm9506, %v9300, %v5403
    %v9558 = vsel %vm9506, %v9301, %v5405
    %v9559 = vsel %vm9506, %v9302, %v5407
    %v9560 = vsel %vm9506, %v9303, %v5409
    %v9561 = vsel %vm9506, %v9304, %v5411
    %v9562 = vsel %vm9506, %v9305, %v5413
    %v9563 = vsel %vm9506, %v9306, %v5415
    %v9564 = vsel %vm9506, %v9307, %v5417
    %v9565 = vsel %vm9506, %v9308, %v5419
    %v9566 = vsel %vm9506, %v9309, %v5421
    %v9567 = vsel %vm9506, %v9310, %v5423
    %v9568 = vsel %vm9506, %v9311, %v5425
    %v9569 = vsel %vm9506, %v9312, %v5427
    %v9570 = vsel %vm9506, %v9313, %v5429
    %v9571 = vsel %vm9506, %v9314, %v5431
    %v9572 = vsel %vm9506, %v9315, %v5433
    %v9573 = vsel %vm9506, %v9316, %v5435
    %v9574 = vsel %vm9506, %v9317, %v5437
    %v9575 = vsel %vm9506, %v9318, %v5439
    %v9576 = vsel %vm9506, %v9319, %v5441
    %v9577 = vsel %vm9506, %v9320, %v5443
    %v9578 = vsel %vm9506, %v9321, %v5445
    %v9579 = vsel %vm9506, %v9322, %v5447
    %v9580 = vsel %vm9506, %v9323, %v5449
    %v9581 = vsel %vm9506, %v9324, %v5451
    %v9582 = vsel %vm9506, %v9325, %v5453
    %v9583 = vsel %vm9506, %v9326, %v5455
    %v9584 = vsel %vm9506, %v9327, %v5457
    %v9585 = vsel %vm9506, %v9328, %v5459
    %v9586 = vsel %vm9506, %v9329, %v5461
    %v9587 = vsel %vm9506, %v9330, %v5463
    %v9588 = vsel %vm9506, %v9331, %v5465
    %v9589 = vsel %vm9506, %v9332, %v5467
    %v9590 = vsel %vm9506, %v9333, %v5469
    %v9591 = vsel %vm9506, %v9334, %v5471
    %v9592 = vsel %vm9506, %v9335, %v5473
    %v9593 = vsel %vm9506, %v9336, %v5475
    %v9594 = vsel %vm9506, %v9337, %v5477
    %v9595 = vsel %vm9506, %v9338, %v5479
    %v9596 = vsel %vm9506, %v9339, %v5481
    %v9597 = vsel %vm9506, %v9340, %v5483
    %v9598 = vsel %vm9506, %v9341, %v5485
    %v9599 = vsel %vm9506, %v9342, %v5487
    %v9600 = vsel %vm9506, %v9343, %v5489
    %v9601 = vsel %vm9506, %v9344, %v5491
    %v9602 = vsel %vm9506, %v9345, %v5493
    %v9603 = vsel %vm9506, %v9346, %v5495
    %v9604 = vsel %vm9506, %v9347, %v5497
    %v9605 = vsel %vm9506, %v9348, %v5499
    %v9606 = vsel %vm9506, %v9349, %v5501
    %v9607 = vsel %vm9506, %v9350, %v5503
    %v9608 = vsel %vm9506, %v9351, %v5505
    %v9609 = vsel %vm9506, %v9352, %v5507
    %v9610 = vsel %vm9506, %v9353, %v5509
    %v9611 = vsel %vm9506, %v9354, %v5511
    %v9612 = vsel %vm9506, %v9355, %v5513
    %v9613 = vsel %vm9506, %v9356, %v5515
    %v9614 = vsel %vm9506, %v9357, %v5517
    %v9615 = vsel %vm9506, %v9358, %v5519
    %v9616 = vsel %vm9506, %v9359, %v5521
    %v9617 = vsel %vm9506, %v9360, %v5523
    %v9618 = vsel %vm9506, %v9361, %v5525
    %v9619 = vsel %vm9506, %v9362, %v5527
    %v9620 = vsel %vm9506, %v9363, %v5529
    %v9621 = vsel %vm9506, %v9364, %v5531
    %v9622 = vsel %vm9506, %v9365, %v5533
    %v9623 = vsel %vm9506, %v9366, %v5535
    %v9624 = vsel %vm9506, %v9367, %v5537
    %v9625 = vsel %vm9506, %v9368, %v5539
    %v9626 = vsel %vm9506, %v9369, %v5541
    %v9627 = vsel %vm9506, %v9370, %v5543
    %v9628 = vsel %vm9506, %v9371, %v5545
    %v9629 = vsel %vm9506, %v9372, %v5547
    %v9630 = vsel %vm9506, %v9373, %v5549
    %v9631 = vsel %vm9506, %v9374, %v5551
    %v9632 = vsel %vm9506, %v9375, %v5553
    %v9633 = vsel %vm9506, %v9376, %v5555
    %v9634 = vsel %vm9506, %v9377, %v5557
    %v9635 = vsel %vm9506, %v9378, %v5559
    %v9636 = vsel %vm9506, %v9379, %v5561
    %v9637 = vsel %vm9506, %v9380, %v5563
    %v9638 = vsel %vm9506, %v9381, %v5565
    %v9639 = vsel %vm9506, %v9382, %v5567
    %v9640 = vsel %vm9506, %v9383, %v5569
    %v9641 = vsel %vm9506, %v9384, %v5571
    %v9642 = vsel %vm9506, %v9385, %v5573
    %v9643 = vsel %vm9506, %v9386, %v5575
    %v9644 = vsel %vm9506, %v9387, %v5577
    %v9645 = vsel %vm9506, %v9388, %v5579
    %v9646 = vsel %vm9506, %v9389, %v5581
    %v9647 = vsel %vm9506, %v9390, %v5583
    %v9648 = vsel %vm9506, %v9391, %v5585
    %v9649 = vsel %vm9506, %v9392, %v5587
    %v9650 = vsel %vm9506, %v9393, %v5589
    %v9651 = vsel %vm9506, %v9394, %v5591
    %v9652 = vsel %vm9506, %v9395, %v5593
    %v9653 = vsel %vm9506, %v9396, %v5595
    %v9654 = vsel %vm9506, %v9397, %v5597
    %v9655 = vsel %vm9506, %v9398, %v5599
    %v9656 = vsel %vm9506, %v9399, %v5601
    %v9657 = vsel %vm9506, %v9400, %v5603
    %v9658 = vsel %vm9506, %v9401, %v5605
    %v9659 = vsel %vm9506, %v9402, %v5607
    %v9660 = vsel %vm9506, %v9403, %v5609
    %v9661 = vsel %vm9506, %v9404, %v5611
    %v9662 = vsel %vm9506, %v9405, %v5613
    %v9663 = vsel %vm9506, %v9406, %v5615
    %v9664 = vsel %vm9506, %v9407, %v5617
    %v9665 = vsel %vm9506, %v9408, %v5619
    %v9666 = vsel %vm9506, %v9409, %v5621
    %v9667 = vsel %vm9506, %v9410, %v5623
    %v9668 = vsel %vm9506, %v9411, %v5625
    %v9669 = vsel %vm9506, %v9412, %v5627
    %v9670 = vsel %vm9506, %v9413, %v5629
    %v9671 = vsel %vm9506, %v9414, %v5631
    %v9672 = vsel %vm9506, %v9415, %v5633
    %v9673 = vsel %vm9506, %v9416, %v5635
    %v9674 = vsel %vm9506, %v9417, %v5637
    %v9675 = vsel %vm9506, %v9418, %v5639
    %v9676 = vsel %vm9506, %v9419, %v5641
    %v9677 = vsel %vm9506, %v9420, %v5643
    %v9678 = vsel %vm9506, %v9421, %v5645
    %v9679 = vsel %vm9506, %v9422, %v5647
    %v9680 = vsel %vm9506, %v9423, %v5649
    %v9681 = vsel %vm9506, %v9424, %v5651
    %v9682 = vsel %vm9506, %v9425, %v5653
    %v9683 = vsel %vm9506, %v9426, %v5655
    %v9684 = vsel %vm9506, %v9427, %v5657
    %v9685 = vsel %vm9506, %v9428, %v5659
    %v9686 = vsel %vm9506, %v9429, %v5661
    %v9687 = vsel %vm9506, %v9430, %v5663
    %v9688 = vsel %vm9506, %v9431, %v5665
    %v9689 = vsel %vm9506, %v9432, %v5667
    %v9690 = vsel %vm9506, %v9433, %v5669
    %v9691 = vsel %vm9506, %v9434, %v5671
    %v9692 = vsel %vm9506, %v9435, %v5673
    %v9693 = vsel %vm9506, %v9436, %v5675
    %v9694 = vsel %vm9506, %v9437, %v5677
    %v9695 = vsel %vm9506, %v9438, %v5679
    %v9696 = vsel %vm9506, %v9439, %v5681
    %v9697 = vsel %vm9506, %v9440, %v5683
    %v9698 = vsel %vm9506, %v9441, %v5685
    %v9699 = vsel %vm9506, %v9442, %v5687
    %v9700 = vsel %vm9506, %v9443, %v5689
    %v9701 = vsel %vm9506, %v9444, %v5691
    %v9702 = vsel %vm9506, %v9445, %v5693
    %v9703 = vsel %vm9506, %v9446, %v5695
    %v9704 = vsel %vm9506, %v9447, %v5697
    %v9705 = vsel %vm9506, %v9448, %v5699
    %v9706 = vsel %vm9506, %v9449, %v5701
    %v9707 = vsel %vm9506, %v9450, %v5703
    %v9708 = vsel %vm9506, %v9451, %v5705
    %v9709 = vsel %vm9506, %v9452, %v5707
    %v9710 = vsel %vm9506, %v9453, %v5709
    %v9711 = vsel %vm9506, %v9454, %v5711
    %v9712 = vsel %vm9506, %v9455, %v5713
    %v9713 = vsel %vm9506, %v9456, %v5715
    %v9714 = vsel %vm9506, %v9457, %v5717
    %v9715 = vsel %vm9506, %v9458, %v5719
    %v9716 = vsel %vm9506, %v9459, %v5721
    %v9717 = vsel %vm9506, %v9460, %v5723
    %v9718 = vsel %vm9506, %v9461, %v5725
    %v9719 = vsel %vm9506, %v9462, %v5727
    %v9720 = vsel %vm9506, %v9463, %v5729
    %v9721 = vsel %vm9506, %v9464, %v5731
    %v9722 = vsel %vm9506, %v9465, %v5733
    %v9723 = vsel %vm9506, %v9466, %v5735
    %v9724 = vsel %vm9506, %v9467, %v5737
    %v9725 = vsel %vm9506, %v9468, %v5739
    %v9726 = vsel %vm9506, %v9469, %v5741
    %v9727 = vsel %vm9506, %v9470, %v5743
    %v9728 = vsel %vm9506, %v9471, %v5745
    %v9729 = vsel %vm9506, %v9472, %v5747
    %v9730 = vsel %vm9506, %v9473, %v5749
    %v9731 = vsel %vm9506, %v9474, %v5751
    %v9732 = vsel %vm9506, %v9475, %v5753
    %v9733 = vsel %vm9506, %v9476, %v5755
    %v9734 = vsel %vm9506, %v9477, %v5757
    %v9735 = vsel %vm9506, %v9478, %v5759
    %v9736 = vsel %vm9506, %v9479, %v5761
    %v9737 = vsel %vm9506, %v9480, %v5763
    %v9738 = vsel %vm9506, %v9481, %v5765
    %v9739 = vsel %vm9506, %v9482, %v5767
    %v9740 = vsel %vm9506, %v9483, %v5769
    %v9741 = vsel %vm9506, %v9484, %v5771
    %v9742 = vsel %vm9506, %v9485, %v5773
    %v9743 = vsel %vm9506, %v9486, %v5775
    %v9744 = vsel %vm9506, %v9487, %v5777
    %v9745 = vsel %vm9506, %v9488, %v5779
    %v9746 = vsel %vm9506, %v9489, %v5781
    %v9747 = vsel %vm9506, %v9490, %v5783
    %v9748 = vsel %vm9506, %v9491, %v5785
    %v9749 = vsel %vm9506, %v9492, %v5787
    %v9750 = vsel %vm9506, %v9493, %v5789
    %v9751 = vsel %vm9506, %v9494, %v5791
    %v9752 = vsel %vm9506, %v9495, %v5793
    %v9753 = vsel %vm9506, %v9496, %v5795
    %v9754 = vsel %vm9506, %v9497, %v5797
    %v9755 = vsel %vm9506, %v9498, %v5799
    %v9756 = vsel %vm9506, %v9499, %v5801
    %v9757 = vsel %vm9506, %v9500, %v5803
    %v9758 = vsel %vm9506, %v9501, %v5805
    %v9759 = vsel %vm9506, %v9502, %v5807
    %v9760 = vsel %vm9506, %v9503, %v5809
    %v9761 = vsel %vm9506, %v9504, %v5811
    %v9762 = vsel %vm9506, %v9505, %v5813
    %vm9763 = vcmask 392192
    %v9764 = vsel %vm9763, %v9507, %v6087
    %v9765 = vsel %vm9763, %v9508, %v6089
    %v9766 = vsel %vm9763, %v9509, %v6091
    %v9767 = vsel %vm9763, %v9510, %v6093
    %v9768 = vsel %vm9763, %v9511, %v6095
    %v9769 = vsel %vm9763, %v9512, %v6097
    %v9770 = vsel %vm9763, %v9513, %v6099
    %v9771 = vsel %vm9763, %v9514, %v6101
    %v9772 = vsel %vm9763, %v9515, %v6103
    %v9773 = vsel %vm9763, %v9516, %v6105
    %v9774 = vsel %vm9763, %v9517, %v6107
    %v9775 = vsel %vm9763, %v9518, %v6109
    %v9776 = vsel %vm9763, %v9519, %v6111
    %v9777 = vsel %vm9763, %v9520, %v6113
    %v9778 = vsel %vm9763, %v9521, %v6115
    %v9779 = vsel %vm9763, %v9522, %v6117
    %v9780 = vsel %vm9763, %v9523, %v6119
    %v9781 = vsel %vm9763, %v9524, %v6121
    %v9782 = vsel %vm9763, %v9525, %v6123
    %v9783 = vsel %vm9763, %v9526, %v6125
    %v9784 = vsel %vm9763, %v9527, %v6127
    %v9785 = vsel %vm9763, %v9528, %v6129
    %v9786 = vsel %vm9763, %v9529, %v6131
    %v9787 = vsel %vm9763, %v9530, %v6133
    %v9788 = vsel %vm9763, %v9531, %v6135
    %v9789 = vsel %vm9763, %v9532, %v6137
    %v9790 = vsel %vm9763, %v9533, %v6139
    %v9791 = vsel %vm9763, %v9534, %v6141
    %v9792 = vsel %vm9763, %v9535, %v6143
    %v9793 = vsel %vm9763, %v9536, %v6145
    %v9794 = vsel %vm9763, %v9537, %v6147
    %v9795 = vsel %vm9763, %v9538, %v6149
    %v9796 = vsel %vm9763, %v9539, %v6151
    %v9797 = vsel %vm9763, %v9540, %v6153
    %v9798 = vsel %vm9763, %v9541, %v6155
    %v9799 = vsel %vm9763, %v9542, %v6157
    %v9800 = vsel %vm9763, %v9543, %v6159
    %v9801 = vsel %vm9763, %v9544, %v6161
    %v9802 = vsel %vm9763, %v9545, %v6163
    %v9803 = vsel %vm9763, %v9546, %v6165
    %v9804 = vsel %vm9763, %v9547, %v6167
    %v9805 = vsel %vm9763, %v9548, %v6169
    %v9806 = vsel %vm9763, %v9549, %v6171
    %v9807 = vsel %vm9763, %v9550, %v6173
    %v9808 = vsel %vm9763, %v9551, %v6175
    %v9809 = vsel %vm9763, %v9552, %v6177
    %v9810 = vsel %vm9763, %v9553, %v6179
    %v9811 = vsel %vm9763, %v9554, %v6181
    %v9812 = vsel %vm9763, %v9555, %v6183
    %v9813 = vsel %vm9763, %v9556, %v6185
    %v9814 = vsel %vm9763, %v9557, %v6187
    %v9815 = vsel %vm9763, %v9558, %v6189
    %v9816 = vsel %vm9763, %v9559, %v6191
    %v9817 = vsel %vm9763, %v9560, %v6193
    %v9818 = vsel %vm9763, %v9561, %v6195
    %v9819 = vsel %vm9763, %v9562, %v6197
    %v9820 = vsel %vm9763, %v9563, %v6199
    %v9821 = vsel %vm9763, %v9564, %v6201
    %v9822 = vsel %vm9763, %v9565, %v6203
    %v9823 = vsel %vm9763, %v9566, %v6205
    %v9824 = vsel %vm9763, %v9567, %v6207
    %v9825 = vsel %vm9763, %v9568, %v6209
    %v9826 = vsel %vm9763, %v9569, %v6211
    %v9827 = vsel %vm9763, %v9570, %v6213
    %v9828 = vsel %vm9763, %v9571, %v6215
    %v9829 = vsel %vm9763, %v9572, %v6217
    %v9830 = vsel %vm9763, %v9573, %v6219
    %v9831 = vsel %vm9763, %v9574, %v6221
    %v9832 = vsel %vm9763, %v9575, %v6223
    %v9833 = vsel %vm9763, %v9576, %v6225
    %v9834 = vsel %vm9763, %v9577, %v6227
    %v9835 = vsel %vm9763, %v9578, %v6229
    %v9836 = vsel %vm9763, %v9579, %v6231
    %v9837 = vsel %vm9763, %v9580, %v6233
    %v9838 = vsel %vm9763, %v9581, %v6235
    %v9839 = vsel %vm9763, %v9582, %v6237
    %v9840 = vsel %vm9763, %v9583, %v6239
    %v9841 = vsel %vm9763, %v9584, %v6241
    %v9842 = vsel %vm9763, %v9585, %v6243
    %v9843 = vsel %vm9763, %v9586, %v6245
    %v9844 = vsel %vm9763, %v9587, %v6247
    %v9845 = vsel %vm9763, %v9588, %v6249
    %v9846 = vsel %vm9763, %v9589, %v6251
    %v9847 = vsel %vm9763, %v9590, %v6253
    %v9848 = vsel %vm9763, %v9591, %v6255
    %v9849 = vsel %vm9763, %v9592, %v6257
    %v9850 = vsel %vm9763, %v9593, %v6259
    %v9851 = vsel %vm9763, %v9594, %v6261
    %v9852 = vsel %vm9763, %v9595, %v6263
    %v9853 = vsel %vm9763, %v9596, %v6265
    %v9854 = vsel %vm9763, %v9597, %v6267
    %v9855 = vsel %vm9763, %v9598, %v6269
    %v9856 = vsel %vm9763, %v9599, %v6271
    %v9857 = vsel %vm9763, %v9600, %v6273
    %v9858 = vsel %vm9763, %v9601, %v6275
    %v9859 = vsel %vm9763, %v9602, %v6277
    %v9860 = vsel %vm9763, %v9603, %v6279
    %v9861 = vsel %vm9763, %v9604, %v6281
    %v9862 = vsel %vm9763, %v9605, %v6283
    %v9863 = vsel %vm9763, %v9606, %v6285
    %v9864 = vsel %vm9763, %v9607, %v6287
    %v9865 = vsel %vm9763, %v9608, %v6289
    %v9866 = vsel %vm9763, %v9609, %v6291
    %v9867 = vsel %vm9763, %v9610, %v6293
    %v9868 = vsel %vm9763, %v9611, %v6295
    %v9869 = vsel %vm9763, %v9612, %v6297
    %v9870 = vsel %vm9763, %v9613, %v6299
    %v9871 = vsel %vm9763, %v9614, %v6301
    %v9872 = vsel %vm9763, %v9615, %v6303
    %v9873 = vsel %vm9763, %v9616, %v6305
    %v9874 = vsel %vm9763, %v9617, %v6307
    %v9875 = vsel %vm9763, %v9618, %v6309
    %v9876 = vsel %vm9763, %v9619, %v6311
    %v9877 = vsel %vm9763, %v9620, %v6313
    %v9878 = vsel %vm9763, %v9621, %v6315
    %v9879 = vsel %vm9763, %v9622, %v6317
    %v9880 = vsel %vm9763, %v9623, %v6319
    %v9881 = vsel %vm9763, %v9624, %v6321
    %v9882 = vsel %vm9763, %v9625, %v6323
    %v9883 = vsel %vm9763, %v9626, %v6325
    %v9884 = vsel %vm9763, %v9627, %v6327
    %v9885 = vsel %vm9763, %v9628, %v6329
    %v9886 = vsel %vm9763, %v9629, %v6331
    %v9887 = vsel %vm9763, %v9630, %v6333
    %v9888 = vsel %vm9763, %v9631, %v6335
    %v9889 = vsel %vm9763, %v9632, %v6337
    %v9890 = vsel %vm9763, %v9633, %v6339
    %v9891 = vsel %vm9763, %v9634, %v6341
    %v9892 = vsel %vm9763, %v9635, %v6343
    %v9893 = vsel %vm9763, %v9636, %v6345
    %v9894 = vsel %vm9763, %v9637, %v6347
    %v9895 = vsel %vm9763, %v9638, %v6349
    %v9896 = vsel %vm9763, %v9639, %v6351
    %v9897 = vsel %vm9763, %v9640, %v6353
    %v9898 = vsel %vm9763, %v9641, %v6355
    %v9899 = vsel %vm9763, %v9642, %v6357
    %v9900 = vsel %vm9763, %v9643, %v6359
    %v9901 = vsel %vm9763, %v9644, %v6361
    %v9902 = vsel %vm9763, %v9645, %v6363
    %v9903 = vsel %vm9763, %v9646, %v6365
    %v9904 = vsel %vm9763, %v9647, %v6367
    %v9905 = vsel %vm9763, %v9648, %v6369
    %v9906 = vsel %vm9763, %v9649, %v6371
    %v9907 = vsel %vm9763, %v9650, %v6373
    %v9908 = vsel %vm9763, %v9651, %v6375
    %v9909 = vsel %vm9763, %v9652, %v6377
    %v9910 = vsel %vm9763, %v9653, %v6379
    %v9911 = vsel %vm9763, %v9654, %v6381
    %v9912 = vsel %vm9763, %v9655, %v6383
    %v9913 = vsel %vm9763, %v9656, %v6385
    %v9914 = vsel %vm9763, %v9657, %v6387
    %v9915 = vsel %vm9763, %v9658, %v6389
    %v9916 = vsel %vm9763, %v9659, %v6391
    %v9917 = vsel %vm9763, %v9660, %v6393
    %v9918 = vsel %vm9763, %v9661, %v6395
    %v9919 = vsel %vm9763, %v9662, %v6397
    %v9920 = vsel %vm9763, %v9663, %v6399
    %v9921 = vsel %vm9763, %v9664, %v6401
    %v9922 = vsel %vm9763, %v9665, %v6403
    %v9923 = vsel %vm9763, %v9666, %v6405
    %v9924 = vsel %vm9763, %v9667, %v6407
    %v9925 = vsel %vm9763, %v9668, %v6409
    %v9926 = vsel %vm9763, %v9669, %v6411
    %v9927 = vsel %vm9763, %v9670, %v6413
    %v9928 = vsel %vm9763, %v9671, %v6415
    %v9929 = vsel %vm9763, %v9672, %v6417
    %v9930 = vsel %vm9763, %v9673, %v6419
    %v9931 = vsel %vm9763, %v9674, %v6421
    %v9932 = vsel %vm9763, %v9675, %v6423
    %v9933 = vsel %vm9763, %v9676, %v6425
    %v9934 = vsel %vm9763, %v9677, %v6427
    %v9935 = vsel %vm9763, %v9678, %v6429
    %v9936 = vsel %vm9763, %v9679, %v6431
    %v9937 = vsel %vm9763, %v9680, %v6433
    %v9938 = vsel %vm9763, %v9681, %v6435
    %v9939 = vsel %vm9763, %v9682, %v6437
    %v9940 = vsel %vm9763, %v9683, %v6439
    %v9941 = vsel %vm9763, %v9684, %v6441
    %v9942 = vsel %vm9763, %v9685, %v6443
    %v9943 = vsel %vm9763, %v9686, %v6445
    %v9944 = vsel %vm9763, %v9687, %v6447
    %v9945 = vsel %vm9763, %v9688, %v6449
    %v9946 = vsel %vm9763, %v9689, %v6451
    %v9947 = vsel %vm9763, %v9690, %v6453
    %v9948 = vsel %vm9763, %v9691, %v6455
    %v9949 = vsel %vm9763, %v9692, %v6457
    %v9950 = vsel %vm9763, %v9693, %v6459
    %v9951 = vsel %vm9763, %v9694, %v6461
    %v9952 = vsel %vm9763, %v9695, %v6463
    %v9953 = vsel %vm9763, %v9696, %v6465
    %v9954 = vsel %vm9763, %v9697, %v6467
    %v9955 = vsel %vm9763, %v9698, %v6469
    %v9956 = vsel %vm9763, %v9699, %v6471
    %v9957 = vsel %vm9763, %v9700, %v6473
    %v9958 = vsel %vm9763, %v9701, %v6475
    %v9959 = vsel %vm9763, %v9702, %v6477
    %v9960 = vsel %vm9763, %v9703, %v6479
    %v9961 = vsel %vm9763, %v9704, %v6481
    %v9962 = vsel %vm9763, %v9705, %v6483
    %v9963 = vsel %vm9763, %v9706, %v6485
    %v9964 = vsel %vm9763, %v9707, %v6487
    %v9965 = vsel %vm9763, %v9708, %v6489
    %v9966 = vsel %vm9763, %v9709, %v6491
    %v9967 = vsel %vm9763, %v9710, %v6493
    %v9968 = vsel %vm9763, %v9711, %v6495
    %v9969 = vsel %vm9763, %v9712, %v6497
    %v9970 = vsel %vm9763, %v9713, %v6499
    %v9971 = vsel %vm9763, %v9714, %v6501
    %v9972 = vsel %vm9763, %v9715, %v6503
    %v9973 = vsel %vm9763, %v9716, %v6505
    %v9974 = vsel %vm9763, %v9717, %v6507
    %v9975 = vsel %vm9763, %v9718, %v6509
    %v9976 = vsel %vm9763, %v9719, %v6511
    %v9977 = vsel %vm9763, %v9720, %v6513
    %v9978 = vsel %vm9763, %v9721, %v6515
    %v9979 = vsel %vm9763, %v9722, %v6517
    %v9980 = vsel %vm9763, %v9723, %v6519
    %v9981 = vsel %vm9763, %v9724, %v6521
    %v9982 = vsel %vm9763, %v9725, %v6523
    %v9983 = vsel %vm9763, %v9726, %v6525
    %v9984 = vsel %vm9763, %v9727, %v6527
    %v9985 = vsel %vm9763, %v9728, %v6529
    %v9986 = vsel %vm9763, %v9729, %v6531
    %v9987 = vsel %vm9763, %v9730, %v6533
    %v9988 = vsel %vm9763, %v9731, %v6535
    %v9989 = vsel %vm9763, %v9732, %v6537
    %v9990 = vsel %vm9763, %v9733, %v6539
    %v9991 = vsel %vm9763, %v9734, %v6541
    %v9992 = vsel %vm9763, %v9735, %v6543
    %v9993 = vsel %vm9763, %v9736, %v6545
    %v9994 = vsel %vm9763, %v9737, %v6547
    %v9995 = vsel %vm9763, %v9738, %v6549
    %v9996 = vsel %vm9763, %v9739, %v6551
    %v9997 = vsel %vm9763, %v9740, %v6553
    %v9998 = vsel %vm9763, %v9741, %v6555
    %v9999 = vsel %vm9763, %v9742, %v6557
    %v10000 = vsel %vm9763, %v9743, %v6559
    %v10001 = vsel %vm9763, %v9744, %v6561
    %v10002 = vsel %vm9763, %v9745, %v6563
    %v10003 = vsel %vm9763, %v9746, %v6565
    %v10004 = vsel %vm9763, %v9747, %v6567
    %v10005 = vsel %vm9763, %v9748, %v6569
    %v10006 = vsel %vm9763, %v9749, %v6571
    %v10007 = vsel %vm9763, %v9750, %v6573
    %v10008 = vsel %vm9763, %v9751, %v6575
    %v10009 = vsel %vm9763, %v9752, %v6577
    %v10010 = vsel %vm9763, %v9753, %v6579
    %v10011 = vsel %vm9763, %v9754, %v6581
    %v10012 = vsel %vm9763, %v9755, %v6583
    %v10013 = vsel %vm9763, %v9756, %v6585
    %v10014 = vsel %vm9763, %v9757, %v6587
    %v10015 = vsel %vm9763, %v9758, %v6589
    %v10016 = vsel %vm9763, %v9759, %v6591
    %v10017 = vsel %vm9763, %v9760, %v6593
    %v10018 = vsel %vm9763, %v9761, %v6595
    %v10019 = vsel %vm9763, %v9762, %v6597
    %vm10020 = vcmask 457728
    %v10021 = vsel %vm10020, %v9764, %v6903
    %v10022 = vsel %vm10020, %v9765, %v6905
    %v10023 = vsel %vm10020, %v9766, %v6907
    %v10024 = vsel %vm10020, %v9767, %v6909
    %v10025 = vsel %vm10020, %v9768, %v6911
    %v10026 = vsel %vm10020, %v9769, %v6913
    %v10027 = vsel %vm10020, %v9770, %v6915
    %v10028 = vsel %vm10020, %v9771, %v6917
    %v10029 = vsel %vm10020, %v9772, %v6919
    %v10030 = vsel %vm10020, %v9773, %v6921
    %v10031 = vsel %vm10020, %v9774, %v6923
    %v10032 = vsel %vm10020, %v9775, %v6925
    %v10033 = vsel %vm10020, %v9776, %v6927
    %v10034 = vsel %vm10020, %v9777, %v6929
    %v10035 = vsel %vm10020, %v9778, %v6931
    %v10036 = vsel %vm10020, %v9779, %v6933
    %v10037 = vsel %vm10020, %v9780, %v6935
    %v10038 = vsel %vm10020, %v9781, %v6937
    %v10039 = vsel %vm10020, %v9782, %v6939
    %v10040 = vsel %vm10020, %v9783, %v6941
    %v10041 = vsel %vm10020, %v9784, %v6943
    %v10042 = vsel %vm10020, %v9785, %v6945
    %v10043 = vsel %vm10020, %v9786, %v6947
    %v10044 = vsel %vm10020, %v9787, %v6949
    %v10045 = vsel %vm10020, %v9788, %v6951
    %v10046 = vsel %vm10020, %v9789, %v6953
    %v10047 = vsel %vm10020, %v9790, %v6955
    %v10048 = vsel %vm10020, %v9791, %v6957
    %v10049 = vsel %vm10020, %v9792, %v6959
    %v10050 = vsel %vm10020, %v9793, %v6961
    %v10051 = vsel %vm10020, %v9794, %v6963
    %v10052 = vsel %vm10020, %v9795, %v6965
    %v10053 = vsel %vm10020, %v9796, %v6967
    %v10054 = vsel %vm10020, %v9797, %v6969
    %v10055 = vsel %vm10020, %v9798, %v6971
    %v10056 = vsel %vm10020, %v9799, %v6973
    %v10057 = vsel %vm10020, %v9800, %v6975
    %v10058 = vsel %vm10020, %v9801, %v6977
    %v10059 = vsel %vm10020, %v9802, %v6979
    %v10060 = vsel %vm10020, %v9803, %v6981
    %v10061 = vsel %vm10020, %v9804, %v6983
    %v10062 = vsel %vm10020, %v9805, %v6985
    %v10063 = vsel %vm10020, %v9806, %v6987
    %v10064 = vsel %vm10020, %v9807, %v6989
    %v10065 = vsel %vm10020, %v9808, %v6991
    %v10066 = vsel %vm10020, %v9809, %v6993
    %v10067 = vsel %vm10020, %v9810, %v6995
    %v10068 = vsel %vm10020, %v9811, %v6997
    %v10069 = vsel %vm10020, %v9812, %v6999
    %v10070 = vsel %vm10020, %v9813, %v7001
    %v10071 = vsel %vm10020, %v9814, %v7003
    %v10072 = vsel %vm10020, %v9815, %v7005
    %v10073 = vsel %vm10020, %v9816, %v7007
    %v10074 = vsel %vm10020, %v9817, %v7009
    %v10075 = vsel %vm10020, %v9818, %v7011
    %v10076 = vsel %vm10020, %v9819, %v7013
    %v10077 = vsel %vm10020, %v9820, %v7015
    %v10078 = vsel %vm10020, %v9821, %v7017
    %v10079 = vsel %vm10020, %v9822, %v7019
    %v10080 = vsel %vm10020, %v9823, %v7021
    %v10081 = vsel %vm10020, %v9824, %v7023
    %v10082 = vsel %vm10020, %v9825, %v7025
    %v10083 = vsel %vm10020, %v9826, %v7027
    %v10084 = vsel %vm10020, %v9827, %v7029
    %v10085 = vsel %vm10020, %v9828, %v7031
    %v10086 = vsel %vm10020, %v9829, %v7033
    %v10087 = vsel %vm10020, %v9830, %v7035
    %v10088 = vsel %vm10020, %v9831, %v7037
    %v10089 = vsel %vm10020, %v9832, %v7039
    %v10090 = vsel %vm10020, %v9833, %v7041
    %v10091 = vsel %vm10020, %v9834, %v7043
    %v10092 = vsel %vm10020, %v9835, %v7045
    %v10093 = vsel %vm10020, %v9836, %v7047
    %v10094 = vsel %vm10020, %v9837, %v7049
    %v10095 = vsel %vm10020, %v9838, %v7051
    %v10096 = vsel %vm10020, %v9839, %v7053
    %v10097 = vsel %vm10020, %v9840, %v7055
    %v10098 = vsel %vm10020, %v9841, %v7057
    %v10099 = vsel %vm10020, %v9842, %v7059
    %v10100 = vsel %vm10020, %v9843, %v7061
    %v10101 = vsel %vm10020, %v9844, %v7063
    %v10102 = vsel %vm10020, %v9845, %v7065
    %v10103 = vsel %vm10020, %v9846, %v7067
    %v10104 = vsel %vm10020, %v9847, %v7069
    %v10105 = vsel %vm10020, %v9848, %v7071
    %v10106 = vsel %vm10020, %v9849, %v7073
    %v10107 = vsel %vm10020, %v9850, %v7075
    %v10108 = vsel %vm10020, %v9851, %v7077
    %v10109 = vsel %vm10020, %v9852, %v7079
    %v10110 = vsel %vm10020, %v9853, %v7081
    %v10111 = vsel %vm10020, %v9854, %v7083
    %v10112 = vsel %vm10020, %v9855, %v7085
    %v10113 = vsel %vm10020, %v9856, %v7087
    %v10114 = vsel %vm10020, %v9857, %v7089
    %v10115 = vsel %vm10020, %v9858, %v7091
    %v10116 = vsel %vm10020, %v9859, %v7093
    %v10117 = vsel %vm10020, %v9860, %v7095
    %v10118 = vsel %vm10020, %v9861, %v7097
    %v10119 = vsel %vm10020, %v9862, %v7099
    %v10120 = vsel %vm10020, %v9863, %v7101
    %v10121 = vsel %vm10020, %v9864, %v7103
    %v10122 = vsel %vm10020, %v9865, %v7105
    %v10123 = vsel %vm10020, %v9866, %v7107
    %v10124 = vsel %vm10020, %v9867, %v7109
    %v10125 = vsel %vm10020, %v9868, %v7111
    %v10126 = vsel %vm10020, %v9869, %v7113
    %v10127 = vsel %vm10020, %v9870, %v7115
    %v10128 = vsel %vm10020, %v9871, %v7117
    %v10129 = vsel %vm10020, %v9872, %v7119
    %v10130 = vsel %vm10020, %v9873, %v7121
    %v10131 = vsel %vm10020, %v9874, %v7123
    %v10132 = vsel %vm10020, %v9875, %v7125
    %v10133 = vsel %vm10020, %v9876, %v7127
    %v10134 = vsel %vm10020, %v9877, %v7129
    %v10135 = vsel %vm10020, %v9878, %v7131
    %v10136 = vsel %vm10020, %v9879, %v7133
    %v10137 = vsel %vm10020, %v9880, %v7135
    %v10138 = vsel %vm10020, %v9881, %v7137
    %v10139 = vsel %vm10020, %v9882, %v7139
    %v10140 = vsel %vm10020, %v9883, %v7141
    %v10141 = vsel %vm10020, %v9884, %v7143
    %v10142 = vsel %vm10020, %v9885, %v7145
    %v10143 = vsel %vm10020, %v9886, %v7147
    %v10144 = vsel %vm10020, %v9887, %v7149
    %v10145 = vsel %vm10020, %v9888, %v7151
    %v10146 = vsel %vm10020, %v9889, %v7153
    %v10147 = vsel %vm10020, %v9890, %v7155
    %v10148 = vsel %vm10020, %v9891, %v7157
    %v10149 = vsel %vm10020, %v9892, %v7159
    %v10150 = vsel %vm10020, %v9893, %v7161
    %v10151 = vsel %vm10020, %v9894, %v7163
    %v10152 = vsel %vm10020, %v9895, %v7165
    %v10153 = vsel %vm10020, %v9896, %v7167
    %v10154 = vsel %vm10020, %v9897, %v7169
    %v10155 = vsel %vm10020, %v9898, %v7171
    %v10156 = vsel %vm10020, %v9899, %v7173
    %v10157 = vsel %vm10020, %v9900, %v7175
    %v10158 = vsel %vm10020, %v9901, %v7177
    %v10159 = vsel %vm10020, %v9902, %v7179
    %v10160 = vsel %vm10020, %v9903, %v7181
    %v10161 = vsel %vm10020, %v9904, %v7183
    %v10162 = vsel %vm10020, %v9905, %v7185
    %v10163 = vsel %vm10020, %v9906, %v7187
    %v10164 = vsel %vm10020, %v9907, %v7189
    %v10165 = vsel %vm10020, %v9908, %v7191
    %v10166 = vsel %vm10020, %v9909, %v7193
    %v10167 = vsel %vm10020, %v9910, %v7195
    %v10168 = vsel %vm10020, %v9911, %v7197
    %v10169 = vsel %vm10020, %v9912, %v7199
    %v10170 = vsel %vm10020, %v9913, %v7201
    %v10171 = vsel %vm10020, %v9914, %v7203
    %v10172 = vsel %vm10020, %v9915, %v7205
    %v10173 = vsel %vm10020, %v9916, %v7207
    %v10174 = vsel %vm10020, %v9917, %v7209
    %v10175 = vsel %vm10020, %v9918, %v7211
    %v10176 = vsel %vm10020, %v9919, %v7213
    %v10177 = vsel %vm10020, %v9920, %v7215
    %v10178 = vsel %vm10020, %v9921, %v7217
    %v10179 = vsel %vm10020, %v9922, %v7219
    %v10180 = vsel %vm10020, %v9923, %v7221
    %v10181 = vsel %vm10020, %v9924, %v7223
    %v10182 = vsel %vm10020, %v9925, %v7225
    %v10183 = vsel %vm10020, %v9926, %v7227
    %v10184 = vsel %vm10020, %v9927, %v7229
    %v10185 = vsel %vm10020, %v9928, %v7231
    %v10186 = vsel %vm10020, %v9929, %v7233
    %v10187 = vsel %vm10020, %v9930, %v7235
    %v10188 = vsel %vm10020, %v9931, %v7237
    %v10189 = vsel %vm10020, %v9932, %v7239
    %v10190 = vsel %vm10020, %v9933, %v7241
    %v10191 = vsel %vm10020, %v9934, %v7243
    %v10192 = vsel %vm10020, %v9935, %v7245
    %v10193 = vsel %vm10020, %v9936, %v7247
    %v10194 = vsel %vm10020, %v9937, %v7249
    %v10195 = vsel %vm10020, %v9938, %v7251
    %v10196 = vsel %vm10020, %v9939, %v7253
    %v10197 = vsel %vm10020, %v9940, %v7255
    %v10198 = vsel %vm10020, %v9941, %v7257
    %v10199 = vsel %vm10020, %v9942, %v7259
    %v10200 = vsel %vm10020, %v9943, %v7261
    %v10201 = vsel %vm10020, %v9944, %v7263
    %v10202 = vsel %vm10020, %v9945, %v7265
    %v10203 = vsel %vm10020, %v9946, %v7267
    %v10204 = vsel %vm10020, %v9947, %v7269
    %v10205 = vsel %vm10020, %v9948, %v7271
    %v10206 = vsel %vm10020, %v9949, %v7273
    %v10207 = vsel %vm10020, %v9950, %v7275
    %v10208 = vsel %vm10020, %v9951, %v7277
    %v10209 = vsel %vm10020, %v9952, %v7279
    %v10210 = vsel %vm10020, %v9953, %v7281
    %v10211 = vsel %vm10020, %v9954, %v7283
    %v10212 = vsel %vm10020, %v9955, %v7285
    %v10213 = vsel %vm10020, %v9956, %v7287
    %v10214 = vsel %vm10020, %v9957, %v7289
    %v10215 = vsel %vm10020, %v9958, %v7291
    %v10216 = vsel %vm10020, %v9959, %v7293
    %v10217 = vsel %vm10020, %v9960, %v7295
    %v10218 = vsel %vm10020, %v9961, %v7297
    %v10219 = vsel %vm10020, %v9962, %v7299
    %v10220 = vsel %vm10020, %v9963, %v7301
    %v10221 = vsel %vm10020, %v9964, %v7303
    %v10222 = vsel %vm10020, %v9965, %v7305
    %v10223 = vsel %vm10020, %v9966, %v7307
    %v10224 = vsel %vm10020, %v9967, %v7309
    %v10225 = vsel %vm10020, %v9968, %v7311
    %v10226 = vsel %vm10020, %v9969, %v7313
    %v10227 = vsel %vm10020, %v9970, %v7315
    %v10228 = vsel %vm10020, %v9971, %v7317
    %v10229 = vsel %vm10020, %v9972, %v7319
    %v10230 = vsel %vm10020, %v9973, %v7321
    %v10231 = vsel %vm10020, %v9974, %v7323
    %v10232 = vsel %vm10020, %v9975, %v7325
    %v10233 = vsel %vm10020, %v9976, %v7327
    %v10234 = vsel %vm10020, %v9977, %v7329
    %v10235 = vsel %vm10020, %v9978, %v7331
    %v10236 = vsel %vm10020, %v9979, %v7333
    %v10237 = vsel %vm10020, %v9980, %v7335
    %v10238 = vsel %vm10020, %v9981, %v7337
    %v10239 = vsel %vm10020, %v9982, %v7339
    %v10240 = vsel %vm10020, %v9983, %v7341
    %v10241 = vsel %vm10020, %v9984, %v7343
    %v10242 = vsel %vm10020, %v9985, %v7345
    %v10243 = vsel %vm10020, %v9986, %v7347
    %v10244 = vsel %vm10020, %v9987, %v7349
    %v10245 = vsel %vm10020, %v9988, %v7351
    %v10246 = vsel %vm10020, %v9989, %v7353
    %v10247 = vsel %vm10020, %v9990, %v7355
    %v10248 = vsel %vm10020, %v9991, %v7357
    %v10249 = vsel %vm10020, %v9992, %v7359
    %v10250 = vsel %vm10020, %v9993, %v7361
    %v10251 = vsel %vm10020, %v9994, %v7363
    %v10252 = vsel %vm10020, %v9995, %v7365
    %v10253 = vsel %vm10020, %v9996, %v7367
    %v10254 = vsel %vm10020, %v9997, %v7369
    %v10255 = vsel %vm10020, %v9998, %v7371
    %v10256 = vsel %vm10020, %v9999, %v7373
    %v10257 = vsel %vm10020, %v10000, %v7375
    %v10258 = vsel %vm10020, %v10001, %v7377
    %v10259 = vsel %vm10020, %v10002, %v7379
    %v10260 = vsel %vm10020, %v10003, %v7381
    %v10261 = vsel %vm10020, %v10004, %v7383
    %v10262 = vsel %vm10020, %v10005, %v7385
    %v10263 = vsel %vm10020, %v10006, %v7387
    %v10264 = vsel %vm10020, %v10007, %v7389
    %v10265 = vsel %vm10020, %v10008, %v7391
    %v10266 = vsel %vm10020, %v10009, %v7393
    %v10267 = vsel %vm10020, %v10010, %v7395
    %v10268 = vsel %vm10020, %v10011, %v7397
    %v10269 = vsel %vm10020, %v10012, %v7399
    %v10270 = vsel %vm10020, %v10013, %v7401
    %v10271 = vsel %vm10020, %v10014, %v7403
    %v10272 = vsel %vm10020, %v10015, %v7405
    %v10273 = vsel %vm10020, %v10016, %v7407
    %v10274 = vsel %vm10020, %v10017, %v7409
    %v10275 = vsel %vm10020, %v10018, %v7411
    %v10276 = vsel %vm10020, %v10019, %v7413
    %vm10277 = vcmask 523264
    %v10278 = vsel %vm10277, %v10021, %v7711
    %v10279 = vsel %vm10277, %v10022, %v7713
    %v10280 = vsel %vm10277, %v10023, %v7715
    %v10281 = vsel %vm10277, %v10024, %v7717
    %v10282 = vsel %vm10277, %v10025, %v7719
    %v10283 = vsel %vm10277, %v10026, %v7721
    %v10284 = vsel %vm10277, %v10027, %v7723
    %v10285 = vsel %vm10277, %v10028, %v7725
    %v10286 = vsel %vm10277, %v10029, %v7727
    %v10287 = vsel %vm10277, %v10030, %v7729
    %v10288 = vsel %vm10277, %v10031, %v7731
    %v10289 = vsel %vm10277, %v10032, %v7733
    %v10290 = vsel %vm10277, %v10033, %v7735
    %v10291 = vsel %vm10277, %v10034, %v7737
    %v10292 = vsel %vm10277, %v10035, %v7739
    %v10293 = vsel %vm10277, %v10036, %v7741
    %v10294 = vsel %vm10277, %v10037, %v7743
    %v10295 = vsel %vm10277, %v10038, %v7745
    %v10296 = vsel %vm10277, %v10039, %v7747
    %v10297 = vsel %vm10277, %v10040, %v7749
    %v10298 = vsel %vm10277, %v10041, %v7751
    %v10299 = vsel %vm10277, %v10042, %v7753
    %v10300 = vsel %vm10277, %v10043, %v7755
    %v10301 = vsel %vm10277, %v10044, %v7757
    %v10302 = vsel %vm10277, %v10045, %v7759
    %v10303 = vsel %vm10277, %v10046, %v7761
    %v10304 = vsel %vm10277, %v10047, %v7763
    %v10305 = vsel %vm10277, %v10048, %v7765
    %v10306 = vsel %vm10277, %v10049, %v7767
    %v10307 = vsel %vm10277, %v10050, %v7769
    %v10308 = vsel %vm10277, %v10051, %v7771
    %v10309 = vsel %vm10277, %v10052, %v7773
    %v10310 = vsel %vm10277, %v10053, %v7775
    %v10311 = vsel %vm10277, %v10054, %v7777
    %v10312 = vsel %vm10277, %v10055, %v7779
    %v10313 = vsel %vm10277, %v10056, %v7781
    %v10314 = vsel %vm10277, %v10057, %v7783
    %v10315 = vsel %vm10277, %v10058, %v7785
    %v10316 = vsel %vm10277, %v10059, %v7787
    %v10317 = vsel %vm10277, %v10060, %v7789
    %v10318 = vsel %vm10277, %v10061, %v7791
    %v10319 = vsel %vm10277, %v10062, %v7793
    %v10320 = vsel %vm10277, %v10063, %v7795
    %v10321 = vsel %vm10277, %v10064, %v7797
    %v10322 = vsel %vm10277, %v10065, %v7799
    %v10323 = vsel %vm10277, %v10066, %v7801
    %v10324 = vsel %vm10277, %v10067, %v7803
    %v10325 = vsel %vm10277, %v10068, %v7805
    %v10326 = vsel %vm10277, %v10069, %v7807
    %v10327 = vsel %vm10277, %v10070, %v7809
    %v10328 = vsel %vm10277, %v10071, %v7811
    %v10329 = vsel %vm10277, %v10072, %v7813
    %v10330 = vsel %vm10277, %v10073, %v7815
    %v10331 = vsel %vm10277, %v10074, %v7817
    %v10332 = vsel %vm10277, %v10075, %v7819
    %v10333 = vsel %vm10277, %v10076, %v7821
    %v10334 = vsel %vm10277, %v10077, %v7823
    %v10335 = vsel %vm10277, %v10078, %v7825
    %v10336 = vsel %vm10277, %v10079, %v7827
    %v10337 = vsel %vm10277, %v10080, %v7829
    %v10338 = vsel %vm10277, %v10081, %v7831
    %v10339 = vsel %vm10277, %v10082, %v7833
    %v10340 = vsel %vm10277, %v10083, %v7835
    %v10341 = vsel %vm10277, %v10084, %v7837
    %v10342 = vsel %vm10277, %v10085, %v7839
    %v10343 = vsel %vm10277, %v10086, %v7841
    %v10344 = vsel %vm10277, %v10087, %v7843
    %v10345 = vsel %vm10277, %v10088, %v7845
    %v10346 = vsel %vm10277, %v10089, %v7847
    %v10347 = vsel %vm10277, %v10090, %v7849
    %v10348 = vsel %vm10277, %v10091, %v7851
    %v10349 = vsel %vm10277, %v10092, %v7853
    %v10350 = vsel %vm10277, %v10093, %v7855
    %v10351 = vsel %vm10277, %v10094, %v7857
    %v10352 = vsel %vm10277, %v10095, %v7859
    %v10353 = vsel %vm10277, %v10096, %v7861
    %v10354 = vsel %vm10277, %v10097, %v7863
    %v10355 = vsel %vm10277, %v10098, %v7865
    %v10356 = vsel %vm10277, %v10099, %v7867
    %v10357 = vsel %vm10277, %v10100, %v7869
    %v10358 = vsel %vm10277, %v10101, %v7871
    %v10359 = vsel %vm10277, %v10102, %v7873
    %v10360 = vsel %vm10277, %v10103, %v7875
    %v10361 = vsel %vm10277, %v10104, %v7877
    %v10362 = vsel %vm10277, %v10105, %v7879
    %v10363 = vsel %vm10277, %v10106, %v7881
    %v10364 = vsel %vm10277, %v10107, %v7883
    %v10365 = vsel %vm10277, %v10108, %v7885
    %v10366 = vsel %vm10277, %v10109, %v7887
    %v10367 = vsel %vm10277, %v10110, %v7889
    %v10368 = vsel %vm10277, %v10111, %v7891
    %v10369 = vsel %vm10277, %v10112, %v7893
    %v10370 = vsel %vm10277, %v10113, %v7895
    %v10371 = vsel %vm10277, %v10114, %v7897
    %v10372 = vsel %vm10277, %v10115, %v7899
    %v10373 = vsel %vm10277, %v10116, %v7901
    %v10374 = vsel %vm10277, %v10117, %v7903
    %v10375 = vsel %vm10277, %v10118, %v7905
    %v10376 = vsel %vm10277, %v10119, %v7907
    %v10377 = vsel %vm10277, %v10120, %v7909
    %v10378 = vsel %vm10277, %v10121, %v7911
    %v10379 = vsel %vm10277, %v10122, %v7913
    %v10380 = vsel %vm10277, %v10123, %v7915
    %v10381 = vsel %vm10277, %v10124, %v7917
    %v10382 = vsel %vm10277, %v10125, %v7919
    %v10383 = vsel %vm10277, %v10126, %v7921
    %v10384 = vsel %vm10277, %v10127, %v7923
    %v10385 = vsel %vm10277, %v10128, %v7925
    %v10386 = vsel %vm10277, %v10129, %v7927
    %v10387 = vsel %vm10277, %v10130, %v7929
    %v10388 = vsel %vm10277, %v10131, %v7931
    %v10389 = vsel %vm10277, %v10132, %v7933
    %v10390 = vsel %vm10277, %v10133, %v7935
    %v10391 = vsel %vm10277, %v10134, %v7937
    %v10392 = vsel %vm10277, %v10135, %v7939
    %v10393 = vsel %vm10277, %v10136, %v7941
    %v10394 = vsel %vm10277, %v10137, %v7943
    %v10395 = vsel %vm10277, %v10138, %v7945
    %v10396 = vsel %vm10277, %v10139, %v7947
    %v10397 = vsel %vm10277, %v10140, %v7949
    %v10398 = vsel %vm10277, %v10141, %v7951
    %v10399 = vsel %vm10277, %v10142, %v7953
    %v10400 = vsel %vm10277, %v10143, %v7955
    %v10401 = vsel %vm10277, %v10144, %v7957
    %v10402 = vsel %vm10277, %v10145, %v7959
    %v10403 = vsel %vm10277, %v10146, %v7961
    %v10404 = vsel %vm10277, %v10147, %v7963
    %v10405 = vsel %vm10277, %v10148, %v7965
    %v10406 = vsel %vm10277, %v10149, %v7967
    %v10407 = vsel %vm10277, %v10150, %v7969
    %v10408 = vsel %vm10277, %v10151, %v7971
    %v10409 = vsel %vm10277, %v10152, %v7973
    %v10410 = vsel %vm10277, %v10153, %v7975
    %v10411 = vsel %vm10277, %v10154, %v7977
    %v10412 = vsel %vm10277, %v10155, %v7979
    %v10413 = vsel %vm10277, %v10156, %v7981
    %v10414 = vsel %vm10277, %v10157, %v7983
    %v10415 = vsel %vm10277, %v10158, %v7985
    %v10416 = vsel %vm10277, %v10159, %v7987
    %v10417 = vsel %vm10277, %v10160, %v7989
    %v10418 = vsel %vm10277, %v10161, %v7991
    %v10419 = vsel %vm10277, %v10162, %v7993
    %v10420 = vsel %vm10277, %v10163, %v7995
    %v10421 = vsel %vm10277, %v10164, %v7997
    %v10422 = vsel %vm10277, %v10165, %v7999
    %v10423 = vsel %vm10277, %v10166, %v8001
    %v10424 = vsel %vm10277, %v10167, %v8003
    %v10425 = vsel %vm10277, %v10168, %v8005
    %v10426 = vsel %vm10277, %v10169, %v8007
    %v10427 = vsel %vm10277, %v10170, %v8009
    %v10428 = vsel %vm10277, %v10171, %v8011
    %v10429 = vsel %vm10277, %v10172, %v8013
    %v10430 = vsel %vm10277, %v10173, %v8015
    %v10431 = vsel %vm10277, %v10174, %v8017
    %v10432 = vsel %vm10277, %v10175, %v8019
    %v10433 = vsel %vm10277, %v10176, %v8021
    %v10434 = vsel %vm10277, %v10177, %v8023
    %v10435 = vsel %vm10277, %v10178, %v8025
    %v10436 = vsel %vm10277, %v10179, %v8027
    %v10437 = vsel %vm10277, %v10180, %v8029
    %v10438 = vsel %vm10277, %v10181, %v8031
    %v10439 = vsel %vm10277, %v10182, %v8033
    %v10440 = vsel %vm10277, %v10183, %v8035
    %v10441 = vsel %vm10277, %v10184, %v8037
    %v10442 = vsel %vm10277, %v10185, %v8039
    %v10443 = vsel %vm10277, %v10186, %v8041
    %v10444 = vsel %vm10277, %v10187, %v8043
    %v10445 = vsel %vm10277, %v10188, %v8045
    %v10446 = vsel %vm10277, %v10189, %v8047
    %v10447 = vsel %vm10277, %v10190, %v8049
    %v10448 = vsel %vm10277, %v10191, %v8051
    %v10449 = vsel %vm10277, %v10192, %v8053
    %v10450 = vsel %vm10277, %v10193, %v8055
    %v10451 = vsel %vm10277, %v10194, %v8057
    %v10452 = vsel %vm10277, %v10195, %v8059
    %v10453 = vsel %vm10277, %v10196, %v8061
    %v10454 = vsel %vm10277, %v10197, %v8063
    %v10455 = vsel %vm10277, %v10198, %v8065
    %v10456 = vsel %vm10277, %v10199, %v8067
    %v10457 = vsel %vm10277, %v10200, %v8069
    %v10458 = vsel %vm10277, %v10201, %v8071
    %v10459 = vsel %vm10277, %v10202, %v8073
    %v10460 = vsel %vm10277, %v10203, %v8075
    %v10461 = vsel %vm10277, %v10204, %v8077
    %v10462 = vsel %vm10277, %v10205, %v8079
    %v10463 = vsel %vm10277, %v10206, %v8081
    %v10464 = vsel %vm10277, %v10207, %v8083
    %v10465 = vsel %vm10277, %v10208, %v8085
    %v10466 = vsel %vm10277, %v10209, %v8087
    %v10467 = vsel %vm10277, %v10210, %v8089
    %v10468 = vsel %vm10277, %v10211, %v8091
    %v10469 = vsel %vm10277, %v10212, %v8093
    %v10470 = vsel %vm10277, %v10213, %v8095
    %v10471 = vsel %vm10277, %v10214, %v8097
    %v10472 = vsel %vm10277, %v10215, %v8099
    %v10473 = vsel %vm10277, %v10216, %v8101
    %v10474 = vsel %vm10277, %v10217, %v8103
    %v10475 = vsel %vm10277, %v10218, %v8105
    %v10476 = vsel %vm10277, %v10219, %v8107
    %v10477 = vsel %vm10277, %v10220, %v8109
    %v10478 = vsel %vm10277, %v10221, %v8111
    %v10479 = vsel %vm10277, %v10222, %v8113
    %v10480 = vsel %vm10277, %v10223, %v8115
    %v10481 = vsel %vm10277, %v10224, %v8117
    %v10482 = vsel %vm10277, %v10225, %v8119
    %v10483 = vsel %vm10277, %v10226, %v8121
    %v10484 = vsel %vm10277, %v10227, %v8123
    %v10485 = vsel %vm10277, %v10228, %v8125
    %v10486 = vsel %vm10277, %v10229, %v8127
    %v10487 = vsel %vm10277, %v10230, %v8129
    %v10488 = vsel %vm10277, %v10231, %v8131
    %v10489 = vsel %vm10277, %v10232, %v8133
    %v10490 = vsel %vm10277, %v10233, %v8135
    %v10491 = vsel %vm10277, %v10234, %v8137
    %v10492 = vsel %vm10277, %v10235, %v8139
    %v10493 = vsel %vm10277, %v10236, %v8141
    %v10494 = vsel %vm10277, %v10237, %v8143
    %v10495 = vsel %vm10277, %v10238, %v8145
    %v10496 = vsel %vm10277, %v10239, %v8147
    %v10497 = vsel %vm10277, %v10240, %v8149
    %v10498 = vsel %vm10277, %v10241, %v8151
    %v10499 = vsel %vm10277, %v10242, %v8153
    %v10500 = vsel %vm10277, %v10243, %v8155
    %v10501 = vsel %vm10277, %v10244, %v8157
    %v10502 = vsel %vm10277, %v10245, %v8159
    %v10503 = vsel %vm10277, %v10246, %v8161
    %v10504 = vsel %vm10277, %v10247, %v8163
    %v10505 = vsel %vm10277, %v10248, %v8165
    %v10506 = vsel %vm10277, %v10249, %v8167
    %v10507 = vsel %vm10277, %v10250, %v8169
    %v10508 = vsel %vm10277, %v10251, %v8171
    %v10509 = vsel %vm10277, %v10252, %v8173
    %v10510 = vsel %vm10277, %v10253, %v8175
    %v10511 = vsel %vm10277, %v10254, %v8177
    %v10512 = vsel %vm10277, %v10255, %v8179
    %v10513 = vsel %vm10277, %v10256, %v8181
    %v10514 = vsel %vm10277, %v10257, %v8183
    %v10515 = vsel %vm10277, %v10258, %v8185
    %v10516 = vsel %vm10277, %v10259, %v8187
    %v10517 = vsel %vm10277, %v10260, %v8189
    %v10518 = vsel %vm10277, %v10261, %v8191
    %v10519 = vsel %vm10277, %v10262, %v8193
    %v10520 = vsel %vm10277, %v10263, %v8195
    %v10521 = vsel %vm10277, %v10264, %v8197
    %v10522 = vsel %vm10277, %v10265, %v8199
    %v10523 = vsel %vm10277, %v10266, %v8201
    %v10524 = vsel %vm10277, %v10267, %v8203
    %v10525 = vsel %vm10277, %v10268, %v8205
    %v10526 = vsel %vm10277, %v10269, %v8207
    %v10527 = vsel %vm10277, %v10270, %v8209
    %v10528 = vsel %vm10277, %v10271, %v8211
    %v10529 = vsel %vm10277, %v10272, %v8213
    %v10530 = vsel %vm10277, %v10273, %v8215
    %v10531 = vsel %vm10277, %v10274, %v8217
    %v10532 = vsel %vm10277, %v10275, %v8219
    %v10533 = vsel %vm10277, %v10276, %v8221
    %v10534 = vpack.c.bf16 %v10279, %v10278
    %v10535 = vpack.c.bf16 %v10281, %v10280
    %v10536 = vpack.c.bf16 %v10283, %v10282
    %v10537 = vpack.c.bf16 %v10285, %v10284
    %v10538 = vpack.c.bf16 %v10287, %v10286
    %v10539 = vpack.c.bf16 %v10289, %v10288
    %v10540 = vpack.c.bf16 %v10291, %v10290
    %v10541 = vpack.c.bf16 %v10293, %v10292
    %v10542 = vpack.c.bf16 %v10295, %v10294
    %v10543 = vpack.c.bf16 %v10297, %v10296
    %v10544 = vpack.c.bf16 %v10299, %v10298
    %v10545 = vpack.c.bf16 %v10301, %v10300
    %v10546 = vpack.c.bf16 %v10303, %v10302
    %v10547 = vpack.c.bf16 %v10305, %v10304
    %v10548 = vpack.c.bf16 %v10307, %v10306
    %v10549 = vpack.c.bf16 %v10309, %v10308
    %v10550 = vpack.c.bf16 %v10311, %v10310
    %v10551 = vpack.c.bf16 %v10313, %v10312
    %v10552 = vpack.c.bf16 %v10315, %v10314
    %v10553 = vpack.c.bf16 %v10317, %v10316
    %v10554 = vpack.c.bf16 %v10319, %v10318
    %v10555 = vpack.c.bf16 %v10321, %v10320
    %v10556 = vpack.c.bf16 %v10323, %v10322
    %v10557 = vpack.c.bf16 %v10325, %v10324
    %v10558 = vpack.c.bf16 %v10327, %v10326
    %v10559 = vpack.c.bf16 %v10329, %v10328
    %v10560 = vpack.c.bf16 %v10331, %v10330
    %v10561 = vpack.c.bf16 %v10333, %v10332
    %v10562 = vpack.c.bf16 %v10335, %v10334
    %v10563 = vpack.c.bf16 %v10337, %v10336
    %v10564 = vpack.c.bf16 %v10339, %v10338
    %v10565 = vpack.c.bf16 %v10341, %v10340
    %v10566 = vpack.c.bf16 %v10343, %v10342
    %v10567 = vpack.c.bf16 %v10345, %v10344
    %v10568 = vpack.c.bf16 %v10347, %v10346
    %v10569 = vpack.c.bf16 %v10349, %v10348
    %v10570 = vpack.c.bf16 %v10351, %v10350
    %v10571 = vpack.c.bf16 %v10353, %v10352
    %v10572 = vpack.c.bf16 %v10355, %v10354
    %v10573 = vpack.c.bf16 %v10357, %v10356
    %v10574 = vpack.c.bf16 %v10359, %v10358
    %v10575 = vpack.c.bf16 %v10361, %v10360
    %v10576 = vpack.c.bf16 %v10363, %v10362
    %v10577 = vpack.c.bf16 %v10365, %v10364
    %v10578 = vpack.c.bf16 %v10367, %v10366
    %v10579 = vpack.c.bf16 %v10369, %v10368
    %v10580 = vpack.c.bf16 %v10371, %v10370
    %v10581 = vpack.c.bf16 %v10373, %v10372
    %v10582 = vpack.c.bf16 %v10375, %v10374
    %v10583 = vpack.c.bf16 %v10377, %v10376
    %v10584 = vpack.c.bf16 %v10379, %v10378
    %v10585 = vpack.c.bf16 %v10381, %v10380
    %v10586 = vpack.c.bf16 %v10383, %v10382
    %v10587 = vpack.c.bf16 %v10385, %v10384
    %v10588 = vpack.c.bf16 %v10387, %v10386
    %v10589 = vpack.c.bf16 %v10389, %v10388
    %v10590 = vpack.c.bf16 %v10391, %v10390
    %v10591 = vpack.c.bf16 %v10393, %v10392
    %v10592 = vpack.c.bf16 %v10395, %v10394
    %v10593 = vpack.c.bf16 %v10397, %v10396
    %v10594 = vpack.c.bf16 %v10399, %v10398
    %v10595 = vpack.c.bf16 %v10401, %v10400
    %v10596 = vpack.c.bf16 %v10403, %v10402
    %v10597 = vpack.c.bf16 %v10405, %v10404
    %v10598 = vpack.c.bf16 %v10407, %v10406
    %v10599 = vpack.c.bf16 %v10409, %v10408
    %v10600 = vpack.c.bf16 %v10411, %v10410
    %v10601 = vpack.c.bf16 %v10413, %v10412
    %v10602 = vpack.c.bf16 %v10415, %v10414
    %v10603 = vpack.c.bf16 %v10417, %v10416
    %v10604 = vpack.c.bf16 %v10419, %v10418
    %v10605 = vpack.c.bf16 %v10421, %v10420
    %v10606 = vpack.c.bf16 %v10423, %v10422
    %v10607 = vpack.c.bf16 %v10425, %v10424
    %v10608 = vpack.c.bf16 %v10427, %v10426
    %v10609 = vpack.c.bf16 %v10429, %v10428
    %v10610 = vpack.c.bf16 %v10431, %v10430
    %v10611 = vpack.c.bf16 %v10433, %v10432
    %v10612 = vpack.c.bf16 %v10435, %v10434
    %v10613 = vpack.c.bf16 %v10437, %v10436
    %v10614 = vpack.c.bf16 %v10439, %v10438
    %v10615 = vpack.c.bf16 %v10441, %v10440
    %v10616 = vpack.c.bf16 %v10443, %v10442
    %v10617 = vpack.c.bf16 %v10445, %v10444
    %v10618 = vpack.c.bf16 %v10447, %v10446
    %v10619 = vpack.c.bf16 %v10449, %v10448
    %v10620 = vpack.c.bf16 %v10451, %v10450
    %v10621 = vpack.c.bf16 %v10453, %v10452
    %v10622 = vpack.c.bf16 %v10455, %v10454
    %v10623 = vpack.c.bf16 %v10457, %v10456
    %v10624 = vpack.c.bf16 %v10459, %v10458
    %v10625 = vpack.c.bf16 %v10461, %v10460
    %v10626 = vpack.c.bf16 %v10463, %v10462
    %v10627 = vpack.c.bf16 %v10465, %v10464
    %v10628 = vpack.c.bf16 %v10467, %v10466
    %v10629 = vpack.c.bf16 %v10469, %v10468
    %v10630 = vpack.c.bf16 %v10471, %v10470
    %v10631 = vpack.c.bf16 %v10473, %v10472
    %v10632 = vpack.c.bf16 %v10475, %v10474
    %v10633 = vpack.c.bf16 %v10477, %v10476
    %v10634 = vpack.c.bf16 %v10479, %v10478
    %v10635 = vpack.c.bf16 %v10481, %v10480
    %v10636 = vpack.c.bf16 %v10483, %v10482
    %v10637 = vpack.c.bf16 %v10485, %v10484
    %v10638 = vpack.c.bf16 %v10487, %v10486
    %v10639 = vpack.c.bf16 %v10489, %v10488
    %v10640 = vpack.c.bf16 %v10491, %v10490
    %v10641 = vpack.c.bf16 %v10493, %v10492
    %v10642 = vpack.c.bf16 %v10495, %v10494
    %v10643 = vpack.c.bf16 %v10497, %v10496
    %v10644 = vpack.c.bf16 %v10499, %v10498
    %v10645 = vpack.c.bf16 %v10501, %v10500
    %v10646 = vpack.c.bf16 %v10503, %v10502
    %v10647 = vpack.c.bf16 %v10505, %v10504
    %v10648 = vpack.c.bf16 %v10507, %v10506
    %v10649 = vpack.c.bf16 %v10509, %v10508
    %v10650 = vpack.c.bf16 %v10511, %v10510
    %v10651 = vpack.c.bf16 %v10513, %v10512
    %v10652 = vpack.c.bf16 %v10515, %v10514
    %v10653 = vpack.c.bf16 %v10517, %v10516
    %v10654 = vpack.c.bf16 %v10519, %v10518
    %v10655 = vpack.c.bf16 %v10521, %v10520
    %v10656 = vpack.c.bf16 %v10523, %v10522
    %v10657 = vpack.c.bf16 %v10525, %v10524
    %v10658 = vpack.c.bf16 %v10527, %v10526
    %v10659 = vpack.c.bf16 %v10529, %v10528
    %v10660 = vpack.c.bf16 %v10531, %v10530
    %v10661 = vpack.c.bf16 %v10533, %v10532
    %v10662 = vld [vmem:[%s1] sm:$0xf]
    %v10663 = vld [vmem:[%s1 + $0x4] sm:$0xf]
    %v10664 = vld [vmem:[%s1 + $0x8] sm:$0xf]
    %v10665 = vld [vmem:[%s1 + $0xc] sm:$0xf]
    %v10666 = vld [vmem:[%s1 + $0x10] sm:$0xf]
    %v10667 = vld [vmem:[%s1 + $0x14] sm:$0xf]
    %v10668 = vld [vmem:[%s1 + $0x18] sm:$0xf]
    %v10669 = vld [vmem:[%s1 + $0x1c] sm:$0xf]
    %v10670 = vld [vmem:[%s1 + $0x20] sm:$0xf]
    %v10671 = vld [vmem:[%s2] sm:$0x1]
    %v10673 = vlaneseq
    %v10674 = vshrl.u32 %v10673, 7
    %v10675 = vsub.s32 0, %v10674
    %v10676 = vrot.slane %v10671, %v10675
    %v10687 = vunpack.c.l.b16 %v10662
    %v10688 = vunpack.c.l.b16 %v10663
    %v10689 = vunpack.c.l.b16 %v10664
    %v10690 = vunpack.c.l.b16 %v10665
    %v10691 = vunpack.c.l.b16 %v10666
    %v10692 = vunpack.c.l.b16 %v10667
    %v10693 = vunpack.c.l.b16 %v10668
    %v10694 = vunpack.c.l.b16 %v10669
    %v10695 = vunpack.c.l.b16 %v10670
    %v10696 = vpack.c.b16 %v10688, %v10687
    %v10697 = vpack.c.b16 %v10690, %v10689
    %v10698 = vpack.c.b16 %v10692, %v10691
    %v10699 = vpack.c.b16 %v10694, %v10693
    %v10700 = vpack.c.b16 %v10695, %v10695
    %vm10705 = vcmask 588800
    %v10707 = vsel %vm10705, %v10534, 0
    %v10710 = vsel %vm10705, %v10535, 0
    %v10713 = vsel %vm10705, %v10536, 0
    %v10716 = vsel %vm10705, %v10537, 0
    %v10719 = vsel %vm10705, %v10538, 0
    %v10722 = vsel %vm10705, %v10539, 0
    %v10725 = vsel %vm10705, %v10540, 0
    %v10728 = vsel %vm10705, %v10541, 0
    %v10731 = vsel %vm10705, %v10542, 0
    %v10734 = vsel %vm10705, %v10543, 0
    %v10737 = vsel %vm10705, %v10544, 0
    %v10740 = vsel %vm10705, %v10545, 0
    %v10743 = vsel %vm10705, %v10546, 0
    %v10746 = vsel %vm10705, %v10547, 0
    %v10749 = vsel %vm10705, %v10548, 0
    %v10752 = vsel %vm10705, %v10549, 0
    %v10755 = vsel %vm10705, %v10550, 0
    %v10758 = vsel %vm10705, %v10551, 0
    %v10761 = vsel %vm10705, %v10552, 0
    %v10764 = vsel %vm10705, %v10553, 0
    %v10767 = vsel %vm10705, %v10554, 0
    %v10770 = vsel %vm10705, %v10555, 0
    %v10773 = vsel %vm10705, %v10556, 0
    %v10776 = vsel %vm10705, %v10557, 0
    %v10779 = vsel %vm10705, %v10558, 0
    %v10782 = vsel %vm10705, %v10559, 0
    %v10785 = vsel %vm10705, %v10560, 0
    %v10788 = vsel %vm10705, %v10561, 0
    %v10791 = vsel %vm10705, %v10562, 0
    %v10794 = vsel %vm10705, %v10563, 0
    %v10797 = vsel %vm10705, %v10564, 0
    %v10800 = vsel %vm10705, %v10565, 0
    %v10803 = vsel %vm10705, %v10566, 0
    %v10806 = vsel %vm10705, %v10567, 0
    %v10809 = vsel %vm10705, %v10568, 0
    %v10812 = vsel %vm10705, %v10569, 0
    %v10815 = vsel %vm10705, %v10570, 0
    %v10818 = vsel %vm10705, %v10571, 0
    %v10821 = vsel %vm10705, %v10572, 0
    %v10824 = vsel %vm10705, %v10573, 0
    %v10827 = vsel %vm10705, %v10574, 0
    %v10830 = vsel %vm10705, %v10575, 0
    %v10833 = vsel %vm10705, %v10576, 0
    %v10836 = vsel %vm10705, %v10577, 0
    %v10839 = vsel %vm10705, %v10578, 0
    %v10842 = vsel %vm10705, %v10579, 0
    %v10845 = vsel %vm10705, %v10580, 0
    %v10848 = vsel %vm10705, %v10581, 0
    %v10851 = vsel %vm10705, %v10582, 0
    %v10854 = vsel %vm10705, %v10583, 0
    %v10857 = vsel %vm10705, %v10584, 0
    %v10860 = vsel %vm10705, %v10585, 0
    %v10863 = vsel %vm10705, %v10586, 0
    %v10866 = vsel %vm10705, %v10587, 0
    %v10869 = vsel %vm10705, %v10588, 0
    %v10872 = vsel %vm10705, %v10589, 0
    %v10875 = vsel %vm10705, %v10590, 0
    %v10878 = vsel %vm10705, %v10591, 0
    %v10881 = vsel %vm10705, %v10592, 0
    %v10884 = vsel %vm10705, %v10593, 0
    %v10887 = vsel %vm10705, %v10594, 0
    %v10890 = vsel %vm10705, %v10595, 0
    %v10893 = vsel %vm10705, %v10596, 0
    %v10896 = vsel %vm10705, %v10597, 0
    %v10899 = vsel %vm10705, %v10598, 0
    %v10902 = vsel %vm10705, %v10599, 0
    %v10905 = vsel %vm10705, %v10600, 0
    %v10908 = vsel %vm10705, %v10601, 0
    %v10911 = vsel %vm10705, %v10602, 0
    %v10914 = vsel %vm10705, %v10603, 0
    %v10917 = vsel %vm10705, %v10604, 0
    %v10920 = vsel %vm10705, %v10605, 0
    %v10923 = vsel %vm10705, %v10606, 0
    %v10926 = vsel %vm10705, %v10607, 0
    %v10929 = vsel %vm10705, %v10608, 0
    %v10932 = vsel %vm10705, %v10609, 0
    %v10935 = vsel %vm10705, %v10610, 0
    %v10938 = vsel %vm10705, %v10611, 0
    %v10941 = vsel %vm10705, %v10612, 0
    %v10944 = vsel %vm10705, %v10613, 0
    %v10947 = vsel %vm10705, %v10614, 0
    %v10950 = vsel %vm10705, %v10615, 0
    %v10953 = vsel %vm10705, %v10616, 0
    %v10956 = vsel %vm10705, %v10617, 0
    %v10959 = vsel %vm10705, %v10618, 0
    %v10962 = vsel %vm10705, %v10619, 0
    %v10965 = vsel %vm10705, %v10620, 0
    %v10968 = vsel %vm10705, %v10621, 0
    %v10971 = vsel %vm10705, %v10622, 0
    %v10974 = vsel %vm10705, %v10623, 0
    %v10977 = vsel %vm10705, %v10624, 0
    %v10980 = vsel %vm10705, %v10625, 0
    %v10983 = vsel %vm10705, %v10626, 0
    %v10986 = vsel %vm10705, %v10627, 0
    %v10989 = vsel %vm10705, %v10628, 0
    %v10992 = vsel %vm10705, %v10629, 0
    %v10995 = vsel %vm10705, %v10630, 0
    %v10998 = vsel %vm10705, %v10631, 0
    %v11001 = vsel %vm10705, %v10632, 0
    %v11004 = vsel %vm10705, %v10633, 0
    %v11007 = vsel %vm10705, %v10634, 0
    %v11010 = vsel %vm10705, %v10635, 0
    %v11013 = vsel %vm10705, %v10636, 0
    %v11016 = vsel %vm10705, %v10637, 0
    %v11019 = vsel %vm10705, %v10638, 0
    %v11022 = vsel %vm10705, %v10639, 0
    %v11025 = vsel %vm10705, %v10640, 0
    %v11028 = vsel %vm10705, %v10641, 0
    %v11031 = vsel %vm10705, %v10642, 0
    %v11034 = vsel %vm10705, %v10643, 0
    %v11037 = vsel %vm10705, %v10644, 0
    %v11040 = vsel %vm10705, %v10645, 0
    %v11043 = vsel %vm10705, %v10646, 0
    %v11046 = vsel %vm10705, %v10647, 0
    %v11049 = vsel %vm10705, %v10648, 0
    %v11052 = vsel %vm10705, %v10649, 0
    %v11055 = vsel %vm10705, %v10650, 0
    %v11058 = vsel %vm10705, %v10651, 0
    %v11061 = vsel %vm10705, %v10652, 0
    %v11064 = vsel %vm10705, %v10653, 0
    %v11067 = vsel %vm10705, %v10654, 0
    %v11070 = vsel %vm10705, %v10655, 0
    %v11073 = vsel %vm10705, %v10656, 0
    %v11076 = vsel %vm10705, %v10657, 0
    %v11079 = vsel %vm10705, %v10658, 0
    %v11082 = vsel %vm10705, %v10659, 0
    %v11085 = vsel %vm10705, %v10660, 0
    %v11088 = vsel %vm10705, %v10661, 0
    %vm11090 = vcmask 1043456
    %v11092 = vsel %vm11090, %v10700, 0
    %11094 = vmatprep.subr.bf16.mxu0 0
    %11095 = vmatpush1.bf16.msra.mxu0 0
    %11096 = vmatprep.subr.bf16.mxu0 0
    %11097 = vmatpush1.bf16.msra.mxu0 0
    %11098 = vmatprep.subr.bf16.mxu0 0
    %11099 = vmatpush1.bf16.msra.mxu0 0
    %11100 = vmatprep.subr.bf16.mxu0 0
    %11101 = vmatpush1.bf16.msra.mxu0 %v11092
    %11102 = vmatprep.subr.bf16.mxu0 0
    %11103 = vmatpush1.bf16.msra.mxu0 %v10699
    %11104 = vmatprep.subr.bf16.mxu0 0
    %11105 = vmatpush1.bf16.msra.mxu0 %v10698
    %11106 = vmatprep.subr.bf16.mxu0 0
    %11107 = vmatpush1.bf16.msra.mxu0 %v10697
    %11108 = vmatprep.subr.bf16.mxu0 0
    %11109 = vmatpush1.bf16.msra.mxu0 %v10696
    %11110 = vmatprep.subr.bf16.mxu0 0
    %11111 = vmatpush2.bf16.msra.mxu0 0
    %11112 = vmatprep.subr.bf16.mxu0 0
    %11113 = vmatpush2.bf16.msra.mxu0 0
    %11114 = vmatprep.subr.bf16.mxu0 0
    %11115 = vmatpush2.bf16.msra.mxu0 0
    %11116 = vmatprep.subr.bf16.mxu0 0
    %11117 = vmatpush2.bf16.msra.mxu0 0
    %11118 = vmatprep.subr.bf16.mxu0 0
    %11119 = vmatpush2.bf16.msra.mxu0 0
    %11120 = vmatprep.subr.bf16.mxu0 0
    %11121 = vmatpush2.bf16.msra.mxu0 0
    %11122 = vmatprep.subr.bf16.mxu0 0
    %11123 = vmatpush2.bf16.msra.mxu0 0
    %11124 = vmatprep.subr.bf16.mxu0 0
    %11125 = vmatpush2.bf16.msra.mxu0 0
    %11126 = vmatprep.mubr.bf16.mxu0 0
    %11127 = vmatmul.mubr.bf16.gmra.mxu0 %v10707
    %v11128 = vpop.f32.mrf.mxu0
    %v11129 = vadd.f32 %v10676, %v11128
    %v11130 = vpop.f32.mrf.mxu0
    %v11131 = vpop.f32.mrf.mxu0
    %v11132 = vadd.f32 %v10676, %v11131
    %v11133 = vpop.f32.mrf.mxu0
    %11134 = vmatprep.mubr.bf16.mxu0 0
    %11135 = vmatmul.mubr.bf16.gmra.mxu0 %v10710
    %v11136 = vpop.f32.mrf.mxu0
    %v11137 = vadd.f32 %v10676, %v11136
    %v11138 = vpop.f32.mrf.mxu0
    %v11139 = vpop.f32.mrf.mxu0
    %v11140 = vadd.f32 %v10676, %v11139
    %v11141 = vpop.f32.mrf.mxu0
    %11142 = vmatprep.mubr.bf16.mxu0 0
    %11143 = vmatmul.mubr.bf16.gmra.mxu0 %v10713
    %v11144 = vpop.f32.mrf.mxu0
    %v11145 = vadd.f32 %v10676, %v11144
    %v11146 = vpop.f32.mrf.mxu0
    %v11147 = vpop.f32.mrf.mxu0
    %v11148 = vadd.f32 %v10676, %v11147
    %v11149 = vpop.f32.mrf.mxu0
    %11150 = vmatprep.mubr.bf16.mxu0 0
    %11151 = vmatmul.mubr.bf16.gmra.mxu0 %v10716
    %v11152 = vpop.f32.mrf.mxu0
    %v11153 = vadd.f32 %v10676, %v11152
    %v11154 = vpop.f32.mrf.mxu0
    %v11155 = vpop.f32.mrf.mxu0
    %v11156 = vadd.f32 %v10676, %v11155
    %v11157 = vpop.f32.mrf.mxu0
    %11158 = vmatprep.mubr.bf16.mxu0 0
    %11159 = vmatmul.mubr.bf16.gmra.mxu0 %v10719
    %v11160 = vpop.f32.mrf.mxu0
    %v11161 = vadd.f32 %v10676, %v11160
    %v11162 = vpop.f32.mrf.mxu0
    %v11163 = vpop.f32.mrf.mxu0
    %v11164 = vadd.f32 %v10676, %v11163
    %v11165 = vpop.f32.mrf.mxu0
    %11166 = vmatprep.mubr.bf16.mxu0 0
    %11167 = vmatmul.mubr.bf16.gmra.mxu0 %v10722
    %v11168 = vpop.f32.mrf.mxu0
    %v11169 = vadd.f32 %v10676, %v11168
    %v11170 = vpop.f32.mrf.mxu0
    %v11171 = vpop.f32.mrf.mxu0
    %v11172 = vadd.f32 %v10676, %v11171
    %v11173 = vpop.f32.mrf.mxu0
    %11174 = vmatprep.mubr.bf16.mxu0 0
    %11175 = vmatmul.mubr.bf16.gmra.mxu0 %v10725
    %v11176 = vpop.f32.mrf.mxu0
    %v11177 = vadd.f32 %v10676, %v11176
    %v11178 = vpop.f32.mrf.mxu0
    %v11179 = vpop.f32.mrf.mxu0
    %v11180 = vadd.f32 %v10676, %v11179
    %v11181 = vpop.f32.mrf.mxu0
    %11182 = vmatprep.mubr.bf16.mxu0 0
    %11183 = vmatmul.mubr.bf16.gmra.mxu0 %v10728
    %v11184 = vpop.f32.mrf.mxu0
    %v11185 = vadd.f32 %v10676, %v11184
    %v11186 = vpop.f32.mrf.mxu0
    %v11187 = vpop.f32.mrf.mxu0
    %v11188 = vadd.f32 %v10676, %v11187
    %v11189 = vpop.f32.mrf.mxu0
    %11190 = vmatprep.mubr.bf16.mxu0 0
    %11191 = vmatmul.mubr.bf16.gmra.mxu0 %v10731
    %v11192 = vpop.f32.mrf.mxu0
    %v11193 = vadd.f32 %v10676, %v11192
    %v11194 = vpop.f32.mrf.mxu0
    %v11195 = vpop.f32.mrf.mxu0
    %v11196 = vadd.f32 %v10676, %v11195
    %v11197 = vpop.f32.mrf.mxu0
    %11198 = vmatprep.mubr.bf16.mxu0 0
    %11199 = vmatmul.mubr.bf16.gmra.mxu0 %v10734
    %v11200 = vpop.f32.mrf.mxu0
    %v11201 = vadd.f32 %v10676, %v11200
    %v11202 = vpop.f32.mrf.mxu0
    %v11203 = vpop.f32.mrf.mxu0
    %v11204 = vadd.f32 %v10676, %v11203
    %v11205 = vpop.f32.mrf.mxu0
    %11206 = vmatprep.mubr.bf16.mxu0 0
    %11207 = vmatmul.mubr.bf16.gmra.mxu0 %v10737
    %v11208 = vpop.f32.mrf.mxu0
    %v11209 = vadd.f32 %v10676, %v11208
    %v11210 = vpop.f32.mrf.mxu0
    %v11211 = vpop.f32.mrf.mxu0
    %v11212 = vadd.f32 %v10676, %v11211
    %v11213 = vpop.f32.mrf.mxu0
    %11214 = vmatprep.mubr.bf16.mxu0 0
    %11215 = vmatmul.mubr.bf16.gmra.mxu0 %v10740
    %v11216 = vpop.f32.mrf.mxu0
    %v11217 = vadd.f32 %v10676, %v11216
    %v11218 = vpop.f32.mrf.mxu0
    %v11219 = vpop.f32.mrf.mxu0
    %v11220 = vadd.f32 %v10676, %v11219
    %v11221 = vpop.f32.mrf.mxu0
    %11222 = vmatprep.mubr.bf16.mxu0 0
    %11223 = vmatmul.mubr.bf16.gmra.mxu0 %v10743
    %v11224 = vpop.f32.mrf.mxu0
    %v11225 = vadd.f32 %v10676, %v11224
    %v11226 = vpop.f32.mrf.mxu0
    %v11227 = vpop.f32.mrf.mxu0
    %v11228 = vadd.f32 %v10676, %v11227
    %v11229 = vpop.f32.mrf.mxu0
    %11230 = vmatprep.mubr.bf16.mxu0 0
    %11231 = vmatmul.mubr.bf16.gmra.mxu0 %v10746
    %v11232 = vpop.f32.mrf.mxu0
    %v11233 = vadd.f32 %v10676, %v11232
    %v11234 = vpop.f32.mrf.mxu0
    %v11235 = vpop.f32.mrf.mxu0
    %v11236 = vadd.f32 %v10676, %v11235
    %v11237 = vpop.f32.mrf.mxu0
    %11238 = vmatprep.mubr.bf16.mxu0 0
    %11239 = vmatmul.mubr.bf16.gmra.mxu0 %v10749
    %v11240 = vpop.f32.mrf.mxu0
    %v11241 = vadd.f32 %v10676, %v11240
    %v11242 = vpop.f32.mrf.mxu0
    %v11243 = vpop.f32.mrf.mxu0
    %v11244 = vadd.f32 %v10676, %v11243
    %v11245 = vpop.f32.mrf.mxu0
    %11246 = vmatprep.mubr.bf16.mxu0 0
    %11247 = vmatmul.mubr.bf16.gmra.mxu0 %v10752
    %v11248 = vpop.f32.mrf.mxu0
    %v11249 = vadd.f32 %v10676, %v11248
    %v11250 = vpop.f32.mrf.mxu0
    %v11251 = vpop.f32.mrf.mxu0
    %v11252 = vadd.f32 %v10676, %v11251
    %v11253 = vpop.f32.mrf.mxu0
    %11254 = vmatprep.mubr.bf16.mxu0 0
    %11255 = vmatmul.mubr.bf16.gmra.mxu0 %v10755
    %v11256 = vpop.f32.mrf.mxu0
    %v11257 = vadd.f32 %v10676, %v11256
    %v11258 = vpop.f32.mrf.mxu0
    %v11259 = vpop.f32.mrf.mxu0
    %v11260 = vadd.f32 %v10676, %v11259
    %v11261 = vpop.f32.mrf.mxu0
    %11262 = vmatprep.mubr.bf16.mxu0 0
    %11263 = vmatmul.mubr.bf16.gmra.mxu0 %v10758
    %v11264 = vpop.f32.mrf.mxu0
    %v11265 = vadd.f32 %v10676, %v11264
    %v11266 = vpop.f32.mrf.mxu0
    %v11267 = vpop.f32.mrf.mxu0
    %v11268 = vadd.f32 %v10676, %v11267
    %v11269 = vpop.f32.mrf.mxu0
    %11270 = vmatprep.mubr.bf16.mxu0 0
    %11271 = vmatmul.mubr.bf16.gmra.mxu0 %v10761
    %v11272 = vpop.f32.mrf.mxu0
    %v11273 = vadd.f32 %v10676, %v11272
    %v11274 = vpop.f32.mrf.mxu0
    %v11275 = vpop.f32.mrf.mxu0
    %v11276 = vadd.f32 %v10676, %v11275
    %v11277 = vpop.f32.mrf.mxu0
    %11278 = vmatprep.mubr.bf16.mxu0 0
    %11279 = vmatmul.mubr.bf16.gmra.mxu0 %v10764
    %v11280 = vpop.f32.mrf.mxu0
    %v11281 = vadd.f32 %v10676, %v11280
    %v11282 = vpop.f32.mrf.mxu0
    %v11283 = vpop.f32.mrf.mxu0
    %v11284 = vadd.f32 %v10676, %v11283
    %v11285 = vpop.f32.mrf.mxu0
    %11286 = vmatprep.mubr.bf16.mxu0 0
    %11287 = vmatmul.mubr.bf16.gmra.mxu0 %v10767
    %v11288 = vpop.f32.mrf.mxu0
    %v11289 = vadd.f32 %v10676, %v11288
    %v11290 = vpop.f32.mrf.mxu0
    %v11291 = vpop.f32.mrf.mxu0
    %v11292 = vadd.f32 %v10676, %v11291
    %v11293 = vpop.f32.mrf.mxu0
    %11294 = vmatprep.mubr.bf16.mxu0 0
    %11295 = vmatmul.mubr.bf16.gmra.mxu0 %v10770
    %v11296 = vpop.f32.mrf.mxu0
    %v11297 = vadd.f32 %v10676, %v11296
    %v11298 = vpop.f32.mrf.mxu0
    %v11299 = vpop.f32.mrf.mxu0
    %v11300 = vadd.f32 %v10676, %v11299
    %v11301 = vpop.f32.mrf.mxu0
    %11302 = vmatprep.mubr.bf16.mxu0 0
    %11303 = vmatmul.mubr.bf16.gmra.mxu0 %v10773
    %v11304 = vpop.f32.mrf.mxu0
    %v11305 = vadd.f32 %v10676, %v11304
    %v11306 = vpop.f32.mrf.mxu0
    %v11307 = vpop.f32.mrf.mxu0
    %v11308 = vadd.f32 %v10676, %v11307
    %v11309 = vpop.f32.mrf.mxu0
    %11310 = vmatprep.mubr.bf16.mxu0 0
    %11311 = vmatmul.mubr.bf16.gmra.mxu0 %v10776
    %v11312 = vpop.f32.mrf.mxu0
    %v11313 = vadd.f32 %v10676, %v11312
    %v11314 = vpop.f32.mrf.mxu0
    %v11315 = vpop.f32.mrf.mxu0
    %v11316 = vadd.f32 %v10676, %v11315
    %v11317 = vpop.f32.mrf.mxu0
    %11318 = vmatprep.mubr.bf16.mxu0 0
    %11319 = vmatmul.mubr.bf16.gmra.mxu0 %v10779
    %v11320 = vpop.f32.mrf.mxu0
    %v11321 = vadd.f32 %v10676, %v11320
    %v11322 = vpop.f32.mrf.mxu0
    %v11323 = vpop.f32.mrf.mxu0
    %v11324 = vadd.f32 %v10676, %v11323
    %v11325 = vpop.f32.mrf.mxu0
    %11326 = vmatprep.mubr.bf16.mxu0 0
    %11327 = vmatmul.mubr.bf16.gmra.mxu0 %v10782
    %v11328 = vpop.f32.mrf.mxu0
    %v11329 = vadd.f32 %v10676, %v11328
    %v11330 = vpop.f32.mrf.mxu0
    %v11331 = vpop.f32.mrf.mxu0
    %v11332 = vadd.f32 %v10676, %v11331
    %v11333 = vpop.f32.mrf.mxu0
    %11334 = vmatprep.mubr.bf16.mxu0 0
    %11335 = vmatmul.mubr.bf16.gmra.mxu0 %v10785
    %v11336 = vpop.f32.mrf.mxu0
    %v11337 = vadd.f32 %v10676, %v11336
    %v11338 = vpop.f32.mrf.mxu0
    %v11339 = vpop.f32.mrf.mxu0
    %v11340 = vadd.f32 %v10676, %v11339
    %v11341 = vpop.f32.mrf.mxu0
    %11342 = vmatprep.mubr.bf16.mxu0 0
    %11343 = vmatmul.mubr.bf16.gmra.mxu0 %v10788
    %v11344 = vpop.f32.mrf.mxu0
    %v11345 = vadd.f32 %v10676, %v11344
    %v11346 = vpop.f32.mrf.mxu0
    %v11347 = vpop.f32.mrf.mxu0
    %v11348 = vadd.f32 %v10676, %v11347
    %v11349 = vpop.f32.mrf.mxu0
    %11350 = vmatprep.mubr.bf16.mxu0 0
    %11351 = vmatmul.mubr.bf16.gmra.mxu0 %v10791
    %v11352 = vpop.f32.mrf.mxu0
    %v11353 = vadd.f32 %v10676, %v11352
    %v11354 = vpop.f32.mrf.mxu0
    %v11355 = vpop.f32.mrf.mxu0
    %v11356 = vadd.f32 %v10676, %v11355
    %v11357 = vpop.f32.mrf.mxu0
    %11358 = vmatprep.mubr.bf16.mxu0 0
    %11359 = vmatmul.mubr.bf16.gmra.mxu0 %v10794
    %v11360 = vpop.f32.mrf.mxu0
    %v11361 = vadd.f32 %v10676, %v11360
    %v11362 = vpop.f32.mrf.mxu0
    %v11363 = vpop.f32.mrf.mxu0
    %v11364 = vadd.f32 %v10676, %v11363
    %v11365 = vpop.f32.mrf.mxu0
    %11366 = vmatprep.mubr.bf16.mxu0 0
    %11367 = vmatmul.mubr.bf16.gmra.mxu0 %v10797
    %v11368 = vpop.f32.mrf.mxu0
    %v11369 = vadd.f32 %v10676, %v11368
    %v11370 = vpop.f32.mrf.mxu0
    %v11371 = vpop.f32.mrf.mxu0
    %v11372 = vadd.f32 %v10676, %v11371
    %v11373 = vpop.f32.mrf.mxu0
    %11374 = vmatprep.mubr.bf16.mxu0 0
    %11375 = vmatmul.mubr.bf16.gmra.mxu0 %v10800
    %v11376 = vpop.f32.mrf.mxu0
    %v11377 = vadd.f32 %v10676, %v11376
    %v11378 = vpop.f32.mrf.mxu0
    %v11379 = vpop.f32.mrf.mxu0
    %v11380 = vadd.f32 %v10676, %v11379
    %v11381 = vpop.f32.mrf.mxu0
    %11382 = vmatprep.mubr.bf16.mxu0 0
    %11383 = vmatmul.mubr.bf16.gmra.mxu0 %v10803
    %v11384 = vpop.f32.mrf.mxu0
    %v11385 = vadd.f32 %v10676, %v11384
    %v11386 = vpop.f32.mrf.mxu0
    %v11387 = vpop.f32.mrf.mxu0
    %v11388 = vadd.f32 %v10676, %v11387
    %v11389 = vpop.f32.mrf.mxu0
    %11390 = vmatprep.mubr.bf16.mxu0 0
    %11391 = vmatmul.mubr.bf16.gmra.mxu0 %v10806
    %v11392 = vpop.f32.mrf.mxu0
    %v11393 = vadd.f32 %v10676, %v11392
    %v11394 = vpop.f32.mrf.mxu0
    %v11395 = vpop.f32.mrf.mxu0
    %v11396 = vadd.f32 %v10676, %v11395
    %v11397 = vpop.f32.mrf.mxu0
    %11398 = vmatprep.mubr.bf16.mxu0 0
    %11399 = vmatmul.mubr.bf16.gmra.mxu0 %v10809
    %v11400 = vpop.f32.mrf.mxu0
    %v11401 = vadd.f32 %v10676, %v11400
    %v11402 = vpop.f32.mrf.mxu0
    %v11403 = vpop.f32.mrf.mxu0
    %v11404 = vadd.f32 %v10676, %v11403
    %v11405 = vpop.f32.mrf.mxu0
    %11406 = vmatprep.mubr.bf16.mxu0 0
    %11407 = vmatmul.mubr.bf16.gmra.mxu0 %v10812
    %v11408 = vpop.f32.mrf.mxu0
    %v11409 = vadd.f32 %v10676, %v11408
    %v11410 = vpop.f32.mrf.mxu0
    %v11411 = vpop.f32.mrf.mxu0
    %v11412 = vadd.f32 %v10676, %v11411
    %v11413 = vpop.f32.mrf.mxu0
    %11414 = vmatprep.mubr.bf16.mxu0 0
    %11415 = vmatmul.mubr.bf16.gmra.mxu0 %v10815
    %v11416 = vpop.f32.mrf.mxu0
    %v11417 = vadd.f32 %v10676, %v11416
    %v11418 = vpop.f32.mrf.mxu0
    %v11419 = vpop.f32.mrf.mxu0
    %v11420 = vadd.f32 %v10676, %v11419
    %v11421 = vpop.f32.mrf.mxu0
    %11422 = vmatprep.mubr.bf16.mxu0 0
    %11423 = vmatmul.mubr.bf16.gmra.mxu0 %v10818
    %v11424 = vpop.f32.mrf.mxu0
    %v11425 = vadd.f32 %v10676, %v11424
    %v11426 = vpop.f32.mrf.mxu0
    %v11427 = vpop.f32.mrf.mxu0
    %v11428 = vadd.f32 %v10676, %v11427
    %v11429 = vpop.f32.mrf.mxu0
    %11430 = vmatprep.mubr.bf16.mxu0 0
    %11431 = vmatmul.mubr.bf16.gmra.mxu0 %v10821
    %v11432 = vpop.f32.mrf.mxu0
    %v11433 = vadd.f32 %v10676, %v11432
    %v11434 = vpop.f32.mrf.mxu0
    %v11435 = vpop.f32.mrf.mxu0
    %v11436 = vadd.f32 %v10676, %v11435
    %v11437 = vpop.f32.mrf.mxu0
    %11438 = vmatprep.mubr.bf16.mxu0 0
    %11439 = vmatmul.mubr.bf16.gmra.mxu0 %v10824
    %v11440 = vpop.f32.mrf.mxu0
    %v11441 = vadd.f32 %v10676, %v11440
    %v11442 = vpop.f32.mrf.mxu0
    %v11443 = vpop.f32.mrf.mxu0
    %v11444 = vadd.f32 %v10676, %v11443
    %v11445 = vpop.f32.mrf.mxu0
    %11446 = vmatprep.mubr.bf16.mxu0 0
    %11447 = vmatmul.mubr.bf16.gmra.mxu0 %v10827
    %v11448 = vpop.f32.mrf.mxu0
    %v11449 = vadd.f32 %v10676, %v11448
    %v11450 = vpop.f32.mrf.mxu0
    %v11451 = vpop.f32.mrf.mxu0
    %v11452 = vadd.f32 %v10676, %v11451
    %v11453 = vpop.f32.mrf.mxu0
    %11454 = vmatprep.mubr.bf16.mxu0 0
    %11455 = vmatmul.mubr.bf16.gmra.mxu0 %v10830
    %v11456 = vpop.f32.mrf.mxu0
    %v11457 = vadd.f32 %v10676, %v11456
    %v11458 = vpop.f32.mrf.mxu0
    %v11459 = vpop.f32.mrf.mxu0
    %v11460 = vadd.f32 %v10676, %v11459
    %v11461 = vpop.f32.mrf.mxu0
    %11462 = vmatprep.mubr.bf16.mxu0 0
    %11463 = vmatmul.mubr.bf16.gmra.mxu0 %v10833
    %v11464 = vpop.f32.mrf.mxu0
    %v11465 = vadd.f32 %v10676, %v11464
    %v11466 = vpop.f32.mrf.mxu0
    %v11467 = vpop.f32.mrf.mxu0
    %v11468 = vadd.f32 %v10676, %v11467
    %v11469 = vpop.f32.mrf.mxu0
    %11470 = vmatprep.mubr.bf16.mxu0 0
    %11471 = vmatmul.mubr.bf16.gmra.mxu0 %v10836
    %v11472 = vpop.f32.mrf.mxu0
    %v11473 = vadd.f32 %v10676, %v11472
    %v11474 = vpop.f32.mrf.mxu0
    %v11475 = vpop.f32.mrf.mxu0
    %v11476 = vadd.f32 %v10676, %v11475
    %v11477 = vpop.f32.mrf.mxu0
    %11478 = vmatprep.mubr.bf16.mxu0 0
    %11479 = vmatmul.mubr.bf16.gmra.mxu0 %v10839
    %v11480 = vpop.f32.mrf.mxu0
    %v11481 = vadd.f32 %v10676, %v11480
    %v11482 = vpop.f32.mrf.mxu0
    %v11483 = vpop.f32.mrf.mxu0
    %v11484 = vadd.f32 %v10676, %v11483
    %v11485 = vpop.f32.mrf.mxu0
    %11486 = vmatprep.mubr.bf16.mxu0 0
    %11487 = vmatmul.mubr.bf16.gmra.mxu0 %v10842
    %v11488 = vpop.f32.mrf.mxu0
    %v11489 = vadd.f32 %v10676, %v11488
    %v11490 = vpop.f32.mrf.mxu0
    %v11491 = vpop.f32.mrf.mxu0
    %v11492 = vadd.f32 %v10676, %v11491
    %v11493 = vpop.f32.mrf.mxu0
    %11494 = vmatprep.mubr.bf16.mxu0 0
    %11495 = vmatmul.mubr.bf16.gmra.mxu0 %v10845
    %v11496 = vpop.f32.mrf.mxu0
    %v11497 = vadd.f32 %v10676, %v11496
    %v11498 = vpop.f32.mrf.mxu0
    %v11499 = vpop.f32.mrf.mxu0
    %v11500 = vadd.f32 %v10676, %v11499
    %v11501 = vpop.f32.mrf.mxu0
    %11502 = vmatprep.mubr.bf16.mxu0 0
    %11503 = vmatmul.mubr.bf16.gmra.mxu0 %v10848
    %v11504 = vpop.f32.mrf.mxu0
    %v11505 = vadd.f32 %v10676, %v11504
    %v11506 = vpop.f32.mrf.mxu0
    %v11507 = vpop.f32.mrf.mxu0
    %v11508 = vadd.f32 %v10676, %v11507
    %v11509 = vpop.f32.mrf.mxu0
    %11510 = vmatprep.mubr.bf16.mxu0 0
    %11511 = vmatmul.mubr.bf16.gmra.mxu0 %v10851
    %v11512 = vpop.f32.mrf.mxu0
    %v11513 = vadd.f32 %v10676, %v11512
    %v11514 = vpop.f32.mrf.mxu0
    %v11515 = vpop.f32.mrf.mxu0
    %v11516 = vadd.f32 %v10676, %v11515
    %v11517 = vpop.f32.mrf.mxu0
    %11518 = vmatprep.mubr.bf16.mxu0 0
    %11519 = vmatmul.mubr.bf16.gmra.mxu0 %v10854
    %v11520 = vpop.f32.mrf.mxu0
    %v11521 = vadd.f32 %v10676, %v11520
    %v11522 = vpop.f32.mrf.mxu0
    %v11523 = vpop.f32.mrf.mxu0
    %v11524 = vadd.f32 %v10676, %v11523
    %v11525 = vpop.f32.mrf.mxu0
    %11526 = vmatprep.mubr.bf16.mxu0 0
    %11527 = vmatmul.mubr.bf16.gmra.mxu0 %v10857
    %v11528 = vpop.f32.mrf.mxu0
    %v11529 = vadd.f32 %v10676, %v11528
    %v11530 = vpop.f32.mrf.mxu0
    %v11531 = vpop.f32.mrf.mxu0
    %v11532 = vadd.f32 %v10676, %v11531
    %v11533 = vpop.f32.mrf.mxu0
    %11534 = vmatprep.mubr.bf16.mxu0 0
    %11535 = vmatmul.mubr.bf16.gmra.mxu0 %v10860
    %v11536 = vpop.f32.mrf.mxu0
    %v11537 = vadd.f32 %v10676, %v11536
    %v11538 = vpop.f32.mrf.mxu0
    %v11539 = vpop.f32.mrf.mxu0
    %v11540 = vadd.f32 %v10676, %v11539
    %v11541 = vpop.f32.mrf.mxu0
    %11542 = vmatprep.mubr.bf16.mxu0 0
    %11543 = vmatmul.mubr.bf16.gmra.mxu0 %v10863
    %v11544 = vpop.f32.mrf.mxu0
    %v11545 = vadd.f32 %v10676, %v11544
    %v11546 = vpop.f32.mrf.mxu0
    %v11547 = vpop.f32.mrf.mxu0
    %v11548 = vadd.f32 %v10676, %v11547
    %v11549 = vpop.f32.mrf.mxu0
    %11550 = vmatprep.mubr.bf16.mxu0 0
    %11551 = vmatmul.mubr.bf16.gmra.mxu0 %v10866
    %v11552 = vpop.f32.mrf.mxu0
    %v11553 = vadd.f32 %v10676, %v11552
    %v11554 = vpop.f32.mrf.mxu0
    %v11555 = vpop.f32.mrf.mxu0
    %v11556 = vadd.f32 %v10676, %v11555
    %v11557 = vpop.f32.mrf.mxu0
    %11558 = vmatprep.mubr.bf16.mxu0 0
    %11559 = vmatmul.mubr.bf16.gmra.mxu0 %v10869
    %v11560 = vpop.f32.mrf.mxu0
    %v11561 = vadd.f32 %v10676, %v11560
    %v11562 = vpop.f32.mrf.mxu0
    %v11563 = vpop.f32.mrf.mxu0
    %v11564 = vadd.f32 %v10676, %v11563
    %v11565 = vpop.f32.mrf.mxu0
    %11566 = vmatprep.mubr.bf16.mxu0 0
    %11567 = vmatmul.mubr.bf16.gmra.mxu0 %v10872
    %v11568 = vpop.f32.mrf.mxu0
    %v11569 = vadd.f32 %v10676, %v11568
    %v11570 = vpop.f32.mrf.mxu0
    %v11571 = vpop.f32.mrf.mxu0
    %v11572 = vadd.f32 %v10676, %v11571
    %v11573 = vpop.f32.mrf.mxu0
    %11574 = vmatprep.mubr.bf16.mxu0 0
    %11575 = vmatmul.mubr.bf16.gmra.mxu0 %v10875
    %v11576 = vpop.f32.mrf.mxu0
    %v11577 = vadd.f32 %v10676, %v11576
    %v11578 = vpop.f32.mrf.mxu0
    %v11579 = vpop.f32.mrf.mxu0
    %v11580 = vadd.f32 %v10676, %v11579
    %v11581 = vpop.f32.mrf.mxu0
    %11582 = vmatprep.mubr.bf16.mxu0 0
    %11583 = vmatmul.mubr.bf16.gmra.mxu0 %v10878
    %v11584 = vpop.f32.mrf.mxu0
    %v11585 = vadd.f32 %v10676, %v11584
    %v11586 = vpop.f32.mrf.mxu0
    %v11587 = vpop.f32.mrf.mxu0
    %v11588 = vadd.f32 %v10676, %v11587
    %v11589 = vpop.f32.mrf.mxu0
    %11590 = vmatprep.mubr.bf16.mxu0 0
    %11591 = vmatmul.mubr.bf16.gmra.mxu0 %v10881
    %v11592 = vpop.f32.mrf.mxu0
    %v11593 = vadd.f32 %v10676, %v11592
    %v11594 = vpop.f32.mrf.mxu0
    %v11595 = vpop.f32.mrf.mxu0
    %v11596 = vadd.f32 %v10676, %v11595
    %v11597 = vpop.f32.mrf.mxu0
    %11598 = vmatprep.mubr.bf16.mxu0 0
    %11599 = vmatmul.mubr.bf16.gmra.mxu0 %v10884
    %v11600 = vpop.f32.mrf.mxu0
    %v11601 = vadd.f32 %v10676, %v11600
    %v11602 = vpop.f32.mrf.mxu0
    %v11603 = vpop.f32.mrf.mxu0
    %v11604 = vadd.f32 %v10676, %v11603
    %v11605 = vpop.f32.mrf.mxu0
    %11606 = vmatprep.mubr.bf16.mxu0 0
    %11607 = vmatmul.mubr.bf16.gmra.mxu0 %v10887
    %v11608 = vpop.f32.mrf.mxu0
    %v11609 = vadd.f32 %v10676, %v11608
    %v11610 = vpop.f32.mrf.mxu0
    %v11611 = vpop.f32.mrf.mxu0
    %v11612 = vadd.f32 %v10676, %v11611
    %v11613 = vpop.f32.mrf.mxu0
    %11614 = vmatprep.mubr.bf16.mxu0 0
    %11615 = vmatmul.mubr.bf16.gmra.mxu0 %v10890
    %v11616 = vpop.f32.mrf.mxu0
    %v11617 = vadd.f32 %v10676, %v11616
    %v11618 = vpop.f32.mrf.mxu0
    %v11619 = vpop.f32.mrf.mxu0
    %v11620 = vadd.f32 %v10676, %v11619
    %v11621 = vpop.f32.mrf.mxu0
    %11622 = vmatprep.mubr.bf16.mxu0 0
    %11623 = vmatmul.mubr.bf16.gmra.mxu0 %v10893
    %v11624 = vpop.f32.mrf.mxu0
    %v11625 = vadd.f32 %v10676, %v11624
    %v11626 = vpop.f32.mrf.mxu0
    %v11627 = vpop.f32.mrf.mxu0
    %v11628 = vadd.f32 %v10676, %v11627
    %v11629 = vpop.f32.mrf.mxu0
    %11630 = vmatprep.mubr.bf16.mxu0 0
    %11631 = vmatmul.mubr.bf16.gmra.mxu0 %v10896
    %v11632 = vpop.f32.mrf.mxu0
    %v11633 = vadd.f32 %v10676, %v11632
    %v11634 = vpop.f32.mrf.mxu0
    %v11635 = vpop.f32.mrf.mxu0
    %v11636 = vadd.f32 %v10676, %v11635
    %v11637 = vpop.f32.mrf.mxu0
    %11638 = vmatprep.mubr.bf16.mxu0 0
    %11639 = vmatmul.mubr.bf16.gmra.mxu0 %v10899
    %v11640 = vpop.f32.mrf.mxu0
    %v11641 = vadd.f32 %v10676, %v11640
    %v11642 = vpop.f32.mrf.mxu0
    %v11643 = vpop.f32.mrf.mxu0
    %v11644 = vadd.f32 %v10676, %v11643
    %v11645 = vpop.f32.mrf.mxu0
    %11646 = vmatprep.mubr.bf16.mxu0 0
    %11647 = vmatmul.mubr.bf16.gmra.mxu0 %v10902
    %v11648 = vpop.f32.mrf.mxu0
    %v11649 = vadd.f32 %v10676, %v11648
    %v11650 = vpop.f32.mrf.mxu0
    %v11651 = vpop.f32.mrf.mxu0
    %v11652 = vadd.f32 %v10676, %v11651
    %v11653 = vpop.f32.mrf.mxu0
    %11654 = vmatprep.mubr.bf16.mxu0 0
    %11655 = vmatmul.mubr.bf16.gmra.mxu0 %v10905
    %v11656 = vpop.f32.mrf.mxu0
    %v11657 = vadd.f32 %v10676, %v11656
    %v11658 = vpop.f32.mrf.mxu0
    %v11659 = vpop.f32.mrf.mxu0
    %v11660 = vadd.f32 %v10676, %v11659
    %v11661 = vpop.f32.mrf.mxu0
    %11662 = vmatprep.mubr.bf16.mxu0 0
    %11663 = vmatmul.mubr.bf16.gmra.mxu0 %v10908
    %v11664 = vpop.f32.mrf.mxu0
    %v11665 = vadd.f32 %v10676, %v11664
    %v11666 = vpop.f32.mrf.mxu0
    %v11667 = vpop.f32.mrf.mxu0
    %v11668 = vadd.f32 %v10676, %v11667
    %v11669 = vpop.f32.mrf.mxu0
    %11670 = vmatprep.mubr.bf16.mxu0 0
    %11671 = vmatmul.mubr.bf16.gmra.mxu0 %v10911
    %v11672 = vpop.f32.mrf.mxu0
    %v11673 = vadd.f32 %v10676, %v11672
    %v11674 = vpop.f32.mrf.mxu0
    %v11675 = vpop.f32.mrf.mxu0
    %v11676 = vadd.f32 %v10676, %v11675
    %v11677 = vpop.f32.mrf.mxu0
    %11678 = vmatprep.mubr.bf16.mxu0 0
    %11679 = vmatmul.mubr.bf16.gmra.mxu0 %v10914
    %v11680 = vpop.f32.mrf.mxu0
    %v11681 = vadd.f32 %v10676, %v11680
    %v11682 = vpop.f32.mrf.mxu0
    %v11683 = vpop.f32.mrf.mxu0
    %v11684 = vadd.f32 %v10676, %v11683
    %v11685 = vpop.f32.mrf.mxu0
    %11686 = vmatprep.mubr.bf16.mxu0 0
    %11687 = vmatmul.mubr.bf16.gmra.mxu0 %v10917
    %v11688 = vpop.f32.mrf.mxu0
    %v11689 = vadd.f32 %v10676, %v11688
    %v11690 = vpop.f32.mrf.mxu0
    %v11691 = vpop.f32.mrf.mxu0
    %v11692 = vadd.f32 %v10676, %v11691
    %v11693 = vpop.f32.mrf.mxu0
    %11694 = vmatprep.mubr.bf16.mxu0 0
    %11695 = vmatmul.mubr.bf16.gmra.mxu0 %v10920
    %v11696 = vpop.f32.mrf.mxu0
    %v11697 = vadd.f32 %v10676, %v11696
    %v11698 = vpop.f32.mrf.mxu0
    %v11699 = vpop.f32.mrf.mxu0
    %v11700 = vadd.f32 %v10676, %v11699
    %v11701 = vpop.f32.mrf.mxu0
    %11702 = vmatprep.mubr.bf16.mxu0 0
    %11703 = vmatmul.mubr.bf16.gmra.mxu0 %v10923
    %v11704 = vpop.f32.mrf.mxu0
    %v11705 = vadd.f32 %v10676, %v11704
    %v11706 = vpop.f32.mrf.mxu0
    %v11707 = vpop.f32.mrf.mxu0
    %v11708 = vadd.f32 %v10676, %v11707
    %v11709 = vpop.f32.mrf.mxu0
    %11710 = vmatprep.mubr.bf16.mxu0 0
    %11711 = vmatmul.mubr.bf16.gmra.mxu0 %v10926
    %v11712 = vpop.f32.mrf.mxu0
    %v11713 = vadd.f32 %v10676, %v11712
    %v11714 = vpop.f32.mrf.mxu0
    %v11715 = vpop.f32.mrf.mxu0
    %v11716 = vadd.f32 %v10676, %v11715
    %v11717 = vpop.f32.mrf.mxu0
    %11718 = vmatprep.mubr.bf16.mxu0 0
    %11719 = vmatmul.mubr.bf16.gmra.mxu0 %v10929
    %v11720 = vpop.f32.mrf.mxu0
    %v11721 = vadd.f32 %v10676, %v11720
    %v11722 = vpop.f32.mrf.mxu0
    %v11723 = vpop.f32.mrf.mxu0
    %v11724 = vadd.f32 %v10676, %v11723
    %v11725 = vpop.f32.mrf.mxu0
    %11726 = vmatprep.mubr.bf16.mxu0 0
    %11727 = vmatmul.mubr.bf16.gmra.mxu0 %v10932
    %v11728 = vpop.f32.mrf.mxu0
    %v11729 = vadd.f32 %v10676, %v11728
    %v11730 = vpop.f32.mrf.mxu0
    %v11731 = vpop.f32.mrf.mxu0
    %v11732 = vadd.f32 %v10676, %v11731
    %v11733 = vpop.f32.mrf.mxu0
    %11734 = vmatprep.mubr.bf16.mxu0 0
    %11735 = vmatmul.mubr.bf16.gmra.mxu0 %v10935
    %v11736 = vpop.f32.mrf.mxu0
    %v11737 = vadd.f32 %v10676, %v11736
    %v11738 = vpop.f32.mrf.mxu0
    %v11739 = vpop.f32.mrf.mxu0
    %v11740 = vadd.f32 %v10676, %v11739
    %v11741 = vpop.f32.mrf.mxu0
    %11742 = vmatprep.mubr.bf16.mxu0 0
    %11743 = vmatmul.mubr.bf16.gmra.mxu0 %v10938
    %v11744 = vpop.f32.mrf.mxu0
    %v11745 = vadd.f32 %v10676, %v11744
    %v11746 = vpop.f32.mrf.mxu0
    %v11747 = vpop.f32.mrf.mxu0
    %v11748 = vadd.f32 %v10676, %v11747
    %v11749 = vpop.f32.mrf.mxu0
    %11750 = vmatprep.mubr.bf16.mxu0 0
    %11751 = vmatmul.mubr.bf16.gmra.mxu0 %v10941
    %v11752 = vpop.f32.mrf.mxu0
    %v11753 = vadd.f32 %v10676, %v11752
    %v11754 = vpop.f32.mrf.mxu0
    %v11755 = vpop.f32.mrf.mxu0
    %v11756 = vadd.f32 %v10676, %v11755
    %v11757 = vpop.f32.mrf.mxu0
    %11758 = vmatprep.mubr.bf16.mxu0 0
    %11759 = vmatmul.mubr.bf16.gmra.mxu0 %v10944
    %v11760 = vpop.f32.mrf.mxu0
    %v11761 = vadd.f32 %v10676, %v11760
    %v11762 = vpop.f32.mrf.mxu0
    %v11763 = vpop.f32.mrf.mxu0
    %v11764 = vadd.f32 %v10676, %v11763
    %v11765 = vpop.f32.mrf.mxu0
    %11766 = vmatprep.mubr.bf16.mxu0 0
    %11767 = vmatmul.mubr.bf16.gmra.mxu0 %v10947
    %v11768 = vpop.f32.mrf.mxu0
    %v11769 = vadd.f32 %v10676, %v11768
    %v11770 = vpop.f32.mrf.mxu0
    %v11771 = vpop.f32.mrf.mxu0
    %v11772 = vadd.f32 %v10676, %v11771
    %v11773 = vpop.f32.mrf.mxu0
    %11774 = vmatprep.mubr.bf16.mxu0 0
    %11775 = vmatmul.mubr.bf16.gmra.mxu0 %v10950
    %v11776 = vpop.f32.mrf.mxu0
    %v11777 = vadd.f32 %v10676, %v11776
    %v11778 = vpop.f32.mrf.mxu0
    %v11779 = vpop.f32.mrf.mxu0
    %v11780 = vadd.f32 %v10676, %v11779
    %v11781 = vpop.f32.mrf.mxu0
    %11782 = vmatprep.mubr.bf16.mxu0 0
    %11783 = vmatmul.mubr.bf16.gmra.mxu0 %v10953
    %v11784 = vpop.f32.mrf.mxu0
    %v11785 = vadd.f32 %v10676, %v11784
    %v11786 = vpop.f32.mrf.mxu0
    %v11787 = vpop.f32.mrf.mxu0
    %v11788 = vadd.f32 %v10676, %v11787
    %v11789 = vpop.f32.mrf.mxu0
    %11790 = vmatprep.mubr.bf16.mxu0 0
    %11791 = vmatmul.mubr.bf16.gmra.mxu0 %v10956
    %v11792 = vpop.f32.mrf.mxu0
    %v11793 = vadd.f32 %v10676, %v11792
    %v11794 = vpop.f32.mrf.mxu0
    %v11795 = vpop.f32.mrf.mxu0
    %v11796 = vadd.f32 %v10676, %v11795
    %v11797 = vpop.f32.mrf.mxu0
    %11798 = vmatprep.mubr.bf16.mxu0 0
    %11799 = vmatmul.mubr.bf16.gmra.mxu0 %v10959
    %v11800 = vpop.f32.mrf.mxu0
    %v11801 = vadd.f32 %v10676, %v11800
    %v11802 = vpop.f32.mrf.mxu0
    %v11803 = vpop.f32.mrf.mxu0
    %v11804 = vadd.f32 %v10676, %v11803
    %v11805 = vpop.f32.mrf.mxu0
    %11806 = vmatprep.mubr.bf16.mxu0 0
    %11807 = vmatmul.mubr.bf16.gmra.mxu0 %v10962
    %v11808 = vpop.f32.mrf.mxu0
    %v11809 = vadd.f32 %v10676, %v11808
    %v11810 = vpop.f32.mrf.mxu0
    %v11811 = vpop.f32.mrf.mxu0
    %v11812 = vadd.f32 %v10676, %v11811
    %v11813 = vpop.f32.mrf.mxu0
    %11814 = vmatprep.mubr.bf16.mxu0 0
    %11815 = vmatmul.mubr.bf16.gmra.mxu0 %v10965
    %v11816 = vpop.f32.mrf.mxu0
    %v11817 = vadd.f32 %v10676, %v11816
    %v11818 = vpop.f32.mrf.mxu0
    %v11819 = vpop.f32.mrf.mxu0
    %v11820 = vadd.f32 %v10676, %v11819
    %v11821 = vpop.f32.mrf.mxu0
    %11822 = vmatprep.mubr.bf16.mxu0 0
    %11823 = vmatmul.mubr.bf16.gmra.mxu0 %v10968
    %v11824 = vpop.f32.mrf.mxu0
    %v11825 = vadd.f32 %v10676, %v11824
    %v11826 = vpop.f32.mrf.mxu0
    %v11827 = vpop.f32.mrf.mxu0
    %v11828 = vadd.f32 %v10676, %v11827
    %v11829 = vpop.f32.mrf.mxu0
    %11830 = vmatprep.mubr.bf16.mxu0 0
    %11831 = vmatmul.mubr.bf16.gmra.mxu0 %v10971
    %v11832 = vpop.f32.mrf.mxu0
    %v11833 = vadd.f32 %v10676, %v11832
    %v11834 = vpop.f32.mrf.mxu0
    %v11835 = vpop.f32.mrf.mxu0
    %v11836 = vadd.f32 %v10676, %v11835
    %v11837 = vpop.f32.mrf.mxu0
    %11838 = vmatprep.mubr.bf16.mxu0 0
    %11839 = vmatmul.mubr.bf16.gmra.mxu0 %v10974
    %v11840 = vpop.f32.mrf.mxu0
    %v11841 = vadd.f32 %v10676, %v11840
    %v11842 = vpop.f32.mrf.mxu0
    %v11843 = vpop.f32.mrf.mxu0
    %v11844 = vadd.f32 %v10676, %v11843
    %v11845 = vpop.f32.mrf.mxu0
    %11846 = vmatprep.mubr.bf16.mxu0 0
    %11847 = vmatmul.mubr.bf16.gmra.mxu0 %v10977
    %v11848 = vpop.f32.mrf.mxu0
    %v11849 = vadd.f32 %v10676, %v11848
    %v11850 = vpop.f32.mrf.mxu0
    %v11851 = vpop.f32.mrf.mxu0
    %v11852 = vadd.f32 %v10676, %v11851
    %v11853 = vpop.f32.mrf.mxu0
    %11854 = vmatprep.mubr.bf16.mxu0 0
    %11855 = vmatmul.mubr.bf16.gmra.mxu0 %v10980
    %v11856 = vpop.f32.mrf.mxu0
    %v11857 = vadd.f32 %v10676, %v11856
    %v11858 = vpop.f32.mrf.mxu0
    %v11859 = vpop.f32.mrf.mxu0
    %v11860 = vadd.f32 %v10676, %v11859
    %v11861 = vpop.f32.mrf.mxu0
    %11862 = vmatprep.mubr.bf16.mxu0 0
    %11863 = vmatmul.mubr.bf16.gmra.mxu0 %v10983
    %v11864 = vpop.f32.mrf.mxu0
    %v11865 = vadd.f32 %v10676, %v11864
    %v11866 = vpop.f32.mrf.mxu0
    %v11867 = vpop.f32.mrf.mxu0
    %v11868 = vadd.f32 %v10676, %v11867
    %v11869 = vpop.f32.mrf.mxu0
    %11870 = vmatprep.mubr.bf16.mxu0 0
    %11871 = vmatmul.mubr.bf16.gmra.mxu0 %v10986
    %v11872 = vpop.f32.mrf.mxu0
    %v11873 = vadd.f32 %v10676, %v11872
    %v11874 = vpop.f32.mrf.mxu0
    %v11875 = vpop.f32.mrf.mxu0
    %v11876 = vadd.f32 %v10676, %v11875
    %v11877 = vpop.f32.mrf.mxu0
    %11878 = vmatprep.mubr.bf16.mxu0 0
    %11879 = vmatmul.mubr.bf16.gmra.mxu0 %v10989
    %v11880 = vpop.f32.mrf.mxu0
    %v11881 = vadd.f32 %v10676, %v11880
    %v11882 = vpop.f32.mrf.mxu0
    %v11883 = vpop.f32.mrf.mxu0
    %v11884 = vadd.f32 %v10676, %v11883
    %v11885 = vpop.f32.mrf.mxu0
    %11886 = vmatprep.mubr.bf16.mxu0 0
    %11887 = vmatmul.mubr.bf16.gmra.mxu0 %v10992
    %v11888 = vpop.f32.mrf.mxu0
    %v11889 = vadd.f32 %v10676, %v11888
    %v11890 = vpop.f32.mrf.mxu0
    %v11891 = vpop.f32.mrf.mxu0
    %v11892 = vadd.f32 %v10676, %v11891
    %v11893 = vpop.f32.mrf.mxu0
    %11894 = vmatprep.mubr.bf16.mxu0 0
    %11895 = vmatmul.mubr.bf16.gmra.mxu0 %v10995
    %v11896 = vpop.f32.mrf.mxu0
    %v11897 = vadd.f32 %v10676, %v11896
    %v11898 = vpop.f32.mrf.mxu0
    %v11899 = vpop.f32.mrf.mxu0
    %v11900 = vadd.f32 %v10676, %v11899
    %v11901 = vpop.f32.mrf.mxu0
    %11902 = vmatprep.mubr.bf16.mxu0 0
    %11903 = vmatmul.mubr.bf16.gmra.mxu0 %v10998
    %v11904 = vpop.f32.mrf.mxu0
    %v11905 = vadd.f32 %v10676, %v11904
    %v11906 = vpop.f32.mrf.mxu0
    %v11907 = vpop.f32.mrf.mxu0
    %v11908 = vadd.f32 %v10676, %v11907
    %v11909 = vpop.f32.mrf.mxu0
    %11910 = vmatprep.mubr.bf16.mxu0 0
    %11911 = vmatmul.mubr.bf16.gmra.mxu0 %v11001
    %v11912 = vpop.f32.mrf.mxu0
    %v11913 = vadd.f32 %v10676, %v11912
    %v11914 = vpop.f32.mrf.mxu0
    %v11915 = vpop.f32.mrf.mxu0
    %v11916 = vadd.f32 %v10676, %v11915
    %v11917 = vpop.f32.mrf.mxu0
    %11918 = vmatprep.mubr.bf16.mxu0 0
    %11919 = vmatmul.mubr.bf16.gmra.mxu0 %v11004
    %v11920 = vpop.f32.mrf.mxu0
    %v11921 = vadd.f32 %v10676, %v11920
    %v11922 = vpop.f32.mrf.mxu0
    %v11923 = vpop.f32.mrf.mxu0
    %v11924 = vadd.f32 %v10676, %v11923
    %v11925 = vpop.f32.mrf.mxu0
    %11926 = vmatprep.mubr.bf16.mxu0 0
    %11927 = vmatmul.mubr.bf16.gmra.mxu0 %v11007
    %v11928 = vpop.f32.mrf.mxu0
    %v11929 = vadd.f32 %v10676, %v11928
    %v11930 = vpop.f32.mrf.mxu0
    %v11931 = vpop.f32.mrf.mxu0
    %v11932 = vadd.f32 %v10676, %v11931
    %v11933 = vpop.f32.mrf.mxu0
    %11934 = vmatprep.mubr.bf16.mxu0 0
    %11935 = vmatmul.mubr.bf16.gmra.mxu0 %v11010
    %v11936 = vpop.f32.mrf.mxu0
    %v11937 = vadd.f32 %v10676, %v11936
    %v11938 = vpop.f32.mrf.mxu0
    %v11939 = vpop.f32.mrf.mxu0
    %v11940 = vadd.f32 %v10676, %v11939
    %v11941 = vpop.f32.mrf.mxu0
    %11942 = vmatprep.mubr.bf16.mxu0 0
    %11943 = vmatmul.mubr.bf16.gmra.mxu0 %v11013
    %v11944 = vpop.f32.mrf.mxu0
    %v11945 = vadd.f32 %v10676, %v11944
    %v11946 = vpop.f32.mrf.mxu0
    %v11947 = vpop.f32.mrf.mxu0
    %v11948 = vadd.f32 %v10676, %v11947
    %v11949 = vpop.f32.mrf.mxu0
    %11950 = vmatprep.mubr.bf16.mxu0 0
    %11951 = vmatmul.mubr.bf16.gmra.mxu0 %v11016
    %v11952 = vpop.f32.mrf.mxu0
    %v11953 = vadd.f32 %v10676, %v11952
    %v11954 = vpop.f32.mrf.mxu0
    %v11955 = vpop.f32.mrf.mxu0
    %v11956 = vadd.f32 %v10676, %v11955
    %v11957 = vpop.f32.mrf.mxu0
    %11958 = vmatprep.mubr.bf16.mxu0 0
    %11959 = vmatmul.mubr.bf16.gmra.mxu0 %v11019
    %v11960 = vpop.f32.mrf.mxu0
    %v11961 = vadd.f32 %v10676, %v11960
    %v11962 = vpop.f32.mrf.mxu0
    %v11963 = vpop.f32.mrf.mxu0
    %v11964 = vadd.f32 %v10676, %v11963
    %v11965 = vpop.f32.mrf.mxu0
    %11966 = vmatprep.mubr.bf16.mxu0 0
    %11967 = vmatmul.mubr.bf16.gmra.mxu0 %v11022
    %v11968 = vpop.f32.mrf.mxu0
    %v11969 = vadd.f32 %v10676, %v11968
    %v11970 = vpop.f32.mrf.mxu0
    %v11971 = vpop.f32.mrf.mxu0
    %v11972 = vadd.f32 %v10676, %v11971
    %v11973 = vpop.f32.mrf.mxu0
    %11974 = vmatprep.mubr.bf16.mxu0 0
    %11975 = vmatmul.mubr.bf16.gmra.mxu0 %v11025
    %v11976 = vpop.f32.mrf.mxu0
    %v11977 = vadd.f32 %v10676, %v11976
    %v11978 = vpop.f32.mrf.mxu0
    %v11979 = vpop.f32.mrf.mxu0
    %v11980 = vadd.f32 %v10676, %v11979
    %v11981 = vpop.f32.mrf.mxu0
    %11982 = vmatprep.mubr.bf16.mxu0 0
    %11983 = vmatmul.mubr.bf16.gmra.mxu0 %v11028
    %v11984 = vpop.f32.mrf.mxu0
    %v11985 = vadd.f32 %v10676, %v11984
    %v11986 = vpop.f32.mrf.mxu0
    %v11987 = vpop.f32.mrf.mxu0
    %v11988 = vadd.f32 %v10676, %v11987
    %v11989 = vpop.f32.mrf.mxu0
    %11990 = vmatprep.mubr.bf16.mxu0 0
    %11991 = vmatmul.mubr.bf16.gmra.mxu0 %v11031
    %v11992 = vpop.f32.mrf.mxu0
    %v11993 = vadd.f32 %v10676, %v11992
    %v11994 = vpop.f32.mrf.mxu0
    %v11995 = vpop.f32.mrf.mxu0
    %v11996 = vadd.f32 %v10676, %v11995
    %v11997 = vpop.f32.mrf.mxu0
    %11998 = vmatprep.mubr.bf16.mxu0 0
    %11999 = vmatmul.mubr.bf16.gmra.mxu0 %v11034
    %v12000 = vpop.f32.mrf.mxu0
    %v12001 = vadd.f32 %v10676, %v12000
    %v12002 = vpop.f32.mrf.mxu0
    %v12003 = vpop.f32.mrf.mxu0
    %v12004 = vadd.f32 %v10676, %v12003
    %v12005 = vpop.f32.mrf.mxu0
    %12006 = vmatprep.mubr.bf16.mxu0 0
    %12007 = vmatmul.mubr.bf16.gmra.mxu0 %v11037
    %v12008 = vpop.f32.mrf.mxu0
    %v12009 = vadd.f32 %v10676, %v12008
    %v12010 = vpop.f32.mrf.mxu0
    %v12011 = vpop.f32.mrf.mxu0
    %v12012 = vadd.f32 %v10676, %v12011
    %v12013 = vpop.f32.mrf.mxu0
    %12014 = vmatprep.mubr.bf16.mxu0 0
    %12015 = vmatmul.mubr.bf16.gmra.mxu0 %v11040
    %v12016 = vpop.f32.mrf.mxu0
    %v12017 = vadd.f32 %v10676, %v12016
    %v12018 = vpop.f32.mrf.mxu0
    %v12019 = vpop.f32.mrf.mxu0
    %v12020 = vadd.f32 %v10676, %v12019
    %v12021 = vpop.f32.mrf.mxu0
    %12022 = vmatprep.mubr.bf16.mxu0 0
    %12023 = vmatmul.mubr.bf16.gmra.mxu0 %v11043
    %v12024 = vpop.f32.mrf.mxu0
    %v12025 = vadd.f32 %v10676, %v12024
    %v12026 = vpop.f32.mrf.mxu0
    %v12027 = vpop.f32.mrf.mxu0
    %v12028 = vadd.f32 %v10676, %v12027
    %v12029 = vpop.f32.mrf.mxu0
    %12030 = vmatprep.mubr.bf16.mxu0 0
    %12031 = vmatmul.mubr.bf16.gmra.mxu0 %v11046
    %v12032 = vpop.f32.mrf.mxu0
    %v12033 = vadd.f32 %v10676, %v12032
    %v12034 = vpop.f32.mrf.mxu0
    %v12035 = vpop.f32.mrf.mxu0
    %v12036 = vadd.f32 %v10676, %v12035
    %v12037 = vpop.f32.mrf.mxu0
    %12038 = vmatprep.mubr.bf16.mxu0 0
    %12039 = vmatmul.mubr.bf16.gmra.mxu0 %v11049
    %v12040 = vpop.f32.mrf.mxu0
    %v12041 = vadd.f32 %v10676, %v12040
    %v12042 = vpop.f32.mrf.mxu0
    %v12043 = vpop.f32.mrf.mxu0
    %v12044 = vadd.f32 %v10676, %v12043
    %v12045 = vpop.f32.mrf.mxu0
    %12046 = vmatprep.mubr.bf16.mxu0 0
    %12047 = vmatmul.mubr.bf16.gmra.mxu0 %v11052
    %v12048 = vpop.f32.mrf.mxu0
    %v12049 = vadd.f32 %v10676, %v12048
    %v12050 = vpop.f32.mrf.mxu0
    %v12051 = vpop.f32.mrf.mxu0
    %v12052 = vadd.f32 %v10676, %v12051
    %v12053 = vpop.f32.mrf.mxu0
    %12054 = vmatprep.mubr.bf16.mxu0 0
    %12055 = vmatmul.mubr.bf16.gmra.mxu0 %v11055
    %v12056 = vpop.f32.mrf.mxu0
    %v12057 = vadd.f32 %v10676, %v12056
    %v12058 = vpop.f32.mrf.mxu0
    %v12059 = vpop.f32.mrf.mxu0
    %v12060 = vadd.f32 %v10676, %v12059
    %v12061 = vpop.f32.mrf.mxu0
    %12062 = vmatprep.mubr.bf16.mxu0 0
    %12063 = vmatmul.mubr.bf16.gmra.mxu0 %v11058
    %v12064 = vpop.f32.mrf.mxu0
    %v12065 = vadd.f32 %v10676, %v12064
    %v12066 = vpop.f32.mrf.mxu0
    %v12067 = vpop.f32.mrf.mxu0
    %v12068 = vadd.f32 %v10676, %v12067
    %v12069 = vpop.f32.mrf.mxu0
    %12070 = vmatprep.mubr.bf16.mxu0 0
    %12071 = vmatmul.mubr.bf16.gmra.mxu0 %v11061
    %v12072 = vpop.f32.mrf.mxu0
    %v12073 = vadd.f32 %v10676, %v12072
    %v12074 = vpop.f32.mrf.mxu0
    %v12075 = vpop.f32.mrf.mxu0
    %v12076 = vadd.f32 %v10676, %v12075
    %v12077 = vpop.f32.mrf.mxu0
    %12078 = vmatprep.mubr.bf16.mxu0 0
    %12079 = vmatmul.mubr.bf16.gmra.mxu0 %v11064
    %v12080 = vpop.f32.mrf.mxu0
    %v12081 = vadd.f32 %v10676, %v12080
    %v12082 = vpop.f32.mrf.mxu0
    %v12083 = vpop.f32.mrf.mxu0
    %v12084 = vadd.f32 %v10676, %v12083
    %v12085 = vpop.f32.mrf.mxu0
    %12086 = vmatprep.mubr.bf16.mxu0 0
    %12087 = vmatmul.mubr.bf16.gmra.mxu0 %v11067
    %v12088 = vpop.f32.mrf.mxu0
    %v12089 = vadd.f32 %v10676, %v12088
    %v12090 = vpop.f32.mrf.mxu0
    %v12091 = vpop.f32.mrf.mxu0
    %v12092 = vadd.f32 %v10676, %v12091
    %v12093 = vpop.f32.mrf.mxu0
    %12094 = vmatprep.mubr.bf16.mxu0 0
    %12095 = vmatmul.mubr.bf16.gmra.mxu0 %v11070
    %v12096 = vpop.f32.mrf.mxu0
    %v12097 = vadd.f32 %v10676, %v12096
    %v12098 = vpop.f32.mrf.mxu0
    %v12099 = vpop.f32.mrf.mxu0
    %v12100 = vadd.f32 %v10676, %v12099
    %v12101 = vpop.f32.mrf.mxu0
    %12102 = vmatprep.mubr.bf16.mxu0 0
    %12103 = vmatmul.mubr.bf16.gmra.mxu0 %v11073
    %v12104 = vpop.f32.mrf.mxu0
    %v12105 = vadd.f32 %v10676, %v12104
    %v12106 = vpop.f32.mrf.mxu0
    %v12107 = vpop.f32.mrf.mxu0
    %v12108 = vadd.f32 %v10676, %v12107
    %v12109 = vpop.f32.mrf.mxu0
    %12110 = vmatprep.mubr.bf16.mxu0 0
    %12111 = vmatmul.mubr.bf16.gmra.mxu0 %v11076
    %v12112 = vpop.f32.mrf.mxu0
    %v12113 = vadd.f32 %v10676, %v12112
    %v12114 = vpop.f32.mrf.mxu0
    %v12115 = vpop.f32.mrf.mxu0
    %v12116 = vadd.f32 %v10676, %v12115
    %v12117 = vpop.f32.mrf.mxu0
    %12118 = vmatprep.mubr.bf16.mxu0 0
    %12119 = vmatmul.mubr.bf16.gmra.mxu0 %v11079
    %v12120 = vpop.f32.mrf.mxu0
    %v12121 = vadd.f32 %v10676, %v12120
    %v12122 = vpop.f32.mrf.mxu0
    %v12123 = vpop.f32.mrf.mxu0
    %v12124 = vadd.f32 %v10676, %v12123
    %v12125 = vpop.f32.mrf.mxu0
    %12126 = vmatprep.mubr.bf16.mxu0 0
    %12127 = vmatmul.mubr.bf16.gmra.mxu0 %v11082
    %v12128 = vpop.f32.mrf.mxu0
    %v12129 = vadd.f32 %v10676, %v12128
    %v12130 = vpop.f32.mrf.mxu0
    %v12131 = vpop.f32.mrf.mxu0
    %v12132 = vadd.f32 %v10676, %v12131
    %v12133 = vpop.f32.mrf.mxu0
    %12134 = vmatprep.mubr.bf16.mxu0 0
    %12135 = vmatmul.mubr.bf16.gmra.mxu0 %v11085
    %v12136 = vpop.f32.mrf.mxu0
    %v12137 = vadd.f32 %v10676, %v12136
    %v12138 = vpop.f32.mrf.mxu0
    %v12139 = vpop.f32.mrf.mxu0
    %v12140 = vadd.f32 %v10676, %v12139
    %v12141 = vpop.f32.mrf.mxu0
    %12142 = vmatprep.mubr.bf16.mxu0 0
    %12143 = vmatmul.mubr.bf16.gmra.mxu0 %v11088
    %v12144 = vpop.f32.mrf.mxu0
    %v12145 = vadd.f32 %v10676, %v12144
    %v12146 = vpop.f32.mrf.mxu0
    %v12147 = vpop.f32.mrf.mxu0
    %v12148 = vadd.f32 %v10676, %v12147
    %v12149 = vpop.f32.mrf.mxu0
    %12150 = vdwg.mxu0
    %v12151 = vmax.f32 %v11129, 0.0
    %v12152 = vmax.f32 %v11132, 0.0
    %v12153 = vmax.f32 %v11137, 0.0
    %v12154 = vmax.f32 %v11140, 0.0
    %v12155 = vmax.f32 %v11145, 0.0
    %v12156 = vmax.f32 %v11148, 0.0
    %v12157 = vmax.f32 %v11153, 0.0
    %v12158 = vmax.f32 %v11156, 0.0
    %v12159 = vmax.f32 %v11161, 0.0
    %v12160 = vmax.f32 %v11164, 0.0
    %v12161 = vmax.f32 %v11169, 0.0
    %v12162 = vmax.f32 %v11172, 0.0
    %v12163 = vmax.f32 %v11177, 0.0
    %v12164 = vmax.f32 %v11180, 0.0
    %v12165 = vmax.f32 %v11185, 0.0
    %v12166 = vmax.f32 %v11188, 0.0
    %v12167 = vmax.f32 %v11193, 0.0
    %v12168 = vmax.f32 %v11196, 0.0
    %v12169 = vmax.f32 %v11201, 0.0
    %v12170 = vmax.f32 %v11204, 0.0
    %v12171 = vmax.f32 %v11209, 0.0
    %v12172 = vmax.f32 %v11212, 0.0
    %v12173 = vmax.f32 %v11217, 0.0
    %v12174 = vmax.f32 %v11220, 0.0
    %v12175 = vmax.f32 %v11225, 0.0
    %v12176 = vmax.f32 %v11228, 0.0
    %v12177 = vmax.f32 %v11233, 0.0
    %v12178 = vmax.f32 %v11236, 0.0
    %v12179 = vmax.f32 %v11241, 0.0
    %v12180 = vmax.f32 %v11244, 0.0
    %v12181 = vmax.f32 %v11249, 0.0
    %v12182 = vmax.f32 %v11252, 0.0
    %v12183 = vmax.f32 %v11257, 0.0
    %v12184 = vmax.f32 %v11260, 0.0
    %v12185 = vmax.f32 %v11265, 0.0
    %v12186 = vmax.f32 %v11268, 0.0
    %v12187 = vmax.f32 %v11273, 0.0
    %v12188 = vmax.f32 %v11276, 0.0
    %v12189 = vmax.f32 %v11281, 0.0
    %v12190 = vmax.f32 %v11284, 0.0
    %v12191 = vmax.f32 %v11289, 0.0
    %v12192 = vmax.f32 %v11292, 0.0
    %v12193 = vmax.f32 %v11297, 0.0
    %v12194 = vmax.f32 %v11300, 0.0
    %v12195 = vmax.f32 %v11305, 0.0
    %v12196 = vmax.f32 %v11308, 0.0
    %v12197 = vmax.f32 %v11313, 0.0
    %v12198 = vmax.f32 %v11316, 0.0
    %v12199 = vmax.f32 %v11321, 0.0
    %v12200 = vmax.f32 %v11324, 0.0
    %v12201 = vmax.f32 %v11329, 0.0
    %v12202 = vmax.f32 %v11332, 0.0
    %v12203 = vmax.f32 %v11337, 0.0
    %v12204 = vmax.f32 %v11340, 0.0
    %v12205 = vmax.f32 %v11345, 0.0
    %v12206 = vmax.f32 %v11348, 0.0
    %v12207 = vmax.f32 %v11353, 0.0
    %v12208 = vmax.f32 %v11356, 0.0
    %v12209 = vmax.f32 %v11361, 0.0
    %v12210 = vmax.f32 %v11364, 0.0
    %v12211 = vmax.f32 %v11369, 0.0
    %v12212 = vmax.f32 %v11372, 0.0
    %v12213 = vmax.f32 %v11377, 0.0
    %v12214 = vmax.f32 %v11380, 0.0
    %v12215 = vmax.f32 %v11385, 0.0
    %v12216 = vmax.f32 %v11388, 0.0
    %v12217 = vmax.f32 %v11393, 0.0
    %v12218 = vmax.f32 %v11396, 0.0
    %v12219 = vmax.f32 %v11401, 0.0
    %v12220 = vmax.f32 %v11404, 0.0
    %v12221 = vmax.f32 %v11409, 0.0
    %v12222 = vmax.f32 %v11412, 0.0
    %v12223 = vmax.f32 %v11417, 0.0
    %v12224 = vmax.f32 %v11420, 0.0
    %v12225 = vmax.f32 %v11425, 0.0
    %v12226 = vmax.f32 %v11428, 0.0
    %v12227 = vmax.f32 %v11433, 0.0
    %v12228 = vmax.f32 %v11436, 0.0
    %v12229 = vmax.f32 %v11441, 0.0
    %v12230 = vmax.f32 %v11444, 0.0
    %v12231 = vmax.f32 %v11449, 0.0
    %v12232 = vmax.f32 %v11452, 0.0
    %v12233 = vmax.f32 %v11457, 0.0
    %v12234 = vmax.f32 %v11460, 0.0
    %v12235 = vmax.f32 %v11465, 0.0
    %v12236 = vmax.f32 %v11468, 0.0
    %v12237 = vmax.f32 %v11473, 0.0
    %v12238 = vmax.f32 %v11476, 0.0
    %v12239 = vmax.f32 %v11481, 0.0
    %v12240 = vmax.f32 %v11484, 0.0
    %v12241 = vmax.f32 %v11489, 0.0
    %v12242 = vmax.f32 %v11492, 0.0
    %v12243 = vmax.f32 %v11497, 0.0
    %v12244 = vmax.f32 %v11500, 0.0
    %v12245 = vmax.f32 %v11505, 0.0
    %v12246 = vmax.f32 %v11508, 0.0
    %v12247 = vmax.f32 %v11513, 0.0
    %v12248 = vmax.f32 %v11516, 0.0
    %v12249 = vmax.f32 %v11521, 0.0
    %v12250 = vmax.f32 %v11524, 0.0
    %v12251 = vmax.f32 %v11529, 0.0
    %v12252 = vmax.f32 %v11532, 0.0
    %v12253 = vmax.f32 %v11537, 0.0
    %v12254 = vmax.f32 %v11540, 0.0
    %v12255 = vmax.f32 %v11545, 0.0
    %v12256 = vmax.f32 %v11548, 0.0
    %v12257 = vmax.f32 %v11553, 0.0
    %v12258 = vmax.f32 %v11556, 0.0
    %v12259 = vmax.f32 %v11561, 0.0
    %v12260 = vmax.f32 %v11564, 0.0
    %v12261 = vmax.f32 %v11569, 0.0
    %v12262 = vmax.f32 %v11572, 0.0
    %v12263 = vmax.f32 %v11577, 0.0
    %v12264 = vmax.f32 %v11580, 0.0
    %v12265 = vmax.f32 %v11585, 0.0
    %v12266 = vmax.f32 %v11588, 0.0
    %v12267 = vmax.f32 %v11593, 0.0
    %v12268 = vmax.f32 %v11596, 0.0
    %v12269 = vmax.f32 %v11601, 0.0
    %v12270 = vmax.f32 %v11604, 0.0
    %v12271 = vmax.f32 %v11609, 0.0
    %v12272 = vmax.f32 %v11612, 0.0
    %v12273 = vmax.f32 %v11617, 0.0
    %v12274 = vmax.f32 %v11620, 0.0
    %v12275 = vmax.f32 %v11625, 0.0
    %v12276 = vmax.f32 %v11628, 0.0
    %v12277 = vmax.f32 %v11633, 0.0
    %v12278 = vmax.f32 %v11636, 0.0
    %v12279 = vmax.f32 %v11641, 0.0
    %v12280 = vmax.f32 %v11644, 0.0
    %v12281 = vmax.f32 %v11649, 0.0
    %v12282 = vmax.f32 %v11652, 0.0
    %v12283 = vmax.f32 %v11657, 0.0
    %v12284 = vmax.f32 %v11660, 0.0
    %v12285 = vmax.f32 %v11665, 0.0
    %v12286 = vmax.f32 %v11668, 0.0
    %v12287 = vmax.f32 %v11673, 0.0
    %v12288 = vmax.f32 %v11676, 0.0
    %v12289 = vmax.f32 %v11681, 0.0
    %v12290 = vmax.f32 %v11684, 0.0
    %v12291 = vmax.f32 %v11689, 0.0
    %v12292 = vmax.f32 %v11692, 0.0
    %v12293 = vmax.f32 %v11697, 0.0
    %v12294 = vmax.f32 %v11700, 0.0
    %v12295 = vmax.f32 %v11705, 0.0
    %v12296 = vmax.f32 %v11708, 0.0
    %v12297 = vmax.f32 %v11713, 0.0
    %v12298 = vmax.f32 %v11716, 0.0
    %v12299 = vmax.f32 %v11721, 0.0
    %v12300 = vmax.f32 %v11724, 0.0
    %v12301 = vmax.f32 %v11729, 0.0
    %v12302 = vmax.f32 %v11732, 0.0
    %v12303 = vmax.f32 %v11737, 0.0
    %v12304 = vmax.f32 %v11740, 0.0
    %v12305 = vmax.f32 %v11745, 0.0
    %v12306 = vmax.f32 %v11748, 0.0
    %v12307 = vmax.f32 %v11753, 0.0
    %v12308 = vmax.f32 %v11756, 0.0
    %v12309 = vmax.f32 %v11761, 0.0
    %v12310 = vmax.f32 %v11764, 0.0
    %v12311 = vmax.f32 %v11769, 0.0
    %v12312 = vmax.f32 %v11772, 0.0
    %v12313 = vmax.f32 %v11777, 0.0
    %v12314 = vmax.f32 %v11780, 0.0
    %v12315 = vmax.f32 %v11785, 0.0
    %v12316 = vmax.f32 %v11788, 0.0
    %v12317 = vmax.f32 %v11793, 0.0
    %v12318 = vmax.f32 %v11796, 0.0
    %v12319 = vmax.f32 %v11801, 0.0
    %v12320 = vmax.f32 %v11804, 0.0
    %v12321 = vmax.f32 %v11809, 0.0
    %v12322 = vmax.f32 %v11812, 0.0
    %v12323 = vmax.f32 %v11817, 0.0
    %v12324 = vmax.f32 %v11820, 0.0
    %v12325 = vmax.f32 %v11825, 0.0
    %v12326 = vmax.f32 %v11828, 0.0
    %v12327 = vmax.f32 %v11833, 0.0
    %v12328 = vmax.f32 %v11836, 0.0
    %v12329 = vmax.f32 %v11841, 0.0
    %v12330 = vmax.f32 %v11844, 0.0
    %v12331 = vmax.f32 %v11849, 0.0
    %v12332 = vmax.f32 %v11852, 0.0
    %v12333 = vmax.f32 %v11857, 0.0
    %v12334 = vmax.f32 %v11860, 0.0
    %v12335 = vmax.f32 %v11865, 0.0
    %v12336 = vmax.f32 %v11868, 0.0
    %v12337 = vmax.f32 %v11873, 0.0
    %v12338 = vmax.f32 %v11876, 0.0
    %v12339 = vmax.f32 %v11881, 0.0
    %v12340 = vmax.f32 %v11884, 0.0
    %v12341 = vmax.f32 %v11889, 0.0
    %v12342 = vmax.f32 %v11892, 0.0
    %v12343 = vmax.f32 %v11897, 0.0
    %v12344 = vmax.f32 %v11900, 0.0
    %v12345 = vmax.f32 %v11905, 0.0
    %v12346 = vmax.f32 %v11908, 0.0
    %v12347 = vmax.f32 %v11913, 0.0
    %v12348 = vmax.f32 %v11916, 0.0
    %v12349 = vmax.f32 %v11921, 0.0
    %v12350 = vmax.f32 %v11924, 0.0
    %v12351 = vmax.f32 %v11929, 0.0
    %v12352 = vmax.f32 %v11932, 0.0
    %v12353 = vmax.f32 %v11937, 0.0
    %v12354 = vmax.f32 %v11940, 0.0
    %v12355 = vmax.f32 %v11945, 0.0
    %v12356 = vmax.f32 %v11948, 0.0
    %v12357 = vmax.f32 %v11953, 0.0
    %v12358 = vmax.f32 %v11956, 0.0
    %v12359 = vmax.f32 %v11961, 0.0
    %v12360 = vmax.f32 %v11964, 0.0
    %v12361 = vmax.f32 %v11969, 0.0
    %v12362 = vmax.f32 %v11972, 0.0
    %v12363 = vmax.f32 %v11977, 0.0
    %v12364 = vmax.f32 %v11980, 0.0
    %v12365 = vmax.f32 %v11985, 0.0
    %v12366 = vmax.f32 %v11988, 0.0
    %v12367 = vmax.f32 %v11993, 0.0
    %v12368 = vmax.f32 %v11996, 0.0
    %v12369 = vmax.f32 %v12001, 0.0
    %v12370 = vmax.f32 %v12004, 0.0
    %v12371 = vmax.f32 %v12009, 0.0
    %v12372 = vmax.f32 %v12012, 0.0
    %v12373 = vmax.f32 %v12017, 0.0
    %v12374 = vmax.f32 %v12020, 0.0
    %v12375 = vmax.f32 %v12025, 0.0
    %v12376 = vmax.f32 %v12028, 0.0
    %v12377 = vmax.f32 %v12033, 0.0
    %v12378 = vmax.f32 %v12036, 0.0
    %v12379 = vmax.f32 %v12041, 0.0
    %v12380 = vmax.f32 %v12044, 0.0
    %v12381 = vmax.f32 %v12049, 0.0
    %v12382 = vmax.f32 %v12052, 0.0
    %v12383 = vmax.f32 %v12057, 0.0
    %v12384 = vmax.f32 %v12060, 0.0
    %v12385 = vmax.f32 %v12065, 0.0
    %v12386 = vmax.f32 %v12068, 0.0
    %v12387 = vmax.f32 %v12073, 0.0
    %v12388 = vmax.f32 %v12076, 0.0
    %v12389 = vmax.f32 %v12081, 0.0
    %v12390 = vmax.f32 %v12084, 0.0
    %v12391 = vmax.f32 %v12089, 0.0
    %v12392 = vmax.f32 %v12092, 0.0
    %v12393 = vmax.f32 %v12097, 0.0
    %v12394 = vmax.f32 %v12100, 0.0
    %v12395 = vmax.f32 %v12105, 0.0
    %v12396 = vmax.f32 %v12108, 0.0
    %v12397 = vmax.f32 %v12113, 0.0
    %v12398 = vmax.f32 %v12116, 0.0
    %v12399 = vmax.f32 %v12121, 0.0
    %v12400 = vmax.f32 %v12124, 0.0
    %v12401 = vmax.f32 %v12129, 0.0
    %v12402 = vmax.f32 %v12132, 0.0
    %v12403 = vmax.f32 %v12137, 0.0
    %v12404 = vmax.f32 %v12140, 0.0
    %v12405 = vmax.f32 %v12145, 0.0
    %v12406 = vmax.f32 %v12148, 0.0
    %v12407 = vsel %vm9249, %v12151, 0.0
    %v12408 = vsel %vm9249, %v12152, 0.0
    %v12409 = vadd.f32 %v12407, %v12408
    %v12410 = vsel %vm9249, %v12153, 0.0
    %v12411 = vadd.f32 %v12409, %v12410
    %v12412 = vsel %vm9249, %v12154, 0.0
    %v12413 = vadd.f32 %v12411, %v12412
    %v12414 = vsel %vm9249, %v12155, 0.0
    %v12415 = vadd.f32 %v12413, %v12414
    %v12416 = vsel %vm9249, %v12156, 0.0
    %v12417 = vadd.f32 %v12415, %v12416
    %v12418 = vsel %vm9249, %v12157, 0.0
    %v12419 = vadd.f32 %v12417, %v12418
    %v12420 = vsel %vm9249, %v12158, 0.0
    %v12421 = vadd.f32 %v12419, %v12420
    %v12422 = vsel %vm9249, %v12159, 0.0
    %v12423 = vadd.f32 %v12421, %v12422
    %v12424 = vsel %vm9249, %v12160, 0.0
    %v12425 = vadd.f32 %v12423, %v12424
    %v12426 = vsel %vm9249, %v12161, 0.0
    %v12427 = vadd.f32 %v12425, %v12426
    %v12428 = vsel %vm9249, %v12162, 0.0
    %v12429 = vadd.f32 %v12427, %v12428
    %v12430 = vsel %vm9249, %v12163, 0.0
    %v12431 = vadd.f32 %v12429, %v12430
    %v12432 = vsel %vm9249, %v12164, 0.0
    %v12433 = vadd.f32 %v12431, %v12432
    %v12434 = vsel %vm9249, %v12165, 0.0
    %v12435 = vadd.f32 %v12433, %v12434
    %v12436 = vsel %vm9249, %v12166, 0.0
    %v12437 = vadd.f32 %v12435, %v12436
    %v12438 = vsel %vm9249, %v12167, 0.0
    %v12439 = vadd.f32 %v12437, %v12438
    %v12440 = vsel %vm9249, %v12168, 0.0
    %v12441 = vadd.f32 %v12439, %v12440
    %v12442 = vsel %vm9249, %v12169, 0.0
    %v12443 = vadd.f32 %v12441, %v12442
    %v12444 = vsel %vm9249, %v12170, 0.0
    %v12445 = vadd.f32 %v12443, %v12444
    %v12446 = vsel %vm9249, %v12171, 0.0
    %v12447 = vadd.f32 %v12445, %v12446
    %v12448 = vsel %vm9249, %v12172, 0.0
    %v12449 = vadd.f32 %v12447, %v12448
    %v12450 = vsel %vm9249, %v12173, 0.0
    %v12451 = vadd.f32 %v12449, %v12450
    %v12452 = vsel %vm9249, %v12174, 0.0
    %v12453 = vadd.f32 %v12451, %v12452
    %v12454 = vsel %vm9249, %v12175, 0.0
    %v12455 = vadd.f32 %v12453, %v12454
    %v12456 = vsel %vm9249, %v12176, 0.0
    %v12457 = vadd.f32 %v12455, %v12456
    %v12458 = vsel %vm9249, %v12177, 0.0
    %v12459 = vadd.f32 %v12457, %v12458
    %v12460 = vsel %vm9249, %v12178, 0.0
    %v12461 = vadd.f32 %v12459, %v12460
    %v12462 = vsel %vm9249, %v12179, 0.0
    %v12463 = vadd.f32 %v12461, %v12462
    %v12464 = vsel %vm9249, %v12180, 0.0
    %v12465 = vadd.f32 %v12463, %v12464
    %v12466 = vsel %vm9249, %v12181, 0.0
    %v12467 = vadd.f32 %v12465, %v12466
    %v12468 = vsel %vm9249, %v12182, 0.0
    %v12469 = vadd.f32 %v12467, %v12468
    %v12470 = vrot.slane %v12469, 4
    %v12471 = vadd.f32 %v12469, %v12470
    %v12472 = vrot.slane %v12471, 2
    %v12473 = vadd.f32 %v12471, %v12472
    %v12474 = vrot.slane %v12473, 1
    %v12475 = vadd.f32 %v12473, %v12474
    %v12476 = vsel %vm9249, %v12183, 0.0
    %v12477 = vsel %vm9249, %v12184, 0.0
    %v12478 = vadd.f32 %v12476, %v12477
    %v12479 = vsel %vm9249, %v12185, 0.0
    %v12480 = vadd.f32 %v12478, %v12479
    %v12481 = vsel %vm9249, %v12186, 0.0
    %v12482 = vadd.f32 %v12480, %v12481
    %v12483 = vsel %vm9249, %v12187, 0.0
    %v12484 = vadd.f32 %v12482, %v12483
    %v12485 = vsel %vm9249, %v12188, 0.0
    %v12486 = vadd.f32 %v12484, %v12485
    %v12487 = vsel %vm9249, %v12189, 0.0
    %v12488 = vadd.f32 %v12486, %v12487
    %v12489 = vsel %vm9249, %v12190, 0.0
    %v12490 = vadd.f32 %v12488, %v12489
    %v12491 = vsel %vm9249, %v12191, 0.0
    %v12492 = vadd.f32 %v12490, %v12491
    %v12493 = vsel %vm9249, %v12192, 0.0
    %v12494 = vadd.f32 %v12492, %v12493
    %v12495 = vsel %vm9249, %v12193, 0.0
    %v12496 = vadd.f32 %v12494, %v12495
    %v12497 = vsel %vm9249, %v12194, 0.0
    %v12498 = vadd.f32 %v12496, %v12497
    %v12499 = vsel %vm9249, %v12195, 0.0
    %v12500 = vadd.f32 %v12498, %v12499
    %v12501 = vsel %vm9249, %v12196, 0.0
    %v12502 = vadd.f32 %v12500, %v12501
    %v12503 = vsel %vm9249, %v12197, 0.0
    %v12504 = vadd.f32 %v12502, %v12503
    %v12505 = vsel %vm9249, %v12198, 0.0
    %v12506 = vadd.f32 %v12504, %v12505
    %v12507 = vsel %vm9249, %v12199, 0.0
    %v12508 = vadd.f32 %v12506, %v12507
    %v12509 = vsel %vm9249, %v12200, 0.0
    %v12510 = vadd.f32 %v12508, %v12509
    %v12511 = vsel %vm9249, %v12201, 0.0
    %v12512 = vadd.f32 %v12510, %v12511
    %v12513 = vsel %vm9249, %v12202, 0.0
    %v12514 = vadd.f32 %v12512, %v12513
    %v12515 = vsel %vm9249, %v12203, 0.0
    %v12516 = vadd.f32 %v12514, %v12515
    %v12517 = vsel %vm9249, %v12204, 0.0
    %v12518 = vadd.f32 %v12516, %v12517
    %v12519 = vsel %vm9249, %v12205, 0.0
    %v12520 = vadd.f32 %v12518, %v12519
    %v12521 = vsel %vm9249, %v12206, 0.0
    %v12522 = vadd.f32 %v12520, %v12521
    %v12523 = vsel %vm9249, %v12207, 0.0
    %v12524 = vadd.f32 %v12522, %v12523
    %v12525 = vsel %vm9249, %v12208, 0.0
    %v12526 = vadd.f32 %v12524, %v12525
    %v12527 = vsel %vm9249, %v12209, 0.0
    %v12528 = vadd.f32 %v12526, %v12527
    %v12529 = vsel %vm9249, %v12210, 0.0
    %v12530 = vadd.f32 %v12528, %v12529
    %v12531 = vsel %vm9249, %v12211, 0.0
    %v12532 = vadd.f32 %v12530, %v12531
    %v12533 = vsel %vm9249, %v12212, 0.0
    %v12534 = vadd.f32 %v12532, %v12533
    %v12535 = vsel %vm9249, %v12213, 0.0
    %v12536 = vadd.f32 %v12534, %v12535
    %v12537 = vsel %vm9249, %v12214, 0.0
    %v12538 = vadd.f32 %v12536, %v12537
    %v12539 = vrot.slane %v12538, 4
    %v12540 = vadd.f32 %v12538, %v12539
    %v12541 = vrot.slane %v12540, 2
    %v12542 = vadd.f32 %v12540, %v12541
    %v12543 = vrot.slane %v12542, 1
    %v12544 = vadd.f32 %v12542, %v12543
    %v12545 = vsel %vm9249, %v12215, 0.0
    %v12546 = vsel %vm9249, %v12216, 0.0
    %v12547 = vadd.f32 %v12545, %v12546
    %v12548 = vsel %vm9249, %v12217, 0.0
    %v12549 = vadd.f32 %v12547, %v12548
    %v12550 = vsel %vm9249, %v12218, 0.0
    %v12551 = vadd.f32 %v12549, %v12550
    %v12552 = vsel %vm9249, %v12219, 0.0
    %v12553 = vadd.f32 %v12551, %v12552
    %v12554 = vsel %vm9249, %v12220, 0.0
    %v12555 = vadd.f32 %v12553, %v12554
    %v12556 = vsel %vm9249, %v12221, 0.0
    %v12557 = vadd.f32 %v12555, %v12556
    %v12558 = vsel %vm9249, %v12222, 0.0
    %v12559 = vadd.f32 %v12557, %v12558
    %v12560 = vsel %vm9249, %v12223, 0.0
    %v12561 = vadd.f32 %v12559, %v12560
    %v12562 = vsel %vm9249, %v12224, 0.0
    %v12563 = vadd.f32 %v12561, %v12562
    %v12564 = vsel %vm9249, %v12225, 0.0
    %v12565 = vadd.f32 %v12563, %v12564
    %v12566 = vsel %vm9249, %v12226, 0.0
    %v12567 = vadd.f32 %v12565, %v12566
    %v12568 = vsel %vm9249, %v12227, 0.0
    %v12569 = vadd.f32 %v12567, %v12568
    %v12570 = vsel %vm9249, %v12228, 0.0
    %v12571 = vadd.f32 %v12569, %v12570
    %v12572 = vsel %vm9249, %v12229, 0.0
    %v12573 = vadd.f32 %v12571, %v12572
    %v12574 = vsel %vm9249, %v12230, 0.0
    %v12575 = vadd.f32 %v12573, %v12574
    %v12576 = vsel %vm9249, %v12231, 0.0
    %v12577 = vadd.f32 %v12575, %v12576
    %v12578 = vsel %vm9249, %v12232, 0.0
    %v12579 = vadd.f32 %v12577, %v12578
    %v12580 = vsel %vm9249, %v12233, 0.0
    %v12581 = vadd.f32 %v12579, %v12580
    %v12582 = vsel %vm9249, %v12234, 0.0
    %v12583 = vadd.f32 %v12581, %v12582
    %v12584 = vsel %vm9249, %v12235, 0.0
    %v12585 = vadd.f32 %v12583, %v12584
    %v12586 = vsel %vm9249, %v12236, 0.0
    %v12587 = vadd.f32 %v12585, %v12586
    %v12588 = vsel %vm9249, %v12237, 0.0
    %v12589 = vadd.f32 %v12587, %v12588
    %v12590 = vsel %vm9249, %v12238, 0.0
    %v12591 = vadd.f32 %v12589, %v12590
    %v12592 = vsel %vm9249, %v12239, 0.0
    %v12593 = vadd.f32 %v12591, %v12592
    %v12594 = vsel %vm9249, %v12240, 0.0
    %v12595 = vadd.f32 %v12593, %v12594
    %v12596 = vsel %vm9249, %v12241, 0.0
    %v12597 = vadd.f32 %v12595, %v12596
    %v12598 = vsel %vm9249, %v12242, 0.0
    %v12599 = vadd.f32 %v12597, %v12598
    %v12600 = vsel %vm9249, %v12243, 0.0
    %v12601 = vadd.f32 %v12599, %v12600
    %v12602 = vsel %vm9249, %v12244, 0.0
    %v12603 = vadd.f32 %v12601, %v12602
    %v12604 = vsel %vm9249, %v12245, 0.0
    %v12605 = vadd.f32 %v12603, %v12604
    %v12606 = vsel %vm9249, %v12246, 0.0
    %v12607 = vadd.f32 %v12605, %v12606
    %v12608 = vrot.slane %v12607, 4
    %v12609 = vadd.f32 %v12607, %v12608
    %v12610 = vrot.slane %v12609, 2
    %v12611 = vadd.f32 %v12609, %v12610
    %v12612 = vrot.slane %v12611, 1
    %v12613 = vadd.f32 %v12611, %v12612
    %v12614 = vsel %vm9249, %v12247, 0.0
    %v12615 = vsel %vm9249, %v12248, 0.0
    %v12616 = vadd.f32 %v12614, %v12615
    %v12617 = vsel %vm9249, %v12249, 0.0
    %v12618 = vadd.f32 %v12616, %v12617
    %v12619 = vsel %vm9249, %v12250, 0.0
    %v12620 = vadd.f32 %v12618, %v12619
    %v12621 = vsel %vm9249, %v12251, 0.0
    %v12622 = vadd.f32 %v12620, %v12621
    %v12623 = vsel %vm9249, %v12252, 0.0
    %v12624 = vadd.f32 %v12622, %v12623
    %v12625 = vsel %vm9249, %v12253, 0.0
    %v12626 = vadd.f32 %v12624, %v12625
    %v12627 = vsel %vm9249, %v12254, 0.0
    %v12628 = vadd.f32 %v12626, %v12627
    %v12629 = vsel %vm9249, %v12255, 0.0
    %v12630 = vadd.f32 %v12628, %v12629
    %v12631 = vsel %vm9249, %v12256, 0.0
    %v12632 = vadd.f32 %v12630, %v12631
    %v12633 = vsel %vm9249, %v12257, 0.0
    %v12634 = vadd.f32 %v12632, %v12633
    %v12635 = vsel %vm9249, %v12258, 0.0
    %v12636 = vadd.f32 %v12634, %v12635
    %v12637 = vsel %vm9249, %v12259, 0.0
    %v12638 = vadd.f32 %v12636, %v12637
    %v12639 = vsel %vm9249, %v12260, 0.0
    %v12640 = vadd.f32 %v12638, %v12639
    %v12641 = vsel %vm9249, %v12261, 0.0
    %v12642 = vadd.f32 %v12640, %v12641
    %v12643 = vsel %vm9249, %v12262, 0.0
    %v12644 = vadd.f32 %v12642, %v12643
    %v12645 = vsel %vm9249, %v12263, 0.0
    %v12646 = vadd.f32 %v12644, %v12645
    %v12647 = vsel %vm9249, %v12264, 0.0
    %v12648 = vadd.f32 %v12646, %v12647
    %v12649 = vsel %vm9249, %v12265, 0.0
    %v12650 = vadd.f32 %v12648, %v12649
    %v12651 = vsel %vm9249, %v12266, 0.0
    %v12652 = vadd.f32 %v12650, %v12651
    %v12653 = vsel %vm9249, %v12267, 0.0
    %v12654 = vadd.f32 %v12652, %v12653
    %v12655 = vsel %vm9249, %v12268, 0.0
    %v12656 = vadd.f32 %v12654, %v12655
    %v12657 = vsel %vm9249, %v12269, 0.0
    %v12658 = vadd.f32 %v12656, %v12657
    %v12659 = vsel %vm9249, %v12270, 0.0
    %v12660 = vadd.f32 %v12658, %v12659
    %v12661 = vsel %vm9249, %v12271, 0.0
    %v12662 = vadd.f32 %v12660, %v12661
    %v12663 = vsel %vm9249, %v12272, 0.0
    %v12664 = vadd.f32 %v12662, %v12663
    %v12665 = vsel %vm9249, %v12273, 0.0
    %v12666 = vadd.f32 %v12664, %v12665
    %v12667 = vsel %vm9249, %v12274, 0.0
    %v12668 = vadd.f32 %v12666, %v12667
    %v12669 = vsel %vm9249, %v12275, 0.0
    %v12670 = vadd.f32 %v12668, %v12669
    %v12671 = vsel %vm9249, %v12276, 0.0
    %v12672 = vadd.f32 %v12670, %v12671
    %v12673 = vsel %vm9249, %v12277, 0.0
    %v12674 = vadd.f32 %v12672, %v12673
    %v12675 = vsel %vm9249, %v12278, 0.0
    %v12676 = vadd.f32 %v12674, %v12675
    %v12677 = vrot.slane %v12676, 4
    %v12678 = vadd.f32 %v12676, %v12677
    %v12679 = vrot.slane %v12678, 2
    %v12680 = vadd.f32 %v12678, %v12679
    %v12681 = vrot.slane %v12680, 1
    %v12682 = vadd.f32 %v12680, %v12681
    %v12683 = vsel %vm9249, %v12279, 0.0
    %v12684 = vsel %vm9249, %v12280, 0.0
    %v12685 = vadd.f32 %v12683, %v12684
    %v12686 = vsel %vm9249, %v12281, 0.0
    %v12687 = vadd.f32 %v12685, %v12686
    %v12688 = vsel %vm9249, %v12282, 0.0
    %v12689 = vadd.f32 %v12687, %v12688
    %v12690 = vsel %vm9249, %v12283, 0.0
    %v12691 = vadd.f32 %v12689, %v12690
    %v12692 = vsel %vm9249, %v12284, 0.0
    %v12693 = vadd.f32 %v12691, %v12692
    %v12694 = vsel %vm9249, %v12285, 0.0
    %v12695 = vadd.f32 %v12693, %v12694
    %v12696 = vsel %vm9249, %v12286, 0.0
    %v12697 = vadd.f32 %v12695, %v12696
    %v12698 = vsel %vm9249, %v12287, 0.0
    %v12699 = vadd.f32 %v12697, %v12698
    %v12700 = vsel %vm9249, %v12288, 0.0
    %v12701 = vadd.f32 %v12699, %v12700
    %v12702 = vsel %vm9249, %v12289, 0.0
    %v12703 = vadd.f32 %v12701, %v12702
    %v12704 = vsel %vm9249, %v12290, 0.0
    %v12705 = vadd.f32 %v12703, %v12704
    %v12706 = vsel %vm9249, %v12291, 0.0
    %v12707 = vadd.f32 %v12705, %v12706
    %v12708 = vsel %vm9249, %v12292, 0.0
    %v12709 = vadd.f32 %v12707, %v12708
    %v12710 = vsel %vm9249, %v12293, 0.0
    %v12711 = vadd.f32 %v12709, %v12710
    %v12712 = vsel %vm9249, %v12294, 0.0
    %v12713 = vadd.f32 %v12711, %v12712
    %v12714 = vsel %vm9249, %v12295, 0.0
    %v12715 = vadd.f32 %v12713, %v12714
    %v12716 = vsel %vm9249, %v12296, 0.0
    %v12717 = vadd.f32 %v12715, %v12716
    %v12718 = vsel %vm9249, %v12297, 0.0
    %v12719 = vadd.f32 %v12717, %v12718
    %v12720 = vsel %vm9249, %v12298, 0.0
    %v12721 = vadd.f32 %v12719, %v12720
    %v12722 = vsel %vm9249, %v12299, 0.0
    %v12723 = vadd.f32 %v12721, %v12722
    %v12724 = vsel %vm9249, %v12300, 0.0
    %v12725 = vadd.f32 %v12723, %v12724
    %v12726 = vsel %vm9249, %v12301, 0.0
    %v12727 = vadd.f32 %v12725, %v12726
    %v12728 = vsel %vm9249, %v12302, 0.0
    %v12729 = vadd.f32 %v12727, %v12728
    %v12730 = vsel %vm9249, %v12303, 0.0
    %v12731 = vadd.f32 %v12729, %v12730
    %v12732 = vsel %vm9249, %v12304, 0.0
    %v12733 = vadd.f32 %v12731, %v12732
    %v12734 = vsel %vm9249, %v12305, 0.0
    %v12735 = vadd.f32 %v12733, %v12734
    %v12736 = vsel %vm9249, %v12306, 0.0
    %v12737 = vadd.f32 %v12735, %v12736
    %v12738 = vsel %vm9249, %v12307, 0.0
    %v12739 = vadd.f32 %v12737, %v12738
    %v12740 = vsel %vm9249, %v12308, 0.0
    %v12741 = vadd.f32 %v12739, %v12740
    %v12742 = vsel %vm9249, %v12309, 0.0
    %v12743 = vadd.f32 %v12741, %v12742
    %v12744 = vsel %vm9249, %v12310, 0.0
    %v12745 = vadd.f32 %v12743, %v12744
    %v12746 = vrot.slane %v12745, 4
    %v12747 = vadd.f32 %v12745, %v12746
    %v12748 = vrot.slane %v12747, 2
    %v12749 = vadd.f32 %v12747, %v12748
    %v12750 = vrot.slane %v12749, 1
    %v12751 = vadd.f32 %v12749, %v12750
    %v12752 = vsel %vm9249, %v12311, 0.0
    %v12753 = vsel %vm9249, %v12312, 0.0
    %v12754 = vadd.f32 %v12752, %v12753
    %v12755 = vsel %vm9249, %v12313, 0.0
    %v12756 = vadd.f32 %v12754, %v12755
    %v12757 = vsel %vm9249, %v12314, 0.0
    %v12758 = vadd.f32 %v12756, %v12757
    %v12759 = vsel %vm9249, %v12315, 0.0
    %v12760 = vadd.f32 %v12758, %v12759
    %v12761 = vsel %vm9249, %v12316, 0.0
    %v12762 = vadd.f32 %v12760, %v12761
    %v12763 = vsel %vm9249, %v12317, 0.0
    %v12764 = vadd.f32 %v12762, %v12763
    %v12765 = vsel %vm9249, %v12318, 0.0
    %v12766 = vadd.f32 %v12764, %v12765
    %v12767 = vsel %vm9249, %v12319, 0.0
    %v12768 = vadd.f32 %v12766, %v12767
    %v12769 = vsel %vm9249, %v12320, 0.0
    %v12770 = vadd.f32 %v12768, %v12769
    %v12771 = vsel %vm9249, %v12321, 0.0
    %v12772 = vadd.f32 %v12770, %v12771
    %v12773 = vsel %vm9249, %v12322, 0.0
    %v12774 = vadd.f32 %v12772, %v12773
    %v12775 = vsel %vm9249, %v12323, 0.0
    %v12776 = vadd.f32 %v12774, %v12775
    %v12777 = vsel %vm9249, %v12324, 0.0
    %v12778 = vadd.f32 %v12776, %v12777
    %v12779 = vsel %vm9249, %v12325, 0.0
    %v12780 = vadd.f32 %v12778, %v12779
    %v12781 = vsel %vm9249, %v12326, 0.0
    %v12782 = vadd.f32 %v12780, %v12781
    %v12783 = vsel %vm9249, %v12327, 0.0
    %v12784 = vadd.f32 %v12782, %v12783
    %v12785 = vsel %vm9249, %v12328, 0.0
    %v12786 = vadd.f32 %v12784, %v12785
    %v12787 = vsel %vm9249, %v12329, 0.0
    %v12788 = vadd.f32 %v12786, %v12787
    %v12789 = vsel %vm9249, %v12330, 0.0
    %v12790 = vadd.f32 %v12788, %v12789
    %v12791 = vsel %vm9249, %v12331, 0.0
    %v12792 = vadd.f32 %v12790, %v12791
    %v12793 = vsel %vm9249, %v12332, 0.0
    %v12794 = vadd.f32 %v12792, %v12793
    %v12795 = vsel %vm9249, %v12333, 0.0
    %v12796 = vadd.f32 %v12794, %v12795
    %v12797 = vsel %vm9249, %v12334, 0.0
    %v12798 = vadd.f32 %v12796, %v12797
    %v12799 = vsel %vm9249, %v12335, 0.0
    %v12800 = vadd.f32 %v12798, %v12799
    %v12801 = vsel %vm9249, %v12336, 0.0
    %v12802 = vadd.f32 %v12800, %v12801
    %v12803 = vsel %vm9249, %v12337, 0.0
    %v12804 = vadd.f32 %v12802, %v12803
    %v12805 = vsel %vm9249, %v12338, 0.0
    %v12806 = vadd.f32 %v12804, %v12805
    %v12807 = vsel %vm9249, %v12339, 0.0
    %v12808 = vadd.f32 %v12806, %v12807
    %v12809 = vsel %vm9249, %v12340, 0.0
    %v12810 = vadd.f32 %v12808, %v12809
    %v12811 = vsel %vm9249, %v12341, 0.0
    %v12812 = vadd.f32 %v12810, %v12811
    %v12813 = vsel %vm9249, %v12342, 0.0
    %v12814 = vadd.f32 %v12812, %v12813
    %v12815 = vrot.slane %v12814, 4
    %v12816 = vadd.f32 %v12814, %v12815
    %v12817 = vrot.slane %v12816, 2
    %v12818 = vadd.f32 %v12816, %v12817
    %v12819 = vrot.slane %v12818, 1
    %v12820 = vadd.f32 %v12818, %v12819
    %v12821 = vsel %vm9249, %v12343, 0.0
    %v12822 = vsel %vm9249, %v12344, 0.0
    %v12823 = vadd.f32 %v12821, %v12822
    %v12824 = vsel %vm9249, %v12345, 0.0
    %v12825 = vadd.f32 %v12823, %v12824
    %v12826 = vsel %vm9249, %v12346, 0.0
    %v12827 = vadd.f32 %v12825, %v12826
    %v12828 = vsel %vm9249, %v12347, 0.0
    %v12829 = vadd.f32 %v12827, %v12828
    %v12830 = vsel %vm9249, %v12348, 0.0
    %v12831 = vadd.f32 %v12829, %v12830
    %v12832 = vsel %vm9249, %v12349, 0.0
    %v12833 = vadd.f32 %v12831, %v12832
    %v12834 = vsel %vm9249, %v12350, 0.0
    %v12835 = vadd.f32 %v12833, %v12834
    %v12836 = vsel %vm9249, %v12351, 0.0
    %v12837 = vadd.f32 %v12835, %v12836
    %v12838 = vsel %vm9249, %v12352, 0.0
    %v12839 = vadd.f32 %v12837, %v12838
    %v12840 = vsel %vm9249, %v12353, 0.0
    %v12841 = vadd.f32 %v12839, %v12840
    %v12842 = vsel %vm9249, %v12354, 0.0
    %v12843 = vadd.f32 %v12841, %v12842
    %v12844 = vsel %vm9249, %v12355, 0.0
    %v12845 = vadd.f32 %v12843, %v12844
    %v12846 = vsel %vm9249, %v12356, 0.0
    %v12847 = vadd.f32 %v12845, %v12846
    %v12848 = vsel %vm9249, %v12357, 0.0
    %v12849 = vadd.f32 %v12847, %v12848
    %v12850 = vsel %vm9249, %v12358, 0.0
    %v12851 = vadd.f32 %v12849, %v12850
    %v12852 = vsel %vm9249, %v12359, 0.0
    %v12853 = vadd.f32 %v12851, %v12852
    %v12854 = vsel %vm9249, %v12360, 0.0
    %v12855 = vadd.f32 %v12853, %v12854
    %v12856 = vsel %vm9249, %v12361, 0.0
    %v12857 = vadd.f32 %v12855, %v12856
    %v12858 = vsel %vm9249, %v12362, 0.0
    %v12859 = vadd.f32 %v12857, %v12858
    %v12860 = vsel %vm9249, %v12363, 0.0
    %v12861 = vadd.f32 %v12859, %v12860
    %v12862 = vsel %vm9249, %v12364, 0.0
    %v12863 = vadd.f32 %v12861, %v12862
    %v12864 = vsel %vm9249, %v12365, 0.0
    %v12865 = vadd.f32 %v12863, %v12864
    %v12866 = vsel %vm9249, %v12366, 0.0
    %v12867 = vadd.f32 %v12865, %v12866
    %v12868 = vsel %vm9249, %v12367, 0.0
    %v12869 = vadd.f32 %v12867, %v12868
    %v12870 = vsel %vm9249, %v12368, 0.0
    %v12871 = vadd.f32 %v12869, %v12870
    %v12872 = vsel %vm9249, %v12369, 0.0
    %v12873 = vadd.f32 %v12871, %v12872
    %v12874 = vsel %vm9249, %v12370, 0.0
    %v12875 = vadd.f32 %v12873, %v12874
    %v12876 = vsel %vm9249, %v12371, 0.0
    %v12877 = vadd.f32 %v12875, %v12876
    %v12878 = vsel %vm9249, %v12372, 0.0
    %v12879 = vadd.f32 %v12877, %v12878
    %v12880 = vsel %vm9249, %v12373, 0.0
    %v12881 = vadd.f32 %v12879, %v12880
    %v12882 = vsel %vm9249, %v12374, 0.0
    %v12883 = vadd.f32 %v12881, %v12882
    %v12884 = vrot.slane %v12883, 4
    %v12885 = vadd.f32 %v12883, %v12884
    %v12886 = vrot.slane %v12885, 2
    %v12887 = vadd.f32 %v12885, %v12886
    %v12888 = vrot.slane %v12887, 1
    %v12889 = vadd.f32 %v12887, %v12888
    %v12890 = vsel %vm9249, %v12375, 0.0
    %v12891 = vsel %vm9249, %v12376, 0.0
    %v12892 = vadd.f32 %v12890, %v12891
    %v12893 = vsel %vm9249, %v12377, 0.0
    %v12894 = vadd.f32 %v12892, %v12893
    %v12895 = vsel %vm9249, %v12378, 0.0
    %v12896 = vadd.f32 %v12894, %v12895
    %v12897 = vsel %vm9249, %v12379, 0.0
    %v12898 = vadd.f32 %v12896, %v12897
    %v12899 = vsel %vm9249, %v12380, 0.0
    %v12900 = vadd.f32 %v12898, %v12899
    %v12901 = vsel %vm9249, %v12381, 0.0
    %v12902 = vadd.f32 %v12900, %v12901
    %v12903 = vsel %vm9249, %v12382, 0.0
    %v12904 = vadd.f32 %v12902, %v12903
    %v12905 = vsel %vm9249, %v12383, 0.0
    %v12906 = vadd.f32 %v12904, %v12905
    %v12907 = vsel %vm9249, %v12384, 0.0
    %v12908 = vadd.f32 %v12906, %v12907
    %v12909 = vsel %vm9249, %v12385, 0.0
    %v12910 = vadd.f32 %v12908, %v12909
    %v12911 = vsel %vm9249, %v12386, 0.0
    %v12912 = vadd.f32 %v12910, %v12911
    %v12913 = vsel %vm9249, %v12387, 0.0
    %v12914 = vadd.f32 %v12912, %v12913
    %v12915 = vsel %vm9249, %v12388, 0.0
    %v12916 = vadd.f32 %v12914, %v12915
    %v12917 = vsel %vm9249, %v12389, 0.0
    %v12918 = vadd.f32 %v12916, %v12917
    %v12919 = vsel %vm9249, %v12390, 0.0
    %v12920 = vadd.f32 %v12918, %v12919
    %v12921 = vsel %vm9249, %v12391, 0.0
    %v12922 = vadd.f32 %v12920, %v12921
    %v12923 = vsel %vm9249, %v12392, 0.0
    %v12924 = vadd.f32 %v12922, %v12923
    %v12925 = vsel %vm9249, %v12393, 0.0
    %v12926 = vadd.f32 %v12924, %v12925
    %v12927 = vsel %vm9249, %v12394, 0.0
    %v12928 = vadd.f32 %v12926, %v12927
    %v12929 = vsel %vm9249, %v12395, 0.0
    %v12930 = vadd.f32 %v12928, %v12929
    %v12931 = vsel %vm9249, %v12396, 0.0
    %v12932 = vadd.f32 %v12930, %v12931
    %v12933 = vsel %vm9249, %v12397, 0.0
    %v12934 = vadd.f32 %v12932, %v12933
    %v12935 = vsel %vm9249, %v12398, 0.0
    %v12936 = vadd.f32 %v12934, %v12935
    %v12937 = vsel %vm9249, %v12399, 0.0
    %v12938 = vadd.f32 %v12936, %v12937
    %v12939 = vsel %vm9249, %v12400, 0.0
    %v12940 = vadd.f32 %v12938, %v12939
    %v12941 = vsel %vm9249, %v12401, 0.0
    %v12942 = vadd.f32 %v12940, %v12941
    %v12943 = vsel %vm9249, %v12402, 0.0
    %v12944 = vadd.f32 %v12942, %v12943
    %v12945 = vsel %vm9249, %v12403, 0.0
    %v12946 = vadd.f32 %v12944, %v12945
    %v12947 = vsel %vm9249, %v12404, 0.0
    %v12948 = vadd.f32 %v12946, %v12947
    %v12949 = vsel %vm9249, %v12405, 0.0
    %v12950 = vadd.f32 %v12948, %v12949
    %v12951 = vsel %vm9249, %v12406, 0.0
    %v12952 = vadd.f32 %v12950, %v12951
    %v12953 = vrot.slane %v12952, 4
    %v12954 = vadd.f32 %v12952, %v12953
    %v12955 = vrot.slane %v12954, 2
    %v12956 = vadd.f32 %v12954, %v12955
    %v12957 = vrot.slane %v12956, 1
    %v12958 = vadd.f32 %v12956, %v12957
    %v12959 = vmul.f32 %v12475, 0.00390625
    %v12960 = vmul.f32 %v12544, 0.00390625
    %v12961 = vmul.f32 %v12613, 0.00390625
    %v12962 = vmul.f32 %v12682, 0.00390625
    %v12963 = vmul.f32 %v12751, 0.00390625
    %v12964 = vmul.f32 %v12820, 0.00390625
    %v12965 = vmul.f32 %v12889, 0.00390625
    %v12966 = vmul.f32 %v12958, 0.00390625
    %v12967 = vpack.c.bf16 %v12959, %v12959
    %v12968 = vpack.c.bf16 %v12960, %v12960
    %v12969 = vpack.c.bf16 %v12961, %v12961
    %v12970 = vpack.c.bf16 %v12962, %v12962
    %v12971 = vpack.c.bf16 %v12963, %v12963
    %v12972 = vpack.c.bf16 %v12964, %v12964
    %v12973 = vpack.c.bf16 %v12965, %v12965
    %v12974 = vpack.c.bf16 %v12966, %v12966
    %v12975 = vld [vmem:[%s3] sm:$0xf]
    %v12976 = vld [vmem:[%s3 + $0x4] sm:$0xf]
    %v12977 = vld [vmem:[%s3 + $0x8] sm:$0xf]
    %v12978 = vld [vmem:[%s3 + $0xc] sm:$0xf]
    %v12979 = vld [vmem:[%s4] sm:$0x1]
    %v12981 = vlaneseq
    %v12982 = vshrl.u32 %v12981, 7
    %v12983 = vsub.s32 0, %v12982
    %v12984 = vrot.slane %v12979, %v12983
    %v12994 = vunpack.c.l.b16 %v12967
    %v12995 = vunpack.c.l.b16 %v12968
    %v12996 = vunpack.c.l.b16 %v12969
    %v12997 = vunpack.c.l.b16 %v12970
    %v12998 = vunpack.c.l.b16 %v12971
    %v12999 = vunpack.c.l.b16 %v12972
    %v13000 = vunpack.c.l.b16 %v12973
    %v13001 = vunpack.c.l.b16 %v12974
    %vm13002 = vcmask 1041409
    %v13003 = vsel %vm13002, %v12995, %v12994
    %vm13004 = vcmask 1042434
    %v13005 = vsel %vm13004, %v12996, %v13003
    %vm13006 = vcmask 1043459
    %v13007 = vsel %vm13006, %v12997, %v13005
    %vm13008 = vcmask 1044484
    %v13009 = vsel %vm13008, %v12998, %v13007
    %vm13010 = vcmask 1045509
    %v13011 = vsel %vm13010, %v12999, %v13009
    %vm13012 = vcmask 1046534
    %v13013 = vsel %vm13012, %v13000, %v13011
    %vm13014 = vcmask 1047559
    %v13015 = vsel %vm13014, %v13001, %v13013
    %v13016 = vpack.c.b16 %v13015, %v13015
    %v13021 = vunpack.c.l.b16 %v12975
    %v13022 = vunpack.c.l.b16 %v12976
    %v13023 = vunpack.c.l.b16 %v12977
    %v13024 = vunpack.c.l.b16 %v12978
    %v13025 = vpack.c.b16 %v13022, %v13021
    %v13026 = vpack.c.b16 %v13024, %v13023
    %v13030 = vsel %vm9249, %v13016, 0
    %13032 = vmatprep.subr.bf16.mxu0 0
    %13033 = vmatpush1.bf16.msra.mxu0 0
    %13034 = vmatprep.subr.bf16.mxu0 0
    %13035 = vmatpush1.bf16.msra.mxu0 0
    %13036 = vmatprep.subr.bf16.mxu0 0
    %13037 = vmatpush1.bf16.msra.mxu0 0
    %13038 = vmatprep.subr.bf16.mxu0 0
    %13039 = vmatpush1.bf16.msra.mxu0 0
    %13040 = vmatprep.subr.bf16.mxu0 0
    %13041 = vmatpush1.bf16.msra.mxu0 0
    %13042 = vmatprep.subr.bf16.mxu0 0
    %13043 = vmatpush1.bf16.msra.mxu0 0
    %13044 = vmatprep.subr.bf16.mxu0 0
    %13045 = vmatpush1.bf16.msra.mxu0 %v13026
    %13046 = vmatprep.subr.bf16.mxu0 0
    %13047 = vmatpush1.bf16.msra.mxu0 %v13025
    %13048 = vmatprep.subr.bf16.mxu0 0
    %13049 = vmatpush2.bf16.msra.mxu0 0
    %13050 = vmatprep.subr.bf16.mxu0 0
    %13051 = vmatpush2.bf16.msra.mxu0 0
    %13052 = vmatprep.subr.bf16.mxu0 0
    %13053 = vmatpush2.bf16.msra.mxu0 0
    %13054 = vmatprep.subr.bf16.mxu0 0
    %13055 = vmatpush2.bf16.msra.mxu0 0
    %13056 = vmatprep.subr.bf16.mxu0 0
    %13057 = vmatpush2.bf16.msra.mxu0 0
    %13058 = vmatprep.subr.bf16.mxu0 0
    %13059 = vmatpush2.bf16.msra.mxu0 0
    %13060 = vmatprep.subr.bf16.mxu0 0
    %13061 = vmatpush2.bf16.msra.mxu0 0
    %13062 = vmatprep.subr.bf16.mxu0 0
    %13063 = vmatpush2.bf16.msra.mxu0 0
    %13064 = vmatprep.mubr.bf16.mxu0 0
    %13065 = vmatmul.mubr.bf16.gmra.mxu0 %v13030
    %v13066 = vpop.f32.mrf.mxu0
    %v13067 = vadd.f32 %v12984, %v13066
    %v13068 = vpop.f32.mrf.mxu0
    %v13069 = vpop.f32.mrf.mxu0
    %v13070 = vpop.f32.mrf.mxu0
    %13071 = vdwg.mxu0
    %v13072 = vmax.f32 %v13067, 0.0
    %v13073 = vpack.c.bf16 %v13072, %v13072
    %v13074 = vld [vmem:[%s5] sm:$0xf]
    %v13075 = vld [vmem:[%s5 + $0x4] sm:$0xf]
    %v13076 = vld [vmem:[%s5 + $0x8] sm:$0xf]
    %v13077 = vld [vmem:[%s5 + $0xc] sm:$0xf]
    %v13078 = vld [vmem:[%s6] sm:$0x1]
    %v13080 = vlaneseq
    %v13081 = vshrl.u32 %v13080, 7
    %v13082 = vsub.s32 0, %v13081
    %v13083 = vrot.slane %v13078, %v13082
    %v13089 = vunpack.c.l.b16 %v13074
    %v13090 = vunpack.c.l.b16 %v13075
    %v13091 = vunpack.c.l.b16 %v13076
    %v13092 = vunpack.c.l.b16 %v13077
    %v13093 = vpack.c.b16 %v13090, %v13089
    %v13094 = vpack.c.b16 %v13092, %v13091
    %v13098 = vsel %vm9249, %v13073, 0
    %13100 = vmatprep.subr.bf16.mxu0 0
    %13101 = vmatpush1.bf16.msra.mxu0 0
    %13102 = vmatprep.subr.bf16.mxu0 0
    %13103 = vmatpush1.bf16.msra.mxu0 0
    %13104 = vmatprep.subr.bf16.mxu0 0
    %13105 = vmatpush1.bf16.msra.mxu0 0
    %13106 = vmatprep.subr.bf16.mxu0 0
    %13107 = vmatpush1.bf16.msra.mxu0 0
    %13108 = vmatprep.subr.bf16.mxu0 0
    %13109 = vmatpush1.bf16.msra.mxu0 0
    %13110 = vmatprep.subr.bf16.mxu0 0
    %13111 = vmatpush1.bf16.msra.mxu0 0
    %13112 = vmatprep.subr.bf16.mxu0 0
    %13113 = vmatpush1.bf16.msra.mxu0 %v13094
    %13114 = vmatprep.subr.bf16.mxu0 0
    %13115 = vmatpush1.bf16.msra.mxu0 %v13093
    %13116 = vmatprep.subr.bf16.mxu0 0
    %13117 = vmatpush2.bf16.msra.mxu0 0
    %13118 = vmatprep.subr.bf16.mxu0 0
    %13119 = vmatpush2.bf16.msra.mxu0 0
    %13120 = vmatprep.subr.bf16.mxu0 0
    %13121 = vmatpush2.bf16.msra.mxu0 0
    %13122 = vmatprep.subr.bf16.mxu0 0
    %13123 = vmatpush2.bf16.msra.mxu0 0
    %13124 = vmatprep.subr.bf16.mxu0 0
    %13125 = vmatpush2.bf16.msra.mxu0 0
    %13126 = vmatprep.subr.bf16.mxu0 0
    %13127 = vmatpush2.bf16.msra.mxu0 0
    %13128 = vmatprep.subr.bf16.mxu0 0
    %13129 = vmatpush2.bf16.msra.mxu0 0
    %13130 = vmatprep.subr.bf16.mxu0 0
    %13131 = vmatpush2.bf16.msra.mxu0 0
    %13132 = vmatprep.mubr.bf16.mxu0 0
    %13133 = vmatmul.mubr.bf16.gmra.mxu0 %v13098
    %v13134 = vpop.f32.mrf.mxu0
    %v13135 = vadd.f32 %v13083, %v13134
    %v13136 = vpop.f32.mrf.mxu0
    %v13137 = vpop.f32.mrf.mxu0
    %v13138 = vpop.f32.mrf.mxu0
    %13139 = vdwg.mxu0
    %13140 = vst [vmem:[#allocation2] sm:$0xff] %v13135
    // Predicated region
    $region30: #{tpu_custom_call.1} parent=1 // pred_check
      _
    $region31: #{tpu_custom_call.1} parent=1 // pred_check_branch
      %13142 = sbr.rel (0) target = $region33
    $region32: #{tpu_custom_call.1} parent=1 // pred_region
      %s13144 = ssub.s32 128, 128
      %13145 = vsyncadd [#allocation3], %s13144
      %s13147 = sshll.u32 [#allocation2], 4
      %s13148 = int_to_ptr.vmem [resolvable:$true] %s13147
      %13150 = dma.vmem_to_hbm [thread:$0]  %s13148, 128, %s7, [#allocation3]
    $region33: #{tpu_custom_call.1} parent=1 // pred_fallthru
      _
    // Predicated region
    $region34: #{tpu_custom_call.1} parent=1 // pred_check
      _
    $region35: #{tpu_custom_call.1} parent=1 // pred_check_branch
      %13152 = sbr.rel (0) target = $region37
    $region36: #{tpu_custom_call.1} parent=1 // pred_region
      %13153 = dma.done [#allocation3], 128
    $region37: #{tpu_custom_call.1} parent=1 // pred_fallthru
      _
    %13154 = vsyncpa [#allocation3], 1

</llo_original>
